<compile_context>
chip_gen: v7x
topology: tpu7x:2x2x1
jax: 0.10.0
libtpu: 0.0.40
codegen_flags: <defaults>
</compile_context>

<pallas_src>
import functools
import math

import jax
import jax.numpy as jnp
from jax import lax
from jax.experimental import pallas as pl
from jax.experimental.pallas import tpu as pltpu

F32 = jnp.float32
LANE = 128   # lane width: classifier weight/bias and logits are padded to this
SUBL = 8     # sublane group: logits padded to 8 rows for an unmasked store


class Config:
    vocab_size = 100
    hidden_size = 32
    num_hidden_layers = 2
    num_attention_heads = 4
    intermediate_size = 64
    max_position_embeddings = 64
    type_vocab_size = 2
    visual_embedding_dim = 16
    num_labels = 3
    layer_norm_eps = 1e-12


# ----------------------------------------------------------------------------
# The fused kernel (embedding LN, visual projection, encoder, pooler, head)
# ----------------------------------------------------------------------------
def _fused_visual_bert_kernel(
    # activations
    emb_ref,        # (M, H)   word+pos+token_type (text) / tok_type+pos+bias (visual)
    vis_ref,        # (M, Dv)  zeros for text rows, visual features for visual rows
    ext_ref,        # (1, M)   (1 - attention_mask) * -10000, flattened
    # packed parameter slabs
    misc_ref,       # (8, 128) emb_ln_g/b, pool_b, cls_t_b, cls_ln_g/b, cls_b_pad
    headmat_ref,    # (4, H, 128) vis_proj_w, pool_w, cls_t_w, cls_w_pad
    lvec_ref,       # (L, 8, I)   ao_b, ln1_g/b, i_b, o_b, ln2_g/b
    qkvb_w_ref,     # (L, heads, 3, H+8, dh) per-head Wq*scale|Wk|Wv, bias in row H
    ao_w_ref,       # (L, heads, dh, H) per-head slice of the attn-output projection
    ffn_w_ref,      # (L, H+I, I)  rows [0:H]=i_w (H,I), rows [H:H+I]=o_w (I,H)
    # output
    logits_ref,     # (8, 128)
    *, L, heads, H, I, Dv, eps, B, S, M):

    def layer_norm(x, g, b):
        mu = jnp.mean(x, axis=-1, keepdims=True)
        var = jnp.mean(jnp.square(x - mu), axis=-1, keepdims=True)
        return (x - mu) * lax.rsqrt(var + eps) * g + b

    def gelu(x):
        # TODO(synk): HF BERT uses exact erf GELU; tanh approximation is used
        # for guaranteed Mosaic lowering (~1e-3 relative difference).
        return 0.5 * x * (1.0 + jnp.tanh(0.7978845608028654 *
                                         (x + 0.044715 * x * x * x)))

    # --- unpack small parameter slabs ----------------------------------------
    misc = misc_ref[...]                                  # (8, 128)
    emb_g, emb_b = misc[0:1, 0:H], misc[1:2, 0:H]
    pool_b, clst_b = misc[2:3, 0:H], misc[3:4, 0:H]
    clsln_g, clsln_b = misc[4:5, 0:H], misc[5:6, 0:H]
    cls_b = misc[6:7, :]                                  # (1, 128)

    vis_w = headmat_ref[0, 0:Dv, 0:H]                     # (Dv, H)
    pool_w = headmat_ref[1, :, 0:H]                       # (H, H)
    clst_w = headmat_ref[2, :, 0:H]                       # (H, H)
    cls_w = headmat_ref[3]                                # (H, 128)

    # --- BertVisioLinguisticEmbeddings ---------------------------------------
    emb = emb_ref[...] + jnp.dot(vis_ref[...], vis_w,
                                 preferred_element_type=F32)
    h = layer_norm(emb, emb_g, emb_b)                     # (M, H)

    # --- block-diagonal additive attention mask, built in-kernel -------------
    ri = lax.broadcasted_iota(jnp.int32, (M, M), 0)
    ci = lax.broadcasted_iota(jnp.int32, (M, M), 1)
    # batch index of a flat position = floor((idx + 0.5) / S)  (robust in f32)
    rb = jnp.floor((ri.astype(F32) + 0.5) * (1.0 / S))
    cb = jnp.floor((ci.astype(F32) + 0.5) * (1.0 / S))
    ext_b = jnp.broadcast_to(ext_ref[...], (M, M))        # per-column ext value
    mask = jnp.where(rb == cb, ext_b, jnp.float32(-1e9))  # cross-batch blocked

    # --- BertEncoder (static unroll; fine at L=2) -----------------------------
    for l in range(L):
        vecs = lvec_ref[l]                                # (8, I)
        ao_b = vecs[0:1, 0:H]
        ln1_g, ln1_b = vecs[1:2, 0:H], vecs[2:3, 0:H]
        i_b = vecs[3:4, 0:I]
        o_b = vecs[4:5, 0:H]
        ln2_g, ln2_b = vecs[5:6, 0:H], vecs[6:7, 0:H]

        attn = None
        for hd in range(heads):
            # per-head augmented weights: rows [0:H] = W, row H = bias.
            wq = qkvb_w_ref[l, hd, 0]                     # (H+8, dh), scale folded
            wk = qkvb_w_ref[l, hd, 1]
            wv = qkvb_w_ref[l, hd, 2]
            q = jnp.dot(h, wq[0:H, :], preferred_element_type=F32) + wq[H:H + 1, :]
            k = jnp.dot(h, wk[0:H, :], preferred_element_type=F32) + wk[H:H + 1, :]
            v = jnp.dot(h, wv[0:H, :], preferred_element_type=F32) + wv[H:H + 1, :]
            s = lax.dot_general(q, k, (((1,), (1,)), ((), ())),
                                preferred_element_type=F32) + mask   # (M, M)
            s = s - jnp.max(s, axis=-1, keepdims=True)
            p = jnp.exp(s)
            p = p * pl.reciprocal(jnp.sum(p, axis=-1, keepdims=True), approx=True)
            ctx = jnp.dot(p, v, preferred_element_type=F32)          # (M, dh)
            # fold per-head context straight into the output projection
            # (back-to-back matmul-accumulates -> MRB accumulate on v7x).
            part = jnp.dot(ctx, ao_w_ref[l, hd], preferred_element_type=F32)
            attn = part if attn is None else attn + part

        attn = attn + ao_b
        h1 = layer_norm(attn + h, ln1_g, ln1_b)

        i_w = ffn_w_ref[l, 0:H, 0:I]                      # (H, I)
        o_w = ffn_w_ref[l, H:H + I, 0:H]                  # (I, H)
        inter = gelu(jnp.dot(h1, i_w, preferred_element_type=F32) + i_b)
        out = jnp.dot(inter, o_w, preferred_element_type=F32) + o_b
        h = layer_norm(out + h1, ln2_g, ln2_b)

    # --- BertPooler: first token per sequence via in-kernel one-hot matmul ----
    bi = lax.broadcasted_iota(jnp.int32, (SUBL, M), 0)
    mi = lax.broadcasted_iota(jnp.int32, (SUBL, M), 1)
    sel = jnp.where((bi < B) & (mi == bi * S), 1.0, 0.0).astype(F32)  # (8, M)
    first = jnp.dot(sel, h, preferred_element_type=F32)               # (8, H)
    pooled = jnp.tanh(jnp.dot(first, pool_w, preferred_element_type=F32) + pool_b)

    # --- classifier: BertPredictionHeadTransform + Linear (lane/sublane dense)
    t = gelu(jnp.dot(pooled, clst_w, preferred_element_type=F32) + clst_b)
    t = layer_norm(t, clsln_g, clsln_b)
    logits_ref[...] = jnp.dot(t, cls_w, preferred_element_type=F32) + cls_b


# ----------------------------------------------------------------------------
# pallas_call wrapper: no grid, whole-array VMEM operands (no pipelining)
# ----------------------------------------------------------------------------
def fused_forward(inputs, cfg, *, B, S):
    H = cfg.hidden_size
    kern = functools.partial(
        _fused_visual_bert_kernel,
        L=cfg.num_hidden_layers,
        heads=cfg.num_attention_heads,
        H=H, I=cfg.intermediate_size, Dv=cfg.visual_embedding_dim,
        eps=cfg.layer_norm_eps, B=B, S=S, M=B * S)
    vmem = pltpu.MemorySpace.VMEM
    return pl.pallas_call(
        kern,
        out_shape=jax.ShapeDtypeStruct((SUBL, LANE), F32),
        in_specs=[pl.BlockSpec(memory_space=vmem)] * len(inputs),
        out_specs=pl.BlockSpec(memory_space=vmem),
    )(*inputs)


# ----------------------------------------------------------------------------
# Parameters: natural BERT-like shapes, then one-time packing (outside jit)
# ----------------------------------------------------------------------------
def init_params(key, cfg):
    H, I, L = cfg.hidden_size, cfg.intermediate_size, cfg.num_hidden_layers
    keys = iter(jax.random.split(key, 32))

    def w(shape):
        return 0.02 * jax.random.normal(next(keys), shape, F32)

    return {
        "word_emb": w((cfg.vocab_size, H)),
        "pos_emb": w((cfg.max_position_embeddings, H)),
        "tok_type_emb": w((cfg.type_vocab_size, H)),
        "tok_type_emb_visual": w((cfg.type_vocab_size, H)),
        "pos_emb_visual": w((cfg.max_position_embeddings, H)),
        "emb_ln_g": jnp.ones((H,), F32), "emb_ln_b": jnp.zeros((H,), F32),
        "vis_proj_w": w((cfg.visual_embedding_dim, H)),
        "vis_proj_b": jnp.zeros((H,), F32),
        "qkv_w": w((L, H, 3 * H)), "qkv_b": jnp.zeros((L, 3 * H), F32),
        "ao_w": w((L, H, H)), "ao_b": jnp.zeros((L, H), F32),
        "ln1_g": jnp.ones((L, H), F32), "ln1_b": jnp.zeros((L, H), F32),
        "i_w": w((L, H, I)), "i_b": jnp.zeros((L, I), F32),
        "o_w": w((L, I, H)), "o_b": jnp.zeros((L, H), F32),
        "ln2_g": jnp.ones((L, H), F32), "ln2_b": jnp.zeros((L, H), F32),
        "pool_w": w((H, H)), "pool_b": jnp.zeros((H,), F32),
        "cls_t_w": w((H, H)), "cls_t_b": jnp.zeros((H,), F32),
        "cls_ln_g": jnp.ones((H,), F32), "cls_ln_b": jnp.zeros((H,), F32),
        "cls_w": w((H, cfg.num_labels)), "cls_b": jnp.zeros((cfg.num_labels,), F32),
    }


def pack_params(p, cfg):
    """One-time host-side packing into the kernel's slabs (outside jit)."""
    H, I, L = cfg.hidden_size, cfg.intermediate_size, cfg.num_hidden_layers
    heads = cfg.num_attention_heads
    dh = H // heads
    Dv = cfg.visual_embedding_dim
    scale = 1.0 / math.sqrt(dh)

    # single-row head/emb params -> one (8, 128) slab
    misc = jnp.zeros((SUBL, LANE), F32)
    misc = misc.at[0, :H].set(p["emb_ln_g"]).at[1, :H].set(p["emb_ln_b"])
    misc = misc.at[2, :H].set(p["pool_b"]).at[3, :H].set(p["cls_t_b"])
    misc = misc.at[4, :H].set(p["cls_ln_g"]).at[5, :H].set(p["cls_ln_b"])
    misc = misc.at[6, :cfg.num_labels].set(p["cls_b"])

    # head matrices, lane-padded to 128
    head_mats = jnp.zeros((4, H, LANE), F32)
    head_mats = head_mats.at[0, :Dv, :H].set(p["vis_proj_w"])
    head_mats = head_mats.at[1, :, :H].set(p["pool_w"])
    head_mats = head_mats.at[2, :, :H].set(p["cls_t_w"])
    head_mats = head_mats.at[3, :, :cfg.num_labels].set(p["cls_w"])

    # per-layer vectors -> one (L, 8, I) slab
    lvecs = jnp.zeros((L, SUBL, I), F32)
    lvecs = lvecs.at[:, 0, :H].set(p["ao_b"])
    lvecs = lvecs.at[:, 1, :H].set(p["ln1_g"]).at[:, 2, :H].set(p["ln1_b"])
    lvecs = lvecs.at[:, 3, :I].set(p["i_b"]).at[:, 4, :H].set(p["o_b"])
    lvecs = lvecs.at[:, 5, :H].set(p["ln2_g"]).at[:, 6, :H].set(p["ln2_b"])

    # per-head QKV weights, 1/sqrt(dh) folded into Q, bias as augmented row H
    qw = p["qkv_w"][:, :, 0:H] * scale
    kw = p["qkv_w"][:, :, H:2 * H]
    vw = p["qkv_w"][:, :, 2 * H:3 * H]
    qb = p["qkv_b"][:, 0:H] * scale
    kb = p["qkv_b"][:, H:2 * H]
    vb = p["qkv_b"][:, 2 * H:3 * H]

    def per_head_w(w):   # (L,H,H) -> (L, heads, H, dh)
        return w.reshape(L, H, heads, dh).transpose(0, 2, 1, 3)

    qkvb_w = jnp.zeros((L, heads, 3, H + SUBL, dh), F32)
    for t, (wm, bv) in enumerate([(qw, qb), (kw, kb), (vw, vb)]):
        qkvb_w = qkvb_w.at[:, :, t, 0:H, :].set(per_head_w(wm))
        qkvb_w = qkvb_w.at[:, :, t, H, :].set(bv.reshape(L, heads, dh))

    ao_w = p["ao_w"].reshape(L, heads, dh, H)             # per-head rows of Wo

    ffn_w = jnp.zeros((L, H + I, I), F32)
    ffn_w = ffn_w.at[:, 0:H, 0:I].set(p["i_w"])
    ffn_w = ffn_w.at[:, H:H + I, 0:H].set(p["o_w"])

    return {
        "word_emb": p["word_emb"], "pos_emb": p["pos_emb"],
        "tok_type_emb": p["tok_type_emb"],
        "tok_type_emb_visual": p["tok_type_emb_visual"],
        # visual position embedding (ids are all zero for 'plain' strategy)
        # and visual projection bias, folded into one constant row:
        "vis_const": p["pos_emb_visual"][0] + p["vis_proj_b"],
        "misc": misc, "head_mats": head_mats, "lvecs": lvecs,
        "qkvb_w": qkvb_w, "ao_w": ao_w, "ffn_w": ffn_w,
    }


# ----------------------------------------------------------------------------
# Model forward (embedding gathers stay in XLA glue; everything else fused)
# ----------------------------------------------------------------------------
def visual_bert_for_classification(packed, cfg, input_ids, input_mask,
                                   attention_mask, token_type_ids,
                                   visual_embeddings, visual_embeddings_type):
    B, St = input_ids.shape
    Sv = visual_embeddings.shape[1]
    S = St + Sv
    M = B * S
    H = cfg.hidden_size
    Dv = cfg.visual_embedding_dim

    # BertVisioLinguisticEmbeddings: table gathers (not matmuls) stay in XLA.
    words = packed["word_emb"][input_ids]                            # (B,St,H)
    pos = packed["pos_emb"][:St][None, :, :]                         # (1,St,H)
    tok = packed["tok_type_emb"][token_type_ids]                     # (B,St,H)
    text_emb = words + pos + tok

    vis_tok = packed["tok_type_emb_visual"][visual_embeddings_type]  # (B,Sv,H)
    vis_aux = vis_tok + packed["vis_const"][None, None, :]

    emb_base = jnp.concatenate([text_emb, vis_aux], axis=1).reshape(M, H)
    vis_pad = jnp.concatenate(
        [jnp.zeros((B, St, Dv), F32), visual_embeddings.astype(F32)],
        axis=1).reshape(M, Dv)
    ext = ((1.0 - attention_mask.astype(F32)) * -10000.0).reshape(1, M)

    logits_pad = fused_forward(
        (emb_base, vis_pad, ext,
         packed["misc"], packed["head_mats"], packed["lvecs"],
         packed["qkvb_w"], packed["ao_w"], packed["ffn_w"]),
        cfg, B=B, S=S)

    # pooler_strategy=='default' -> no vqa IndexSelect (input_mask unused);
    # training_head_type != 'nlvr2'; dropout is identity at inference.
    reshaped = logits_pad[:B, :cfg.num_labels].reshape(-1, cfg.num_labels)
    return {"scores": reshaped}


# ----------------------------------------------------------------------------
if __name__ == "__main__":
    cfg = Config()
    key = jax.random.PRNGKey(0)
    kp, k1, k2 = jax.random.split(key, 3)

    B, S_text, S_vis = 2, 8, 4
    raw_params = init_params(kp, cfg)
    packed = pack_params(raw_params, cfg)   # one-time, outside the jitted path

    input_ids = jax.random.randint(k1, (B, S_text), 0, cfg.vocab_size,
                                   dtype=jnp.int32)
    token_type_ids = jnp.zeros((B, S_text), jnp.int32)
    visual_embeddings = jax.random.normal(
        k2, (B, S_vis, cfg.visual_embedding_dim), F32)
    visual_embeddings_type = jnp.zeros((B, S_vis), jnp.int32)
    attention_mask = jnp.ones((B, S_text + S_vis), jnp.int32)  # text + visual
    input_mask = jnp.ones((B, S_text), jnp.int32)              # unused ('default')

    fwd = jax.jit(lambda p, *args: visual_bert_for_classification(p, cfg, *args))
    out = fwd(packed, input_ids, input_mask, attention_mask, token_type_ids,
              visual_embeddings, visual_embeddings_type)
    jax.block_until_ready(out["scores"])
    assert out["scores"].shape == (B, cfg.num_labels)
    print("KERNEL_OK")
</pallas_src>

<mosaic_0001>
module attributes {stable_mosaic.version = 11 : i64} {
  func.func @_fused_visual_bert_kernel(%arg0: memref<24x32xf32, #tpu.memory_space<vmem>>, %arg1: memref<24x16xf32, #tpu.memory_space<vmem>>, %arg2: memref<1x24xf32, #tpu.memory_space<vmem>>, %arg3: memref<8x128xf32, #tpu.memory_space<vmem>>, %arg4: memref<4x32x128xf32, #tpu.memory_space<vmem>>, %arg5: memref<2x8x64xf32, #tpu.memory_space<vmem>>, %arg6: memref<2x4x3x40x8xf32, #tpu.memory_space<vmem>>, %arg7: memref<2x4x8x32xf32, #tpu.memory_space<vmem>>, %arg8: memref<2x96x64xf32, #tpu.memory_space<vmem>>, %arg9: memref<8x128xf32, #tpu.memory_space<vmem>>) attributes {dimension_semantics = [], scalar_prefetch = 0 : i64, scratch_operands = 0 : i64, tpu.core_type = #tpu.core_type<tc>} {
    %c0 = arith.constant 0 : index
    %c0_0 = arith.constant 0 : index
    %0 = vector.load %arg3[%c0, %c0_0] : memref<8x128xf32, #tpu.memory_space<vmem>>, vector<8x128xf32>
    %1 = vector.extract_strided_slice %0 {offsets = [0, 0], sizes = [1, 32], strides = [1, 1]} : vector<8x128xf32> to vector<1x32xf32>
    %2 = vector.extract_strided_slice %0 {offsets = [1, 0], sizes = [1, 32], strides = [1, 1]} : vector<8x128xf32> to vector<1x32xf32>
    %3 = vector.extract_strided_slice %0 {offsets = [2, 0], sizes = [1, 32], strides = [1, 1]} : vector<8x128xf32> to vector<1x32xf32>
    %4 = vector.extract_strided_slice %0 {offsets = [3, 0], sizes = [1, 32], strides = [1, 1]} : vector<8x128xf32> to vector<1x32xf32>
    %5 = vector.extract_strided_slice %0 {offsets = [4, 0], sizes = [1, 32], strides = [1, 1]} : vector<8x128xf32> to vector<1x32xf32>
    %6 = vector.extract_strided_slice %0 {offsets = [5, 0], sizes = [1, 32], strides = [1, 1]} : vector<8x128xf32> to vector<1x32xf32>
    %7 = vector.extract_strided_slice %0 {offsets = [6, 0], sizes = [1, 128], strides = [1, 1]} : vector<8x128xf32> to vector<1x128xf32>
    %c0_1 = arith.constant 0 : index
    %c0_2 = arith.constant 0 : index
    %c0_3 = arith.constant 0 : index
    %8 = vector.load %arg4[%c0_1, %c0_2, %c0_3] : memref<4x32x128xf32, #tpu.memory_space<vmem>>, vector<1x16x32xf32>
    %9 = vector.shape_cast %8 : vector<1x16x32xf32> to vector<16x32xf32>
    %c1 = arith.constant 1 : index
    %c0_4 = arith.constant 0 : index
    %c0_5 = arith.constant 0 : index
    %10 = vector.load %arg4[%c1, %c0_4, %c0_5] : memref<4x32x128xf32, #tpu.memory_space<vmem>>, vector<1x32x32xf32>
    %11 = vector.shape_cast %10 : vector<1x32x32xf32> to vector<32x32xf32>
    %c2 = arith.constant 2 : index
    %c0_6 = arith.constant 0 : index
    %c0_7 = arith.constant 0 : index
    %12 = vector.load %arg4[%c2, %c0_6, %c0_7] : memref<4x32x128xf32, #tpu.memory_space<vmem>>, vector<1x32x32xf32>
    %13 = vector.shape_cast %12 : vector<1x32x32xf32> to vector<32x32xf32>
    %c3 = arith.constant 3 : index
    %c0_8 = arith.constant 0 : index
    %c0_9 = arith.constant 0 : index
    %14 = vector.load %arg4[%c3, %c0_8, %c0_9] : memref<4x32x128xf32, #tpu.memory_space<vmem>>, vector<1x32x128xf32>
    %15 = vector.shape_cast %14 : vector<1x32x128xf32> to vector<32x128xf32>
    %c0_10 = arith.constant 0 : index
    %c0_11 = arith.constant 0 : index
    %16 = vector.load %arg0[%c0_10, %c0_11] : memref<24x32xf32, #tpu.memory_space<vmem>>, vector<24x32xf32>
    %c0_12 = arith.constant 0 : index
    %c0_13 = arith.constant 0 : index
    %17 = vector.load %arg1[%c0_12, %c0_13] : memref<24x16xf32, #tpu.memory_space<vmem>>, vector<24x16xf32>
    %cst = arith.constant dense<0.000000e+00> : vector<24x32xf32>
    %18 = tpu.matmul %17, %9, %cst {dimension_numbers = #tpu.dot_dimension_numbers<[1], [0], [0], [1], [0, 0, 1, 1], [], []>} : vector<24x16xf32>, vector<16x32xf32>, vector<24x32xf32> -> vector<24x32xf32>
    %19 = arith.addf %16, %18 : vector<24x32xf32>
    %cst_14 = arith.constant dense<0.000000e+00> : vector<24xf32>
    %20 = vector.multi_reduction <add>, %19, %cst_14 [1] : vector<24x32xf32> to vector<24xf32>
    %21 = vector.shape_cast %20 : vector<24xf32> to vector<24x1xf32>
    %cst_15 = arith.constant 3.200000e+01 : f32
    %22 = vector.broadcast %cst_15 : f32 to vector<24x1xf32>
    %23 = arith.divf %21, %22 : vector<24x1xf32>
    %24 = vector.broadcast %23 : vector<24x1xf32> to vector<24x32xf32>
    %25 = arith.subf %19, %24 : vector<24x32xf32>
    %26 = arith.mulf %25, %25 : vector<24x32xf32>
    %cst_16 = arith.constant dense<0.000000e+00> : vector<24xf32>
    %27 = vector.multi_reduction <add>, %26, %cst_16 [1] : vector<24x32xf32> to vector<24xf32>
    %28 = vector.shape_cast %27 : vector<24xf32> to vector<24x1xf32>
    %cst_17 = arith.constant 3.200000e+01 : f32
    %29 = vector.broadcast %cst_17 : f32 to vector<24x1xf32>
    %30 = arith.divf %28, %29 : vector<24x1xf32>
    %31 = vector.broadcast %23 : vector<24x1xf32> to vector<24x32xf32>
    %32 = arith.subf %19, %31 : vector<24x32xf32>
    %cst_18 = arith.constant 9.99999996E-13 : f32
    %33 = vector.broadcast %cst_18 : f32 to vector<24x1xf32>
    %34 = arith.addf %30, %33 : vector<24x1xf32>
    %35 = math.rsqrt %34 : vector<24x1xf32>
    %36 = vector.broadcast %35 : vector<24x1xf32> to vector<24x32xf32>
    %37 = arith.mulf %32, %36 : vector<24x32xf32>
    %38 = vector.broadcast %1 : vector<1x32xf32> to vector<24x32xf32>
    %39 = arith.mulf %37, %38 : vector<24x32xf32>
    %40 = vector.broadcast %2 : vector<1x32xf32> to vector<24x32xf32>
    %41 = arith.addf %39, %40 : vector<24x32xf32>
    %42 = tpu.iota {dimensions = array<i32: 0>} : vector<24x24xi32>
    %43 = tpu.iota {dimensions = array<i32: 1>} : vector<24x24xi32>
    %44 = arith.sitofp %42 : vector<24x24xi32> to vector<24x24xf32>
    %cst_19 = arith.constant 5.000000e-01 : f32
    %45 = vector.broadcast %cst_19 : f32 to vector<24x24xf32>
    %46 = arith.addf %44, %45 : vector<24x24xf32>
    %cst_20 = arith.constant 0.0833333358 : f32
    %47 = vector.broadcast %cst_20 : f32 to vector<24x24xf32>
    %48 = arith.mulf %46, %47 : vector<24x24xf32>
    %49 = math.floor %48 : vector<24x24xf32>
    %50 = arith.sitofp %43 : vector<24x24xi32> to vector<24x24xf32>
    %cst_21 = arith.constant 5.000000e-01 : f32
    %51 = vector.broadcast %cst_21 : f32 to vector<24x24xf32>
    %52 = arith.addf %50, %51 : vector<24x24xf32>
    %cst_22 = arith.constant 0.0833333358 : f32
    %53 = vector.broadcast %cst_22 : f32 to vector<24x24xf32>
    %54 = arith.mulf %52, %53 : vector<24x24xf32>
    %55 = math.floor %54 : vector<24x24xf32>
    %c0_23 = arith.constant 0 : index
    %c0_24 = arith.constant 0 : index
    %56 = vector.load %arg2[%c0_23, %c0_24] : memref<1x24xf32, #tpu.memory_space<vmem>>, vector<1x24xf32>
    %57 = vector.shape_cast %56 : vector<1x24xf32> to vector<1x24xf32>
    %58 = vector.broadcast %57 : vector<1x24xf32> to vector<24x24xf32>
    %59 = arith.cmpf oeq, %49, %55 : vector<24x24xf32>
    %cst_25 = arith.constant -1.000000e+09 : f32
    %60 = vector.broadcast %cst_25 : f32 to vector<24x24xf32>
    %61 = arith.select %59, %58, %60 : vector<24x24xi1>, vector<24x24xf32>
    %c0_26 = arith.constant 0 : index
    %c0_27 = arith.constant 0 : index
    %c0_28 = arith.constant 0 : index
    %62 = vector.load %arg5[%c0_26, %c0_27, %c0_28] : memref<2x8x64xf32, #tpu.memory_space<vmem>>, vector<1x8x64xf32>
    %63 = vector.shape_cast %62 : vector<1x8x64xf32> to vector<8x64xf32>
    %64 = vector.extract_strided_slice %63 {offsets = [0, 0], sizes = [1, 32], strides = [1, 1]} : vector<8x64xf32> to vector<1x32xf32>
    %65 = vector.extract_strided_slice %63 {offsets = [1, 0], sizes = [1, 32], strides = [1, 1]} : vector<8x64xf32> to vector<1x32xf32>
    %66 = vector.extract_strided_slice %63 {offsets = [2, 0], sizes = [1, 32], strides = [1, 1]} : vector<8x64xf32> to vector<1x32xf32>
    %67 = vector.extract_strided_slice %63 {offsets = [3, 0], sizes = [1, 64], strides = [1, 1]} : vector<8x64xf32> to vector<1x64xf32>
    %68 = vector.extract_strided_slice %63 {offsets = [4, 0], sizes = [1, 32], strides = [1, 1]} : vector<8x64xf32> to vector<1x32xf32>
    %69 = vector.extract_strided_slice %63 {offsets = [5, 0], sizes = [1, 32], strides = [1, 1]} : vector<8x64xf32> to vector<1x32xf32>
    %70 = vector.extract_strided_slice %63 {offsets = [6, 0], sizes = [1, 32], strides = [1, 1]} : vector<8x64xf32> to vector<1x32xf32>
    %c0_29 = arith.constant 0 : index
    %c0_30 = arith.constant 0 : index
    %c0_31 = arith.constant 0 : index
    %c0_32 = arith.constant 0 : index
    %c0_33 = arith.constant 0 : index
    %71 = vector.load %arg6[%c0_29, %c0_30, %c0_31, %c0_32, %c0_33] : memref<2x4x3x40x8xf32, #tpu.memory_space<vmem>>, vector<1x1x1x40x8xf32>
    %72 = vector.shape_cast %71 : vector<1x1x1x40x8xf32> to vector<40x8xf32>
    %c0_34 = arith.constant 0 : index
    %c0_35 = arith.constant 0 : index
    %c1_36 = arith.constant 1 : index
    %c0_37 = arith.constant 0 : index
    %c0_38 = arith.constant 0 : index
    %73 = vector.load %arg6[%c0_34, %c0_35, %c1_36, %c0_37, %c0_38] : memref<2x4x3x40x8xf32, #tpu.memory_space<vmem>>, vector<1x1x1x40x8xf32>
    %74 = vector.shape_cast %73 : vector<1x1x1x40x8xf32> to vector<40x8xf32>
    %c0_39 = arith.constant 0 : index
    %c0_40 = arith.constant 0 : index
    %c2_41 = arith.constant 2 : index
    %c0_42 = arith.constant 0 : index
    %c0_43 = arith.constant 0 : index
    %75 = vector.load %arg6[%c0_39, %c0_40, %c2_41, %c0_42, %c0_43] : memref<2x4x3x40x8xf32, #tpu.memory_space<vmem>>, vector<1x1x1x40x8xf32>
    %76 = vector.shape_cast %75 : vector<1x1x1x40x8xf32> to vector<40x8xf32>
    %77 = vector.extract_strided_slice %72 {offsets = [0, 0], sizes = [32, 8], strides = [1, 1]} : vector<40x8xf32> to vector<32x8xf32>
    %cst_44 = arith.constant dense<0.000000e+00> : vector<24x8xf32>
    %78 = tpu.matmul %41, %77, %cst_44 {dimension_numbers = #tpu.dot_dimension_numbers<[1], [0], [0], [1], [0, 0, 1, 1], [], []>} : vector<24x32xf32>, vector<32x8xf32>, vector<24x8xf32> -> vector<24x8xf32>
    %79 = vector.extract_strided_slice %72 {offsets = [32, 0], sizes = [1, 8], strides = [1, 1]} : vector<40x8xf32> to vector<1x8xf32>
    %80 = vector.broadcast %79 : vector<1x8xf32> to vector<24x8xf32>
    %81 = arith.addf %78, %80 : vector<24x8xf32>
    %82 = vector.extract_strided_slice %74 {offsets = [0, 0], sizes = [32, 8], strides = [1, 1]} : vector<40x8xf32> to vector<32x8xf32>
    %cst_45 = arith.constant dense<0.000000e+00> : vector<24x8xf32>
    %83 = tpu.matmul %41, %82, %cst_45 {dimension_numbers = #tpu.dot_dimension_numbers<[1], [0], [0], [1], [0, 0, 1, 1], [], []>} : vector<24x32xf32>, vector<32x8xf32>, vector<24x8xf32> -> vector<24x8xf32>
    %84 = vector.extract_strided_slice %74 {offsets = [32, 0], sizes = [1, 8], strides = [1, 1]} : vector<40x8xf32> to vector<1x8xf32>
    %85 = vector.broadcast %84 : vector<1x8xf32> to vector<24x8xf32>
    %86 = arith.addf %83, %85 : vector<24x8xf32>
    %87 = vector.extract_strided_slice %76 {offsets = [0, 0], sizes = [32, 8], strides = [1, 1]} : vector<40x8xf32> to vector<32x8xf32>
    %cst_46 = arith.constant dense<0.000000e+00> : vector<24x8xf32>
    %88 = tpu.matmul %41, %87, %cst_46 {dimension_numbers = #tpu.dot_dimension_numbers<[1], [0], [0], [1], [0, 0, 1, 1], [], []>} : vector<24x32xf32>, vector<32x8xf32>, vector<24x8xf32> -> vector<24x8xf32>
    %89 = vector.extract_strided_slice %76 {offsets = [32, 0], sizes = [1, 8], strides = [1, 1]} : vector<40x8xf32> to vector<1x8xf32>
    %90 = vector.broadcast %89 : vector<1x8xf32> to vector<24x8xf32>
    %91 = arith.addf %88, %90 : vector<24x8xf32>
    %cst_47 = arith.constant dense<0.000000e+00> : vector<24x24xf32>
    %92 = tpu.matmul %81, %86, %cst_47 {dimension_numbers = #tpu.dot_dimension_numbers<[1], [1], [0], [0], [0, 0, 1, 0], [], []>} : vector<24x8xf32>, vector<24x8xf32>, vector<24x24xf32> -> vector<24x24xf32>
    %93 = arith.addf %92, %61 : vector<24x24xf32>
    %cst_48 = arith.constant dense<0xFF800000> : vector<24xf32>
    %94 = vector.multi_reduction <maximumf>, %93, %cst_48 [1] : vector<24x24xf32> to vector<24xf32>
    %95 = vector.shape_cast %94 : vector<24xf32> to vector<24x1xf32>
    %96 = vector.broadcast %95 : vector<24x1xf32> to vector<24x24xf32>
    %97 = arith.subf %93, %96 : vector<24x24xf32>
    %98 = math.exp %97 : vector<24x24xf32>
    %cst_49 = arith.constant dense<0.000000e+00> : vector<24xf32>
    %99 = vector.multi_reduction <add>, %98, %cst_49 [1] : vector<24x24xf32> to vector<24xf32>
    %100 = vector.shape_cast %99 : vector<24xf32> to vector<24x1xf32>
    %101 = tpu.reciprocal %100 {approx = true} : vector<24x1xf32> -> vector<24x1xf32>
    %102 = vector.broadcast %101 : vector<24x1xf32> to vector<24x24xf32>
    %103 = arith.mulf %98, %102 : vector<24x24xf32>
    %cst_50 = arith.constant dense<0.000000e+00> : vector<24x8xf32>
    %104 = tpu.matmul %103, %91, %cst_50 {dimension_numbers = #tpu.dot_dimension_numbers<[1], [0], [0], [1], [0, 0, 1, 1], [], []>} : vector<24x24xf32>, vector<24x8xf32>, vector<24x8xf32> -> vector<24x8xf32>
    %c0_51 = arith.constant 0 : index
    %c0_52 = arith.constant 0 : index
    %c0_53 = arith.constant 0 : index
    %c0_54 = arith.constant 0 : index
    %105 = vector.load %arg7[%c0_51, %c0_52, %c0_53, %c0_54] : memref<2x4x8x32xf32, #tpu.memory_space<vmem>>, vector<1x1x8x32xf32>
    %106 = vector.shape_cast %105 : vector<1x1x8x32xf32> to vector<8x32xf32>
    %cst_55 = arith.constant dense<0.000000e+00> : vector<24x32xf32>
    %107 = tpu.matmul %104, %106, %cst_55 {dimension_numbers = #tpu.dot_dimension_numbers<[1], [0], [0], [1], [0, 0, 1, 1], [], []>} : vector<24x8xf32>, vector<8x32xf32>, vector<24x32xf32> -> vector<24x32xf32>
    %c0_56 = arith.constant 0 : index
    %c1_57 = arith.constant 1 : index
    %c0_58 = arith.constant 0 : index
    %c0_59 = arith.constant 0 : index
    %c0_60 = arith.constant 0 : index
    %108 = vector.load %arg6[%c0_56, %c1_57, %c0_58, %c0_59, %c0_60] : memref<2x4x3x40x8xf32, #tpu.memory_space<vmem>>, vector<1x1x1x40x8xf32>
    %109 = vector.shape_cast %108 : vector<1x1x1x40x8xf32> to vector<40x8xf32>
    %c0_61 = arith.constant 0 : index
    %c1_62 = arith.constant 1 : index
    %c1_63 = arith.constant 1 : index
    %c0_64 = arith.constant 0 : index
    %c0_65 = arith.constant 0 : index
    %110 = vector.load %arg6[%c0_61, %c1_62, %c1_63, %c0_64, %c0_65] : memref<2x4x3x40x8xf32, #tpu.memory_space<vmem>>, vector<1x1x1x40x8xf32>
    %111 = vector.shape_cast %110 : vector<1x1x1x40x8xf32> to vector<40x8xf32>
    %c0_66 = arith.constant 0 : index
    %c1_67 = arith.constant 1 : index
    %c2_68 = arith.constant 2 : index
    %c0_69 = arith.constant 0 : index
    %c0_70 = arith.constant 0 : index
    %112 = vector.load %arg6[%c0_66, %c1_67, %c2_68, %c0_69, %c0_70] : memref<2x4x3x40x8xf32, #tpu.memory_space<vmem>>, vector<1x1x1x40x8xf32>
    %113 = vector.shape_cast %112 : vector<1x1x1x40x8xf32> to vector<40x8xf32>
    %114 = vector.extract_strided_slice %109 {offsets = [0, 0], sizes = [32, 8], strides = [1, 1]} : vector<40x8xf32> to vector<32x8xf32>
    %cst_71 = arith.constant dense<0.000000e+00> : vector<24x8xf32>
    %115 = tpu.matmul %41, %114, %cst_71 {dimension_numbers = #tpu.dot_dimension_numbers<[1], [0], [0], [1], [0, 0, 1, 1], [], []>} : vector<24x32xf32>, vector<32x8xf32>, vector<24x8xf32> -> vector<24x8xf32>
    %116 = vector.extract_strided_slice %109 {offsets = [32, 0], sizes = [1, 8], strides = [1, 1]} : vector<40x8xf32> to vector<1x8xf32>
    %117 = vector.broadcast %116 : vector<1x8xf32> to vector<24x8xf32>
    %118 = arith.addf %115, %117 : vector<24x8xf32>
    %119 = vector.extract_strided_slice %111 {offsets = [0, 0], sizes = [32, 8], strides = [1, 1]} : vector<40x8xf32> to vector<32x8xf32>
    %cst_72 = arith.constant dense<0.000000e+00> : vector<24x8xf32>
    %120 = tpu.matmul %41, %119, %cst_72 {dimension_numbers = #tpu.dot_dimension_numbers<[1], [0], [0], [1], [0, 0, 1, 1], [], []>} : vector<24x32xf32>, vector<32x8xf32>, vector<24x8xf32> -> vector<24x8xf32>
    %121 = vector.extract_strided_slice %111 {offsets = [32, 0], sizes = [1, 8], strides = [1, 1]} : vector<40x8xf32> to vector<1x8xf32>
    %122 = vector.broadcast %121 : vector<1x8xf32> to vector<24x8xf32>
    %123 = arith.addf %120, %122 : vector<24x8xf32>
    %124 = vector.extract_strided_slice %113 {offsets = [0, 0], sizes = [32, 8], strides = [1, 1]} : vector<40x8xf32> to vector<32x8xf32>
    %cst_73 = arith.constant dense<0.000000e+00> : vector<24x8xf32>
    %125 = tpu.matmul %41, %124, %cst_73 {dimension_numbers = #tpu.dot_dimension_numbers<[1], [0], [0], [1], [0, 0, 1, 1], [], []>} : vector<24x32xf32>, vector<32x8xf32>, vector<24x8xf32> -> vector<24x8xf32>
    %126 = vector.extract_strided_slice %113 {offsets = [32, 0], sizes = [1, 8], strides = [1, 1]} : vector<40x8xf32> to vector<1x8xf32>
    %127 = vector.broadcast %126 : vector<1x8xf32> to vector<24x8xf32>
    %128 = arith.addf %125, %127 : vector<24x8xf32>
    %cst_74 = arith.constant dense<0.000000e+00> : vector<24x24xf32>
    %129 = tpu.matmul %118, %123, %cst_74 {dimension_numbers = #tpu.dot_dimension_numbers<[1], [1], [0], [0], [0, 0, 1, 0], [], []>} : vector<24x8xf32>, vector<24x8xf32>, vector<24x24xf32> -> vector<24x24xf32>
    %130 = arith.addf %129, %61 : vector<24x24xf32>
    %cst_75 = arith.constant dense<0xFF800000> : vector<24xf32>
    %131 = vector.multi_reduction <maximumf>, %130, %cst_75 [1] : vector<24x24xf32> to vector<24xf32>
    %132 = vector.shape_cast %131 : vector<24xf32> to vector<24x1xf32>
    %133 = vector.broadcast %132 : vector<24x1xf32> to vector<24x24xf32>
    %134 = arith.subf %130, %133 : vector<24x24xf32>
    %135 = math.exp %134 : vector<24x24xf32>
    %cst_76 = arith.constant dense<0.000000e+00> : vector<24xf32>
    %136 = vector.multi_reduction <add>, %135, %cst_76 [1] : vector<24x24xf32> to vector<24xf32>
    %137 = vector.shape_cast %136 : vector<24xf32> to vector<24x1xf32>
    %138 = tpu.reciprocal %137 {approx = true} : vector<24x1xf32> -> vector<24x1xf32>
    %139 = vector.broadcast %138 : vector<24x1xf32> to vector<24x24xf32>
    %140 = arith.mulf %135, %139 : vector<24x24xf32>
    %cst_77 = arith.constant dense<0.000000e+00> : vector<24x8xf32>
    %141 = tpu.matmul %140, %128, %cst_77 {dimension_numbers = #tpu.dot_dimension_numbers<[1], [0], [0], [1], [0, 0, 1, 1], [], []>} : vector<24x24xf32>, vector<24x8xf32>, vector<24x8xf32> -> vector<24x8xf32>
    %c0_78 = arith.constant 0 : index
    %c1_79 = arith.constant 1 : index
    %c0_80 = arith.constant 0 : index
    %c0_81 = arith.constant 0 : index
    %142 = vector.load %arg7[%c0_78, %c1_79, %c0_80, %c0_81] : memref<2x4x8x32xf32, #tpu.memory_space<vmem>>, vector<1x1x8x32xf32>
    %143 = vector.shape_cast %142 : vector<1x1x8x32xf32> to vector<8x32xf32>
    %cst_82 = arith.constant dense<0.000000e+00> : vector<24x32xf32>
    %144 = tpu.matmul %141, %143, %cst_82 {dimension_numbers = #tpu.dot_dimension_numbers<[1], [0], [0], [1], [0, 0, 1, 1], [], []>} : vector<24x8xf32>, vector<8x32xf32>, vector<24x32xf32> -> vector<24x32xf32>
    %145 = arith.addf %107, %144 : vector<24x32xf32>
    %c0_83 = arith.constant 0 : index
    %c2_84 = arith.constant 2 : index
    %c0_85 = arith.constant 0 : index
    %c0_86 = arith.constant 0 : index
    %c0_87 = arith.constant 0 : index
    %146 = vector.load %arg6[%c0_83, %c2_84, %c0_85, %c0_86, %c0_87] : memref<2x4x3x40x8xf32, #tpu.memory_space<vmem>>, vector<1x1x1x40x8xf32>
    %147 = vector.shape_cast %146 : vector<1x1x1x40x8xf32> to vector<40x8xf32>
    %c0_88 = arith.constant 0 : index
    %c2_89 = arith.constant 2 : index
    %c1_90 = arith.constant 1 : index
    %c0_91 = arith.constant 0 : index
    %c0_92 = arith.constant 0 : index
    %148 = vector.load %arg6[%c0_88, %c2_89, %c1_90, %c0_91, %c0_92] : memref<2x4x3x40x8xf32, #tpu.memory_space<vmem>>, vector<1x1x1x40x8xf32>
    %149 = vector.shape_cast %148 : vector<1x1x1x40x8xf32> to vector<40x8xf32>
    %c0_93 = arith.constant 0 : index
    %c2_94 = arith.constant 2 : index
    %c2_95 = arith.constant 2 : index
    %c0_96 = arith.constant 0 : index
    %c0_97 = arith.constant 0 : index
    %150 = vector.load %arg6[%c0_93, %c2_94, %c2_95, %c0_96, %c0_97] : memref<2x4x3x40x8xf32, #tpu.memory_space<vmem>>, vector<1x1x1x40x8xf32>
    %151 = vector.shape_cast %150 : vector<1x1x1x40x8xf32> to vector<40x8xf32>
    %152 = vector.extract_strided_slice %147 {offsets = [0, 0], sizes = [32, 8], strides = [1, 1]} : vector<40x8xf32> to vector<32x8xf32>
    %cst_98 = arith.constant dense<0.000000e+00> : vector<24x8xf32>
    %153 = tpu.matmul %41, %152, %cst_98 {dimension_numbers = #tpu.dot_dimension_numbers<[1], [0], [0], [1], [0, 0, 1, 1], [], []>} : vector<24x32xf32>, vector<32x8xf32>, vector<24x8xf32> -> vector<24x8xf32>
    %154 = vector.extract_strided_slice %147 {offsets = [32, 0], sizes = [1, 8], strides = [1, 1]} : vector<40x8xf32> to vector<1x8xf32>
    %155 = vector.broadcast %154 : vector<1x8xf32> to vector<24x8xf32>
    %156 = arith.addf %153, %155 : vector<24x8xf32>
    %157 = vector.extract_strided_slice %149 {offsets = [0, 0], sizes = [32, 8], strides = [1, 1]} : vector<40x8xf32> to vector<32x8xf32>
    %cst_99 = arith.constant dense<0.000000e+00> : vector<24x8xf32>
    %158 = tpu.matmul %41, %157, %cst_99 {dimension_numbers = #tpu.dot_dimension_numbers<[1], [0], [0], [1], [0, 0, 1, 1], [], []>} : vector<24x32xf32>, vector<32x8xf32>, vector<24x8xf32> -> vector<24x8xf32>
    %159 = vector.extract_strided_slice %149 {offsets = [32, 0], sizes = [1, 8], strides = [1, 1]} : vector<40x8xf32> to vector<1x8xf32>
    %160 = vector.broadcast %159 : vector<1x8xf32> to vector<24x8xf32>
    %161 = arith.addf %158, %160 : vector<24x8xf32>
    %162 = vector.extract_strided_slice %151 {offsets = [0, 0], sizes = [32, 8], strides = [1, 1]} : vector<40x8xf32> to vector<32x8xf32>
    %cst_100 = arith.constant dense<0.000000e+00> : vector<24x8xf32>
    %163 = tpu.matmul %41, %162, %cst_100 {dimension_numbers = #tpu.dot_dimension_numbers<[1], [0], [0], [1], [0, 0, 1, 1], [], []>} : vector<24x32xf32>, vector<32x8xf32>, vector<24x8xf32> -> vector<24x8xf32>
    %164 = vector.extract_strided_slice %151 {offsets = [32, 0], sizes = [1, 8], strides = [1, 1]} : vector<40x8xf32> to vector<1x8xf32>
    %165 = vector.broadcast %164 : vector<1x8xf32> to vector<24x8xf32>
    %166 = arith.addf %163, %165 : vector<24x8xf32>
    %cst_101 = arith.constant dense<0.000000e+00> : vector<24x24xf32>
    %167 = tpu.matmul %156, %161, %cst_101 {dimension_numbers = #tpu.dot_dimension_numbers<[1], [1], [0], [0], [0, 0, 1, 0], [], []>} : vector<24x8xf32>, vector<24x8xf32>, vector<24x24xf32> -> vector<24x24xf32>
    %168 = arith.addf %167, %61 : vector<24x24xf32>
    %cst_102 = arith.constant dense<0xFF800000> : vector<24xf32>
    %169 = vector.multi_reduction <maximumf>, %168, %cst_102 [1] : vector<24x24xf32> to vector<24xf32>
    %170 = vector.shape_cast %169 : vector<24xf32> to vector<24x1xf32>
    %171 = vector.broadcast %170 : vector<24x1xf32> to vector<24x24xf32>
    %172 = arith.subf %168, %171 : vector<24x24xf32>
    %173 = math.exp %172 : vector<24x24xf32>
    %cst_103 = arith.constant dense<0.000000e+00> : vector<24xf32>
    %174 = vector.multi_reduction <add>, %173, %cst_103 [1] : vector<24x24xf32> to vector<24xf32>
    %175 = vector.shape_cast %174 : vector<24xf32> to vector<24x1xf32>
    %176 = tpu.reciprocal %175 {approx = true} : vector<24x1xf32> -> vector<24x1xf32>
    %177 = vector.broadcast %176 : vector<24x1xf32> to vector<24x24xf32>
    %178 = arith.mulf %173, %177 : vector<24x24xf32>
    %cst_104 = arith.constant dense<0.000000e+00> : vector<24x8xf32>
    %179 = tpu.matmul %178, %166, %cst_104 {dimension_numbers = #tpu.dot_dimension_numbers<[1], [0], [0], [1], [0, 0, 1, 1], [], []>} : vector<24x24xf32>, vector<24x8xf32>, vector<24x8xf32> -> vector<24x8xf32>
    %c0_105 = arith.constant 0 : index
    %c2_106 = arith.constant 2 : index
    %c0_107 = arith.constant 0 : index
    %c0_108 = arith.constant 0 : index
    %180 = vector.load %arg7[%c0_105, %c2_106, %c0_107, %c0_108] : memref<2x4x8x32xf32, #tpu.memory_space<vmem>>, vector<1x1x8x32xf32>
    %181 = vector.shape_cast %180 : vector<1x1x8x32xf32> to vector<8x32xf32>
    %cst_109 = arith.constant dense<0.000000e+00> : vector<24x32xf32>
    %182 = tpu.matmul %179, %181, %cst_109 {dimension_numbers = #tpu.dot_dimension_numbers<[1], [0], [0], [1], [0, 0, 1, 1], [], []>} : vector<24x8xf32>, vector<8x32xf32>, vector<24x32xf32> -> vector<24x32xf32>
    %183 = arith.addf %145, %182 : vector<24x32xf32>
    %c0_110 = arith.constant 0 : index
    %c3_111 = arith.constant 3 : index
    %c0_112 = arith.constant 0 : index
    %c0_113 = arith.constant 0 : index
    %c0_114 = arith.constant 0 : index
    %184 = vector.load %arg6[%c0_110, %c3_111, %c0_112, %c0_113, %c0_114] : memref<2x4x3x40x8xf32, #tpu.memory_space<vmem>>, vector<1x1x1x40x8xf32>
    %185 = vector.shape_cast %184 : vector<1x1x1x40x8xf32> to vector<40x8xf32>
    %c0_115 = arith.constant 0 : index
    %c3_116 = arith.constant 3 : index
    %c1_117 = arith.constant 1 : index
    %c0_118 = arith.constant 0 : index
    %c0_119 = arith.constant 0 : index
    %186 = vector.load %arg6[%c0_115, %c3_116, %c1_117, %c0_118, %c0_119] : memref<2x4x3x40x8xf32, #tpu.memory_space<vmem>>, vector<1x1x1x40x8xf32>
    %187 = vector.shape_cast %186 : vector<1x1x1x40x8xf32> to vector<40x8xf32>
    %c0_120 = arith.constant 0 : index
    %c3_121 = arith.constant 3 : index
    %c2_122 = arith.constant 2 : index
    %c0_123 = arith.constant 0 : index
    %c0_124 = arith.constant 0 : index
    %188 = vector.load %arg6[%c0_120, %c3_121, %c2_122, %c0_123, %c0_124] : memref<2x4x3x40x8xf32, #tpu.memory_space<vmem>>, vector<1x1x1x40x8xf32>
    %189 = vector.shape_cast %188 : vector<1x1x1x40x8xf32> to vector<40x8xf32>
    %190 = vector.extract_strided_slice %185 {offsets = [0, 0], sizes = [32, 8], strides = [1, 1]} : vector<40x8xf32> to vector<32x8xf32>
    %cst_125 = arith.constant dense<0.000000e+00> : vector<24x8xf32>
    %191 = tpu.matmul %41, %190, %cst_125 {dimension_numbers = #tpu.dot_dimension_numbers<[1], [0], [0], [1], [0, 0, 1, 1], [], []>} : vector<24x32xf32>, vector<32x8xf32>, vector<24x8xf32> -> vector<24x8xf32>
    %192 = vector.extract_strided_slice %185 {offsets = [32, 0], sizes = [1, 8], strides = [1, 1]} : vector<40x8xf32> to vector<1x8xf32>
    %193 = vector.broadcast %192 : vector<1x8xf32> to vector<24x8xf32>
    %194 = arith.addf %191, %193 : vector<24x8xf32>
    %195 = vector.extract_strided_slice %187 {offsets = [0, 0], sizes = [32, 8], strides = [1, 1]} : vector<40x8xf32> to vector<32x8xf32>
    %cst_126 = arith.constant dense<0.000000e+00> : vector<24x8xf32>
    %196 = tpu.matmul %41, %195, %cst_126 {dimension_numbers = #tpu.dot_dimension_numbers<[1], [0], [0], [1], [0, 0, 1, 1], [], []>} : vector<24x32xf32>, vector<32x8xf32>, vector<24x8xf32> -> vector<24x8xf32>
    %197 = vector.extract_strided_slice %187 {offsets = [32, 0], sizes = [1, 8], strides = [1, 1]} : vector<40x8xf32> to vector<1x8xf32>
    %198 = vector.broadcast %197 : vector<1x8xf32> to vector<24x8xf32>
    %199 = arith.addf %196, %198 : vector<24x8xf32>
    %200 = vector.extract_strided_slice %189 {offsets = [0, 0], sizes = [32, 8], strides = [1, 1]} : vector<40x8xf32> to vector<32x8xf32>
    %cst_127 = arith.constant dense<0.000000e+00> : vector<24x8xf32>
    %201 = tpu.matmul %41, %200, %cst_127 {dimension_numbers = #tpu.dot_dimension_numbers<[1], [0], [0], [1], [0, 0, 1, 1], [], []>} : vector<24x32xf32>, vector<32x8xf32>, vector<24x8xf32> -> vector<24x8xf32>
    %202 = vector.extract_strided_slice %189 {offsets = [32, 0], sizes = [1, 8], strides = [1, 1]} : vector<40x8xf32> to vector<1x8xf32>
    %203 = vector.broadcast %202 : vector<1x8xf32> to vector<24x8xf32>
    %204 = arith.addf %201, %203 : vector<24x8xf32>
    %cst_128 = arith.constant dense<0.000000e+00> : vector<24x24xf32>
    %205 = tpu.matmul %194, %199, %cst_128 {dimension_numbers = #tpu.dot_dimension_numbers<[1], [1], [0], [0], [0, 0, 1, 0], [], []>} : vector<24x8xf32>, vector<24x8xf32>, vector<24x24xf32> -> vector<24x24xf32>
    %206 = arith.addf %205, %61 : vector<24x24xf32>
    %cst_129 = arith.constant dense<0xFF800000> : vector<24xf32>
    %207 = vector.multi_reduction <maximumf>, %206, %cst_129 [1] : vector<24x24xf32> to vector<24xf32>
    %208 = vector.shape_cast %207 : vector<24xf32> to vector<24x1xf32>
    %209 = vector.broadcast %208 : vector<24x1xf32> to vector<24x24xf32>
    %210 = arith.subf %206, %209 : vector<24x24xf32>
    %211 = math.exp %210 : vector<24x24xf32>
    %cst_130 = arith.constant dense<0.000000e+00> : vector<24xf32>
    %212 = vector.multi_reduction <add>, %211, %cst_130 [1] : vector<24x24xf32> to vector<24xf32>
    %213 = vector.shape_cast %212 : vector<24xf32> to vector<24x1xf32>
    %214 = tpu.reciprocal %213 {approx = true} : vector<24x1xf32> -> vector<24x1xf32>
    %215 = vector.broadcast %214 : vector<24x1xf32> to vector<24x24xf32>
    %216 = arith.mulf %211, %215 : vector<24x24xf32>
    %cst_131 = arith.constant dense<0.000000e+00> : vector<24x8xf32>
    %217 = tpu.matmul %216, %204, %cst_131 {dimension_numbers = #tpu.dot_dimension_numbers<[1], [0], [0], [1], [0, 0, 1, 1], [], []>} : vector<24x24xf32>, vector<24x8xf32>, vector<24x8xf32> -> vector<24x8xf32>
    %c0_132 = arith.constant 0 : index
    %c3_133 = arith.constant 3 : index
    %c0_134 = arith.constant 0 : index
    %c0_135 = arith.constant 0 : index
    %218 = vector.load %arg7[%c0_132, %c3_133, %c0_134, %c0_135] : memref<2x4x8x32xf32, #tpu.memory_space<vmem>>, vector<1x1x8x32xf32>
    %219 = vector.shape_cast %218 : vector<1x1x8x32xf32> to vector<8x32xf32>
    %cst_136 = arith.constant dense<0.000000e+00> : vector<24x32xf32>
    %220 = tpu.matmul %217, %219, %cst_136 {dimension_numbers = #tpu.dot_dimension_numbers<[1], [0], [0], [1], [0, 0, 1, 1], [], []>} : vector<24x8xf32>, vector<8x32xf32>, vector<24x32xf32> -> vector<24x32xf32>
    %221 = arith.addf %183, %220 : vector<24x32xf32>
    %222 = vector.broadcast %64 : vector<1x32xf32> to vector<24x32xf32>
    %223 = arith.addf %221, %222 : vector<24x32xf32>
    %224 = arith.addf %223, %41 : vector<24x32xf32>
    %cst_137 = arith.constant dense<0.000000e+00> : vector<24xf32>
    %225 = vector.multi_reduction <add>, %224, %cst_137 [1] : vector<24x32xf32> to vector<24xf32>
    %226 = vector.shape_cast %225 : vector<24xf32> to vector<24x1xf32>
    %cst_138 = arith.constant 3.200000e+01 : f32
    %227 = vector.broadcast %cst_138 : f32 to vector<24x1xf32>
    %228 = arith.divf %226, %227 : vector<24x1xf32>
    %229 = vector.broadcast %228 : vector<24x1xf32> to vector<24x32xf32>
    %230 = arith.subf %224, %229 : vector<24x32xf32>
    %231 = arith.mulf %230, %230 : vector<24x32xf32>
    %cst_139 = arith.constant dense<0.000000e+00> : vector<24xf32>
    %232 = vector.multi_reduction <add>, %231, %cst_139 [1] : vector<24x32xf32> to vector<24xf32>
    %233 = vector.shape_cast %232 : vector<24xf32> to vector<24x1xf32>
    %cst_140 = arith.constant 3.200000e+01 : f32
    %234 = vector.broadcast %cst_140 : f32 to vector<24x1xf32>
    %235 = arith.divf %233, %234 : vector<24x1xf32>
    %236 = vector.broadcast %228 : vector<24x1xf32> to vector<24x32xf32>
    %237 = arith.subf %224, %236 : vector<24x32xf32>
    %cst_141 = arith.constant 9.99999996E-13 : f32
    %238 = vector.broadcast %cst_141 : f32 to vector<24x1xf32>
    %239 = arith.addf %235, %238 : vector<24x1xf32>
    %240 = math.rsqrt %239 : vector<24x1xf32>
    %241 = vector.broadcast %240 : vector<24x1xf32> to vector<24x32xf32>
    %242 = arith.mulf %237, %241 : vector<24x32xf32>
    %243 = vector.broadcast %65 : vector<1x32xf32> to vector<24x32xf32>
    %244 = arith.mulf %242, %243 : vector<24x32xf32>
    %245 = vector.broadcast %66 : vector<1x32xf32> to vector<24x32xf32>
    %246 = arith.addf %244, %245 : vector<24x32xf32>
    %c0_142 = arith.constant 0 : index
    %c0_143 = arith.constant 0 : index
    %c0_144 = arith.constant 0 : index
    %247 = vector.load %arg8[%c0_142, %c0_143, %c0_144] : memref<2x96x64xf32, #tpu.memory_space<vmem>>, vector<1x32x64xf32>
    %248 = vector.shape_cast %247 : vector<1x32x64xf32> to vector<32x64xf32>
    %c0_145 = arith.constant 0 : index
    %c32 = arith.constant 32 : index
    %c0_146 = arith.constant 0 : index
    %249 = vector.load %arg8[%c0_145, %c32, %c0_146] : memref<2x96x64xf32, #tpu.memory_space<vmem>>, vector<1x64x32xf32>
    %250 = vector.shape_cast %249 : vector<1x64x32xf32> to vector<64x32xf32>
    %cst_147 = arith.constant dense<0.000000e+00> : vector<24x64xf32>
    %251 = tpu.matmul %246, %248, %cst_147 {dimension_numbers = #tpu.dot_dimension_numbers<[1], [0], [0], [1], [0, 0, 1, 1], [], []>} : vector<24x32xf32>, vector<32x64xf32>, vector<24x64xf32> -> vector<24x64xf32>
    %252 = vector.broadcast %67 : vector<1x64xf32> to vector<24x64xf32>
    %253 = arith.addf %251, %252 : vector<24x64xf32>
    %cst_148 = arith.constant 5.000000e-01 : f32
    %254 = vector.broadcast %cst_148 : f32 to vector<24x64xf32>
    %255 = arith.mulf %254, %253 : vector<24x64xf32>
    %cst_149 = arith.constant 4.471500e-02 : f32
    %256 = vector.broadcast %cst_149 : f32 to vector<24x64xf32>
    %257 = arith.mulf %256, %253 : vector<24x64xf32>
    %258 = arith.mulf %257, %253 : vector<24x64xf32>
    %259 = arith.mulf %258, %253 : vector<24x64xf32>
    %260 = arith.addf %253, %259 : vector<24x64xf32>
    %cst_150 = arith.constant 0.797884583 : f32
    %261 = vector.broadcast %cst_150 : f32 to vector<24x64xf32>
    %262 = arith.mulf %261, %260 : vector<24x64xf32>
    %263 = math.tanh %262 : vector<24x64xf32>
    %cst_151 = arith.constant 1.000000e+00 : f32
    %264 = vector.broadcast %cst_151 : f32 to vector<24x64xf32>
    %265 = arith.addf %264, %263 : vector<24x64xf32>
    %266 = arith.mulf %255, %265 : vector<24x64xf32>
    %cst_152 = arith.constant dense<0.000000e+00> : vector<24x32xf32>
    %267 = tpu.matmul %266, %250, %cst_152 {dimension_numbers = #tpu.dot_dimension_numbers<[1], [0], [0], [1], [0, 0, 1, 1], [], []>} : vector<24x64xf32>, vector<64x32xf32>, vector<24x32xf32> -> vector<24x32xf32>
    %268 = vector.broadcast %68 : vector<1x32xf32> to vector<24x32xf32>
    %269 = arith.addf %267, %268 : vector<24x32xf32>
    %270 = arith.addf %269, %246 : vector<24x32xf32>
    %cst_153 = arith.constant dense<0.000000e+00> : vector<24xf32>
    %271 = vector.multi_reduction <add>, %270, %cst_153 [1] : vector<24x32xf32> to vector<24xf32>
    %272 = vector.shape_cast %271 : vector<24xf32> to vector<24x1xf32>
    %cst_154 = arith.constant 3.200000e+01 : f32
    %273 = vector.broadcast %cst_154 : f32 to vector<24x1xf32>
    %274 = arith.divf %272, %273 : vector<24x1xf32>
    %275 = vector.broadcast %274 : vector<24x1xf32> to vector<24x32xf32>
    %276 = arith.subf %270, %275 : vector<24x32xf32>
    %277 = arith.mulf %276, %276 : vector<24x32xf32>
    %cst_155 = arith.constant dense<0.000000e+00> : vector<24xf32>
    %278 = vector.multi_reduction <add>, %277, %cst_155 [1] : vector<24x32xf32> to vector<24xf32>
    %279 = vector.shape_cast %278 : vector<24xf32> to vector<24x1xf32>
    %cst_156 = arith.constant 3.200000e+01 : f32
    %280 = vector.broadcast %cst_156 : f32 to vector<24x1xf32>
    %281 = arith.divf %279, %280 : vector<24x1xf32>
    %282 = vector.broadcast %274 : vector<24x1xf32> to vector<24x32xf32>
    %283 = arith.subf %270, %282 : vector<24x32xf32>
    %cst_157 = arith.constant 9.99999996E-13 : f32
    %284 = vector.broadcast %cst_157 : f32 to vector<24x1xf32>
    %285 = arith.addf %281, %284 : vector<24x1xf32>
    %286 = math.rsqrt %285 : vector<24x1xf32>
    %287 = vector.broadcast %286 : vector<24x1xf32> to vector<24x32xf32>
    %288 = arith.mulf %283, %287 : vector<24x32xf32>
    %289 = vector.broadcast %69 : vector<1x32xf32> to vector<24x32xf32>
    %290 = arith.mulf %288, %289 : vector<24x32xf32>
    %291 = vector.broadcast %70 : vector<1x32xf32> to vector<24x32xf32>
    %292 = arith.addf %290, %291 : vector<24x32xf32>
    %c1_158 = arith.constant 1 : index
    %c0_159 = arith.constant 0 : index
    %c0_160 = arith.constant 0 : index
    %293 = vector.load %arg5[%c1_158, %c0_159, %c0_160] : memref<2x8x64xf32, #tpu.memory_space<vmem>>, vector<1x8x64xf32>
    %294 = vector.shape_cast %293 : vector<1x8x64xf32> to vector<8x64xf32>
    %295 = vector.extract_strided_slice %294 {offsets = [0, 0], sizes = [1, 32], strides = [1, 1]} : vector<8x64xf32> to vector<1x32xf32>
    %296 = vector.extract_strided_slice %294 {offsets = [1, 0], sizes = [1, 32], strides = [1, 1]} : vector<8x64xf32> to vector<1x32xf32>
    %297 = vector.extract_strided_slice %294 {offsets = [2, 0], sizes = [1, 32], strides = [1, 1]} : vector<8x64xf32> to vector<1x32xf32>
    %298 = vector.extract_strided_slice %294 {offsets = [3, 0], sizes = [1, 64], strides = [1, 1]} : vector<8x64xf32> to vector<1x64xf32>
    %299 = vector.extract_strided_slice %294 {offsets = [4, 0], sizes = [1, 32], strides = [1, 1]} : vector<8x64xf32> to vector<1x32xf32>
    %300 = vector.extract_strided_slice %294 {offsets = [5, 0], sizes = [1, 32], strides = [1, 1]} : vector<8x64xf32> to vector<1x32xf32>
    %301 = vector.extract_strided_slice %294 {offsets = [6, 0], sizes = [1, 32], strides = [1, 1]} : vector<8x64xf32> to vector<1x32xf32>
    %c1_161 = arith.constant 1 : index
    %c0_162 = arith.constant 0 : index
    %c0_163 = arith.constant 0 : index
    %c0_164 = arith.constant 0 : index
    %c0_165 = arith.constant 0 : index
    %302 = vector.load %arg6[%c1_161, %c0_162, %c0_163, %c0_164, %c0_165] : memref<2x4x3x40x8xf32, #tpu.memory_space<vmem>>, vector<1x1x1x40x8xf32>
    %303 = vector.shape_cast %302 : vector<1x1x1x40x8xf32> to vector<40x8xf32>
    %c1_166 = arith.constant 1 : index
    %c0_167 = arith.constant 0 : index
    %c1_168 = arith.constant 1 : index
    %c0_169 = arith.constant 0 : index
    %c0_170 = arith.constant 0 : index
    %304 = vector.load %arg6[%c1_166, %c0_167, %c1_168, %c0_169, %c0_170] : memref<2x4x3x40x8xf32, #tpu.memory_space<vmem>>, vector<1x1x1x40x8xf32>
    %305 = vector.shape_cast %304 : vector<1x1x1x40x8xf32> to vector<40x8xf32>
    %c1_171 = arith.constant 1 : index
    %c0_172 = arith.constant 0 : index
    %c2_173 = arith.constant 2 : index
    %c0_174 = arith.constant 0 : index
    %c0_175 = arith.constant 0 : index
    %306 = vector.load %arg6[%c1_171, %c0_172, %c2_173, %c0_174, %c0_175] : memref<2x4x3x40x8xf32, #tpu.memory_space<vmem>>, vector<1x1x1x40x8xf32>
    %307 = vector.shape_cast %306 : vector<1x1x1x40x8xf32> to vector<40x8xf32>
    %308 = vector.extract_strided_slice %303 {offsets = [0, 0], sizes = [32, 8], strides = [1, 1]} : vector<40x8xf32> to vector<32x8xf32>
    %cst_176 = arith.constant dense<0.000000e+00> : vector<24x8xf32>
    %309 = tpu.matmul %292, %308, %cst_176 {dimension_numbers = #tpu.dot_dimension_numbers<[1], [0], [0], [1], [0, 0, 1, 1], [], []>} : vector<24x32xf32>, vector<32x8xf32>, vector<24x8xf32> -> vector<24x8xf32>
    %310 = vector.extract_strided_slice %303 {offsets = [32, 0], sizes = [1, 8], strides = [1, 1]} : vector<40x8xf32> to vector<1x8xf32>
    %311 = vector.broadcast %310 : vector<1x8xf32> to vector<24x8xf32>
    %312 = arith.addf %309, %311 : vector<24x8xf32>
    %313 = vector.extract_strided_slice %305 {offsets = [0, 0], sizes = [32, 8], strides = [1, 1]} : vector<40x8xf32> to vector<32x8xf32>
    %cst_177 = arith.constant dense<0.000000e+00> : vector<24x8xf32>
    %314 = tpu.matmul %292, %313, %cst_177 {dimension_numbers = #tpu.dot_dimension_numbers<[1], [0], [0], [1], [0, 0, 1, 1], [], []>} : vector<24x32xf32>, vector<32x8xf32>, vector<24x8xf32> -> vector<24x8xf32>
    %315 = vector.extract_strided_slice %305 {offsets = [32, 0], sizes = [1, 8], strides = [1, 1]} : vector<40x8xf32> to vector<1x8xf32>
    %316 = vector.broadcast %315 : vector<1x8xf32> to vector<24x8xf32>
    %317 = arith.addf %314, %316 : vector<24x8xf32>
    %318 = vector.extract_strided_slice %307 {offsets = [0, 0], sizes = [32, 8], strides = [1, 1]} : vector<40x8xf32> to vector<32x8xf32>
    %cst_178 = arith.constant dense<0.000000e+00> : vector<24x8xf32>
    %319 = tpu.matmul %292, %318, %cst_178 {dimension_numbers = #tpu.dot_dimension_numbers<[1], [0], [0], [1], [0, 0, 1, 1], [], []>} : vector<24x32xf32>, vector<32x8xf32>, vector<24x8xf32> -> vector<24x8xf32>
    %320 = vector.extract_strided_slice %307 {offsets = [32, 0], sizes = [1, 8], strides = [1, 1]} : vector<40x8xf32> to vector<1x8xf32>
    %321 = vector.broadcast %320 : vector<1x8xf32> to vector<24x8xf32>
    %322 = arith.addf %319, %321 : vector<24x8xf32>
    %cst_179 = arith.constant dense<0.000000e+00> : vector<24x24xf32>
    %323 = tpu.matmul %312, %317, %cst_179 {dimension_numbers = #tpu.dot_dimension_numbers<[1], [1], [0], [0], [0, 0, 1, 0], [], []>} : vector<24x8xf32>, vector<24x8xf32>, vector<24x24xf32> -> vector<24x24xf32>
    %324 = arith.addf %323, %61 : vector<24x24xf32>
    %cst_180 = arith.constant dense<0xFF800000> : vector<24xf32>
    %325 = vector.multi_reduction <maximumf>, %324, %cst_180 [1] : vector<24x24xf32> to vector<24xf32>
    %326 = vector.shape_cast %325 : vector<24xf32> to vector<24x1xf32>
    %327 = vector.broadcast %326 : vector<24x1xf32> to vector<24x24xf32>
    %328 = arith.subf %324, %327 : vector<24x24xf32>
    %329 = math.exp %328 : vector<24x24xf32>
    %cst_181 = arith.constant dense<0.000000e+00> : vector<24xf32>
    %330 = vector.multi_reduction <add>, %329, %cst_181 [1] : vector<24x24xf32> to vector<24xf32>
    %331 = vector.shape_cast %330 : vector<24xf32> to vector<24x1xf32>
    %332 = tpu.reciprocal %331 {approx = true} : vector<24x1xf32> -> vector<24x1xf32>
    %333 = vector.broadcast %332 : vector<24x1xf32> to vector<24x24xf32>
    %334 = arith.mulf %329, %333 : vector<24x24xf32>
    %cst_182 = arith.constant dense<0.000000e+00> : vector<24x8xf32>
    %335 = tpu.matmul %334, %322, %cst_182 {dimension_numbers = #tpu.dot_dimension_numbers<[1], [0], [0], [1], [0, 0, 1, 1], [], []>} : vector<24x24xf32>, vector<24x8xf32>, vector<24x8xf32> -> vector<24x8xf32>
    %c1_183 = arith.constant 1 : index
    %c0_184 = arith.constant 0 : index
    %c0_185 = arith.constant 0 : index
    %c0_186 = arith.constant 0 : index
    %336 = vector.load %arg7[%c1_183, %c0_184, %c0_185, %c0_186] : memref<2x4x8x32xf32, #tpu.memory_space<vmem>>, vector<1x1x8x32xf32>
    %337 = vector.shape_cast %336 : vector<1x1x8x32xf32> to vector<8x32xf32>
    %cst_187 = arith.constant dense<0.000000e+00> : vector<24x32xf32>
    %338 = tpu.matmul %335, %337, %cst_187 {dimension_numbers = #tpu.dot_dimension_numbers<[1], [0], [0], [1], [0, 0, 1, 1], [], []>} : vector<24x8xf32>, vector<8x32xf32>, vector<24x32xf32> -> vector<24x32xf32>
    %c1_188 = arith.constant 1 : index
    %c1_189 = arith.constant 1 : index
    %c0_190 = arith.constant 0 : index
    %c0_191 = arith.constant 0 : index
    %c0_192 = arith.constant 0 : index
    %339 = vector.load %arg6[%c1_188, %c1_189, %c0_190, %c0_191, %c0_192] : memref<2x4x3x40x8xf32, #tpu.memory_space<vmem>>, vector<1x1x1x40x8xf32>
    %340 = vector.shape_cast %339 : vector<1x1x1x40x8xf32> to vector<40x8xf32>
    %c1_193 = arith.constant 1 : index
    %c1_194 = arith.constant 1 : index
    %c1_195 = arith.constant 1 : index
    %c0_196 = arith.constant 0 : index
    %c0_197 = arith.constant 0 : index
    %341 = vector.load %arg6[%c1_193, %c1_194, %c1_195, %c0_196, %c0_197] : memref<2x4x3x40x8xf32, #tpu.memory_space<vmem>>, vector<1x1x1x40x8xf32>
    %342 = vector.shape_cast %341 : vector<1x1x1x40x8xf32> to vector<40x8xf32>
    %c1_198 = arith.constant 1 : index
    %c1_199 = arith.constant 1 : index
    %c2_200 = arith.constant 2 : index
    %c0_201 = arith.constant 0 : index
    %c0_202 = arith.constant 0 : index
    %343 = vector.load %arg6[%c1_198, %c1_199, %c2_200, %c0_201, %c0_202] : memref<2x4x3x40x8xf32, #tpu.memory_space<vmem>>, vector<1x1x1x40x8xf32>
    %344 = vector.shape_cast %343 : vector<1x1x1x40x8xf32> to vector<40x8xf32>
    %345 = vector.extract_strided_slice %340 {offsets = [0, 0], sizes = [32, 8], strides = [1, 1]} : vector<40x8xf32> to vector<32x8xf32>
    %cst_203 = arith.constant dense<0.000000e+00> : vector<24x8xf32>
    %346 = tpu.matmul %292, %345, %cst_203 {dimension_numbers = #tpu.dot_dimension_numbers<[1], [0], [0], [1], [0, 0, 1, 1], [], []>} : vector<24x32xf32>, vector<32x8xf32>, vector<24x8xf32> -> vector<24x8xf32>
    %347 = vector.extract_strided_slice %340 {offsets = [32, 0], sizes = [1, 8], strides = [1, 1]} : vector<40x8xf32> to vector<1x8xf32>
    %348 = vector.broadcast %347 : vector<1x8xf32> to vector<24x8xf32>
    %349 = arith.addf %346, %348 : vector<24x8xf32>
    %350 = vector.extract_strided_slice %342 {offsets = [0, 0], sizes = [32, 8], strides = [1, 1]} : vector<40x8xf32> to vector<32x8xf32>
    %cst_204 = arith.constant dense<0.000000e+00> : vector<24x8xf32>
    %351 = tpu.matmul %292, %350, %cst_204 {dimension_numbers = #tpu.dot_dimension_numbers<[1], [0], [0], [1], [0, 0, 1, 1], [], []>} : vector<24x32xf32>, vector<32x8xf32>, vector<24x8xf32> -> vector<24x8xf32>
    %352 = vector.extract_strided_slice %342 {offsets = [32, 0], sizes = [1, 8], strides = [1, 1]} : vector<40x8xf32> to vector<1x8xf32>
    %353 = vector.broadcast %352 : vector<1x8xf32> to vector<24x8xf32>
    %354 = arith.addf %351, %353 : vector<24x8xf32>
    %355 = vector.extract_strided_slice %344 {offsets = [0, 0], sizes = [32, 8], strides = [1, 1]} : vector<40x8xf32> to vector<32x8xf32>
    %cst_205 = arith.constant dense<0.000000e+00> : vector<24x8xf32>
    %356 = tpu.matmul %292, %355, %cst_205 {dimension_numbers = #tpu.dot_dimension_numbers<[1], [0], [0], [1], [0, 0, 1, 1], [], []>} : vector<24x32xf32>, vector<32x8xf32>, vector<24x8xf32> -> vector<24x8xf32>
    %357 = vector.extract_strided_slice %344 {offsets = [32, 0], sizes = [1, 8], strides = [1, 1]} : vector<40x8xf32> to vector<1x8xf32>
    %358 = vector.broadcast %357 : vector<1x8xf32> to vector<24x8xf32>
    %359 = arith.addf %356, %358 : vector<24x8xf32>
    %cst_206 = arith.constant dense<0.000000e+00> : vector<24x24xf32>
    %360 = tpu.matmul %349, %354, %cst_206 {dimension_numbers = #tpu.dot_dimension_numbers<[1], [1], [0], [0], [0, 0, 1, 0], [], []>} : vector<24x8xf32>, vector<24x8xf32>, vector<24x24xf32> -> vector<24x24xf32>
    %361 = arith.addf %360, %61 : vector<24x24xf32>
    %cst_207 = arith.constant dense<0xFF800000> : vector<24xf32>
    %362 = vector.multi_reduction <maximumf>, %361, %cst_207 [1] : vector<24x24xf32> to vector<24xf32>
    %363 = vector.shape_cast %362 : vector<24xf32> to vector<24x1xf32>
    %364 = vector.broadcast %363 : vector<24x1xf32> to vector<24x24xf32>
    %365 = arith.subf %361, %364 : vector<24x24xf32>
    %366 = math.exp %365 : vector<24x24xf32>
    %cst_208 = arith.constant dense<0.000000e+00> : vector<24xf32>
    %367 = vector.multi_reduction <add>, %366, %cst_208 [1] : vector<24x24xf32> to vector<24xf32>
    %368 = vector.shape_cast %367 : vector<24xf32> to vector<24x1xf32>
    %369 = tpu.reciprocal %368 {approx = true} : vector<24x1xf32> -> vector<24x1xf32>
    %370 = vector.broadcast %369 : vector<24x1xf32> to vector<24x24xf32>
    %371 = arith.mulf %366, %370 : vector<24x24xf32>
    %cst_209 = arith.constant dense<0.000000e+00> : vector<24x8xf32>
    %372 = tpu.matmul %371, %359, %cst_209 {dimension_numbers = #tpu.dot_dimension_numbers<[1], [0], [0], [1], [0, 0, 1, 1], [], []>} : vector<24x24xf32>, vector<24x8xf32>, vector<24x8xf32> -> vector<24x8xf32>
    %c1_210 = arith.constant 1 : index
    %c1_211 = arith.constant 1 : index
    %c0_212 = arith.constant 0 : index
    %c0_213 = arith.constant 0 : index
    %373 = vector.load %arg7[%c1_210, %c1_211, %c0_212, %c0_213] : memref<2x4x8x32xf32, #tpu.memory_space<vmem>>, vector<1x1x8x32xf32>
    %374 = vector.shape_cast %373 : vector<1x1x8x32xf32> to vector<8x32xf32>
    %cst_214 = arith.constant dense<0.000000e+00> : vector<24x32xf32>
    %375 = tpu.matmul %372, %374, %cst_214 {dimension_numbers = #tpu.dot_dimension_numbers<[1], [0], [0], [1], [0, 0, 1, 1], [], []>} : vector<24x8xf32>, vector<8x32xf32>, vector<24x32xf32> -> vector<24x32xf32>
    %376 = arith.addf %338, %375 : vector<24x32xf32>
    %c1_215 = arith.constant 1 : index
    %c2_216 = arith.constant 2 : index
    %c0_217 = arith.constant 0 : index
    %c0_218 = arith.constant 0 : index
    %c0_219 = arith.constant 0 : index
    %377 = vector.load %arg6[%c1_215, %c2_216, %c0_217, %c0_218, %c0_219] : memref<2x4x3x40x8xf32, #tpu.memory_space<vmem>>, vector<1x1x1x40x8xf32>
    %378 = vector.shape_cast %377 : vector<1x1x1x40x8xf32> to vector<40x8xf32>
    %c1_220 = arith.constant 1 : index
    %c2_221 = arith.constant 2 : index
    %c1_222 = arith.constant 1 : index
    %c0_223 = arith.constant 0 : index
    %c0_224 = arith.constant 0 : index
    %379 = vector.load %arg6[%c1_220, %c2_221, %c1_222, %c0_223, %c0_224] : memref<2x4x3x40x8xf32, #tpu.memory_space<vmem>>, vector<1x1x1x40x8xf32>
    %380 = vector.shape_cast %379 : vector<1x1x1x40x8xf32> to vector<40x8xf32>
    %c1_225 = arith.constant 1 : index
    %c2_226 = arith.constant 2 : index
    %c2_227 = arith.constant 2 : index
    %c0_228 = arith.constant 0 : index
    %c0_229 = arith.constant 0 : index
    %381 = vector.load %arg6[%c1_225, %c2_226, %c2_227, %c0_228, %c0_229] : memref<2x4x3x40x8xf32, #tpu.memory_space<vmem>>, vector<1x1x1x40x8xf32>
    %382 = vector.shape_cast %381 : vector<1x1x1x40x8xf32> to vector<40x8xf32>
    %383 = vector.extract_strided_slice %378 {offsets = [0, 0], sizes = [32, 8], strides = [1, 1]} : vector<40x8xf32> to vector<32x8xf32>
    %cst_230 = arith.constant dense<0.000000e+00> : vector<24x8xf32>
    %384 = tpu.matmul %292, %383, %cst_230 {dimension_numbers = #tpu.dot_dimension_numbers<[1], [0], [0], [1], [0, 0, 1, 1], [], []>} : vector<24x32xf32>, vector<32x8xf32>, vector<24x8xf32> -> vector<24x8xf32>
    %385 = vector.extract_strided_slice %378 {offsets = [32, 0], sizes = [1, 8], strides = [1, 1]} : vector<40x8xf32> to vector<1x8xf32>
    %386 = vector.broadcast %385 : vector<1x8xf32> to vector<24x8xf32>
    %387 = arith.addf %384, %386 : vector<24x8xf32>
    %388 = vector.extract_strided_slice %380 {offsets = [0, 0], sizes = [32, 8], strides = [1, 1]} : vector<40x8xf32> to vector<32x8xf32>
    %cst_231 = arith.constant dense<0.000000e+00> : vector<24x8xf32>
    %389 = tpu.matmul %292, %388, %cst_231 {dimension_numbers = #tpu.dot_dimension_numbers<[1], [0], [0], [1], [0, 0, 1, 1], [], []>} : vector<24x32xf32>, vector<32x8xf32>, vector<24x8xf32> -> vector<24x8xf32>
    %390 = vector.extract_strided_slice %380 {offsets = [32, 0], sizes = [1, 8], strides = [1, 1]} : vector<40x8xf32> to vector<1x8xf32>
    %391 = vector.broadcast %390 : vector<1x8xf32> to vector<24x8xf32>
    %392 = arith.addf %389, %391 : vector<24x8xf32>
    %393 = vector.extract_strided_slice %382 {offsets = [0, 0], sizes = [32, 8], strides = [1, 1]} : vector<40x8xf32> to vector<32x8xf32>
    %cst_232 = arith.constant dense<0.000000e+00> : vector<24x8xf32>
    %394 = tpu.matmul %292, %393, %cst_232 {dimension_numbers = #tpu.dot_dimension_numbers<[1], [0], [0], [1], [0, 0, 1, 1], [], []>} : vector<24x32xf32>, vector<32x8xf32>, vector<24x8xf32> -> vector<24x8xf32>
    %395 = vector.extract_strided_slice %382 {offsets = [32, 0], sizes = [1, 8], strides = [1, 1]} : vector<40x8xf32> to vector<1x8xf32>
    %396 = vector.broadcast %395 : vector<1x8xf32> to vector<24x8xf32>
    %397 = arith.addf %394, %396 : vector<24x8xf32>
    %cst_233 = arith.constant dense<0.000000e+00> : vector<24x24xf32>
    %398 = tpu.matmul %387, %392, %cst_233 {dimension_numbers = #tpu.dot_dimension_numbers<[1], [1], [0], [0], [0, 0, 1, 0], [], []>} : vector<24x8xf32>, vector<24x8xf32>, vector<24x24xf32> -> vector<24x24xf32>
    %399 = arith.addf %398, %61 : vector<24x24xf32>
    %cst_234 = arith.constant dense<0xFF800000> : vector<24xf32>
    %400 = vector.multi_reduction <maximumf>, %399, %cst_234 [1] : vector<24x24xf32> to vector<24xf32>
    %401 = vector.shape_cast %400 : vector<24xf32> to vector<24x1xf32>
    %402 = vector.broadcast %401 : vector<24x1xf32> to vector<24x24xf32>
    %403 = arith.subf %399, %402 : vector<24x24xf32>
    %404 = math.exp %403 : vector<24x24xf32>
    %cst_235 = arith.constant dense<0.000000e+00> : vector<24xf32>
    %405 = vector.multi_reduction <add>, %404, %cst_235 [1] : vector<24x24xf32> to vector<24xf32>
    %406 = vector.shape_cast %405 : vector<24xf32> to vector<24x1xf32>
    %407 = tpu.reciprocal %406 {approx = true} : vector<24x1xf32> -> vector<24x1xf32>
    %408 = vector.broadcast %407 : vector<24x1xf32> to vector<24x24xf32>
    %409 = arith.mulf %404, %408 : vector<24x24xf32>
    %cst_236 = arith.constant dense<0.000000e+00> : vector<24x8xf32>
    %410 = tpu.matmul %409, %397, %cst_236 {dimension_numbers = #tpu.dot_dimension_numbers<[1], [0], [0], [1], [0, 0, 1, 1], [], []>} : vector<24x24xf32>, vector<24x8xf32>, vector<24x8xf32> -> vector<24x8xf32>
    %c1_237 = arith.constant 1 : index
    %c2_238 = arith.constant 2 : index
    %c0_239 = arith.constant 0 : index
    %c0_240 = arith.constant 0 : index
    %411 = vector.load %arg7[%c1_237, %c2_238, %c0_239, %c0_240] : memref<2x4x8x32xf32, #tpu.memory_space<vmem>>, vector<1x1x8x32xf32>
    %412 = vector.shape_cast %411 : vector<1x1x8x32xf32> to vector<8x32xf32>
    %cst_241 = arith.constant dense<0.000000e+00> : vector<24x32xf32>
    %413 = tpu.matmul %410, %412, %cst_241 {dimension_numbers = #tpu.dot_dimension_numbers<[1], [0], [0], [1], [0, 0, 1, 1], [], []>} : vector<24x8xf32>, vector<8x32xf32>, vector<24x32xf32> -> vector<24x32xf32>
    %414 = arith.addf %376, %413 : vector<24x32xf32>
    %c1_242 = arith.constant 1 : index
    %c3_243 = arith.constant 3 : index
    %c0_244 = arith.constant 0 : index
    %c0_245 = arith.constant 0 : index
    %c0_246 = arith.constant 0 : index
    %415 = vector.load %arg6[%c1_242, %c3_243, %c0_244, %c0_245, %c0_246] : memref<2x4x3x40x8xf32, #tpu.memory_space<vmem>>, vector<1x1x1x40x8xf32>
    %416 = vector.shape_cast %415 : vector<1x1x1x40x8xf32> to vector<40x8xf32>
    %c1_247 = arith.constant 1 : index
    %c3_248 = arith.constant 3 : index
    %c1_249 = arith.constant 1 : index
    %c0_250 = arith.constant 0 : index
    %c0_251 = arith.constant 0 : index
    %417 = vector.load %arg6[%c1_247, %c3_248, %c1_249, %c0_250, %c0_251] : memref<2x4x3x40x8xf32, #tpu.memory_space<vmem>>, vector<1x1x1x40x8xf32>
    %418 = vector.shape_cast %417 : vector<1x1x1x40x8xf32> to vector<40x8xf32>
    %c1_252 = arith.constant 1 : index
    %c3_253 = arith.constant 3 : index
    %c2_254 = arith.constant 2 : index
    %c0_255 = arith.constant 0 : index
    %c0_256 = arith.constant 0 : index
    %419 = vector.load %arg6[%c1_252, %c3_253, %c2_254, %c0_255, %c0_256] : memref<2x4x3x40x8xf32, #tpu.memory_space<vmem>>, vector<1x1x1x40x8xf32>
    %420 = vector.shape_cast %419 : vector<1x1x1x40x8xf32> to vector<40x8xf32>
    %421 = vector.extract_strided_slice %416 {offsets = [0, 0], sizes = [32, 8], strides = [1, 1]} : vector<40x8xf32> to vector<32x8xf32>
    %cst_257 = arith.constant dense<0.000000e+00> : vector<24x8xf32>
    %422 = tpu.matmul %292, %421, %cst_257 {dimension_numbers = #tpu.dot_dimension_numbers<[1], [0], [0], [1], [0, 0, 1, 1], [], []>} : vector<24x32xf32>, vector<32x8xf32>, vector<24x8xf32> -> vector<24x8xf32>
    %423 = vector.extract_strided_slice %416 {offsets = [32, 0], sizes = [1, 8], strides = [1, 1]} : vector<40x8xf32> to vector<1x8xf32>
    %424 = vector.broadcast %423 : vector<1x8xf32> to vector<24x8xf32>
    %425 = arith.addf %422, %424 : vector<24x8xf32>
    %426 = vector.extract_strided_slice %418 {offsets = [0, 0], sizes = [32, 8], strides = [1, 1]} : vector<40x8xf32> to vector<32x8xf32>
    %cst_258 = arith.constant dense<0.000000e+00> : vector<24x8xf32>
    %427 = tpu.matmul %292, %426, %cst_258 {dimension_numbers = #tpu.dot_dimension_numbers<[1], [0], [0], [1], [0, 0, 1, 1], [], []>} : vector<24x32xf32>, vector<32x8xf32>, vector<24x8xf32> -> vector<24x8xf32>
    %428 = vector.extract_strided_slice %418 {offsets = [32, 0], sizes = [1, 8], strides = [1, 1]} : vector<40x8xf32> to vector<1x8xf32>
    %429 = vector.broadcast %428 : vector<1x8xf32> to vector<24x8xf32>
    %430 = arith.addf %427, %429 : vector<24x8xf32>
    %431 = vector.extract_strided_slice %420 {offsets = [0, 0], sizes = [32, 8], strides = [1, 1]} : vector<40x8xf32> to vector<32x8xf32>
    %cst_259 = arith.constant dense<0.000000e+00> : vector<24x8xf32>
    %432 = tpu.matmul %292, %431, %cst_259 {dimension_numbers = #tpu.dot_dimension_numbers<[1], [0], [0], [1], [0, 0, 1, 1], [], []>} : vector<24x32xf32>, vector<32x8xf32>, vector<24x8xf32> -> vector<24x8xf32>
    %433 = vector.extract_strided_slice %420 {offsets = [32, 0], sizes = [1, 8], strides = [1, 1]} : vector<40x8xf32> to vector<1x8xf32>
    %434 = vector.broadcast %433 : vector<1x8xf32> to vector<24x8xf32>
    %435 = arith.addf %432, %434 : vector<24x8xf32>
    %cst_260 = arith.constant dense<0.000000e+00> : vector<24x24xf32>
    %436 = tpu.matmul %425, %430, %cst_260 {dimension_numbers = #tpu.dot_dimension_numbers<[1], [1], [0], [0], [0, 0, 1, 0], [], []>} : vector<24x8xf32>, vector<24x8xf32>, vector<24x24xf32> -> vector<24x24xf32>
    %437 = arith.addf %436, %61 : vector<24x24xf32>
    %cst_261 = arith.constant dense<0xFF800000> : vector<24xf32>
    %438 = vector.multi_reduction <maximumf>, %437, %cst_261 [1] : vector<24x24xf32> to vector<24xf32>
    %439 = vector.shape_cast %438 : vector<24xf32> to vector<24x1xf32>
    %440 = vector.broadcast %439 : vector<24x1xf32> to vector<24x24xf32>
    %441 = arith.subf %437, %440 : vector<24x24xf32>
    %442 = math.exp %441 : vector<24x24xf32>
    %cst_262 = arith.constant dense<0.000000e+00> : vector<24xf32>
    %443 = vector.multi_reduction <add>, %442, %cst_262 [1] : vector<24x24xf32> to vector<24xf32>
    %444 = vector.shape_cast %443 : vector<24xf32> to vector<24x1xf32>
    %445 = tpu.reciprocal %444 {approx = true} : vector<24x1xf32> -> vector<24x1xf32>
    %446 = vector.broadcast %445 : vector<24x1xf32> to vector<24x24xf32>
    %447 = arith.mulf %442, %446 : vector<24x24xf32>
    %cst_263 = arith.constant dense<0.000000e+00> : vector<24x8xf32>
    %448 = tpu.matmul %447, %435, %cst_263 {dimension_numbers = #tpu.dot_dimension_numbers<[1], [0], [0], [1], [0, 0, 1, 1], [], []>} : vector<24x24xf32>, vector<24x8xf32>, vector<24x8xf32> -> vector<24x8xf32>
    %c1_264 = arith.constant 1 : index
    %c3_265 = arith.constant 3 : index
    %c0_266 = arith.constant 0 : index
    %c0_267 = arith.constant 0 : index
    %449 = vector.load %arg7[%c1_264, %c3_265, %c0_266, %c0_267] : memref<2x4x8x32xf32, #tpu.memory_space<vmem>>, vector<1x1x8x32xf32>
    %450 = vector.shape_cast %449 : vector<1x1x8x32xf32> to vector<8x32xf32>
    %cst_268 = arith.constant dense<0.000000e+00> : vector<24x32xf32>
    %451 = tpu.matmul %448, %450, %cst_268 {dimension_numbers = #tpu.dot_dimension_numbers<[1], [0], [0], [1], [0, 0, 1, 1], [], []>} : vector<24x8xf32>, vector<8x32xf32>, vector<24x32xf32> -> vector<24x32xf32>
    %452 = arith.addf %414, %451 : vector<24x32xf32>
    %453 = vector.broadcast %295 : vector<1x32xf32> to vector<24x32xf32>
    %454 = arith.addf %452, %453 : vector<24x32xf32>
    %455 = arith.addf %454, %292 : vector<24x32xf32>
    %cst_269 = arith.constant dense<0.000000e+00> : vector<24xf32>
    %456 = vector.multi_reduction <add>, %455, %cst_269 [1] : vector<24x32xf32> to vector<24xf32>
    %457 = vector.shape_cast %456 : vector<24xf32> to vector<24x1xf32>
    %cst_270 = arith.constant 3.200000e+01 : f32
    %458 = vector.broadcast %cst_270 : f32 to vector<24x1xf32>
    %459 = arith.divf %457, %458 : vector<24x1xf32>
    %460 = vector.broadcast %459 : vector<24x1xf32> to vector<24x32xf32>
    %461 = arith.subf %455, %460 : vector<24x32xf32>
    %462 = arith.mulf %461, %461 : vector<24x32xf32>
    %cst_271 = arith.constant dense<0.000000e+00> : vector<24xf32>
    %463 = vector.multi_reduction <add>, %462, %cst_271 [1] : vector<24x32xf32> to vector<24xf32>
    %464 = vector.shape_cast %463 : vector<24xf32> to vector<24x1xf32>
    %cst_272 = arith.constant 3.200000e+01 : f32
    %465 = vector.broadcast %cst_272 : f32 to vector<24x1xf32>
    %466 = arith.divf %464, %465 : vector<24x1xf32>
    %467 = vector.broadcast %459 : vector<24x1xf32> to vector<24x32xf32>
    %468 = arith.subf %455, %467 : vector<24x32xf32>
    %cst_273 = arith.constant 9.99999996E-13 : f32
    %469 = vector.broadcast %cst_273 : f32 to vector<24x1xf32>
    %470 = arith.addf %466, %469 : vector<24x1xf32>
    %471 = math.rsqrt %470 : vector<24x1xf32>
    %472 = vector.broadcast %471 : vector<24x1xf32> to vector<24x32xf32>
    %473 = arith.mulf %468, %472 : vector<24x32xf32>
    %474 = vector.broadcast %296 : vector<1x32xf32> to vector<24x32xf32>
    %475 = arith.mulf %473, %474 : vector<24x32xf32>
    %476 = vector.broadcast %297 : vector<1x32xf32> to vector<24x32xf32>
    %477 = arith.addf %475, %476 : vector<24x32xf32>
    %c1_274 = arith.constant 1 : index
    %c0_275 = arith.constant 0 : index
    %c0_276 = arith.constant 0 : index
    %478 = vector.load %arg8[%c1_274, %c0_275, %c0_276] : memref<2x96x64xf32, #tpu.memory_space<vmem>>, vector<1x32x64xf32>
    %479 = vector.shape_cast %478 : vector<1x32x64xf32> to vector<32x64xf32>
    %c1_277 = arith.constant 1 : index
    %c32_278 = arith.constant 32 : index
    %c0_279 = arith.constant 0 : index
    %480 = vector.load %arg8[%c1_277, %c32_278, %c0_279] : memref<2x96x64xf32, #tpu.memory_space<vmem>>, vector<1x64x32xf32>
    %481 = vector.shape_cast %480 : vector<1x64x32xf32> to vector<64x32xf32>
    %cst_280 = arith.constant dense<0.000000e+00> : vector<24x64xf32>
    %482 = tpu.matmul %477, %479, %cst_280 {dimension_numbers = #tpu.dot_dimension_numbers<[1], [0], [0], [1], [0, 0, 1, 1], [], []>} : vector<24x32xf32>, vector<32x64xf32>, vector<24x64xf32> -> vector<24x64xf32>
    %483 = vector.broadcast %298 : vector<1x64xf32> to vector<24x64xf32>
    %484 = arith.addf %482, %483 : vector<24x64xf32>
    %cst_281 = arith.constant 5.000000e-01 : f32
    %485 = vector.broadcast %cst_281 : f32 to vector<24x64xf32>
    %486 = arith.mulf %485, %484 : vector<24x64xf32>
    %cst_282 = arith.constant 4.471500e-02 : f32
    %487 = vector.broadcast %cst_282 : f32 to vector<24x64xf32>
    %488 = arith.mulf %487, %484 : vector<24x64xf32>
    %489 = arith.mulf %488, %484 : vector<24x64xf32>
    %490 = arith.mulf %489, %484 : vector<24x64xf32>
    %491 = arith.addf %484, %490 : vector<24x64xf32>
    %cst_283 = arith.constant 0.797884583 : f32
    %492 = vector.broadcast %cst_283 : f32 to vector<24x64xf32>
    %493 = arith.mulf %492, %491 : vector<24x64xf32>
    %494 = math.tanh %493 : vector<24x64xf32>
    %cst_284 = arith.constant 1.000000e+00 : f32
    %495 = vector.broadcast %cst_284 : f32 to vector<24x64xf32>
    %496 = arith.addf %495, %494 : vector<24x64xf32>
    %497 = arith.mulf %486, %496 : vector<24x64xf32>
    %cst_285 = arith.constant dense<0.000000e+00> : vector<24x32xf32>
    %498 = tpu.matmul %497, %481, %cst_285 {dimension_numbers = #tpu.dot_dimension_numbers<[1], [0], [0], [1], [0, 0, 1, 1], [], []>} : vector<24x64xf32>, vector<64x32xf32>, vector<24x32xf32> -> vector<24x32xf32>
    %499 = vector.broadcast %299 : vector<1x32xf32> to vector<24x32xf32>
    %500 = arith.addf %498, %499 : vector<24x32xf32>
    %501 = arith.addf %500, %477 : vector<24x32xf32>
    %cst_286 = arith.constant dense<0.000000e+00> : vector<24xf32>
    %502 = vector.multi_reduction <add>, %501, %cst_286 [1] : vector<24x32xf32> to vector<24xf32>
    %503 = vector.shape_cast %502 : vector<24xf32> to vector<24x1xf32>
    %cst_287 = arith.constant 3.200000e+01 : f32
    %504 = vector.broadcast %cst_287 : f32 to vector<24x1xf32>
    %505 = arith.divf %503, %504 : vector<24x1xf32>
    %506 = vector.broadcast %505 : vector<24x1xf32> to vector<24x32xf32>
    %507 = arith.subf %501, %506 : vector<24x32xf32>
    %508 = arith.mulf %507, %507 : vector<24x32xf32>
    %cst_288 = arith.constant dense<0.000000e+00> : vector<24xf32>
    %509 = vector.multi_reduction <add>, %508, %cst_288 [1] : vector<24x32xf32> to vector<24xf32>
    %510 = vector.shape_cast %509 : vector<24xf32> to vector<24x1xf32>
    %cst_289 = arith.constant 3.200000e+01 : f32
    %511 = vector.broadcast %cst_289 : f32 to vector<24x1xf32>
    %512 = arith.divf %510, %511 : vector<24x1xf32>
    %513 = vector.broadcast %505 : vector<24x1xf32> to vector<24x32xf32>
    %514 = arith.subf %501, %513 : vector<24x32xf32>
    %cst_290 = arith.constant 9.99999996E-13 : f32
    %515 = vector.broadcast %cst_290 : f32 to vector<24x1xf32>
    %516 = arith.addf %512, %515 : vector<24x1xf32>
    %517 = math.rsqrt %516 : vector<24x1xf32>
    %518 = vector.broadcast %517 : vector<24x1xf32> to vector<24x32xf32>
    %519 = arith.mulf %514, %518 : vector<24x32xf32>
    %520 = vector.broadcast %300 : vector<1x32xf32> to vector<24x32xf32>
    %521 = arith.mulf %519, %520 : vector<24x32xf32>
    %522 = vector.broadcast %301 : vector<1x32xf32> to vector<24x32xf32>
    %523 = arith.addf %521, %522 : vector<24x32xf32>
    %524 = tpu.iota {dimensions = array<i32: 0>} : vector<8x24xi32>
    %525 = tpu.iota {dimensions = array<i32: 1>} : vector<8x24xi32>
    %c2_i32 = arith.constant 2 : i32
    %526 = vector.broadcast %c2_i32 : i32 to vector<8x24xi32>
    %527 = arith.cmpi slt, %524, %526 : vector<8x24xi32>
    %c12_i32 = arith.constant 12 : i32
    %528 = vector.broadcast %c12_i32 : i32 to vector<8x24xi32>
    %529 = arith.muli %524, %528 : vector<8x24xi32>
    %530 = arith.cmpi eq, %525, %529 : vector<8x24xi32>
    %531 = arith.andi %527, %530 : vector<8x24xi1>
    %cst_291 = arith.constant 1.000000e+00 : f32
    %cst_292 = arith.constant 0.000000e+00 : f32
    %532 = vector.broadcast %cst_291 : f32 to vector<8x24xf32>
    %533 = vector.broadcast %cst_292 : f32 to vector<8x24xf32>
    %534 = arith.select %531, %532, %533 : vector<8x24xi1>, vector<8x24xf32>
    %cst_293 = arith.constant dense<0.000000e+00> : vector<8x32xf32>
    %535 = tpu.matmul %534, %523, %cst_293 {dimension_numbers = #tpu.dot_dimension_numbers<[1], [0], [0], [1], [0, 0, 1, 1], [], []>} : vector<8x24xf32>, vector<24x32xf32>, vector<8x32xf32> -> vector<8x32xf32>
    %cst_294 = arith.constant dense<0.000000e+00> : vector<8x32xf32>
    %536 = tpu.matmul %535, %11, %cst_294 {dimension_numbers = #tpu.dot_dimension_numbers<[1], [0], [0], [1], [0, 0, 1, 1], [], []>} : vector<8x32xf32>, vector<32x32xf32>, vector<8x32xf32> -> vector<8x32xf32>
    %537 = vector.broadcast %3 : vector<1x32xf32> to vector<8x32xf32>
    %538 = arith.addf %536, %537 : vector<8x32xf32>
    %539 = math.tanh %538 : vector<8x32xf32>
    %cst_295 = arith.constant dense<0.000000e+00> : vector<8x32xf32>
    %540 = tpu.matmul %539, %13, %cst_295 {dimension_numbers = #tpu.dot_dimension_numbers<[1], [0], [0], [1], [0, 0, 1, 1], [], []>} : vector<8x32xf32>, vector<32x32xf32>, vector<8x32xf32> -> vector<8x32xf32>
    %541 = vector.broadcast %4 : vector<1x32xf32> to vector<8x32xf32>
    %542 = arith.addf %540, %541 : vector<8x32xf32>
    %cst_296 = arith.constant 5.000000e-01 : f32
    %543 = vector.broadcast %cst_296 : f32 to vector<8x32xf32>
    %544 = arith.mulf %543, %542 : vector<8x32xf32>
    %cst_297 = arith.constant 4.471500e-02 : f32
    %545 = vector.broadcast %cst_297 : f32 to vector<8x32xf32>
    %546 = arith.mulf %545, %542 : vector<8x32xf32>
    %547 = arith.mulf %546, %542 : vector<8x32xf32>
    %548 = arith.mulf %547, %542 : vector<8x32xf32>
    %549 = arith.addf %542, %548 : vector<8x32xf32>
    %cst_298 = arith.constant 0.797884583 : f32
    %550 = vector.broadcast %cst_298 : f32 to vector<8x32xf32>
    %551 = arith.mulf %550, %549 : vector<8x32xf32>
    %552 = math.tanh %551 : vector<8x32xf32>
    %cst_299 = arith.constant 1.000000e+00 : f32
    %553 = vector.broadcast %cst_299 : f32 to vector<8x32xf32>
    %554 = arith.addf %553, %552 : vector<8x32xf32>
    %555 = arith.mulf %544, %554 : vector<8x32xf32>
    %cst_300 = arith.constant dense<0.000000e+00> : vector<8xf32>
    %556 = vector.multi_reduction <add>, %555, %cst_300 [1] : vector<8x32xf32> to vector<8xf32>
    %557 = vector.shape_cast %556 : vector<8xf32> to vector<8x1xf32>
    %cst_301 = arith.constant 3.200000e+01 : f32
    %558 = vector.broadcast %cst_301 : f32 to vector<8x1xf32>
    %559 = arith.divf %557, %558 : vector<8x1xf32>
    %560 = vector.broadcast %559 : vector<8x1xf32> to vector<8x32xf32>
    %561 = arith.subf %555, %560 : vector<8x32xf32>
    %562 = arith.mulf %561, %561 : vector<8x32xf32>
    %cst_302 = arith.constant dense<0.000000e+00> : vector<8xf32>
    %563 = vector.multi_reduction <add>, %562, %cst_302 [1] : vector<8x32xf32> to vector<8xf32>
    %564 = vector.shape_cast %563 : vector<8xf32> to vector<8x1xf32>
    %cst_303 = arith.constant 3.200000e+01 : f32
    %565 = vector.broadcast %cst_303 : f32 to vector<8x1xf32>
    %566 = arith.divf %564, %565 : vector<8x1xf32>
    %567 = vector.broadcast %559 : vector<8x1xf32> to vector<8x32xf32>
    %568 = arith.subf %555, %567 : vector<8x32xf32>
    %cst_304 = arith.constant 9.99999996E-13 : f32
    %569 = vector.broadcast %cst_304 : f32 to vector<8x1xf32>
    %570 = arith.addf %566, %569 : vector<8x1xf32>
    %571 = math.rsqrt %570 : vector<8x1xf32>
    %572 = vector.broadcast %571 : vector<8x1xf32> to vector<8x32xf32>
    %573 = arith.mulf %568, %572 : vector<8x32xf32>
    %574 = vector.broadcast %5 : vector<1x32xf32> to vector<8x32xf32>
    %575 = arith.mulf %573, %574 : vector<8x32xf32>
    %576 = vector.broadcast %6 : vector<1x32xf32> to vector<8x32xf32>
    %577 = arith.addf %575, %576 : vector<8x32xf32>
    %cst_305 = arith.constant dense<0.000000e+00> : vector<8x128xf32>
    %578 = tpu.matmul %577, %15, %cst_305 {dimension_numbers = #tpu.dot_dimension_numbers<[1], [0], [0], [1], [0, 0, 1, 1], [], []>} : vector<8x32xf32>, vector<32x128xf32>, vector<8x128xf32> -> vector<8x128xf32>
    %579 = vector.broadcast %7 : vector<1x128xf32> to vector<8x128xf32>
    %580 = arith.addf %578, %579 : vector<8x128xf32>
    %c0_306 = arith.constant 0 : index
    %c0_307 = arith.constant 0 : index
    %581 = vector.load %arg9[%c0_306, %c0_307] : memref<8x128xf32, #tpu.memory_space<vmem>>, vector<8x128xf32>
    tpu.vector_store %arg9[%c0_306, %c0_307], %580 {strides = array<i32>} : memref<8x128xf32, #tpu.memory_space<vmem>>, vector<8x128xf32>,
    return
  }
}

</mosaic_0001>

<llo_original>
// kernel: _lambda_.1
$region0: #{_lambda_.1}
  #allocation0 [shape = 'u32[]', space=smem, size = 0x4, offset = 0x4, fixed_abs, tag = 'smem constant byte address 0x4 - core index']
  #allocation1 [shape = 'u32[144,128]{1,0:T(1,128)}', space=vmem, size = 0x12000, scoped, tag = 'internal scratch']
  %s0 = inlined_call_operand.vmem [shape: f32[24,32], index: 0, kind: input, shape index: {}]
  %s1 = inlined_call_operand.vmem [shape: f32[24,16], index: 1, kind: input, shape index: {}]
  %s2 = inlined_call_operand.vmem [shape: f32[1,24], index: 2, kind: input, shape index: {}]
  %s3 = inlined_call_operand.vmem [shape: f32[8,128], index: 3, kind: input, shape index: {}]
  %s4 = inlined_call_operand.vmem [shape: f32[4,32,128], index: 4, kind: input, shape index: {}]
  %s5 = inlined_call_operand.vmem [shape: f32[2,8,64], index: 5, kind: input, shape index: {}]
  %s6 = inlined_call_operand.vmem [shape: f32[2,4,3,40,8], index: 6, kind: input, shape index: {}]
  %s7 = inlined_call_operand.vmem [shape: f32[2,4,8,32], index: 7, kind: input, shape index: {}]
  %s8 = inlined_call_operand.vmem [shape: f32[2,96,64], index: 8, kind: input, shape index: {}]
  %s9 = inlined_call_operand.vmem [shape: f32[8,128], index: 9, kind: output, shape index: {}]
  %s10 = sld [smem:[#allocation0]]
  $region46: #{_lambda_.1} parent=0
    _
  %s12 = ssub.s32 1, %s10
  %s13 = scalar_select 0, %s12, %s10
  // Predicated region
  $region2: #{_lambda_.1} parent=0 // pred_check
    _
  $region3: #{_lambda_.1} parent=0 // pred_check_branch
    %15 = sbr.rel (0) target = $region5
  $region4: #{_lambda_.1} parent=0 // pred_region
    _
  $region5: #{_lambda_.1} parent=0 // pred_fallthru
    _
  // Predicated region
  $region6: #{_lambda_.1} parent=0 // pred_check
    _
  $region7: #{_lambda_.1} parent=0 // pred_check_branch
    %17 = sbr.rel (0) target = $region9
  $region8: #{_lambda_.1} parent=0 // pred_region
    _
  $region9: #{_lambda_.1} parent=0 // pred_fallthru
    _
  // Predicated region
  $region10: #{_lambda_.1} parent=0 // pred_check
    _
  $region11: #{_lambda_.1} parent=0 // pred_check_branch
    %19 = sbr.rel (0) target = $region13
  $region12: #{_lambda_.1} parent=0 // pred_region
    _
  $region13: #{_lambda_.1} parent=0 // pred_fallthru
    _
  // Predicated region
  $region14: #{_lambda_.1} parent=0 // pred_check
    _
  $region15: #{_lambda_.1} parent=0 // pred_check_branch
    %21 = sbr.rel (0) target = $region17
  $region16: #{_lambda_.1} parent=0 // pred_region
    _
  $region17: #{_lambda_.1} parent=0 // pred_fallthru
    _
  // Predicated region
  $region18: #{_lambda_.1} parent=0 // pred_check
    _
  $region19: #{_lambda_.1} parent=0 // pred_check_branch
    %23 = sbr.rel (0) target = $region21
  $region20: #{_lambda_.1} parent=0 // pred_region
    _
  $region21: #{_lambda_.1} parent=0 // pred_fallthru
    _
  // Predicated region
  $region22: #{_lambda_.1} parent=0 // pred_check
    _
  $region23: #{_lambda_.1} parent=0 // pred_check_branch
    %25 = sbr.rel (0) target = $region25
  $region24: #{_lambda_.1} parent=0 // pred_region
    _
  $region25: #{_lambda_.1} parent=0 // pred_fallthru
    _
  // Predicated region
  $region26: #{_lambda_.1} parent=0 // pred_check
    _
  $region27: #{_lambda_.1} parent=0 // pred_check_branch
    %27 = sbr.rel (0) target = $region29
  $region28: #{_lambda_.1} parent=0 // pred_region
    _
  $region29: #{_lambda_.1} parent=0 // pred_fallthru
    _
  // Predicated region
  $region30: #{_lambda_.1} parent=0 // pred_check
    _
  $region31: #{_lambda_.1} parent=0 // pred_check_branch
    %29 = sbr.rel (0) target = $region33
  $region32: #{_lambda_.1} parent=0 // pred_region
    _
  $region33: #{_lambda_.1} parent=0 // pred_fallthru
    _
  // Predicated region
  $region34: #{_lambda_.1} parent=0 // pred_check
    _
  $region35: #{_lambda_.1} parent=0 // pred_check_branch
    %31 = sbr.rel (0) target = $region37
  $region36: #{_lambda_.1} parent=0 // pred_region
    _
  $region37: #{_lambda_.1} parent=0 // pred_fallthru
    _
  %v32 = vld [vmem:[%s3] sm:$0xff]
  %v33 = vld [vmem:[%s4] sm:$0xff]
  %v34 = vld [vmem:[%s4 + $0x8] sm:$0xff]
  %s35 = scalar_lea.vmem %s4, 32
  %v36 = vld [vmem:[%s35] sm:$0xff]
  %v37 = vld [vmem:[%s35 + $0x8] sm:$0xff]
  %v38 = vld [vmem:[%s35 + $0x10] sm:$0xff]
  %v39 = vld [vmem:[%s35 + $0x18] sm:$0xff]
  %s40 = scalar_lea.vmem %s4, 64
  %v41 = vld [vmem:[%s40] sm:$0xff]
  %v42 = vld [vmem:[%s40 + $0x8] sm:$0xff]
  %v43 = vld [vmem:[%s40 + $0x10] sm:$0xff]
  %v44 = vld [vmem:[%s40 + $0x18] sm:$0xff]
  %s45 = scalar_lea.vmem %s4, 96
  %v46 = vld [vmem:[%s45] sm:$0xff]
  %v47 = vld [vmem:[%s45 + $0x8] sm:$0xff]
  %v48 = vld [vmem:[%s45 + $0x10] sm:$0xff]
  %v49 = vld [vmem:[%s45 + $0x18] sm:$0xff]
  %v50 = vld [vmem:[%s0] sm:$0xff]
  %v51 = vld [vmem:[%s0 + $0x8] sm:$0xff]
  %v52 = vld [vmem:[%s0 + $0x10] sm:$0xff]
  %v53 = vld [vmem:[%s1] sm:$0xff]
  %v54 = vld [vmem:[%s1 + $0x8] sm:$0xff]
  %v55 = vld [vmem:[%s1 + $0x10] sm:$0xff]
  %vm56 = vcmask 130048
  %v58 = vsel %vm56, %v53, 0
  %v61 = vsel %vm56, %v54, 0
  %v64 = vsel %vm56, %v55, 0
  %66 = vmatprep.subr.mxu0 0.0
  %67 = vmatpush1.msra.mxu0 %v33
  %68 = vmatprep.subr.mxu0 0.0
  %69 = vmatpush1.msra.mxu0 %v34
  %70 = vmatprep.subr.mxu0 0.0
  %71 = vmatpush1.msra.mxu0 0.0
  %72 = vmatprep.subr.mxu0 0.0
  %73 = vmatpush1.msra.mxu0 0.0
  %74 = vmatprep.subr.mxu0 0.0
  %75 = vmatpush1.msra.mxu0 0.0
  %76 = vmatprep.subr.mxu0 0.0
  %77 = vmatpush1.msra.mxu0 0.0
  %78 = vmatprep.subr.mxu0 0.0
  %79 = vmatpush1.msra.mxu0 0.0
  %80 = vmatprep.subr.mxu0 0.0
  %81 = vmatpush1.msra.mxu0 0.0
  %82 = vmatprep.subr.mxu0 0.0
  %83 = vmatpush1.msra.mxu0 0.0
  %84 = vmatprep.subr.mxu0 0.0
  %85 = vmatpush1.msra.mxu0 0.0
  %86 = vmatprep.subr.mxu0 0.0
  %87 = vmatpush1.msra.mxu0 0.0
  %88 = vmatprep.subr.mxu0 0.0
  %89 = vmatpush1.msra.mxu0 0.0
  %90 = vmatprep.subr.mxu0 0.0
  %91 = vmatpush1.msra.mxu0 0.0
  %92 = vmatprep.subr.mxu0 0.0
  %93 = vmatpush1.msra.mxu0 0.0
  %94 = vmatprep.subr.mxu0 0.0
  %95 = vmatpush1.msra.mxu0 0.0
  %96 = vmatprep.subr.mxu0 0.0
  %97 = vmatpush1.msra.mxu0 0.0
  %98 = vmatprep.subr.mxu0 0.0
  %99 = vmatpush1.msra.mxu0 0.0
  %100 = vmatprep.subr.mxu0 0.0
  %101 = vmatpush1.msra.mxu0 0.0
  %102 = vmatprep.subr.mxu0 0.0
  %103 = vmatpush1.msra.mxu0 0.0
  %104 = vmatprep.subr.mxu0 0.0
  %105 = vmatpush1.msra.mxu0 0.0
  %106 = vmatprep.subr.mxu0 0.0
  %107 = vmatpush1.msra.mxu0 0.0
  %108 = vmatprep.subr.mxu0 0.0
  %109 = vmatpush1.msra.mxu0 0.0
  %110 = vmatprep.subr.mxu0 0.0
  %111 = vmatpush1.msra.mxu0 0.0
  %112 = vmatprep.subr.mxu0 0.0
  %113 = vmatpush1.msra.mxu0 0.0
  %114 = vmatprep.subr.mxu0 0.0
  %115 = vmatpush1.msra.mxu0 0.0
  %116 = vmatprep.subr.mxu0 0.0
  %117 = vmatpush1.msra.mxu0 0.0
  %118 = vmatprep.subr.mxu0 0.0
  %119 = vmatpush1.msra.mxu0 0.0
  %120 = vmatprep.subr.mxu0 0.0
  %121 = vmatpush1.msra.mxu0 0.0
  %122 = vmatprep.subr.mxu0 0.0
  %123 = vmatpush1.msra.mxu0 0.0
  %124 = vmatprep.subr.mxu0 0.0
  %125 = vmatpush1.msra.mxu0 0.0
  %126 = vmatprep.subr.mxu0 0.0
  %127 = vmatpush1.msra.mxu0 0.0
  %128 = vmatprep.subr.mxu0 0.0
  %129 = vmatpush1.msra.mxu0 0.0
  %130 = vmatprep.mubr.f32.mxu0 0.0
  %131 = vmatmul.mubr.f32.gmra.mrb[0].mxu0 %v58
  %v132 = vpop.f32.mrb[0].mxu0
  %v133 = vadd.f32 0.0, %v132
  %v134 = vpop.f32.mrb[0].mxu0
  %135 = vmatprep.mubr.f32.mxu0 0.0
  %136 = vmatmul.mubr.f32.gmra.mrb[0].mxu0 %v61
  %v137 = vpop.f32.mrb[0].mxu0
  %v138 = vadd.f32 0.0, %v137
  %v139 = vpop.f32.mrb[0].mxu0
  %140 = vmatprep.mubr.f32.mxu0 0.0
  %141 = vmatmul.mubr.f32.gmra.mrb[0].mxu0 %v64
  %v142 = vpop.f32.mrb[0].mxu0
  %v143 = vadd.f32 0.0, %v142
  %v144 = vpop.f32.mrb[0].mxu0
  %145 = vdwg.mxu0
  %v146 = vadd.f32 %v50, %v133
  %v147 = vadd.f32 %v51, %v138
  %v148 = vadd.f32 %v52, %v143
  %vm149 = vcmask 261120
  %v150 = vsel %vm149, %v146, 0.0
  %151 = vadd.xlane.f32.xlu0 %v150
  %v152 = vpop.xlane.xlu0 %151
  %v153 = vsel %vm149, %v147, 0.0
  %154 = vadd.xlane.f32.xlu0 %v153
  %v155 = vpop.xlane.xlu0 %154
  %v156 = vsel %vm149, %v148, 0.0
  %157 = vadd.xlane.f32.xlu0 %v156
  %v158 = vpop.xlane.xlu0 %157
  %v159 = vrcp.pop 32.0
  %v160 = vmul.f32 %v152, %v159
  %v161 = vmul.f32 %v155, %v159
  %v162 = vmul.f32 %v158, %v159
  %v163 = vsub.f32 %v146, %v160
  %v164 = vsub.f32 %v147, %v161
  %v165 = vsub.f32 %v148, %v162
  %v166 = vmul.f32 %v163, %v163
  %v167 = vmul.f32 %v164, %v164
  %v168 = vmul.f32 %v165, %v165
  %v169 = vsel %vm149, %v166, 0.0
  %170 = vadd.xlane.f32.xlu0 %v169
  %v171 = vpop.xlane.xlu0 %170
  %v172 = vsel %vm149, %v167, 0.0
  %173 = vadd.xlane.f32.xlu0 %v172
  %v174 = vpop.xlane.xlu0 %173
  %v175 = vsel %vm149, %v168, 0.0
  %176 = vadd.xlane.f32.xlu0 %v175
  %v177 = vpop.xlane.xlu0 %176
  %v178 = vmul.f32 %v171, %v159
  %v179 = vmul.f32 %v174, %v159
  %v180 = vmul.f32 %v177, %v159
  %v181 = vadd.f32 %v178, 1e-12
  %v182 = vadd.f32 %v179, 1e-12
  %v183 = vadd.f32 %v180, 1e-12
  %v184 = vrsqrt.pop %v181
  %v185 = vrsqrt.pop %v182
  %v186 = vrsqrt.pop %v183
  %v187 = vmul.f32 %v163, %v184
  %v188 = vmul.f32 %v164, %v185
  %v189 = vmul.f32 %v165, %v186
  %v190 = vlaneseq
  %v191 = vshrl.u32 %v190, 7
  %v192 = vsub.s32 0, %v191
  %v193 = vrot.slane %v32, %v192
  %v194 = vmul.f32 %v187, %v193
  %v195 = vmul.f32 %v188, %v193
  %v196 = vmul.f32 %v189, %v193
  %v197 = vlaneseq
  %v198 = vshrl.u32 %v197, 7
  %v199 = vsub.s32 1, %v198
  %v200 = vrot.slane %v32, %v199
  %v201 = vadd.f32 %v194, %v200
  %v202 = vadd.f32 %v195, %v200
  %v203 = vadd.f32 %v196, %v200
  %v204 = vlaneseq
  %v205 = vshrl.u32 %v204, 7
  %v206 = vadd.s32 %v205, 8
  %v207 = vadd.s32 %v205, 16
  %v208 = vlaneseq
  %v209 = vand.u32 %v208, 127
  %v210 = vcvt.s32.f32 %v205
  %v211 = vcvt.s32.f32 %v206
  %v212 = vcvt.s32.f32 %v207
  %v213 = vadd.f32 %v210, 0.5
  %v214 = vadd.f32 %v211, 0.5
  %v215 = vadd.f32 %v212, 0.5
  %v216 = vmul.f32 %v213, 0.083333336
  %v217 = vmul.f32 %v214, 0.083333336
  %v218 = vmul.f32 %v215, 0.083333336
  %v219 = vfloor.f32 %v216
  %v220 = vfloor.f32 %v217
  %v221 = vfloor.f32 %v218
  %v222 = vcvt.s32.f32 %v209
  %v223 = vadd.f32 %v222, 0.5
  %v224 = vmul.f32 %v223, 0.083333336
  %v225 = vfloor.f32 %v224
  %v226 = vld [vmem:[%s2] sm:$0x1]
  %v228 = vlaneseq
  %v229 = vshrl.u32 %v228, 7
  %v230 = vsub.s32 0, %v229
  %v231 = vrot.slane %v226, %v230
  %vm233 = vcmp.eq.f32.partialorder %v219, %v225
  %vm234 = vcmp.eq.f32.partialorder %v220, %v225
  %vm235 = vcmp.eq.f32.partialorder %v221, %v225
  %v236 = vsel %vm233, %v231, -1e+09
  %v237 = vsel %vm234, %v231, -1e+09
  %v238 = vsel %vm235, %v231, -1e+09
  %v239 = vld [vmem:[%s5] sm:$0xff]
  %v240 = vld [vmem:[%s6] sm:$0xff]
  %v241 = vld [vmem:[%s6 + $0x8] sm:$0xff]
  %v242 = vld [vmem:[%s6 + $0x10] sm:$0xff]
  %v243 = vld [vmem:[%s6 + $0x18] sm:$0xff]
  %v244 = vld [vmem:[%s6 + $0x20] sm:$0xff]
  %s245 = scalar_lea.vmem %s6, 40
  %v246 = vld [vmem:[%s245] sm:$0xff]
  %v247 = vld [vmem:[%s245 + $0x8] sm:$0xff]
  %v248 = vld [vmem:[%s245 + $0x10] sm:$0xff]
  %v249 = vld [vmem:[%s245 + $0x18] sm:$0xff]
  %v250 = vld [vmem:[%s245 + $0x20] sm:$0xff]
  %s251 = scalar_lea.vmem %s6, 80
  %v252 = vld [vmem:[%s251] sm:$0xff]
  %v253 = vld [vmem:[%s251 + $0x8] sm:$0xff]
  %v254 = vld [vmem:[%s251 + $0x10] sm:$0xff]
  %v255 = vld [vmem:[%s251 + $0x18] sm:$0xff]
  %v256 = vld [vmem:[%s251 + $0x20] sm:$0xff]
  %v257 = vlaneseq
  %v258 = vshrl.u32 %v257, 7
  %v259 = vsub.s32 0, %v258
  %v260 = vrot.slane %v244, %v259
  %v262 = vsel %vm149, %v201, 0
  %v265 = vsel %vm149, %v202, 0
  %v268 = vsel %vm149, %v203, 0
  %270 = vmatprep.subr.mxu0 0.0
  %271 = vmatpush1.msra.mxu0 %v240
  %272 = vmatprep.subr.mxu0 0.0
  %273 = vmatpush1.msra.mxu0 %v241
  %274 = vmatprep.subr.mxu0 0.0
  %275 = vmatpush1.msra.mxu0 %v242
  %276 = vmatprep.subr.mxu0 0.0
  %277 = vmatpush1.msra.mxu0 %v243
  %278 = vmatprep.subr.mxu0 0.0
  %279 = vmatpush1.msra.mxu0 0.0
  %280 = vmatprep.subr.mxu0 0.0
  %281 = vmatpush1.msra.mxu0 0.0
  %282 = vmatprep.subr.mxu0 0.0
  %283 = vmatpush1.msra.mxu0 0.0
  %284 = vmatprep.subr.mxu0 0.0
  %285 = vmatpush1.msra.mxu0 0.0
  %286 = vmatprep.subr.mxu0 0.0
  %287 = vmatpush1.msra.mxu0 0.0
  %288 = vmatprep.subr.mxu0 0.0
  %289 = vmatpush1.msra.mxu0 0.0
  %290 = vmatprep.subr.mxu0 0.0
  %291 = vmatpush1.msra.mxu0 0.0
  %292 = vmatprep.subr.mxu0 0.0
  %293 = vmatpush1.msra.mxu0 0.0
  %294 = vmatprep.subr.mxu0 0.0
  %295 = vmatpush1.msra.mxu0 0.0
  %296 = vmatprep.subr.mxu0 0.0
  %297 = vmatpush1.msra.mxu0 0.0
  %298 = vmatprep.subr.mxu0 0.0
  %299 = vmatpush1.msra.mxu0 0.0
  %300 = vmatprep.subr.mxu0 0.0
  %301 = vmatpush1.msra.mxu0 0.0
  %302 = vmatprep.subr.mxu0 0.0
  %303 = vmatpush1.msra.mxu0 0.0
  %304 = vmatprep.subr.mxu0 0.0
  %305 = vmatpush1.msra.mxu0 0.0
  %306 = vmatprep.subr.mxu0 0.0
  %307 = vmatpush1.msra.mxu0 0.0
  %308 = vmatprep.subr.mxu0 0.0
  %309 = vmatpush1.msra.mxu0 0.0
  %310 = vmatprep.subr.mxu0 0.0
  %311 = vmatpush1.msra.mxu0 0.0
  %312 = vmatprep.subr.mxu0 0.0
  %313 = vmatpush1.msra.mxu0 0.0
  %314 = vmatprep.subr.mxu0 0.0
  %315 = vmatpush1.msra.mxu0 0.0
  %316 = vmatprep.subr.mxu0 0.0
  %317 = vmatpush1.msra.mxu0 0.0
  %318 = vmatprep.subr.mxu0 0.0
  %319 = vmatpush1.msra.mxu0 0.0
  %320 = vmatprep.subr.mxu0 0.0
  %321 = vmatpush1.msra.mxu0 0.0
  %322 = vmatprep.subr.mxu0 0.0
  %323 = vmatpush1.msra.mxu0 0.0
  %324 = vmatprep.subr.mxu0 0.0
  %325 = vmatpush1.msra.mxu0 0.0
  %326 = vmatprep.subr.mxu0 0.0
  %327 = vmatpush1.msra.mxu0 0.0
  %328 = vmatprep.subr.mxu0 0.0
  %329 = vmatpush1.msra.mxu0 0.0
  %330 = vmatprep.subr.mxu0 0.0
  %331 = vmatpush1.msra.mxu0 0.0
  %332 = vmatprep.subr.mxu0 0.0
  %333 = vmatpush1.msra.mxu0 0.0
  %334 = vmatprep.mubr.f32.mxu0 0.0
  %335 = vmatmul.mubr.f32.gmra.mrb[0].mxu0 %v262
  %v336 = vpop.f32.mrb[0].mxu0
  %v337 = vadd.f32 %v260, %v336
  %v338 = vpop.f32.mrb[0].mxu0
  %339 = vmatprep.mubr.f32.mxu0 0.0
  %340 = vmatmul.mubr.f32.gmra.mrb[0].mxu0 %v265
  %v341 = vpop.f32.mrb[0].mxu0
  %v342 = vadd.f32 %v260, %v341
  %v343 = vpop.f32.mrb[0].mxu0
  %344 = vmatprep.mubr.f32.mxu0 0.0
  %345 = vmatmul.mubr.f32.gmra.mrb[0].mxu0 %v268
  %v346 = vpop.f32.mrb[0].mxu0
  %v347 = vadd.f32 %v260, %v346
  %v348 = vpop.f32.mrb[0].mxu0
  %349 = vdwg.mxu0
  %v350 = vlaneseq
  %v351 = vshrl.u32 %v350, 7
  %v352 = vsub.s32 0, %v351
  %v353 = vrot.slane %v250, %v352
  %354 = vmatprep.subr.mxu0 0.0
  %355 = vmatpush1.msra.mxu0 %v246
  %356 = vmatprep.subr.mxu0 0.0
  %357 = vmatpush1.msra.mxu0 %v247
  %358 = vmatprep.subr.mxu0 0.0
  %359 = vmatpush1.msra.mxu0 %v248
  %360 = vmatprep.subr.mxu0 0.0
  %361 = vmatpush1.msra.mxu0 %v249
  %362 = vmatprep.subr.mxu0 0.0
  %363 = vmatpush1.msra.mxu0 0.0
  %364 = vmatprep.subr.mxu0 0.0
  %365 = vmatpush1.msra.mxu0 0.0
  %366 = vmatprep.subr.mxu0 0.0
  %367 = vmatpush1.msra.mxu0 0.0
  %368 = vmatprep.subr.mxu0 0.0
  %369 = vmatpush1.msra.mxu0 0.0
  %370 = vmatprep.subr.mxu0 0.0
  %371 = vmatpush1.msra.mxu0 0.0
  %372 = vmatprep.subr.mxu0 0.0
  %373 = vmatpush1.msra.mxu0 0.0
  %374 = vmatprep.subr.mxu0 0.0
  %375 = vmatpush1.msra.mxu0 0.0
  %376 = vmatprep.subr.mxu0 0.0
  %377 = vmatpush1.msra.mxu0 0.0
  %378 = vmatprep.subr.mxu0 0.0
  %379 = vmatpush1.msra.mxu0 0.0
  %380 = vmatprep.subr.mxu0 0.0
  %381 = vmatpush1.msra.mxu0 0.0
  %382 = vmatprep.subr.mxu0 0.0
  %383 = vmatpush1.msra.mxu0 0.0
  %384 = vmatprep.subr.mxu0 0.0
  %385 = vmatpush1.msra.mxu0 0.0
  %386 = vmatprep.subr.mxu0 0.0
  %387 = vmatpush1.msra.mxu0 0.0
  %388 = vmatprep.subr.mxu0 0.0
  %389 = vmatpush1.msra.mxu0 0.0
  %390 = vmatprep.subr.mxu0 0.0
  %391 = vmatpush1.msra.mxu0 0.0
  %392 = vmatprep.subr.mxu0 0.0
  %393 = vmatpush1.msra.mxu0 0.0
  %394 = vmatprep.subr.mxu0 0.0
  %395 = vmatpush1.msra.mxu0 0.0
  %396 = vmatprep.subr.mxu0 0.0
  %397 = vmatpush1.msra.mxu0 0.0
  %398 = vmatprep.subr.mxu0 0.0
  %399 = vmatpush1.msra.mxu0 0.0
  %400 = vmatprep.subr.mxu0 0.0
  %401 = vmatpush1.msra.mxu0 0.0
  %402 = vmatprep.subr.mxu0 0.0
  %403 = vmatpush1.msra.mxu0 0.0
  %404 = vmatprep.subr.mxu0 0.0
  %405 = vmatpush1.msra.mxu0 0.0
  %406 = vmatprep.subr.mxu0 0.0
  %407 = vmatpush1.msra.mxu0 0.0
  %408 = vmatprep.subr.mxu0 0.0
  %409 = vmatpush1.msra.mxu0 0.0
  %410 = vmatprep.subr.mxu0 0.0
  %411 = vmatpush1.msra.mxu0 0.0
  %412 = vmatprep.subr.mxu0 0.0
  %413 = vmatpush1.msra.mxu0 0.0
  %414 = vmatprep.subr.mxu0 0.0
  %415 = vmatpush1.msra.mxu0 0.0
  %416 = vmatprep.subr.mxu0 0.0
  %417 = vmatpush1.msra.mxu0 0.0
  %418 = vmatprep.mubr.f32.mxu0 0.0
  %419 = vmatmul.mubr.f32.gmra.mrb[0].mxu0 %v262
  %v420 = vpop.f32.mrb[0].mxu0
  %v421 = vadd.f32 %v353, %v420
  %v422 = vpop.f32.mrb[0].mxu0
  %423 = vmatprep.mubr.f32.mxu0 0.0
  %424 = vmatmul.mubr.f32.gmra.mrb[0].mxu0 %v265
  %v425 = vpop.f32.mrb[0].mxu0
  %v426 = vadd.f32 %v353, %v425
  %v427 = vpop.f32.mrb[0].mxu0
  %428 = vmatprep.mubr.f32.mxu0 0.0
  %429 = vmatmul.mubr.f32.gmra.mrb[0].mxu0 %v268
  %v430 = vpop.f32.mrb[0].mxu0
  %v431 = vadd.f32 %v353, %v430
  %v432 = vpop.f32.mrb[0].mxu0
  %433 = vdwg.mxu0
  %v434 = vlaneseq
  %v435 = vshrl.u32 %v434, 7
  %v436 = vsub.s32 0, %v435
  %v437 = vrot.slane %v256, %v436
  %438 = vmatprep.subr.mxu0 0.0
  %439 = vmatpush1.msra.mxu0 %v252
  %440 = vmatprep.subr.mxu0 0.0
  %441 = vmatpush1.msra.mxu0 %v253
  %442 = vmatprep.subr.mxu0 0.0
  %443 = vmatpush1.msra.mxu0 %v254
  %444 = vmatprep.subr.mxu0 0.0
  %445 = vmatpush1.msra.mxu0 %v255
  %446 = vmatprep.subr.mxu0 0.0
  %447 = vmatpush1.msra.mxu0 0.0
  %448 = vmatprep.subr.mxu0 0.0
  %449 = vmatpush1.msra.mxu0 0.0
  %450 = vmatprep.subr.mxu0 0.0
  %451 = vmatpush1.msra.mxu0 0.0
  %452 = vmatprep.subr.mxu0 0.0
  %453 = vmatpush1.msra.mxu0 0.0
  %454 = vmatprep.subr.mxu0 0.0
  %455 = vmatpush1.msra.mxu0 0.0
  %456 = vmatprep.subr.mxu0 0.0
  %457 = vmatpush1.msra.mxu0 0.0
  %458 = vmatprep.subr.mxu0 0.0
  %459 = vmatpush1.msra.mxu0 0.0
  %460 = vmatprep.subr.mxu0 0.0
  %461 = vmatpush1.msra.mxu0 0.0
  %462 = vmatprep.subr.mxu0 0.0
  %463 = vmatpush1.msra.mxu0 0.0
  %464 = vmatprep.subr.mxu0 0.0
  %465 = vmatpush1.msra.mxu0 0.0
  %466 = vmatprep.subr.mxu0 0.0
  %467 = vmatpush1.msra.mxu0 0.0
  %468 = vmatprep.subr.mxu0 0.0
  %469 = vmatpush1.msra.mxu0 0.0
  %470 = vmatprep.subr.mxu0 0.0
  %471 = vmatpush1.msra.mxu0 0.0
  %472 = vmatprep.subr.mxu0 0.0
  %473 = vmatpush1.msra.mxu0 0.0
  %474 = vmatprep.subr.mxu0 0.0
  %475 = vmatpush1.msra.mxu0 0.0
  %476 = vmatprep.subr.mxu0 0.0
  %477 = vmatpush1.msra.mxu0 0.0
  %478 = vmatprep.subr.mxu0 0.0
  %479 = vmatpush1.msra.mxu0 0.0
  %480 = vmatprep.subr.mxu0 0.0
  %481 = vmatpush1.msra.mxu0 0.0
  %482 = vmatprep.subr.mxu0 0.0
  %483 = vmatpush1.msra.mxu0 0.0
  %484 = vmatprep.subr.mxu0 0.0
  %485 = vmatpush1.msra.mxu0 0.0
  %486 = vmatprep.subr.mxu0 0.0
  %487 = vmatpush1.msra.mxu0 0.0
  %488 = vmatprep.subr.mxu0 0.0
  %489 = vmatpush1.msra.mxu0 0.0
  %490 = vmatprep.subr.mxu0 0.0
  %491 = vmatpush1.msra.mxu0 0.0
  %492 = vmatprep.subr.mxu0 0.0
  %493 = vmatpush1.msra.mxu0 0.0
  %494 = vmatprep.subr.mxu0 0.0
  %495 = vmatpush1.msra.mxu0 0.0
  %496 = vmatprep.subr.mxu0 0.0
  %497 = vmatpush1.msra.mxu0 0.0
  %498 = vmatprep.subr.mxu0 0.0
  %499 = vmatpush1.msra.mxu0 0.0
  %500 = vmatprep.subr.mxu0 0.0
  %501 = vmatpush1.msra.mxu0 0.0
  %502 = vmatprep.mubr.f32.mxu0 0.0
  %503 = vmatmul.mubr.f32.gmra.mrb[0].mxu0 %v262
  %v504 = vpop.f32.mrb[0].mxu0
  %v505 = vadd.f32 %v437, %v504
  %v506 = vpop.f32.mrb[0].mxu0
  %507 = vmatprep.mubr.f32.mxu0 0.0
  %508 = vmatmul.mubr.f32.gmra.mrb[0].mxu0 %v265
  %v509 = vpop.f32.mrb[0].mxu0
  %v510 = vadd.f32 %v437, %v509
  %v511 = vpop.f32.mrb[0].mxu0
  %512 = vmatprep.mubr.f32.mxu0 0.0
  %513 = vmatmul.mubr.f32.gmra.mrb[0].mxu0 %v268
  %v514 = vpop.f32.mrb[0].mxu0
  %v515 = vadd.f32 %v437, %v514
  %v516 = vpop.f32.mrb[0].mxu0
  %517 = vdwg.mxu0
  %vm518 = vcmask 64512
  %v520 = vsel %vm518, %v337, 0
  %v523 = vsel %vm518, %v342, 0
  %v526 = vsel %vm518, %v347, 0
  %v529 = vsel %vm518, %v421, 0
  %v532 = vsel %vm518, %v426, 0
  %v535 = vsel %vm518, %v431, 0
  %537 = vmatprep.subr.mxu0 0.0
  %538 = vmatpush1.xpose.msra.mxu0 %v529
  %539 = vmatprep.subr.mxu0 0.0
  %540 = vmatpush1.xpose.msra.mxu0 %v532
  %541 = vmatprep.subr.mxu0 0.0
  %542 = vmatpush1.xpose.msra.mxu0 %v535
  %543 = vmatprep.subr.mxu0 0.0
  %544 = vmatpush1.xpose.msra.mxu0 0.0
  %545 = vmatprep.subr.mxu0 0.0
  %546 = vmatpush1.xpose.msra.mxu0 0.0
  %547 = vmatprep.subr.mxu0 0.0
  %548 = vmatpush1.xpose.msra.mxu0 0.0
  %549 = vmatprep.subr.mxu0 0.0
  %550 = vmatpush1.xpose.msra.mxu0 0.0
  %551 = vmatprep.subr.mxu0 0.0
  %552 = vmatpush1.xpose.msra.mxu0 0.0
  %553 = vmatprep.subr.mxu0 0.0
  %554 = vmatpush1.xpose.msra.mxu0 0.0
  %555 = vmatprep.subr.mxu0 0.0
  %556 = vmatpush1.xpose.msra.mxu0 0.0
  %557 = vmatprep.subr.mxu0 0.0
  %558 = vmatpush1.xpose.msra.mxu0 0.0
  %559 = vmatprep.subr.mxu0 0.0
  %560 = vmatpush1.xpose.msra.mxu0 0.0
  %561 = vmatprep.subr.mxu0 0.0
  %562 = vmatpush1.xpose.msra.mxu0 0.0
  %563 = vmatprep.subr.mxu0 0.0
  %564 = vmatpush1.xpose.msra.mxu0 0.0
  %565 = vmatprep.subr.mxu0 0.0
  %566 = vmatpush1.xpose.msra.mxu0 0.0
  %567 = vmatprep.subr.mxu0 0.0
  %568 = vmatpush1.xpose.msra.mxu0 0.0
  %569 = vmatprep.subr.mxu0 0.0
  %570 = vmatpush1.xpose.msra.mxu0 0.0
  %571 = vmatprep.subr.mxu0 0.0
  %572 = vmatpush1.xpose.msra.mxu0 0.0
  %573 = vmatprep.subr.mxu0 0.0
  %574 = vmatpush1.xpose.msra.mxu0 0.0
  %575 = vmatprep.subr.mxu0 0.0
  %576 = vmatpush1.xpose.msra.mxu0 0.0
  %577 = vmatprep.subr.mxu0 0.0
  %578 = vmatpush1.xpose.msra.mxu0 0.0
  %579 = vmatprep.subr.mxu0 0.0
  %580 = vmatpush1.xpose.msra.mxu0 0.0
  %581 = vmatprep.subr.mxu0 0.0
  %582 = vmatpush1.xpose.msra.mxu0 0.0
  %583 = vmatprep.subr.mxu0 0.0
  %584 = vmatpush1.xpose.msra.mxu0 0.0
  %585 = vmatprep.subr.mxu0 0.0
  %586 = vmatpush1.xpose.msra.mxu0 0.0
  %587 = vmatprep.subr.mxu0 0.0
  %588 = vmatpush1.xpose.msra.mxu0 0.0
  %589 = vmatprep.subr.mxu0 0.0
  %590 = vmatpush1.xpose.msra.mxu0 0.0
  %591 = vmatprep.subr.mxu0 0.0
  %592 = vmatpush1.xpose.msra.mxu0 0.0
  %593 = vmatprep.subr.mxu0 0.0
  %594 = vmatpush1.xpose.msra.mxu0 0.0
  %595 = vmatprep.subr.mxu0 0.0
  %596 = vmatpush1.xpose.msra.mxu0 0.0
  %597 = vmatprep.subr.mxu0 0.0
  %598 = vmatpush1.xpose.msra.mxu0 0.0
  %599 = vmatprep.subr.mxu0 0.0
  %600 = vmatpush1.xpose.msra.mxu0 0.0
  %601 = vmatprep.mubr.f32.mxu0 0.0
  %602 = vmatmul.mubr.f32.gmra.mrb[0].mxu0 %v520
  %v603 = vpop.f32.mrb[0].mxu0
  %v604 = vadd.f32 %v236, %v603
  %v605 = vpop.f32.mrb[0].mxu0
  %606 = vmatprep.mubr.f32.mxu0 0.0
  %607 = vmatmul.mubr.f32.gmra.mrb[0].mxu0 %v523
  %v608 = vpop.f32.mrb[0].mxu0
  %v609 = vadd.f32 %v237, %v608
  %v610 = vpop.f32.mrb[0].mxu0
  %611 = vmatprep.mubr.f32.mxu0 0.0
  %612 = vmatmul.mubr.f32.gmra.mrb[0].mxu0 %v526
  %v613 = vpop.f32.mrb[0].mxu0
  %v614 = vadd.f32 %v238, %v613
  %v615 = vpop.f32.mrb[0].mxu0
  %616 = vdwg.mxu0
  %vm617 = vcmask 195584
  %v618 = vsel %vm617, %v604, -inf
  %619 = vmax.xlane.f32.xlu0 %v618
  %v620 = vpop.xlane.xlu0 %619
  %v621 = vsel %vm617, %v609, -inf
  %622 = vmax.xlane.f32.xlu0 %v621
  %v623 = vpop.xlane.xlu0 %622
  %v624 = vsel %vm617, %v614, -inf
  %625 = vmax.xlane.f32.xlu0 %v624
  %v626 = vpop.xlane.xlu0 %625
  %v627 = vsub.f32 %v604, %v620
  %v628 = vsub.f32 %v609, %v623
  %v629 = vsub.f32 %v614, %v626
  %v630 = vmul.f32 %v627, 1.442695
  %v631 = vpow.pop %v630
  %v632 = vmul.f32 %v628, 1.442695
  %v633 = vpow.pop %v632
  %v634 = vmul.f32 %v629, 1.442695
  %v635 = vpow.pop %v634
  %v636 = vsel %vm617, %v631, 0.0
  %637 = vadd.xlane.f32.xlu0 %v636
  %v638 = vpop.xlane.xlu0 %637
  %v639 = vsel %vm617, %v633, 0.0
  %640 = vadd.xlane.f32.xlu0 %v639
  %v641 = vpop.xlane.xlu0 %640
  %v642 = vsel %vm617, %v635, 0.0
  %643 = vadd.xlane.f32.xlu0 %v642
  %v644 = vpop.xlane.xlu0 %643
  %v645 = vrcp.pop %v638
  %v646 = vrcp.pop %v641
  %v647 = vrcp.pop %v644
  %v648 = vmul.f32 %v631, %v645
  %v649 = vmul.f32 %v633, %v646
  %v650 = vmul.f32 %v635, %v647
  %v652 = vsel %vm617, %v648, 0
  %v655 = vsel %vm617, %v649, 0
  %v658 = vsel %vm617, %v650, 0
  %660 = vmatprep.subr.mxu0 0.0
  %661 = vmatpush1.msra.mxu0 %v505
  %662 = vmatprep.subr.mxu0 0.0
  %663 = vmatpush1.msra.mxu0 %v510
  %664 = vmatprep.subr.mxu0 0.0
  %665 = vmatpush1.msra.mxu0 %v515
  %666 = vmatprep.subr.mxu0 0.0
  %667 = vmatpush1.msra.mxu0 0.0
  %668 = vmatprep.subr.mxu0 0.0
  %669 = vmatpush1.msra.mxu0 0.0
  %670 = vmatprep.subr.mxu0 0.0
  %671 = vmatpush1.msra.mxu0 0.0
  %672 = vmatprep.subr.mxu0 0.0
  %673 = vmatpush1.msra.mxu0 0.0
  %674 = vmatprep.subr.mxu0 0.0
  %675 = vmatpush1.msra.mxu0 0.0
  %676 = vmatprep.subr.mxu0 0.0
  %677 = vmatpush1.msra.mxu0 0.0
  %678 = vmatprep.subr.mxu0 0.0
  %679 = vmatpush1.msra.mxu0 0.0
  %680 = vmatprep.subr.mxu0 0.0
  %681 = vmatpush1.msra.mxu0 0.0
  %682 = vmatprep.subr.mxu0 0.0
  %683 = vmatpush1.msra.mxu0 0.0
  %684 = vmatprep.subr.mxu0 0.0
  %685 = vmatpush1.msra.mxu0 0.0
  %686 = vmatprep.subr.mxu0 0.0
  %687 = vmatpush1.msra.mxu0 0.0
  %688 = vmatprep.subr.mxu0 0.0
  %689 = vmatpush1.msra.mxu0 0.0
  %690 = vmatprep.subr.mxu0 0.0
  %691 = vmatpush1.msra.mxu0 0.0
  %692 = vmatprep.subr.mxu0 0.0
  %693 = vmatpush1.msra.mxu0 0.0
  %694 = vmatprep.subr.mxu0 0.0
  %695 = vmatpush1.msra.mxu0 0.0
  %696 = vmatprep.subr.mxu0 0.0
  %697 = vmatpush1.msra.mxu0 0.0
  %698 = vmatprep.subr.mxu0 0.0
  %699 = vmatpush1.msra.mxu0 0.0
  %700 = vmatprep.subr.mxu0 0.0
  %701 = vmatpush1.msra.mxu0 0.0
  %702 = vmatprep.subr.mxu0 0.0
  %703 = vmatpush1.msra.mxu0 0.0
  %704 = vmatprep.subr.mxu0 0.0
  %705 = vmatpush1.msra.mxu0 0.0
  %706 = vmatprep.subr.mxu0 0.0
  %707 = vmatpush1.msra.mxu0 0.0
  %708 = vmatprep.subr.mxu0 0.0
  %709 = vmatpush1.msra.mxu0 0.0
  %710 = vmatprep.subr.mxu0 0.0
  %711 = vmatpush1.msra.mxu0 0.0
  %712 = vmatprep.subr.mxu0 0.0
  %713 = vmatpush1.msra.mxu0 0.0
  %714 = vmatprep.subr.mxu0 0.0
  %715 = vmatpush1.msra.mxu0 0.0
  %716 = vmatprep.subr.mxu0 0.0
  %717 = vmatpush1.msra.mxu0 0.0
  %718 = vmatprep.subr.mxu0 0.0
  %719 = vmatpush1.msra.mxu0 0.0
  %720 = vmatprep.subr.mxu0 0.0
  %721 = vmatpush1.msra.mxu0 0.0
  %722 = vmatprep.subr.mxu0 0.0
  %723 = vmatpush1.msra.mxu0 0.0
  %724 = vmatprep.mubr.f32.mxu0 0.0
  %725 = vmatmul.mubr.f32.gmra.mrb[0].mxu0 %v652
  %v726 = vpop.f32.mrb[0].mxu0
  %v727 = vadd.f32 0.0, %v726
  %v728 = vpop.f32.mrb[0].mxu0
  %729 = vmatprep.mubr.f32.mxu0 0.0
  %730 = vmatmul.mubr.f32.gmra.mrb[0].mxu0 %v655
  %v731 = vpop.f32.mrb[0].mxu0
  %v732 = vadd.f32 0.0, %v731
  %v733 = vpop.f32.mrb[0].mxu0
  %734 = vmatprep.mubr.f32.mxu0 0.0
  %735 = vmatmul.mubr.f32.gmra.mrb[0].mxu0 %v658
  %v736 = vpop.f32.mrb[0].mxu0
  %v737 = vadd.f32 0.0, %v736
  %v738 = vpop.f32.mrb[0].mxu0
  %739 = vdwg.mxu0
  %v740 = vld [vmem:[%s7] sm:$0xff]
  %s741 = scalar_lea.vmem %s6, 120
  %v742 = vld [vmem:[%s741] sm:$0xff]
  %v743 = vld [vmem:[%s741 + $0x8] sm:$0xff]
  %v744 = vld [vmem:[%s741 + $0x10] sm:$0xff]
  %v745 = vld [vmem:[%s741 + $0x18] sm:$0xff]
  %v746 = vld [vmem:[%s741 + $0x20] sm:$0xff]
  %s747 = scalar_lea.vmem %s6, 160
  %v748 = vld [vmem:[%s747] sm:$0xff]
  %v749 = vld [vmem:[%s747 + $0x8] sm:$0xff]
  %v750 = vld [vmem:[%s747 + $0x10] sm:$0xff]
  %v751 = vld [vmem:[%s747 + $0x18] sm:$0xff]
  %v752 = vld [vmem:[%s747 + $0x20] sm:$0xff]
  %s753 = scalar_lea.vmem %s6, 200
  %v754 = vld [vmem:[%s753] sm:$0xff]
  %v755 = vld [vmem:[%s753 + $0x8] sm:$0xff]
  %v756 = vld [vmem:[%s753 + $0x10] sm:$0xff]
  %v757 = vld [vmem:[%s753 + $0x18] sm:$0xff]
  %v758 = vld [vmem:[%s753 + $0x20] sm:$0xff]
  %v759 = vlaneseq
  %v760 = vshrl.u32 %v759, 7
  %v761 = vsub.s32 0, %v760
  %v762 = vrot.slane %v746, %v761
  %763 = vmatprep.subr.mxu0 0.0
  %764 = vmatpush1.msra.mxu0 %v742
  %765 = vmatprep.subr.mxu0 0.0
  %766 = vmatpush1.msra.mxu0 %v743
  %767 = vmatprep.subr.mxu0 0.0
  %768 = vmatpush1.msra.mxu0 %v744
  %769 = vmatprep.subr.mxu0 0.0
  %770 = vmatpush1.msra.mxu0 %v745
  %771 = vmatprep.subr.mxu0 0.0
  %772 = vmatpush1.msra.mxu0 0.0
  %773 = vmatprep.subr.mxu0 0.0
  %774 = vmatpush1.msra.mxu0 0.0
  %775 = vmatprep.subr.mxu0 0.0
  %776 = vmatpush1.msra.mxu0 0.0
  %777 = vmatprep.subr.mxu0 0.0
  %778 = vmatpush1.msra.mxu0 0.0
  %779 = vmatprep.subr.mxu0 0.0
  %780 = vmatpush1.msra.mxu0 0.0
  %781 = vmatprep.subr.mxu0 0.0
  %782 = vmatpush1.msra.mxu0 0.0
  %783 = vmatprep.subr.mxu0 0.0
  %784 = vmatpush1.msra.mxu0 0.0
  %785 = vmatprep.subr.mxu0 0.0
  %786 = vmatpush1.msra.mxu0 0.0
  %787 = vmatprep.subr.mxu0 0.0
  %788 = vmatpush1.msra.mxu0 0.0
  %789 = vmatprep.subr.mxu0 0.0
  %790 = vmatpush1.msra.mxu0 0.0
  %791 = vmatprep.subr.mxu0 0.0
  %792 = vmatpush1.msra.mxu0 0.0
  %793 = vmatprep.subr.mxu0 0.0
  %794 = vmatpush1.msra.mxu0 0.0
  %795 = vmatprep.subr.mxu0 0.0
  %796 = vmatpush1.msra.mxu0 0.0
  %797 = vmatprep.subr.mxu0 0.0
  %798 = vmatpush1.msra.mxu0 0.0
  %799 = vmatprep.subr.mxu0 0.0
  %800 = vmatpush1.msra.mxu0 0.0
  %801 = vmatprep.subr.mxu0 0.0
  %802 = vmatpush1.msra.mxu0 0.0
  %803 = vmatprep.subr.mxu0 0.0
  %804 = vmatpush1.msra.mxu0 0.0
  %805 = vmatprep.subr.mxu0 0.0
  %806 = vmatpush1.msra.mxu0 0.0
  %807 = vmatprep.subr.mxu0 0.0
  %808 = vmatpush1.msra.mxu0 0.0
  %809 = vmatprep.subr.mxu0 0.0
  %810 = vmatpush1.msra.mxu0 0.0
  %811 = vmatprep.subr.mxu0 0.0
  %812 = vmatpush1.msra.mxu0 0.0
  %813 = vmatprep.subr.mxu0 0.0
  %814 = vmatpush1.msra.mxu0 0.0
  %815 = vmatprep.subr.mxu0 0.0
  %816 = vmatpush1.msra.mxu0 0.0
  %817 = vmatprep.subr.mxu0 0.0
  %818 = vmatpush1.msra.mxu0 0.0
  %819 = vmatprep.subr.mxu0 0.0
  %820 = vmatpush1.msra.mxu0 0.0
  %821 = vmatprep.subr.mxu0 0.0
  %822 = vmatpush1.msra.mxu0 0.0
  %823 = vmatprep.subr.mxu0 0.0
  %824 = vmatpush1.msra.mxu0 0.0
  %825 = vmatprep.subr.mxu0 0.0
  %826 = vmatpush1.msra.mxu0 0.0
  %827 = vmatprep.mubr.f32.mxu0 0.0
  %828 = vmatmul.mubr.f32.gmra.mrb[0].mxu0 %v262
  %v829 = vpop.f32.mrb[0].mxu0
  %v830 = vadd.f32 %v762, %v829
  %v831 = vpop.f32.mrb[0].mxu0
  %832 = vmatprep.mubr.f32.mxu0 0.0
  %833 = vmatmul.mubr.f32.gmra.mrb[0].mxu0 %v265
  %v834 = vpop.f32.mrb[0].mxu0
  %v835 = vadd.f32 %v762, %v834
  %v836 = vpop.f32.mrb[0].mxu0
  %837 = vmatprep.mubr.f32.mxu0 0.0
  %838 = vmatmul.mubr.f32.gmra.mrb[0].mxu0 %v268
  %v839 = vpop.f32.mrb[0].mxu0
  %v840 = vadd.f32 %v762, %v839
  %v841 = vpop.f32.mrb[0].mxu0
  %842 = vdwg.mxu0
  %v843 = vlaneseq
  %v844 = vshrl.u32 %v843, 7
  %v845 = vsub.s32 0, %v844
  %v846 = vrot.slane %v752, %v845
  %847 = vmatprep.subr.mxu0 0.0
  %848 = vmatpush1.msra.mxu0 %v748
  %849 = vmatprep.subr.mxu0 0.0
  %850 = vmatpush1.msra.mxu0 %v749
  %851 = vmatprep.subr.mxu0 0.0
  %852 = vmatpush1.msra.mxu0 %v750
  %853 = vmatprep.subr.mxu0 0.0
  %854 = vmatpush1.msra.mxu0 %v751
  %855 = vmatprep.subr.mxu0 0.0
  %856 = vmatpush1.msra.mxu0 0.0
  %857 = vmatprep.subr.mxu0 0.0
  %858 = vmatpush1.msra.mxu0 0.0
  %859 = vmatprep.subr.mxu0 0.0
  %860 = vmatpush1.msra.mxu0 0.0
  %861 = vmatprep.subr.mxu0 0.0
  %862 = vmatpush1.msra.mxu0 0.0
  %863 = vmatprep.subr.mxu0 0.0
  %864 = vmatpush1.msra.mxu0 0.0
  %865 = vmatprep.subr.mxu0 0.0
  %866 = vmatpush1.msra.mxu0 0.0
  %867 = vmatprep.subr.mxu0 0.0
  %868 = vmatpush1.msra.mxu0 0.0
  %869 = vmatprep.subr.mxu0 0.0
  %870 = vmatpush1.msra.mxu0 0.0
  %871 = vmatprep.subr.mxu0 0.0
  %872 = vmatpush1.msra.mxu0 0.0
  %873 = vmatprep.subr.mxu0 0.0
  %874 = vmatpush1.msra.mxu0 0.0
  %875 = vmatprep.subr.mxu0 0.0
  %876 = vmatpush1.msra.mxu0 0.0
  %877 = vmatprep.subr.mxu0 0.0
  %878 = vmatpush1.msra.mxu0 0.0
  %879 = vmatprep.subr.mxu0 0.0
  %880 = vmatpush1.msra.mxu0 0.0
  %881 = vmatprep.subr.mxu0 0.0
  %882 = vmatpush1.msra.mxu0 0.0
  %883 = vmatprep.subr.mxu0 0.0
  %884 = vmatpush1.msra.mxu0 0.0
  %885 = vmatprep.subr.mxu0 0.0
  %886 = vmatpush1.msra.mxu0 0.0
  %887 = vmatprep.subr.mxu0 0.0
  %888 = vmatpush1.msra.mxu0 0.0
  %889 = vmatprep.subr.mxu0 0.0
  %890 = vmatpush1.msra.mxu0 0.0
  %891 = vmatprep.subr.mxu0 0.0
  %892 = vmatpush1.msra.mxu0 0.0
  %893 = vmatprep.subr.mxu0 0.0
  %894 = vmatpush1.msra.mxu0 0.0
  %895 = vmatprep.subr.mxu0 0.0
  %896 = vmatpush1.msra.mxu0 0.0
  %897 = vmatprep.subr.mxu0 0.0
  %898 = vmatpush1.msra.mxu0 0.0
  %899 = vmatprep.subr.mxu0 0.0
  %900 = vmatpush1.msra.mxu0 0.0
  %901 = vmatprep.subr.mxu0 0.0
  %902 = vmatpush1.msra.mxu0 0.0
  %903 = vmatprep.subr.mxu0 0.0
  %904 = vmatpush1.msra.mxu0 0.0
  %905 = vmatprep.subr.mxu0 0.0
  %906 = vmatpush1.msra.mxu0 0.0
  %907 = vmatprep.subr.mxu0 0.0
  %908 = vmatpush1.msra.mxu0 0.0
  %909 = vmatprep.subr.mxu0 0.0
  %910 = vmatpush1.msra.mxu0 0.0
  %911 = vmatprep.mubr.f32.mxu0 0.0
  %912 = vmatmul.mubr.f32.gmra.mrb[0].mxu0 %v262
  %v913 = vpop.f32.mrb[0].mxu0
  %v914 = vadd.f32 %v846, %v913
  %v915 = vpop.f32.mrb[0].mxu0
  %916 = vmatprep.mubr.f32.mxu0 0.0
  %917 = vmatmul.mubr.f32.gmra.mrb[0].mxu0 %v265
  %v918 = vpop.f32.mrb[0].mxu0
  %v919 = vadd.f32 %v846, %v918
  %v920 = vpop.f32.mrb[0].mxu0
  %921 = vmatprep.mubr.f32.mxu0 0.0
  %922 = vmatmul.mubr.f32.gmra.mrb[0].mxu0 %v268
  %v923 = vpop.f32.mrb[0].mxu0
  %v924 = vadd.f32 %v846, %v923
  %v925 = vpop.f32.mrb[0].mxu0
  %926 = vdwg.mxu0
  %v927 = vlaneseq
  %v928 = vshrl.u32 %v927, 7
  %v929 = vsub.s32 0, %v928
  %v930 = vrot.slane %v758, %v929
  %931 = vmatprep.subr.mxu0 0.0
  %932 = vmatpush1.msra.mxu0 %v754
  %933 = vmatprep.subr.mxu0 0.0
  %934 = vmatpush1.msra.mxu0 %v755
  %935 = vmatprep.subr.mxu0 0.0
  %936 = vmatpush1.msra.mxu0 %v756
  %937 = vmatprep.subr.mxu0 0.0
  %938 = vmatpush1.msra.mxu0 %v757
  %939 = vmatprep.subr.mxu0 0.0
  %940 = vmatpush1.msra.mxu0 0.0
  %941 = vmatprep.subr.mxu0 0.0
  %942 = vmatpush1.msra.mxu0 0.0
  %943 = vmatprep.subr.mxu0 0.0
  %944 = vmatpush1.msra.mxu0 0.0
  %945 = vmatprep.subr.mxu0 0.0
  %946 = vmatpush1.msra.mxu0 0.0
  %947 = vmatprep.subr.mxu0 0.0
  %948 = vmatpush1.msra.mxu0 0.0
  %949 = vmatprep.subr.mxu0 0.0
  %950 = vmatpush1.msra.mxu0 0.0
  %951 = vmatprep.subr.mxu0 0.0
  %952 = vmatpush1.msra.mxu0 0.0
  %953 = vmatprep.subr.mxu0 0.0
  %954 = vmatpush1.msra.mxu0 0.0
  %955 = vmatprep.subr.mxu0 0.0
  %956 = vmatpush1.msra.mxu0 0.0
  %957 = vmatprep.subr.mxu0 0.0
  %958 = vmatpush1.msra.mxu0 0.0
  %959 = vmatprep.subr.mxu0 0.0
  %960 = vmatpush1.msra.mxu0 0.0
  %961 = vmatprep.subr.mxu0 0.0
  %962 = vmatpush1.msra.mxu0 0.0
  %963 = vmatprep.subr.mxu0 0.0
  %964 = vmatpush1.msra.mxu0 0.0
  %965 = vmatprep.subr.mxu0 0.0
  %966 = vmatpush1.msra.mxu0 0.0
  %967 = vmatprep.subr.mxu0 0.0
  %968 = vmatpush1.msra.mxu0 0.0
  %969 = vmatprep.subr.mxu0 0.0
  %970 = vmatpush1.msra.mxu0 0.0
  %971 = vmatprep.subr.mxu0 0.0
  %972 = vmatpush1.msra.mxu0 0.0
  %973 = vmatprep.subr.mxu0 0.0
  %974 = vmatpush1.msra.mxu0 0.0
  %975 = vmatprep.subr.mxu0 0.0
  %976 = vmatpush1.msra.mxu0 0.0
  %977 = vmatprep.subr.mxu0 0.0
  %978 = vmatpush1.msra.mxu0 0.0
  %979 = vmatprep.subr.mxu0 0.0
  %980 = vmatpush1.msra.mxu0 0.0
  %981 = vmatprep.subr.mxu0 0.0
  %982 = vmatpush1.msra.mxu0 0.0
  %983 = vmatprep.subr.mxu0 0.0
  %984 = vmatpush1.msra.mxu0 0.0
  %985 = vmatprep.subr.mxu0 0.0
  %986 = vmatpush1.msra.mxu0 0.0
  %987 = vmatprep.subr.mxu0 0.0
  %988 = vmatpush1.msra.mxu0 0.0
  %989 = vmatprep.subr.mxu0 0.0
  %990 = vmatpush1.msra.mxu0 0.0
  %991 = vmatprep.subr.mxu0 0.0
  %992 = vmatpush1.msra.mxu0 0.0
  %993 = vmatprep.subr.mxu0 0.0
  %994 = vmatpush1.msra.mxu0 0.0
  %995 = vmatprep.mubr.f32.mxu0 0.0
  %996 = vmatmul.mubr.f32.gmra.mrb[0].mxu0 %v262
  %v997 = vpop.f32.mrb[0].mxu0
  %v998 = vadd.f32 %v930, %v997
  %v999 = vpop.f32.mrb[0].mxu0
  %1000 = vmatprep.mubr.f32.mxu0 0.0
  %1001 = vmatmul.mubr.f32.gmra.mrb[0].mxu0 %v265
  %v1002 = vpop.f32.mrb[0].mxu0
  %v1003 = vadd.f32 %v930, %v1002
  %v1004 = vpop.f32.mrb[0].mxu0
  %1005 = vmatprep.mubr.f32.mxu0 0.0
  %1006 = vmatmul.mubr.f32.gmra.mrb[0].mxu0 %v268
  %v1007 = vpop.f32.mrb[0].mxu0
  %v1008 = vadd.f32 %v930, %v1007
  %v1009 = vpop.f32.mrb[0].mxu0
  %1010 = vdwg.mxu0
  %v1012 = vsel %vm518, %v830, 0
  %v1015 = vsel %vm518, %v835, 0
  %v1018 = vsel %vm518, %v840, 0
  %v1021 = vsel %vm518, %v914, 0
  %v1024 = vsel %vm518, %v919, 0
  %v1027 = vsel %vm518, %v924, 0
  %1029 = vmatprep.subr.mxu0 0.0
  %1030 = vmatpush1.xpose.msra.mxu0 %v1021
  %1031 = vmatprep.subr.mxu0 0.0
  %1032 = vmatpush1.xpose.msra.mxu0 %v1024
  %1033 = vmatprep.subr.mxu0 0.0
  %1034 = vmatpush1.xpose.msra.mxu0 %v1027
  %1035 = vmatprep.subr.mxu0 0.0
  %1036 = vmatpush1.xpose.msra.mxu0 0.0
  %1037 = vmatprep.subr.mxu0 0.0
  %1038 = vmatpush1.xpose.msra.mxu0 0.0
  %1039 = vmatprep.subr.mxu0 0.0
  %1040 = vmatpush1.xpose.msra.mxu0 0.0
  %1041 = vmatprep.subr.mxu0 0.0
  %1042 = vmatpush1.xpose.msra.mxu0 0.0
  %1043 = vmatprep.subr.mxu0 0.0
  %1044 = vmatpush1.xpose.msra.mxu0 0.0
  %1045 = vmatprep.subr.mxu0 0.0
  %1046 = vmatpush1.xpose.msra.mxu0 0.0
  %1047 = vmatprep.subr.mxu0 0.0
  %1048 = vmatpush1.xpose.msra.mxu0 0.0
  %1049 = vmatprep.subr.mxu0 0.0
  %1050 = vmatpush1.xpose.msra.mxu0 0.0
  %1051 = vmatprep.subr.mxu0 0.0
  %1052 = vmatpush1.xpose.msra.mxu0 0.0
  %1053 = vmatprep.subr.mxu0 0.0
  %1054 = vmatpush1.xpose.msra.mxu0 0.0
  %1055 = vmatprep.subr.mxu0 0.0
  %1056 = vmatpush1.xpose.msra.mxu0 0.0
  %1057 = vmatprep.subr.mxu0 0.0
  %1058 = vmatpush1.xpose.msra.mxu0 0.0
  %1059 = vmatprep.subr.mxu0 0.0
  %1060 = vmatpush1.xpose.msra.mxu0 0.0
  %1061 = vmatprep.subr.mxu0 0.0
  %1062 = vmatpush1.xpose.msra.mxu0 0.0
  %1063 = vmatprep.subr.mxu0 0.0
  %1064 = vmatpush1.xpose.msra.mxu0 0.0
  %1065 = vmatprep.subr.mxu0 0.0
  %1066 = vmatpush1.xpose.msra.mxu0 0.0
  %1067 = vmatprep.subr.mxu0 0.0
  %1068 = vmatpush1.xpose.msra.mxu0 0.0
  %1069 = vmatprep.subr.mxu0 0.0
  %1070 = vmatpush1.xpose.msra.mxu0 0.0
  %1071 = vmatprep.subr.mxu0 0.0
  %1072 = vmatpush1.xpose.msra.mxu0 0.0
  %1073 = vmatprep.subr.mxu0 0.0
  %1074 = vmatpush1.xpose.msra.mxu0 0.0
  %1075 = vmatprep.subr.mxu0 0.0
  %1076 = vmatpush1.xpose.msra.mxu0 0.0
  %1077 = vmatprep.subr.mxu0 0.0
  %1078 = vmatpush1.xpose.msra.mxu0 0.0
  %1079 = vmatprep.subr.mxu0 0.0
  %1080 = vmatpush1.xpose.msra.mxu0 0.0
  %1081 = vmatprep.subr.mxu0 0.0
  %1082 = vmatpush1.xpose.msra.mxu0 0.0
  %1083 = vmatprep.subr.mxu0 0.0
  %1084 = vmatpush1.xpose.msra.mxu0 0.0
  %1085 = vmatprep.subr.mxu0 0.0
  %1086 = vmatpush1.xpose.msra.mxu0 0.0
  %1087 = vmatprep.subr.mxu0 0.0
  %1088 = vmatpush1.xpose.msra.mxu0 0.0
  %1089 = vmatprep.subr.mxu0 0.0
  %1090 = vmatpush1.xpose.msra.mxu0 0.0
  %1091 = vmatprep.subr.mxu0 0.0
  %1092 = vmatpush1.xpose.msra.mxu0 0.0
  %1093 = vmatprep.mubr.f32.mxu0 0.0
  %1094 = vmatmul.mubr.f32.gmra.mrb[0].mxu0 %v1012
  %v1095 = vpop.f32.mrb[0].mxu0
  %v1096 = vadd.f32 %v236, %v1095
  %v1097 = vpop.f32.mrb[0].mxu0
  %1098 = vmatprep.mubr.f32.mxu0 0.0
  %1099 = vmatmul.mubr.f32.gmra.mrb[0].mxu0 %v1015
  %v1100 = vpop.f32.mrb[0].mxu0
  %v1101 = vadd.f32 %v237, %v1100
  %v1102 = vpop.f32.mrb[0].mxu0
  %1103 = vmatprep.mubr.f32.mxu0 0.0
  %1104 = vmatmul.mubr.f32.gmra.mrb[0].mxu0 %v1018
  %v1105 = vpop.f32.mrb[0].mxu0
  %v1106 = vadd.f32 %v238, %v1105
  %v1107 = vpop.f32.mrb[0].mxu0
  %1108 = vdwg.mxu0
  %v1109 = vsel %vm617, %v1096, -inf
  %1110 = vmax.xlane.f32.xlu0 %v1109
  %v1111 = vpop.xlane.xlu0 %1110
  %v1112 = vsel %vm617, %v1101, -inf
  %1113 = vmax.xlane.f32.xlu0 %v1112
  %v1114 = vpop.xlane.xlu0 %1113
  %v1115 = vsel %vm617, %v1106, -inf
  %1116 = vmax.xlane.f32.xlu0 %v1115
  %v1117 = vpop.xlane.xlu0 %1116
  %v1118 = vsub.f32 %v1096, %v1111
  %v1119 = vsub.f32 %v1101, %v1114
  %v1120 = vsub.f32 %v1106, %v1117
  %v1121 = vmul.f32 %v1118, 1.442695
  %v1122 = vpow.pop %v1121
  %v1123 = vmul.f32 %v1119, 1.442695
  %v1124 = vpow.pop %v1123
  %v1125 = vmul.f32 %v1120, 1.442695
  %v1126 = vpow.pop %v1125
  %v1127 = vsel %vm617, %v1122, 0.0
  %1128 = vadd.xlane.f32.xlu0 %v1127
  %v1129 = vpop.xlane.xlu0 %1128
  %v1130 = vsel %vm617, %v1124, 0.0
  %1131 = vadd.xlane.f32.xlu0 %v1130
  %v1132 = vpop.xlane.xlu0 %1131
  %v1133 = vsel %vm617, %v1126, 0.0
  %1134 = vadd.xlane.f32.xlu0 %v1133
  %v1135 = vpop.xlane.xlu0 %1134
  %v1136 = vrcp.pop %v1129
  %v1137 = vrcp.pop %v1132
  %v1138 = vrcp.pop %v1135
  %v1139 = vmul.f32 %v1122, %v1136
  %v1140 = vmul.f32 %v1124, %v1137
  %v1141 = vmul.f32 %v1126, %v1138
  %v1143 = vsel %vm617, %v1139, 0
  %v1146 = vsel %vm617, %v1140, 0
  %v1149 = vsel %vm617, %v1141, 0
  %1151 = vmatprep.subr.mxu0 0.0
  %1152 = vmatpush1.msra.mxu0 %v998
  %1153 = vmatprep.subr.mxu0 0.0
  %1154 = vmatpush1.msra.mxu0 %v1003
  %1155 = vmatprep.subr.mxu0 0.0
  %1156 = vmatpush1.msra.mxu0 %v1008
  %1157 = vmatprep.subr.mxu0 0.0
  %1158 = vmatpush1.msra.mxu0 0.0
  %1159 = vmatprep.subr.mxu0 0.0
  %1160 = vmatpush1.msra.mxu0 0.0
  %1161 = vmatprep.subr.mxu0 0.0
  %1162 = vmatpush1.msra.mxu0 0.0
  %1163 = vmatprep.subr.mxu0 0.0
  %1164 = vmatpush1.msra.mxu0 0.0
  %1165 = vmatprep.subr.mxu0 0.0
  %1166 = vmatpush1.msra.mxu0 0.0
  %1167 = vmatprep.subr.mxu0 0.0
  %1168 = vmatpush1.msra.mxu0 0.0
  %1169 = vmatprep.subr.mxu0 0.0
  %1170 = vmatpush1.msra.mxu0 0.0
  %1171 = vmatprep.subr.mxu0 0.0
  %1172 = vmatpush1.msra.mxu0 0.0
  %1173 = vmatprep.subr.mxu0 0.0
  %1174 = vmatpush1.msra.mxu0 0.0
  %1175 = vmatprep.subr.mxu0 0.0
  %1176 = vmatpush1.msra.mxu0 0.0
  %1177 = vmatprep.subr.mxu0 0.0
  %1178 = vmatpush1.msra.mxu0 0.0
  %1179 = vmatprep.subr.mxu0 0.0
  %1180 = vmatpush1.msra.mxu0 0.0
  %1181 = vmatprep.subr.mxu0 0.0
  %1182 = vmatpush1.msra.mxu0 0.0
  %1183 = vmatprep.subr.mxu0 0.0
  %1184 = vmatpush1.msra.mxu0 0.0
  %1185 = vmatprep.subr.mxu0 0.0
  %1186 = vmatpush1.msra.mxu0 0.0
  %1187 = vmatprep.subr.mxu0 0.0
  %1188 = vmatpush1.msra.mxu0 0.0
  %1189 = vmatprep.subr.mxu0 0.0
  %1190 = vmatpush1.msra.mxu0 0.0
  %1191 = vmatprep.subr.mxu0 0.0
  %1192 = vmatpush1.msra.mxu0 0.0
  %1193 = vmatprep.subr.mxu0 0.0
  %1194 = vmatpush1.msra.mxu0 0.0
  %1195 = vmatprep.subr.mxu0 0.0
  %1196 = vmatpush1.msra.mxu0 0.0
  %1197 = vmatprep.subr.mxu0 0.0
  %1198 = vmatpush1.msra.mxu0 0.0
  %1199 = vmatprep.subr.mxu0 0.0
  %1200 = vmatpush1.msra.mxu0 0.0
  %1201 = vmatprep.subr.mxu0 0.0
  %1202 = vmatpush1.msra.mxu0 0.0
  %1203 = vmatprep.subr.mxu0 0.0
  %1204 = vmatpush1.msra.mxu0 0.0
  %1205 = vmatprep.subr.mxu0 0.0
  %1206 = vmatpush1.msra.mxu0 0.0
  %1207 = vmatprep.subr.mxu0 0.0
  %1208 = vmatpush1.msra.mxu0 0.0
  %1209 = vmatprep.subr.mxu0 0.0
  %1210 = vmatpush1.msra.mxu0 0.0
  %1211 = vmatprep.subr.mxu0 0.0
  %1212 = vmatpush1.msra.mxu0 0.0
  %1213 = vmatprep.subr.mxu0 0.0
  %1214 = vmatpush1.msra.mxu0 0.0
  %1215 = vmatprep.mubr.f32.mxu0 0.0
  %1216 = vmatmul.mubr.f32.gmra.mrb[0].mxu0 %v1143
  %v1217 = vpop.f32.mrb[0].mxu0
  %v1218 = vadd.f32 0.0, %v1217
  %v1219 = vpop.f32.mrb[0].mxu0
  %1220 = vmatprep.mubr.f32.mxu0 0.0
  %1221 = vmatmul.mubr.f32.gmra.mrb[0].mxu0 %v1146
  %v1222 = vpop.f32.mrb[0].mxu0
  %v1223 = vadd.f32 0.0, %v1222
  %v1224 = vpop.f32.mrb[0].mxu0
  %1225 = vmatprep.mubr.f32.mxu0 0.0
  %1226 = vmatmul.mubr.f32.gmra.mrb[0].mxu0 %v1149
  %v1227 = vpop.f32.mrb[0].mxu0
  %v1228 = vadd.f32 0.0, %v1227
  %v1229 = vpop.f32.mrb[0].mxu0
  %1230 = vdwg.mxu0
  %s1231 = scalar_lea.vmem %s7, 8
  %v1232 = vld [vmem:[%s1231] sm:$0xff]
  %v1234 = vsel %vm518, %v1218, 0
  %v1237 = vsel %vm518, %v1223, 0
  %v1240 = vsel %vm518, %v1228, 0
  %1242 = vmatprep.subr.mxu0 0.0
  %1243 = vmatpush1.msra.mxu0 %v1232
  %1244 = vmatprep.subr.mxu0 0.0
  %1245 = vmatpush1.msra.mxu0 0.0
  %1246 = vmatprep.subr.mxu0 0.0
  %1247 = vmatpush1.msra.mxu0 0.0
  %1248 = vmatprep.subr.mxu0 0.0
  %1249 = vmatpush1.msra.mxu0 0.0
  %1250 = vmatprep.subr.mxu0 0.0
  %1251 = vmatpush1.msra.mxu0 0.0
  %1252 = vmatprep.subr.mxu0 0.0
  %1253 = vmatpush1.msra.mxu0 0.0
  %1254 = vmatprep.subr.mxu0 0.0
  %1255 = vmatpush1.msra.mxu0 0.0
  %1256 = vmatprep.subr.mxu0 0.0
  %1257 = vmatpush1.msra.mxu0 0.0
  %1258 = vmatprep.subr.mxu0 0.0
  %1259 = vmatpush1.msra.mxu0 0.0
  %1260 = vmatprep.subr.mxu0 0.0
  %1261 = vmatpush1.msra.mxu0 0.0
  %1262 = vmatprep.subr.mxu0 0.0
  %1263 = vmatpush1.msra.mxu0 0.0
  %1264 = vmatprep.subr.mxu0 0.0
  %1265 = vmatpush1.msra.mxu0 0.0
  %1266 = vmatprep.subr.mxu0 0.0
  %1267 = vmatpush1.msra.mxu0 0.0
  %1268 = vmatprep.subr.mxu0 0.0
  %1269 = vmatpush1.msra.mxu0 0.0
  %1270 = vmatprep.subr.mxu0 0.0
  %1271 = vmatpush1.msra.mxu0 0.0
  %1272 = vmatprep.subr.mxu0 0.0
  %1273 = vmatpush1.msra.mxu0 0.0
  %1274 = vmatprep.subr.mxu0 0.0
  %1275 = vmatpush1.msra.mxu0 0.0
  %1276 = vmatprep.subr.mxu0 0.0
  %1277 = vmatpush1.msra.mxu0 0.0
  %1278 = vmatprep.subr.mxu0 0.0
  %1279 = vmatpush1.msra.mxu0 0.0
  %1280 = vmatprep.subr.mxu0 0.0
  %1281 = vmatpush1.msra.mxu0 0.0
  %1282 = vmatprep.subr.mxu0 0.0
  %1283 = vmatpush1.msra.mxu0 0.0
  %1284 = vmatprep.subr.mxu0 0.0
  %1285 = vmatpush1.msra.mxu0 0.0
  %1286 = vmatprep.subr.mxu0 0.0
  %1287 = vmatpush1.msra.mxu0 0.0
  %1288 = vmatprep.subr.mxu0 0.0
  %1289 = vmatpush1.msra.mxu0 0.0
  %1290 = vmatprep.subr.mxu0 0.0
  %1291 = vmatpush1.msra.mxu0 0.0
  %1292 = vmatprep.subr.mxu0 0.0
  %1293 = vmatpush1.msra.mxu0 0.0
  %1294 = vmatprep.subr.mxu0 0.0
  %1295 = vmatpush1.msra.mxu0 0.0
  %1296 = vmatprep.subr.mxu0 0.0
  %1297 = vmatpush1.msra.mxu0 0.0
  %1298 = vmatprep.subr.mxu0 0.0
  %1299 = vmatpush1.msra.mxu0 0.0
  %1300 = vmatprep.subr.mxu0 0.0
  %1301 = vmatpush1.msra.mxu0 0.0
  %1302 = vmatprep.subr.mxu0 0.0
  %1303 = vmatpush1.msra.mxu0 0.0
  %1304 = vmatprep.subr.mxu0 0.0
  %1305 = vmatpush1.msra.mxu0 0.0
  %1306 = vmatprep.mubr.f32.mxu0 0.0
  %1307 = vmatmul.mubr.f32.gmra.mrb[0].mxu0 %v1234
  %v1308 = vpop.f32.mrb[0].mxu0
  %v1309 = vadd.f32 0.0, %v1308
  %v1310 = vpop.f32.mrb[0].mxu0
  %1311 = vmatprep.mubr.f32.mxu0 0.0
  %1312 = vmatmul.mubr.f32.gmra.mrb[0].mxu0 %v1237
  %v1313 = vpop.f32.mrb[0].mxu0
  %v1314 = vadd.f32 0.0, %v1313
  %v1315 = vpop.f32.mrb[0].mxu0
  %1316 = vmatprep.mubr.f32.mxu0 0.0
  %1317 = vmatmul.mubr.f32.gmra.mrb[0].mxu0 %v1240
  %v1318 = vpop.f32.mrb[0].mxu0
  %v1319 = vadd.f32 0.0, %v1318
  %v1320 = vpop.f32.mrb[0].mxu0
  %1321 = vdwg.mxu0
  %v1323 = vsel %vm518, %v727, 0
  %v1326 = vsel %vm518, %v732, 0
  %v1329 = vsel %vm518, %v737, 0
  %1331 = vmatprep.subr.mxu0 0.0
  %1332 = vmatpush1.msra.mxu0 %v740
  %1333 = vmatprep.subr.mxu0 0.0
  %1334 = vmatpush1.msra.mxu0 0.0
  %1335 = vmatprep.subr.mxu0 0.0
  %1336 = vmatpush1.msra.mxu0 0.0
  %1337 = vmatprep.subr.mxu0 0.0
  %1338 = vmatpush1.msra.mxu0 0.0
  %1339 = vmatprep.subr.mxu0 0.0
  %1340 = vmatpush1.msra.mxu0 0.0
  %1341 = vmatprep.subr.mxu0 0.0
  %1342 = vmatpush1.msra.mxu0 0.0
  %1343 = vmatprep.subr.mxu0 0.0
  %1344 = vmatpush1.msra.mxu0 0.0
  %1345 = vmatprep.subr.mxu0 0.0
  %1346 = vmatpush1.msra.mxu0 0.0
  %1347 = vmatprep.subr.mxu0 0.0
  %1348 = vmatpush1.msra.mxu0 0.0
  %1349 = vmatprep.subr.mxu0 0.0
  %1350 = vmatpush1.msra.mxu0 0.0
  %1351 = vmatprep.subr.mxu0 0.0
  %1352 = vmatpush1.msra.mxu0 0.0
  %1353 = vmatprep.subr.mxu0 0.0
  %1354 = vmatpush1.msra.mxu0 0.0
  %1355 = vmatprep.subr.mxu0 0.0
  %1356 = vmatpush1.msra.mxu0 0.0
  %1357 = vmatprep.subr.mxu0 0.0
  %1358 = vmatpush1.msra.mxu0 0.0
  %1359 = vmatprep.subr.mxu0 0.0
  %1360 = vmatpush1.msra.mxu0 0.0
  %1361 = vmatprep.subr.mxu0 0.0
  %1362 = vmatpush1.msra.mxu0 0.0
  %1363 = vmatprep.subr.mxu0 0.0
  %1364 = vmatpush1.msra.mxu0 0.0
  %1365 = vmatprep.subr.mxu0 0.0
  %1366 = vmatpush1.msra.mxu0 0.0
  %1367 = vmatprep.subr.mxu0 0.0
  %1368 = vmatpush1.msra.mxu0 0.0
  %1369 = vmatprep.subr.mxu0 0.0
  %1370 = vmatpush1.msra.mxu0 0.0
  %1371 = vmatprep.subr.mxu0 0.0
  %1372 = vmatpush1.msra.mxu0 0.0
  %1373 = vmatprep.subr.mxu0 0.0
  %1374 = vmatpush1.msra.mxu0 0.0
  %1375 = vmatprep.subr.mxu0 0.0
  %1376 = vmatpush1.msra.mxu0 0.0
  %1377 = vmatprep.subr.mxu0 0.0
  %1378 = vmatpush1.msra.mxu0 0.0
  %1379 = vmatprep.subr.mxu0 0.0
  %1380 = vmatpush1.msra.mxu0 0.0
  %1381 = vmatprep.subr.mxu0 0.0
  %1382 = vmatpush1.msra.mxu0 0.0
  %1383 = vmatprep.subr.mxu0 0.0
  %1384 = vmatpush1.msra.mxu0 0.0
  %1385 = vmatprep.subr.mxu0 0.0
  %1386 = vmatpush1.msra.mxu0 0.0
  %1387 = vmatprep.subr.mxu0 0.0
  %1388 = vmatpush1.msra.mxu0 0.0
  %1389 = vmatprep.subr.mxu0 0.0
  %1390 = vmatpush1.msra.mxu0 0.0
  %1391 = vmatprep.subr.mxu0 0.0
  %1392 = vmatpush1.msra.mxu0 0.0
  %1393 = vmatprep.subr.mxu0 0.0
  %1394 = vmatpush1.msra.mxu0 0.0
  %1395 = vmatprep.mubr.f32.mxu0 0.0
  %1396 = vmatmul.mubr.f32.gmra.mrb[0].mxu0 %v1323
  %v1397 = vpop.f32.mrb[0].mxu0
  %v1398 = vadd.f32 %v1309, %v1397
  %v1399 = vpop.f32.mrb[0].mxu0
  %1400 = vmatprep.mubr.f32.mxu0 0.0
  %1401 = vmatmul.mubr.f32.gmra.mrb[0].mxu0 %v1326
  %v1402 = vpop.f32.mrb[0].mxu0
  %v1403 = vadd.f32 %v1314, %v1402
  %v1404 = vpop.f32.mrb[0].mxu0
  %1405 = vmatprep.mubr.f32.mxu0 0.0
  %1406 = vmatmul.mubr.f32.gmra.mrb[0].mxu0 %v1329
  %v1407 = vpop.f32.mrb[0].mxu0
  %v1408 = vadd.f32 %v1319, %v1407
  %v1409 = vpop.f32.mrb[0].mxu0
  %1410 = vdwg.mxu0
  %s1411 = scalar_lea.vmem %s6, 240
  %v1412 = vld [vmem:[%s1411] sm:$0xff]
  %v1413 = vld [vmem:[%s1411 + $0x8] sm:$0xff]
  %v1414 = vld [vmem:[%s1411 + $0x10] sm:$0xff]
  %v1415 = vld [vmem:[%s1411 + $0x18] sm:$0xff]
  %v1416 = vld [vmem:[%s1411 + $0x20] sm:$0xff]
  %s1417 = scalar_lea.vmem %s6, 280
  %v1418 = vld [vmem:[%s1417] sm:$0xff]
  %v1419 = vld [vmem:[%s1417 + $0x8] sm:$0xff]
  %v1420 = vld [vmem:[%s1417 + $0x10] sm:$0xff]
  %v1421 = vld [vmem:[%s1417 + $0x18] sm:$0xff]
  %v1422 = vld [vmem:[%s1417 + $0x20] sm:$0xff]
  %s1423 = scalar_lea.vmem %s6, 320
  %v1424 = vld [vmem:[%s1423] sm:$0xff]
  %v1425 = vld [vmem:[%s1423 + $0x8] sm:$0xff]
  %v1426 = vld [vmem:[%s1423 + $0x10] sm:$0xff]
  %v1427 = vld [vmem:[%s1423 + $0x18] sm:$0xff]
  %v1428 = vld [vmem:[%s1423 + $0x20] sm:$0xff]
  %v1429 = vlaneseq
  %v1430 = vshrl.u32 %v1429, 7
  %v1431 = vsub.s32 0, %v1430
  %v1432 = vrot.slane %v1416, %v1431
  %1433 = vmatprep.subr.mxu0 0.0
  %1434 = vmatpush1.msra.mxu0 %v1412
  %1435 = vmatprep.subr.mxu0 0.0
  %1436 = vmatpush1.msra.mxu0 %v1413
  %1437 = vmatprep.subr.mxu0 0.0
  %1438 = vmatpush1.msra.mxu0 %v1414
  %1439 = vmatprep.subr.mxu0 0.0
  %1440 = vmatpush1.msra.mxu0 %v1415
  %1441 = vmatprep.subr.mxu0 0.0
  %1442 = vmatpush1.msra.mxu0 0.0
  %1443 = vmatprep.subr.mxu0 0.0
  %1444 = vmatpush1.msra.mxu0 0.0
  %1445 = vmatprep.subr.mxu0 0.0
  %1446 = vmatpush1.msra.mxu0 0.0
  %1447 = vmatprep.subr.mxu0 0.0
  %1448 = vmatpush1.msra.mxu0 0.0
  %1449 = vmatprep.subr.mxu0 0.0
  %1450 = vmatpush1.msra.mxu0 0.0
  %1451 = vmatprep.subr.mxu0 0.0
  %1452 = vmatpush1.msra.mxu0 0.0
  %1453 = vmatprep.subr.mxu0 0.0
  %1454 = vmatpush1.msra.mxu0 0.0
  %1455 = vmatprep.subr.mxu0 0.0
  %1456 = vmatpush1.msra.mxu0 0.0
  %1457 = vmatprep.subr.mxu0 0.0
  %1458 = vmatpush1.msra.mxu0 0.0
  %1459 = vmatprep.subr.mxu0 0.0
  %1460 = vmatpush1.msra.mxu0 0.0
  %1461 = vmatprep.subr.mxu0 0.0
  %1462 = vmatpush1.msra.mxu0 0.0
  %1463 = vmatprep.subr.mxu0 0.0
  %1464 = vmatpush1.msra.mxu0 0.0
  %1465 = vmatprep.subr.mxu0 0.0
  %1466 = vmatpush1.msra.mxu0 0.0
  %1467 = vmatprep.subr.mxu0 0.0
  %1468 = vmatpush1.msra.mxu0 0.0
  %1469 = vmatprep.subr.mxu0 0.0
  %1470 = vmatpush1.msra.mxu0 0.0
  %1471 = vmatprep.subr.mxu0 0.0
  %1472 = vmatpush1.msra.mxu0 0.0
  %1473 = vmatprep.subr.mxu0 0.0
  %1474 = vmatpush1.msra.mxu0 0.0
  %1475 = vmatprep.subr.mxu0 0.0
  %1476 = vmatpush1.msra.mxu0 0.0
  %1477 = vmatprep.subr.mxu0 0.0
  %1478 = vmatpush1.msra.mxu0 0.0
  %1479 = vmatprep.subr.mxu0 0.0
  %1480 = vmatpush1.msra.mxu0 0.0
  %1481 = vmatprep.subr.mxu0 0.0
  %1482 = vmatpush1.msra.mxu0 0.0
  %1483 = vmatprep.subr.mxu0 0.0
  %1484 = vmatpush1.msra.mxu0 0.0
  %1485 = vmatprep.subr.mxu0 0.0
  %1486 = vmatpush1.msra.mxu0 0.0
  %1487 = vmatprep.subr.mxu0 0.0
  %1488 = vmatpush1.msra.mxu0 0.0
  %1489 = vmatprep.subr.mxu0 0.0
  %1490 = vmatpush1.msra.mxu0 0.0
  %1491 = vmatprep.subr.mxu0 0.0
  %1492 = vmatpush1.msra.mxu0 0.0
  %1493 = vmatprep.subr.mxu0 0.0
  %1494 = vmatpush1.msra.mxu0 0.0
  %1495 = vmatprep.subr.mxu0 0.0
  %1496 = vmatpush1.msra.mxu0 0.0
  %1497 = vmatprep.mubr.f32.mxu0 0.0
  %1498 = vmatmul.mubr.f32.gmra.mrb[0].mxu0 %v262
  %v1499 = vpop.f32.mrb[0].mxu0
  %v1500 = vadd.f32 %v1432, %v1499
  %v1501 = vpop.f32.mrb[0].mxu0
  %1502 = vmatprep.mubr.f32.mxu0 0.0
  %1503 = vmatmul.mubr.f32.gmra.mrb[0].mxu0 %v265
  %v1504 = vpop.f32.mrb[0].mxu0
  %v1505 = vadd.f32 %v1432, %v1504
  %v1506 = vpop.f32.mrb[0].mxu0
  %1507 = vmatprep.mubr.f32.mxu0 0.0
  %1508 = vmatmul.mubr.f32.gmra.mrb[0].mxu0 %v268
  %v1509 = vpop.f32.mrb[0].mxu0
  %v1510 = vadd.f32 %v1432, %v1509
  %v1511 = vpop.f32.mrb[0].mxu0
  %1512 = vdwg.mxu0
  %v1513 = vlaneseq
  %v1514 = vshrl.u32 %v1513, 7
  %v1515 = vsub.s32 0, %v1514
  %v1516 = vrot.slane %v1422, %v1515
  %1517 = vmatprep.subr.mxu0 0.0
  %1518 = vmatpush1.msra.mxu0 %v1418
  %1519 = vmatprep.subr.mxu0 0.0
  %1520 = vmatpush1.msra.mxu0 %v1419
  %1521 = vmatprep.subr.mxu0 0.0
  %1522 = vmatpush1.msra.mxu0 %v1420
  %1523 = vmatprep.subr.mxu0 0.0
  %1524 = vmatpush1.msra.mxu0 %v1421
  %1525 = vmatprep.subr.mxu0 0.0
  %1526 = vmatpush1.msra.mxu0 0.0
  %1527 = vmatprep.subr.mxu0 0.0
  %1528 = vmatpush1.msra.mxu0 0.0
  %1529 = vmatprep.subr.mxu0 0.0
  %1530 = vmatpush1.msra.mxu0 0.0
  %1531 = vmatprep.subr.mxu0 0.0
  %1532 = vmatpush1.msra.mxu0 0.0
  %1533 = vmatprep.subr.mxu0 0.0
  %1534 = vmatpush1.msra.mxu0 0.0
  %1535 = vmatprep.subr.mxu0 0.0
  %1536 = vmatpush1.msra.mxu0 0.0
  %1537 = vmatprep.subr.mxu0 0.0
  %1538 = vmatpush1.msra.mxu0 0.0
  %1539 = vmatprep.subr.mxu0 0.0
  %1540 = vmatpush1.msra.mxu0 0.0
  %1541 = vmatprep.subr.mxu0 0.0
  %1542 = vmatpush1.msra.mxu0 0.0
  %1543 = vmatprep.subr.mxu0 0.0
  %1544 = vmatpush1.msra.mxu0 0.0
  %1545 = vmatprep.subr.mxu0 0.0
  %1546 = vmatpush1.msra.mxu0 0.0
  %1547 = vmatprep.subr.mxu0 0.0
  %1548 = vmatpush1.msra.mxu0 0.0
  %1549 = vmatprep.subr.mxu0 0.0
  %1550 = vmatpush1.msra.mxu0 0.0
  %1551 = vmatprep.subr.mxu0 0.0
  %1552 = vmatpush1.msra.mxu0 0.0
  %1553 = vmatprep.subr.mxu0 0.0
  %1554 = vmatpush1.msra.mxu0 0.0
  %1555 = vmatprep.subr.mxu0 0.0
  %1556 = vmatpush1.msra.mxu0 0.0
  %1557 = vmatprep.subr.mxu0 0.0
  %1558 = vmatpush1.msra.mxu0 0.0
  %1559 = vmatprep.subr.mxu0 0.0
  %1560 = vmatpush1.msra.mxu0 0.0
  %1561 = vmatprep.subr.mxu0 0.0
  %1562 = vmatpush1.msra.mxu0 0.0
  %1563 = vmatprep.subr.mxu0 0.0
  %1564 = vmatpush1.msra.mxu0 0.0
  %1565 = vmatprep.subr.mxu0 0.0
  %1566 = vmatpush1.msra.mxu0 0.0
  %1567 = vmatprep.subr.mxu0 0.0
  %1568 = vmatpush1.msra.mxu0 0.0
  %1569 = vmatprep.subr.mxu0 0.0
  %1570 = vmatpush1.msra.mxu0 0.0
  %1571 = vmatprep.subr.mxu0 0.0
  %1572 = vmatpush1.msra.mxu0 0.0
  %1573 = vmatprep.subr.mxu0 0.0
  %1574 = vmatpush1.msra.mxu0 0.0
  %1575 = vmatprep.subr.mxu0 0.0
  %1576 = vmatpush1.msra.mxu0 0.0
  %1577 = vmatprep.subr.mxu0 0.0
  %1578 = vmatpush1.msra.mxu0 0.0
  %1579 = vmatprep.subr.mxu0 0.0
  %1580 = vmatpush1.msra.mxu0 0.0
  %1581 = vmatprep.mubr.f32.mxu0 0.0
  %1582 = vmatmul.mubr.f32.gmra.mrb[0].mxu0 %v262
  %v1583 = vpop.f32.mrb[0].mxu0
  %v1584 = vadd.f32 %v1516, %v1583
  %v1585 = vpop.f32.mrb[0].mxu0
  %1586 = vmatprep.mubr.f32.mxu0 0.0
  %1587 = vmatmul.mubr.f32.gmra.mrb[0].mxu0 %v265
  %v1588 = vpop.f32.mrb[0].mxu0
  %v1589 = vadd.f32 %v1516, %v1588
  %v1590 = vpop.f32.mrb[0].mxu0
  %1591 = vmatprep.mubr.f32.mxu0 0.0
  %1592 = vmatmul.mubr.f32.gmra.mrb[0].mxu0 %v268
  %v1593 = vpop.f32.mrb[0].mxu0
  %v1594 = vadd.f32 %v1516, %v1593
  %v1595 = vpop.f32.mrb[0].mxu0
  %1596 = vdwg.mxu0
  %v1597 = vlaneseq
  %v1598 = vshrl.u32 %v1597, 7
  %v1599 = vsub.s32 0, %v1598
  %v1600 = vrot.slane %v1428, %v1599
  %1601 = vmatprep.subr.mxu0 0.0
  %1602 = vmatpush1.msra.mxu0 %v1424
  %1603 = vmatprep.subr.mxu0 0.0
  %1604 = vmatpush1.msra.mxu0 %v1425
  %1605 = vmatprep.subr.mxu0 0.0
  %1606 = vmatpush1.msra.mxu0 %v1426
  %1607 = vmatprep.subr.mxu0 0.0
  %1608 = vmatpush1.msra.mxu0 %v1427
  %1609 = vmatprep.subr.mxu0 0.0
  %1610 = vmatpush1.msra.mxu0 0.0
  %1611 = vmatprep.subr.mxu0 0.0
  %1612 = vmatpush1.msra.mxu0 0.0
  %1613 = vmatprep.subr.mxu0 0.0
  %1614 = vmatpush1.msra.mxu0 0.0
  %1615 = vmatprep.subr.mxu0 0.0
  %1616 = vmatpush1.msra.mxu0 0.0
  %1617 = vmatprep.subr.mxu0 0.0
  %1618 = vmatpush1.msra.mxu0 0.0
  %1619 = vmatprep.subr.mxu0 0.0
  %1620 = vmatpush1.msra.mxu0 0.0
  %1621 = vmatprep.subr.mxu0 0.0
  %1622 = vmatpush1.msra.mxu0 0.0
  %1623 = vmatprep.subr.mxu0 0.0
  %1624 = vmatpush1.msra.mxu0 0.0
  %1625 = vmatprep.subr.mxu0 0.0
  %1626 = vmatpush1.msra.mxu0 0.0
  %1627 = vmatprep.subr.mxu0 0.0
  %1628 = vmatpush1.msra.mxu0 0.0
  %1629 = vmatprep.subr.mxu0 0.0
  %1630 = vmatpush1.msra.mxu0 0.0
  %1631 = vmatprep.subr.mxu0 0.0
  %1632 = vmatpush1.msra.mxu0 0.0
  %1633 = vmatprep.subr.mxu0 0.0
  %1634 = vmatpush1.msra.mxu0 0.0
  %1635 = vmatprep.subr.mxu0 0.0
  %1636 = vmatpush1.msra.mxu0 0.0
  %1637 = vmatprep.subr.mxu0 0.0
  %1638 = vmatpush1.msra.mxu0 0.0
  %1639 = vmatprep.subr.mxu0 0.0
  %1640 = vmatpush1.msra.mxu0 0.0
  %1641 = vmatprep.subr.mxu0 0.0
  %1642 = vmatpush1.msra.mxu0 0.0
  %1643 = vmatprep.subr.mxu0 0.0
  %1644 = vmatpush1.msra.mxu0 0.0
  %1645 = vmatprep.subr.mxu0 0.0
  %1646 = vmatpush1.msra.mxu0 0.0
  %1647 = vmatprep.subr.mxu0 0.0
  %1648 = vmatpush1.msra.mxu0 0.0
  %1649 = vmatprep.subr.mxu0 0.0
  %1650 = vmatpush1.msra.mxu0 0.0
  %1651 = vmatprep.subr.mxu0 0.0
  %1652 = vmatpush1.msra.mxu0 0.0
  %1653 = vmatprep.subr.mxu0 0.0
  %1654 = vmatpush1.msra.mxu0 0.0
  %1655 = vmatprep.subr.mxu0 0.0
  %1656 = vmatpush1.msra.mxu0 0.0
  %1657 = vmatprep.subr.mxu0 0.0
  %1658 = vmatpush1.msra.mxu0 0.0
  %1659 = vmatprep.subr.mxu0 0.0
  %1660 = vmatpush1.msra.mxu0 0.0
  %1661 = vmatprep.subr.mxu0 0.0
  %1662 = vmatpush1.msra.mxu0 0.0
  %1663 = vmatprep.subr.mxu0 0.0
  %1664 = vmatpush1.msra.mxu0 0.0
  %1665 = vmatprep.mubr.f32.mxu0 0.0
  %1666 = vmatmul.mubr.f32.gmra.mrb[0].mxu0 %v262
  %v1667 = vpop.f32.mrb[0].mxu0
  %v1668 = vadd.f32 %v1600, %v1667
  %v1669 = vpop.f32.mrb[0].mxu0
  %1670 = vmatprep.mubr.f32.mxu0 0.0
  %1671 = vmatmul.mubr.f32.gmra.mrb[0].mxu0 %v265
  %v1672 = vpop.f32.mrb[0].mxu0
  %v1673 = vadd.f32 %v1600, %v1672
  %v1674 = vpop.f32.mrb[0].mxu0
  %1675 = vmatprep.mubr.f32.mxu0 0.0
  %1676 = vmatmul.mubr.f32.gmra.mrb[0].mxu0 %v268
  %v1677 = vpop.f32.mrb[0].mxu0
  %v1678 = vadd.f32 %v1600, %v1677
  %v1679 = vpop.f32.mrb[0].mxu0
  %1680 = vdwg.mxu0
  %v1682 = vsel %vm518, %v1500, 0
  %v1685 = vsel %vm518, %v1505, 0
  %v1688 = vsel %vm518, %v1510, 0
  %v1691 = vsel %vm518, %v1584, 0
  %v1694 = vsel %vm518, %v1589, 0
  %v1697 = vsel %vm518, %v1594, 0
  %1699 = vmatprep.subr.mxu0 0.0
  %1700 = vmatpush1.xpose.msra.mxu0 %v1691
  %1701 = vmatprep.subr.mxu0 0.0
  %1702 = vmatpush1.xpose.msra.mxu0 %v1694
  %1703 = vmatprep.subr.mxu0 0.0
  %1704 = vmatpush1.xpose.msra.mxu0 %v1697
  %1705 = vmatprep.subr.mxu0 0.0
  %1706 = vmatpush1.xpose.msra.mxu0 0.0
  %1707 = vmatprep.subr.mxu0 0.0
  %1708 = vmatpush1.xpose.msra.mxu0 0.0
  %1709 = vmatprep.subr.mxu0 0.0
  %1710 = vmatpush1.xpose.msra.mxu0 0.0
  %1711 = vmatprep.subr.mxu0 0.0
  %1712 = vmatpush1.xpose.msra.mxu0 0.0
  %1713 = vmatprep.subr.mxu0 0.0
  %1714 = vmatpush1.xpose.msra.mxu0 0.0
  %1715 = vmatprep.subr.mxu0 0.0
  %1716 = vmatpush1.xpose.msra.mxu0 0.0
  %1717 = vmatprep.subr.mxu0 0.0
  %1718 = vmatpush1.xpose.msra.mxu0 0.0
  %1719 = vmatprep.subr.mxu0 0.0
  %1720 = vmatpush1.xpose.msra.mxu0 0.0
  %1721 = vmatprep.subr.mxu0 0.0
  %1722 = vmatpush1.xpose.msra.mxu0 0.0
  %1723 = vmatprep.subr.mxu0 0.0
  %1724 = vmatpush1.xpose.msra.mxu0 0.0
  %1725 = vmatprep.subr.mxu0 0.0
  %1726 = vmatpush1.xpose.msra.mxu0 0.0
  %1727 = vmatprep.subr.mxu0 0.0
  %1728 = vmatpush1.xpose.msra.mxu0 0.0
  %1729 = vmatprep.subr.mxu0 0.0
  %1730 = vmatpush1.xpose.msra.mxu0 0.0
  %1731 = vmatprep.subr.mxu0 0.0
  %1732 = vmatpush1.xpose.msra.mxu0 0.0
  %1733 = vmatprep.subr.mxu0 0.0
  %1734 = vmatpush1.xpose.msra.mxu0 0.0
  %1735 = vmatprep.subr.mxu0 0.0
  %1736 = vmatpush1.xpose.msra.mxu0 0.0
  %1737 = vmatprep.subr.mxu0 0.0
  %1738 = vmatpush1.xpose.msra.mxu0 0.0
  %1739 = vmatprep.subr.mxu0 0.0
  %1740 = vmatpush1.xpose.msra.mxu0 0.0
  %1741 = vmatprep.subr.mxu0 0.0
  %1742 = vmatpush1.xpose.msra.mxu0 0.0
  %1743 = vmatprep.subr.mxu0 0.0
  %1744 = vmatpush1.xpose.msra.mxu0 0.0
  %1745 = vmatprep.subr.mxu0 0.0
  %1746 = vmatpush1.xpose.msra.mxu0 0.0
  %1747 = vmatprep.subr.mxu0 0.0
  %1748 = vmatpush1.xpose.msra.mxu0 0.0
  %1749 = vmatprep.subr.mxu0 0.0
  %1750 = vmatpush1.xpose.msra.mxu0 0.0
  %1751 = vmatprep.subr.mxu0 0.0
  %1752 = vmatpush1.xpose.msra.mxu0 0.0
  %1753 = vmatprep.subr.mxu0 0.0
  %1754 = vmatpush1.xpose.msra.mxu0 0.0
  %1755 = vmatprep.subr.mxu0 0.0
  %1756 = vmatpush1.xpose.msra.mxu0 0.0
  %1757 = vmatprep.subr.mxu0 0.0
  %1758 = vmatpush1.xpose.msra.mxu0 0.0
  %1759 = vmatprep.subr.mxu0 0.0
  %1760 = vmatpush1.xpose.msra.mxu0 0.0
  %1761 = vmatprep.subr.mxu0 0.0
  %1762 = vmatpush1.xpose.msra.mxu0 0.0
  %1763 = vmatprep.mubr.f32.mxu0 0.0
  %1764 = vmatmul.mubr.f32.gmra.mrb[0].mxu0 %v1682
  %v1765 = vpop.f32.mrb[0].mxu0
  %v1766 = vadd.f32 %v236, %v1765
  %v1767 = vpop.f32.mrb[0].mxu0
  %1768 = vmatprep.mubr.f32.mxu0 0.0
  %1769 = vmatmul.mubr.f32.gmra.mrb[0].mxu0 %v1685
  %v1770 = vpop.f32.mrb[0].mxu0
  %v1771 = vadd.f32 %v237, %v1770
  %v1772 = vpop.f32.mrb[0].mxu0
  %1773 = vmatprep.mubr.f32.mxu0 0.0
  %1774 = vmatmul.mubr.f32.gmra.mrb[0].mxu0 %v1688
  %v1775 = vpop.f32.mrb[0].mxu0
  %v1776 = vadd.f32 %v238, %v1775
  %v1777 = vpop.f32.mrb[0].mxu0
  %1778 = vdwg.mxu0
  %v1779 = vsel %vm617, %v1766, -inf
  %1780 = vmax.xlane.f32.xlu0 %v1779
  %v1781 = vpop.xlane.xlu0 %1780
  %v1782 = vsel %vm617, %v1771, -inf
  %1783 = vmax.xlane.f32.xlu0 %v1782
  %v1784 = vpop.xlane.xlu0 %1783
  %v1785 = vsel %vm617, %v1776, -inf
  %1786 = vmax.xlane.f32.xlu0 %v1785
  %v1787 = vpop.xlane.xlu0 %1786
  %v1788 = vsub.f32 %v1766, %v1781
  %v1789 = vsub.f32 %v1771, %v1784
  %v1790 = vsub.f32 %v1776, %v1787
  %v1791 = vmul.f32 %v1788, 1.442695
  %v1792 = vpow.pop %v1791
  %v1793 = vmul.f32 %v1789, 1.442695
  %v1794 = vpow.pop %v1793
  %v1795 = vmul.f32 %v1790, 1.442695
  %v1796 = vpow.pop %v1795
  %v1797 = vsel %vm617, %v1792, 0.0
  %1798 = vadd.xlane.f32.xlu0 %v1797
  %v1799 = vpop.xlane.xlu0 %1798
  %v1800 = vsel %vm617, %v1794, 0.0
  %1801 = vadd.xlane.f32.xlu0 %v1800
  %v1802 = vpop.xlane.xlu0 %1801
  %v1803 = vsel %vm617, %v1796, 0.0
  %1804 = vadd.xlane.f32.xlu0 %v1803
  %v1805 = vpop.xlane.xlu0 %1804
  %v1806 = vrcp.pop %v1799
  %v1807 = vrcp.pop %v1802
  %v1808 = vrcp.pop %v1805
  %v1809 = vmul.f32 %v1792, %v1806
  %v1810 = vmul.f32 %v1794, %v1807
  %v1811 = vmul.f32 %v1796, %v1808
  %v1813 = vsel %vm617, %v1809, 0
  %v1816 = vsel %vm617, %v1810, 0
  %v1819 = vsel %vm617, %v1811, 0
  %1821 = vmatprep.subr.mxu0 0.0
  %1822 = vmatpush1.msra.mxu0 %v1668
  %1823 = vmatprep.subr.mxu0 0.0
  %1824 = vmatpush1.msra.mxu0 %v1673
  %1825 = vmatprep.subr.mxu0 0.0
  %1826 = vmatpush1.msra.mxu0 %v1678
  %1827 = vmatprep.subr.mxu0 0.0
  %1828 = vmatpush1.msra.mxu0 0.0
  %1829 = vmatprep.subr.mxu0 0.0
  %1830 = vmatpush1.msra.mxu0 0.0
  %1831 = vmatprep.subr.mxu0 0.0
  %1832 = vmatpush1.msra.mxu0 0.0
  %1833 = vmatprep.subr.mxu0 0.0
  %1834 = vmatpush1.msra.mxu0 0.0
  %1835 = vmatprep.subr.mxu0 0.0
  %1836 = vmatpush1.msra.mxu0 0.0
  %1837 = vmatprep.subr.mxu0 0.0
  %1838 = vmatpush1.msra.mxu0 0.0
  %1839 = vmatprep.subr.mxu0 0.0
  %1840 = vmatpush1.msra.mxu0 0.0
  %1841 = vmatprep.subr.mxu0 0.0
  %1842 = vmatpush1.msra.mxu0 0.0
  %1843 = vmatprep.subr.mxu0 0.0
  %1844 = vmatpush1.msra.mxu0 0.0
  %1845 = vmatprep.subr.mxu0 0.0
  %1846 = vmatpush1.msra.mxu0 0.0
  %1847 = vmatprep.subr.mxu0 0.0
  %1848 = vmatpush1.msra.mxu0 0.0
  %1849 = vmatprep.subr.mxu0 0.0
  %1850 = vmatpush1.msra.mxu0 0.0
  %1851 = vmatprep.subr.mxu0 0.0
  %1852 = vmatpush1.msra.mxu0 0.0
  %1853 = vmatprep.subr.mxu0 0.0
  %1854 = vmatpush1.msra.mxu0 0.0
  %1855 = vmatprep.subr.mxu0 0.0
  %1856 = vmatpush1.msra.mxu0 0.0
  %1857 = vmatprep.subr.mxu0 0.0
  %1858 = vmatpush1.msra.mxu0 0.0
  %1859 = vmatprep.subr.mxu0 0.0
  %1860 = vmatpush1.msra.mxu0 0.0
  %1861 = vmatprep.subr.mxu0 0.0
  %1862 = vmatpush1.msra.mxu0 0.0
  %1863 = vmatprep.subr.mxu0 0.0
  %1864 = vmatpush1.msra.mxu0 0.0
  %1865 = vmatprep.subr.mxu0 0.0
  %1866 = vmatpush1.msra.mxu0 0.0
  %1867 = vmatprep.subr.mxu0 0.0
  %1868 = vmatpush1.msra.mxu0 0.0
  %1869 = vmatprep.subr.mxu0 0.0
  %1870 = vmatpush1.msra.mxu0 0.0
  %1871 = vmatprep.subr.mxu0 0.0
  %1872 = vmatpush1.msra.mxu0 0.0
  %1873 = vmatprep.subr.mxu0 0.0
  %1874 = vmatpush1.msra.mxu0 0.0
  %1875 = vmatprep.subr.mxu0 0.0
  %1876 = vmatpush1.msra.mxu0 0.0
  %1877 = vmatprep.subr.mxu0 0.0
  %1878 = vmatpush1.msra.mxu0 0.0
  %1879 = vmatprep.subr.mxu0 0.0
  %1880 = vmatpush1.msra.mxu0 0.0
  %1881 = vmatprep.subr.mxu0 0.0
  %1882 = vmatpush1.msra.mxu0 0.0
  %1883 = vmatprep.subr.mxu0 0.0
  %1884 = vmatpush1.msra.mxu0 0.0
  %1885 = vmatprep.mubr.f32.mxu0 0.0
  %1886 = vmatmul.mubr.f32.gmra.mrb[0].mxu0 %v1813
  %v1887 = vpop.f32.mrb[0].mxu0
  %v1888 = vadd.f32 0.0, %v1887
  %v1889 = vpop.f32.mrb[0].mxu0
  %1890 = vmatprep.mubr.f32.mxu0 0.0
  %1891 = vmatmul.mubr.f32.gmra.mrb[0].mxu0 %v1816
  %v1892 = vpop.f32.mrb[0].mxu0
  %v1893 = vadd.f32 0.0, %v1892
  %v1894 = vpop.f32.mrb[0].mxu0
  %1895 = vmatprep.mubr.f32.mxu0 0.0
  %1896 = vmatmul.mubr.f32.gmra.mrb[0].mxu0 %v1819
  %v1897 = vpop.f32.mrb[0].mxu0
  %v1898 = vadd.f32 0.0, %v1897
  %v1899 = vpop.f32.mrb[0].mxu0
  %1900 = vdwg.mxu0
  %s1901 = scalar_lea.vmem %s7, 16
  %v1902 = vld [vmem:[%s1901] sm:$0xff]
  %v1904 = vsel %vm518, %v1888, 0
  %v1907 = vsel %vm518, %v1893, 0
  %v1910 = vsel %vm518, %v1898, 0
  %1912 = vmatprep.subr.mxu0 0.0
  %1913 = vmatpush1.msra.mxu0 %v1902
  %1914 = vmatprep.subr.mxu0 0.0
  %1915 = vmatpush1.msra.mxu0 0.0
  %1916 = vmatprep.subr.mxu0 0.0
  %1917 = vmatpush1.msra.mxu0 0.0
  %1918 = vmatprep.subr.mxu0 0.0
  %1919 = vmatpush1.msra.mxu0 0.0
  %1920 = vmatprep.subr.mxu0 0.0
  %1921 = vmatpush1.msra.mxu0 0.0
  %1922 = vmatprep.subr.mxu0 0.0
  %1923 = vmatpush1.msra.mxu0 0.0
  %1924 = vmatprep.subr.mxu0 0.0
  %1925 = vmatpush1.msra.mxu0 0.0
  %1926 = vmatprep.subr.mxu0 0.0
  %1927 = vmatpush1.msra.mxu0 0.0
  %1928 = vmatprep.subr.mxu0 0.0
  %1929 = vmatpush1.msra.mxu0 0.0
  %1930 = vmatprep.subr.mxu0 0.0
  %1931 = vmatpush1.msra.mxu0 0.0
  %1932 = vmatprep.subr.mxu0 0.0
  %1933 = vmatpush1.msra.mxu0 0.0
  %1934 = vmatprep.subr.mxu0 0.0
  %1935 = vmatpush1.msra.mxu0 0.0
  %1936 = vmatprep.subr.mxu0 0.0
  %1937 = vmatpush1.msra.mxu0 0.0
  %1938 = vmatprep.subr.mxu0 0.0
  %1939 = vmatpush1.msra.mxu0 0.0
  %1940 = vmatprep.subr.mxu0 0.0
  %1941 = vmatpush1.msra.mxu0 0.0
  %1942 = vmatprep.subr.mxu0 0.0
  %1943 = vmatpush1.msra.mxu0 0.0
  %1944 = vmatprep.subr.mxu0 0.0
  %1945 = vmatpush1.msra.mxu0 0.0
  %1946 = vmatprep.subr.mxu0 0.0
  %1947 = vmatpush1.msra.mxu0 0.0
  %1948 = vmatprep.subr.mxu0 0.0
  %1949 = vmatpush1.msra.mxu0 0.0
  %1950 = vmatprep.subr.mxu0 0.0
  %1951 = vmatpush1.msra.mxu0 0.0
  %1952 = vmatprep.subr.mxu0 0.0
  %1953 = vmatpush1.msra.mxu0 0.0
  %1954 = vmatprep.subr.mxu0 0.0
  %1955 = vmatpush1.msra.mxu0 0.0
  %1956 = vmatprep.subr.mxu0 0.0
  %1957 = vmatpush1.msra.mxu0 0.0
  %1958 = vmatprep.subr.mxu0 0.0
  %1959 = vmatpush1.msra.mxu0 0.0
  %1960 = vmatprep.subr.mxu0 0.0
  %1961 = vmatpush1.msra.mxu0 0.0
  %1962 = vmatprep.subr.mxu0 0.0
  %1963 = vmatpush1.msra.mxu0 0.0
  %1964 = vmatprep.subr.mxu0 0.0
  %1965 = vmatpush1.msra.mxu0 0.0
  %1966 = vmatprep.subr.mxu0 0.0
  %1967 = vmatpush1.msra.mxu0 0.0
  %1968 = vmatprep.subr.mxu0 0.0
  %1969 = vmatpush1.msra.mxu0 0.0
  %1970 = vmatprep.subr.mxu0 0.0
  %1971 = vmatpush1.msra.mxu0 0.0
  %1972 = vmatprep.subr.mxu0 0.0
  %1973 = vmatpush1.msra.mxu0 0.0
  %1974 = vmatprep.subr.mxu0 0.0
  %1975 = vmatpush1.msra.mxu0 0.0
  %1976 = vmatprep.mubr.f32.mxu0 0.0
  %1977 = vmatmul.mubr.f32.gmra.mrb[0].mxu0 %v1904
  %v1978 = vpop.f32.mrb[0].mxu0
  %v1979 = vadd.f32 0.0, %v1978
  %v1980 = vpop.f32.mrb[0].mxu0
  %1981 = vmatprep.mubr.f32.mxu0 0.0
  %1982 = vmatmul.mubr.f32.gmra.mrb[0].mxu0 %v1907
  %v1983 = vpop.f32.mrb[0].mxu0
  %v1984 = vadd.f32 0.0, %v1983
  %v1985 = vpop.f32.mrb[0].mxu0
  %1986 = vmatprep.mubr.f32.mxu0 0.0
  %1987 = vmatmul.mubr.f32.gmra.mrb[0].mxu0 %v1910
  %v1988 = vpop.f32.mrb[0].mxu0
  %v1989 = vadd.f32 0.0, %v1988
  %v1990 = vpop.f32.mrb[0].mxu0
  %1991 = vdwg.mxu0
  %v1992 = vadd.f32 %v1398, %v1979
  %v1993 = vadd.f32 %v1403, %v1984
  %v1994 = vadd.f32 %v1408, %v1989
  %s1995 = scalar_lea.vmem %s6, 360
  %v1996 = vld [vmem:[%s1995] sm:$0xff]
  %v1997 = vld [vmem:[%s1995 + $0x8] sm:$0xff]
  %v1998 = vld [vmem:[%s1995 + $0x10] sm:$0xff]
  %v1999 = vld [vmem:[%s1995 + $0x18] sm:$0xff]
  %v2000 = vld [vmem:[%s1995 + $0x20] sm:$0xff]
  %s2001 = scalar_lea.vmem %s6, 400
  %v2002 = vld [vmem:[%s2001] sm:$0xff]
  %v2003 = vld [vmem:[%s2001 + $0x8] sm:$0xff]
  %v2004 = vld [vmem:[%s2001 + $0x10] sm:$0xff]
  %v2005 = vld [vmem:[%s2001 + $0x18] sm:$0xff]
  %v2006 = vld [vmem:[%s2001 + $0x20] sm:$0xff]
  %s2007 = scalar_lea.vmem %s6, 440
  %v2008 = vld [vmem:[%s2007] sm:$0xff]
  %v2009 = vld [vmem:[%s2007 + $0x8] sm:$0xff]
  %v2010 = vld [vmem:[%s2007 + $0x10] sm:$0xff]
  %v2011 = vld [vmem:[%s2007 + $0x18] sm:$0xff]
  %v2012 = vld [vmem:[%s2007 + $0x20] sm:$0xff]
  %v2013 = vlaneseq
  %v2014 = vshrl.u32 %v2013, 7
  %v2015 = vsub.s32 0, %v2014
  %v2016 = vrot.slane %v2000, %v2015
  %2017 = vmatprep.subr.mxu0 0.0
  %2018 = vmatpush1.msra.mxu0 %v1996
  %2019 = vmatprep.subr.mxu0 0.0
  %2020 = vmatpush1.msra.mxu0 %v1997
  %2021 = vmatprep.subr.mxu0 0.0
  %2022 = vmatpush1.msra.mxu0 %v1998
  %2023 = vmatprep.subr.mxu0 0.0
  %2024 = vmatpush1.msra.mxu0 %v1999
  %2025 = vmatprep.subr.mxu0 0.0
  %2026 = vmatpush1.msra.mxu0 0.0
  %2027 = vmatprep.subr.mxu0 0.0
  %2028 = vmatpush1.msra.mxu0 0.0
  %2029 = vmatprep.subr.mxu0 0.0
  %2030 = vmatpush1.msra.mxu0 0.0
  %2031 = vmatprep.subr.mxu0 0.0
  %2032 = vmatpush1.msra.mxu0 0.0
  %2033 = vmatprep.subr.mxu0 0.0
  %2034 = vmatpush1.msra.mxu0 0.0
  %2035 = vmatprep.subr.mxu0 0.0
  %2036 = vmatpush1.msra.mxu0 0.0
  %2037 = vmatprep.subr.mxu0 0.0
  %2038 = vmatpush1.msra.mxu0 0.0
  %2039 = vmatprep.subr.mxu0 0.0
  %2040 = vmatpush1.msra.mxu0 0.0
  %2041 = vmatprep.subr.mxu0 0.0
  %2042 = vmatpush1.msra.mxu0 0.0
  %2043 = vmatprep.subr.mxu0 0.0
  %2044 = vmatpush1.msra.mxu0 0.0
  %2045 = vmatprep.subr.mxu0 0.0
  %2046 = vmatpush1.msra.mxu0 0.0
  %2047 = vmatprep.subr.mxu0 0.0
  %2048 = vmatpush1.msra.mxu0 0.0
  %2049 = vmatprep.subr.mxu0 0.0
  %2050 = vmatpush1.msra.mxu0 0.0
  %2051 = vmatprep.subr.mxu0 0.0
  %2052 = vmatpush1.msra.mxu0 0.0
  %2053 = vmatprep.subr.mxu0 0.0
  %2054 = vmatpush1.msra.mxu0 0.0
  %2055 = vmatprep.subr.mxu0 0.0
  %2056 = vmatpush1.msra.mxu0 0.0
  %2057 = vmatprep.subr.mxu0 0.0
  %2058 = vmatpush1.msra.mxu0 0.0
  %2059 = vmatprep.subr.mxu0 0.0
  %2060 = vmatpush1.msra.mxu0 0.0
  %2061 = vmatprep.subr.mxu0 0.0
  %2062 = vmatpush1.msra.mxu0 0.0
  %2063 = vmatprep.subr.mxu0 0.0
  %2064 = vmatpush1.msra.mxu0 0.0
  %2065 = vmatprep.subr.mxu0 0.0
  %2066 = vmatpush1.msra.mxu0 0.0
  %2067 = vmatprep.subr.mxu0 0.0
  %2068 = vmatpush1.msra.mxu0 0.0
  %2069 = vmatprep.subr.mxu0 0.0
  %2070 = vmatpush1.msra.mxu0 0.0
  %2071 = vmatprep.subr.mxu0 0.0
  %2072 = vmatpush1.msra.mxu0 0.0
  %2073 = vmatprep.subr.mxu0 0.0
  %2074 = vmatpush1.msra.mxu0 0.0
  %2075 = vmatprep.subr.mxu0 0.0
  %2076 = vmatpush1.msra.mxu0 0.0
  %2077 = vmatprep.subr.mxu0 0.0
  %2078 = vmatpush1.msra.mxu0 0.0
  %2079 = vmatprep.subr.mxu0 0.0
  %2080 = vmatpush1.msra.mxu0 0.0
  %2081 = vmatprep.mubr.f32.mxu0 0.0
  %2082 = vmatmul.mubr.f32.gmra.mrb[0].mxu0 %v262
  %v2083 = vpop.f32.mrb[0].mxu0
  %v2084 = vadd.f32 %v2016, %v2083
  %v2085 = vpop.f32.mrb[0].mxu0
  %2086 = vmatprep.mubr.f32.mxu0 0.0
  %2087 = vmatmul.mubr.f32.gmra.mrb[0].mxu0 %v265
  %v2088 = vpop.f32.mrb[0].mxu0
  %v2089 = vadd.f32 %v2016, %v2088
  %v2090 = vpop.f32.mrb[0].mxu0
  %2091 = vmatprep.mubr.f32.mxu0 0.0
  %2092 = vmatmul.mubr.f32.gmra.mrb[0].mxu0 %v268
  %v2093 = vpop.f32.mrb[0].mxu0
  %v2094 = vadd.f32 %v2016, %v2093
  %v2095 = vpop.f32.mrb[0].mxu0
  %2096 = vdwg.mxu0
  %v2097 = vlaneseq
  %v2098 = vshrl.u32 %v2097, 7
  %v2099 = vsub.s32 0, %v2098
  %v2100 = vrot.slane %v2006, %v2099
  %2101 = vmatprep.subr.mxu0 0.0
  %2102 = vmatpush1.msra.mxu0 %v2002
  %2103 = vmatprep.subr.mxu0 0.0
  %2104 = vmatpush1.msra.mxu0 %v2003
  %2105 = vmatprep.subr.mxu0 0.0
  %2106 = vmatpush1.msra.mxu0 %v2004
  %2107 = vmatprep.subr.mxu0 0.0
  %2108 = vmatpush1.msra.mxu0 %v2005
  %2109 = vmatprep.subr.mxu0 0.0
  %2110 = vmatpush1.msra.mxu0 0.0
  %2111 = vmatprep.subr.mxu0 0.0
  %2112 = vmatpush1.msra.mxu0 0.0
  %2113 = vmatprep.subr.mxu0 0.0
  %2114 = vmatpush1.msra.mxu0 0.0
  %2115 = vmatprep.subr.mxu0 0.0
  %2116 = vmatpush1.msra.mxu0 0.0
  %2117 = vmatprep.subr.mxu0 0.0
  %2118 = vmatpush1.msra.mxu0 0.0
  %2119 = vmatprep.subr.mxu0 0.0
  %2120 = vmatpush1.msra.mxu0 0.0
  %2121 = vmatprep.subr.mxu0 0.0
  %2122 = vmatpush1.msra.mxu0 0.0
  %2123 = vmatprep.subr.mxu0 0.0
  %2124 = vmatpush1.msra.mxu0 0.0
  %2125 = vmatprep.subr.mxu0 0.0
  %2126 = vmatpush1.msra.mxu0 0.0
  %2127 = vmatprep.subr.mxu0 0.0
  %2128 = vmatpush1.msra.mxu0 0.0
  %2129 = vmatprep.subr.mxu0 0.0
  %2130 = vmatpush1.msra.mxu0 0.0
  %2131 = vmatprep.subr.mxu0 0.0
  %2132 = vmatpush1.msra.mxu0 0.0
  %2133 = vmatprep.subr.mxu0 0.0
  %2134 = vmatpush1.msra.mxu0 0.0
  %2135 = vmatprep.subr.mxu0 0.0
  %2136 = vmatpush1.msra.mxu0 0.0
  %2137 = vmatprep.subr.mxu0 0.0
  %2138 = vmatpush1.msra.mxu0 0.0
  %2139 = vmatprep.subr.mxu0 0.0
  %2140 = vmatpush1.msra.mxu0 0.0
  %2141 = vmatprep.subr.mxu0 0.0
  %2142 = vmatpush1.msra.mxu0 0.0
  %2143 = vmatprep.subr.mxu0 0.0
  %2144 = vmatpush1.msra.mxu0 0.0
  %2145 = vmatprep.subr.mxu0 0.0
  %2146 = vmatpush1.msra.mxu0 0.0
  %2147 = vmatprep.subr.mxu0 0.0
  %2148 = vmatpush1.msra.mxu0 0.0
  %2149 = vmatprep.subr.mxu0 0.0
  %2150 = vmatpush1.msra.mxu0 0.0
  %2151 = vmatprep.subr.mxu0 0.0
  %2152 = vmatpush1.msra.mxu0 0.0
  %2153 = vmatprep.subr.mxu0 0.0
  %2154 = vmatpush1.msra.mxu0 0.0
  %2155 = vmatprep.subr.mxu0 0.0
  %2156 = vmatpush1.msra.mxu0 0.0
  %2157 = vmatprep.subr.mxu0 0.0
  %2158 = vmatpush1.msra.mxu0 0.0
  %2159 = vmatprep.subr.mxu0 0.0
  %2160 = vmatpush1.msra.mxu0 0.0
  %2161 = vmatprep.subr.mxu0 0.0
  %2162 = vmatpush1.msra.mxu0 0.0
  %2163 = vmatprep.subr.mxu0 0.0
  %2164 = vmatpush1.msra.mxu0 0.0
  %2165 = vmatprep.mubr.f32.mxu0 0.0
  %2166 = vmatmul.mubr.f32.gmra.mrb[0].mxu0 %v262
  %v2167 = vpop.f32.mrb[0].mxu0
  %v2168 = vadd.f32 %v2100, %v2167
  %v2169 = vpop.f32.mrb[0].mxu0
  %2170 = vmatprep.mubr.f32.mxu0 0.0
  %2171 = vmatmul.mubr.f32.gmra.mrb[0].mxu0 %v265
  %v2172 = vpop.f32.mrb[0].mxu0
  %v2173 = vadd.f32 %v2100, %v2172
  %v2174 = vpop.f32.mrb[0].mxu0
  %2175 = vmatprep.mubr.f32.mxu0 0.0
  %2176 = vmatmul.mubr.f32.gmra.mrb[0].mxu0 %v268
  %v2177 = vpop.f32.mrb[0].mxu0
  %v2178 = vadd.f32 %v2100, %v2177
  %v2179 = vpop.f32.mrb[0].mxu0
  %2180 = vdwg.mxu0
  %v2181 = vlaneseq
  %v2182 = vshrl.u32 %v2181, 7
  %v2183 = vsub.s32 0, %v2182
  %v2184 = vrot.slane %v2012, %v2183
  %2185 = vmatprep.subr.mxu0 0.0
  %2186 = vmatpush1.msra.mxu0 %v2008
  %2187 = vmatprep.subr.mxu0 0.0
  %2188 = vmatpush1.msra.mxu0 %v2009
  %2189 = vmatprep.subr.mxu0 0.0
  %2190 = vmatpush1.msra.mxu0 %v2010
  %2191 = vmatprep.subr.mxu0 0.0
  %2192 = vmatpush1.msra.mxu0 %v2011
  %2193 = vmatprep.subr.mxu0 0.0
  %2194 = vmatpush1.msra.mxu0 0.0
  %2195 = vmatprep.subr.mxu0 0.0
  %2196 = vmatpush1.msra.mxu0 0.0
  %2197 = vmatprep.subr.mxu0 0.0
  %2198 = vmatpush1.msra.mxu0 0.0
  %2199 = vmatprep.subr.mxu0 0.0
  %2200 = vmatpush1.msra.mxu0 0.0
  %2201 = vmatprep.subr.mxu0 0.0
  %2202 = vmatpush1.msra.mxu0 0.0
  %2203 = vmatprep.subr.mxu0 0.0
  %2204 = vmatpush1.msra.mxu0 0.0
  %2205 = vmatprep.subr.mxu0 0.0
  %2206 = vmatpush1.msra.mxu0 0.0
  %2207 = vmatprep.subr.mxu0 0.0
  %2208 = vmatpush1.msra.mxu0 0.0
  %2209 = vmatprep.subr.mxu0 0.0
  %2210 = vmatpush1.msra.mxu0 0.0
  %2211 = vmatprep.subr.mxu0 0.0
  %2212 = vmatpush1.msra.mxu0 0.0
  %2213 = vmatprep.subr.mxu0 0.0
  %2214 = vmatpush1.msra.mxu0 0.0
  %2215 = vmatprep.subr.mxu0 0.0
  %2216 = vmatpush1.msra.mxu0 0.0
  %2217 = vmatprep.subr.mxu0 0.0
  %2218 = vmatpush1.msra.mxu0 0.0
  %2219 = vmatprep.subr.mxu0 0.0
  %2220 = vmatpush1.msra.mxu0 0.0
  %2221 = vmatprep.subr.mxu0 0.0
  %2222 = vmatpush1.msra.mxu0 0.0
  %2223 = vmatprep.subr.mxu0 0.0
  %2224 = vmatpush1.msra.mxu0 0.0
  %2225 = vmatprep.subr.mxu0 0.0
  %2226 = vmatpush1.msra.mxu0 0.0
  %2227 = vmatprep.subr.mxu0 0.0
  %2228 = vmatpush1.msra.mxu0 0.0
  %2229 = vmatprep.subr.mxu0 0.0
  %2230 = vmatpush1.msra.mxu0 0.0
  %2231 = vmatprep.subr.mxu0 0.0
  %2232 = vmatpush1.msra.mxu0 0.0
  %2233 = vmatprep.subr.mxu0 0.0
  %2234 = vmatpush1.msra.mxu0 0.0
  %2235 = vmatprep.subr.mxu0 0.0
  %2236 = vmatpush1.msra.mxu0 0.0
  %2237 = vmatprep.subr.mxu0 0.0
  %2238 = vmatpush1.msra.mxu0 0.0
  %2239 = vmatprep.subr.mxu0 0.0
  %2240 = vmatpush1.msra.mxu0 0.0
  %2241 = vmatprep.subr.mxu0 0.0
  %2242 = vmatpush1.msra.mxu0 0.0
  %2243 = vmatprep.subr.mxu0 0.0
  %2244 = vmatpush1.msra.mxu0 0.0
  %2245 = vmatprep.subr.mxu0 0.0
  %2246 = vmatpush1.msra.mxu0 0.0
  %2247 = vmatprep.subr.mxu0 0.0
  %2248 = vmatpush1.msra.mxu0 0.0
  %2249 = vmatprep.mubr.f32.mxu0 0.0
  %2250 = vmatmul.mubr.f32.gmra.mrb[0].mxu0 %v262
  %v2251 = vpop.f32.mrb[0].mxu0
  %v2252 = vadd.f32 %v2184, %v2251
  %v2253 = vpop.f32.mrb[0].mxu0
  %2254 = vmatprep.mubr.f32.mxu0 0.0
  %2255 = vmatmul.mubr.f32.gmra.mrb[0].mxu0 %v265
  %v2256 = vpop.f32.mrb[0].mxu0
  %v2257 = vadd.f32 %v2184, %v2256
  %v2258 = vpop.f32.mrb[0].mxu0
  %2259 = vmatprep.mubr.f32.mxu0 0.0
  %2260 = vmatmul.mubr.f32.gmra.mrb[0].mxu0 %v268
  %v2261 = vpop.f32.mrb[0].mxu0
  %v2262 = vadd.f32 %v2184, %v2261
  %v2263 = vpop.f32.mrb[0].mxu0
  %2264 = vdwg.mxu0
  %v2266 = vsel %vm518, %v2084, 0
  %v2269 = vsel %vm518, %v2089, 0
  %v2272 = vsel %vm518, %v2094, 0
  %v2275 = vsel %vm518, %v2168, 0
  %v2278 = vsel %vm518, %v2173, 0
  %v2281 = vsel %vm518, %v2178, 0
  %2283 = vmatprep.subr.mxu0 0.0
  %2284 = vmatpush1.xpose.msra.mxu0 %v2275
  %2285 = vmatprep.subr.mxu0 0.0
  %2286 = vmatpush1.xpose.msra.mxu0 %v2278
  %2287 = vmatprep.subr.mxu0 0.0
  %2288 = vmatpush1.xpose.msra.mxu0 %v2281
  %2289 = vmatprep.subr.mxu0 0.0
  %2290 = vmatpush1.xpose.msra.mxu0 0.0
  %2291 = vmatprep.subr.mxu0 0.0
  %2292 = vmatpush1.xpose.msra.mxu0 0.0
  %2293 = vmatprep.subr.mxu0 0.0
  %2294 = vmatpush1.xpose.msra.mxu0 0.0
  %2295 = vmatprep.subr.mxu0 0.0
  %2296 = vmatpush1.xpose.msra.mxu0 0.0
  %2297 = vmatprep.subr.mxu0 0.0
  %2298 = vmatpush1.xpose.msra.mxu0 0.0
  %2299 = vmatprep.subr.mxu0 0.0
  %2300 = vmatpush1.xpose.msra.mxu0 0.0
  %2301 = vmatprep.subr.mxu0 0.0
  %2302 = vmatpush1.xpose.msra.mxu0 0.0
  %2303 = vmatprep.subr.mxu0 0.0
  %2304 = vmatpush1.xpose.msra.mxu0 0.0
  %2305 = vmatprep.subr.mxu0 0.0
  %2306 = vmatpush1.xpose.msra.mxu0 0.0
  %2307 = vmatprep.subr.mxu0 0.0
  %2308 = vmatpush1.xpose.msra.mxu0 0.0
  %2309 = vmatprep.subr.mxu0 0.0
  %2310 = vmatpush1.xpose.msra.mxu0 0.0
  %2311 = vmatprep.subr.mxu0 0.0
  %2312 = vmatpush1.xpose.msra.mxu0 0.0
  %2313 = vmatprep.subr.mxu0 0.0
  %2314 = vmatpush1.xpose.msra.mxu0 0.0
  %2315 = vmatprep.subr.mxu0 0.0
  %2316 = vmatpush1.xpose.msra.mxu0 0.0
  %2317 = vmatprep.subr.mxu0 0.0
  %2318 = vmatpush1.xpose.msra.mxu0 0.0
  %2319 = vmatprep.subr.mxu0 0.0
  %2320 = vmatpush1.xpose.msra.mxu0 0.0
  %2321 = vmatprep.subr.mxu0 0.0
  %2322 = vmatpush1.xpose.msra.mxu0 0.0
  %2323 = vmatprep.subr.mxu0 0.0
  %2324 = vmatpush1.xpose.msra.mxu0 0.0
  %2325 = vmatprep.subr.mxu0 0.0
  %2326 = vmatpush1.xpose.msra.mxu0 0.0
  %2327 = vmatprep.subr.mxu0 0.0
  %2328 = vmatpush1.xpose.msra.mxu0 0.0
  %2329 = vmatprep.subr.mxu0 0.0
  %2330 = vmatpush1.xpose.msra.mxu0 0.0
  %2331 = vmatprep.subr.mxu0 0.0
  %2332 = vmatpush1.xpose.msra.mxu0 0.0
  %2333 = vmatprep.subr.mxu0 0.0
  %2334 = vmatpush1.xpose.msra.mxu0 0.0
  %2335 = vmatprep.subr.mxu0 0.0
  %2336 = vmatpush1.xpose.msra.mxu0 0.0
  %2337 = vmatprep.subr.mxu0 0.0
  %2338 = vmatpush1.xpose.msra.mxu0 0.0
  %2339 = vmatprep.subr.mxu0 0.0
  %2340 = vmatpush1.xpose.msra.mxu0 0.0
  %2341 = vmatprep.subr.mxu0 0.0
  %2342 = vmatpush1.xpose.msra.mxu0 0.0
  %2343 = vmatprep.subr.mxu0 0.0
  %2344 = vmatpush1.xpose.msra.mxu0 0.0
  %2345 = vmatprep.subr.mxu0 0.0
  %2346 = vmatpush1.xpose.msra.mxu0 0.0
  %2347 = vmatprep.mubr.f32.mxu0 0.0
  %2348 = vmatmul.mubr.f32.gmra.mrb[0].mxu0 %v2266
  %v2349 = vpop.f32.mrb[0].mxu0
  %v2350 = vadd.f32 %v236, %v2349
  %v2351 = vpop.f32.mrb[0].mxu0
  %2352 = vmatprep.mubr.f32.mxu0 0.0
  %2353 = vmatmul.mubr.f32.gmra.mrb[0].mxu0 %v2269
  %v2354 = vpop.f32.mrb[0].mxu0
  %v2355 = vadd.f32 %v237, %v2354
  %v2356 = vpop.f32.mrb[0].mxu0
  %2357 = vmatprep.mubr.f32.mxu0 0.0
  %2358 = vmatmul.mubr.f32.gmra.mrb[0].mxu0 %v2272
  %v2359 = vpop.f32.mrb[0].mxu0
  %v2360 = vadd.f32 %v238, %v2359
  %v2361 = vpop.f32.mrb[0].mxu0
  %2362 = vdwg.mxu0
  %v2363 = vsel %vm617, %v2350, -inf
  %2364 = vmax.xlane.f32.xlu0 %v2363
  %v2365 = vpop.xlane.xlu0 %2364
  %v2366 = vsel %vm617, %v2355, -inf
  %2367 = vmax.xlane.f32.xlu0 %v2366
  %v2368 = vpop.xlane.xlu0 %2367
  %v2369 = vsel %vm617, %v2360, -inf
  %2370 = vmax.xlane.f32.xlu0 %v2369
  %v2371 = vpop.xlane.xlu0 %2370
  %v2372 = vsub.f32 %v2350, %v2365
  %v2373 = vsub.f32 %v2355, %v2368
  %v2374 = vsub.f32 %v2360, %v2371
  %v2375 = vmul.f32 %v2372, 1.442695
  %v2376 = vpow.pop %v2375
  %v2377 = vmul.f32 %v2373, 1.442695
  %v2378 = vpow.pop %v2377
  %v2379 = vmul.f32 %v2374, 1.442695
  %v2380 = vpow.pop %v2379
  %v2381 = vsel %vm617, %v2376, 0.0
  %2382 = vadd.xlane.f32.xlu0 %v2381
  %v2383 = vpop.xlane.xlu0 %2382
  %v2384 = vsel %vm617, %v2378, 0.0
  %2385 = vadd.xlane.f32.xlu0 %v2384
  %v2386 = vpop.xlane.xlu0 %2385
  %v2387 = vsel %vm617, %v2380, 0.0
  %2388 = vadd.xlane.f32.xlu0 %v2387
  %v2389 = vpop.xlane.xlu0 %2388
  %v2390 = vrcp.pop %v2383
  %v2391 = vrcp.pop %v2386
  %v2392 = vrcp.pop %v2389
  %v2393 = vmul.f32 %v2376, %v2390
  %v2394 = vmul.f32 %v2378, %v2391
  %v2395 = vmul.f32 %v2380, %v2392
  %v2397 = vsel %vm617, %v2393, 0
  %v2400 = vsel %vm617, %v2394, 0
  %v2403 = vsel %vm617, %v2395, 0
  %2405 = vmatprep.subr.mxu0 0.0
  %2406 = vmatpush1.msra.mxu0 %v2252
  %2407 = vmatprep.subr.mxu0 0.0
  %2408 = vmatpush1.msra.mxu0 %v2257
  %2409 = vmatprep.subr.mxu0 0.0
  %2410 = vmatpush1.msra.mxu0 %v2262
  %2411 = vmatprep.subr.mxu0 0.0
  %2412 = vmatpush1.msra.mxu0 0.0
  %2413 = vmatprep.subr.mxu0 0.0
  %2414 = vmatpush1.msra.mxu0 0.0
  %2415 = vmatprep.subr.mxu0 0.0
  %2416 = vmatpush1.msra.mxu0 0.0
  %2417 = vmatprep.subr.mxu0 0.0
  %2418 = vmatpush1.msra.mxu0 0.0
  %2419 = vmatprep.subr.mxu0 0.0
  %2420 = vmatpush1.msra.mxu0 0.0
  %2421 = vmatprep.subr.mxu0 0.0
  %2422 = vmatpush1.msra.mxu0 0.0
  %2423 = vmatprep.subr.mxu0 0.0
  %2424 = vmatpush1.msra.mxu0 0.0
  %2425 = vmatprep.subr.mxu0 0.0
  %2426 = vmatpush1.msra.mxu0 0.0
  %2427 = vmatprep.subr.mxu0 0.0
  %2428 = vmatpush1.msra.mxu0 0.0
  %2429 = vmatprep.subr.mxu0 0.0
  %2430 = vmatpush1.msra.mxu0 0.0
  %2431 = vmatprep.subr.mxu0 0.0
  %2432 = vmatpush1.msra.mxu0 0.0
  %2433 = vmatprep.subr.mxu0 0.0
  %2434 = vmatpush1.msra.mxu0 0.0
  %2435 = vmatprep.subr.mxu0 0.0
  %2436 = vmatpush1.msra.mxu0 0.0
  %2437 = vmatprep.subr.mxu0 0.0
  %2438 = vmatpush1.msra.mxu0 0.0
  %2439 = vmatprep.subr.mxu0 0.0
  %2440 = vmatpush1.msra.mxu0 0.0
  %2441 = vmatprep.subr.mxu0 0.0
  %2442 = vmatpush1.msra.mxu0 0.0
  %2443 = vmatprep.subr.mxu0 0.0
  %2444 = vmatpush1.msra.mxu0 0.0
  %2445 = vmatprep.subr.mxu0 0.0
  %2446 = vmatpush1.msra.mxu0 0.0
  %2447 = vmatprep.subr.mxu0 0.0
  %2448 = vmatpush1.msra.mxu0 0.0
  %2449 = vmatprep.subr.mxu0 0.0
  %2450 = vmatpush1.msra.mxu0 0.0
  %2451 = vmatprep.subr.mxu0 0.0
  %2452 = vmatpush1.msra.mxu0 0.0
  %2453 = vmatprep.subr.mxu0 0.0
  %2454 = vmatpush1.msra.mxu0 0.0
  %2455 = vmatprep.subr.mxu0 0.0
  %2456 = vmatpush1.msra.mxu0 0.0
  %2457 = vmatprep.subr.mxu0 0.0
  %2458 = vmatpush1.msra.mxu0 0.0
  %2459 = vmatprep.subr.mxu0 0.0
  %2460 = vmatpush1.msra.mxu0 0.0
  %2461 = vmatprep.subr.mxu0 0.0
  %2462 = vmatpush1.msra.mxu0 0.0
  %2463 = vmatprep.subr.mxu0 0.0
  %2464 = vmatpush1.msra.mxu0 0.0
  %2465 = vmatprep.subr.mxu0 0.0
  %2466 = vmatpush1.msra.mxu0 0.0
  %2467 = vmatprep.subr.mxu0 0.0
  %2468 = vmatpush1.msra.mxu0 0.0
  %2469 = vmatprep.mubr.f32.mxu0 0.0
  %2470 = vmatmul.mubr.f32.gmra.mrb[0].mxu0 %v2397
  %v2471 = vpop.f32.mrb[0].mxu0
  %v2472 = vadd.f32 0.0, %v2471
  %v2473 = vpop.f32.mrb[0].mxu0
  %2474 = vmatprep.mubr.f32.mxu0 0.0
  %2475 = vmatmul.mubr.f32.gmra.mrb[0].mxu0 %v2400
  %v2476 = vpop.f32.mrb[0].mxu0
  %v2477 = vadd.f32 0.0, %v2476
  %v2478 = vpop.f32.mrb[0].mxu0
  %2479 = vmatprep.mubr.f32.mxu0 0.0
  %2480 = vmatmul.mubr.f32.gmra.mrb[0].mxu0 %v2403
  %v2481 = vpop.f32.mrb[0].mxu0
  %v2482 = vadd.f32 0.0, %v2481
  %v2483 = vpop.f32.mrb[0].mxu0
  %2484 = vdwg.mxu0
  %s2485 = scalar_lea.vmem %s7, 24
  %v2486 = vld [vmem:[%s2485] sm:$0xff]
  %v2488 = vsel %vm518, %v2472, 0
  %v2491 = vsel %vm518, %v2477, 0
  %v2494 = vsel %vm518, %v2482, 0
  %2496 = vmatprep.subr.mxu0 0.0
  %2497 = vmatpush1.msra.mxu0 %v2486
  %2498 = vmatprep.subr.mxu0 0.0
  %2499 = vmatpush1.msra.mxu0 0.0
  %2500 = vmatprep.subr.mxu0 0.0
  %2501 = vmatpush1.msra.mxu0 0.0
  %2502 = vmatprep.subr.mxu0 0.0
  %2503 = vmatpush1.msra.mxu0 0.0
  %2504 = vmatprep.subr.mxu0 0.0
  %2505 = vmatpush1.msra.mxu0 0.0
  %2506 = vmatprep.subr.mxu0 0.0
  %2507 = vmatpush1.msra.mxu0 0.0
  %2508 = vmatprep.subr.mxu0 0.0
  %2509 = vmatpush1.msra.mxu0 0.0
  %2510 = vmatprep.subr.mxu0 0.0
  %2511 = vmatpush1.msra.mxu0 0.0
  %2512 = vmatprep.subr.mxu0 0.0
  %2513 = vmatpush1.msra.mxu0 0.0
  %2514 = vmatprep.subr.mxu0 0.0
  %2515 = vmatpush1.msra.mxu0 0.0
  %2516 = vmatprep.subr.mxu0 0.0
  %2517 = vmatpush1.msra.mxu0 0.0
  %2518 = vmatprep.subr.mxu0 0.0
  %2519 = vmatpush1.msra.mxu0 0.0
  %2520 = vmatprep.subr.mxu0 0.0
  %2521 = vmatpush1.msra.mxu0 0.0
  %2522 = vmatprep.subr.mxu0 0.0
  %2523 = vmatpush1.msra.mxu0 0.0
  %2524 = vmatprep.subr.mxu0 0.0
  %2525 = vmatpush1.msra.mxu0 0.0
  %2526 = vmatprep.subr.mxu0 0.0
  %2527 = vmatpush1.msra.mxu0 0.0
  %2528 = vmatprep.subr.mxu0 0.0
  %2529 = vmatpush1.msra.mxu0 0.0
  %2530 = vmatprep.subr.mxu0 0.0
  %2531 = vmatpush1.msra.mxu0 0.0
  %2532 = vmatprep.subr.mxu0 0.0
  %2533 = vmatpush1.msra.mxu0 0.0
  %2534 = vmatprep.subr.mxu0 0.0
  %2535 = vmatpush1.msra.mxu0 0.0
  %2536 = vmatprep.subr.mxu0 0.0
  %2537 = vmatpush1.msra.mxu0 0.0
  %2538 = vmatprep.subr.mxu0 0.0
  %2539 = vmatpush1.msra.mxu0 0.0
  %2540 = vmatprep.subr.mxu0 0.0
  %2541 = vmatpush1.msra.mxu0 0.0
  %2542 = vmatprep.subr.mxu0 0.0
  %2543 = vmatpush1.msra.mxu0 0.0
  %2544 = vmatprep.subr.mxu0 0.0
  %2545 = vmatpush1.msra.mxu0 0.0
  %2546 = vmatprep.subr.mxu0 0.0
  %2547 = vmatpush1.msra.mxu0 0.0
  %2548 = vmatprep.subr.mxu0 0.0
  %2549 = vmatpush1.msra.mxu0 0.0
  %2550 = vmatprep.subr.mxu0 0.0
  %2551 = vmatpush1.msra.mxu0 0.0
  %2552 = vmatprep.subr.mxu0 0.0
  %2553 = vmatpush1.msra.mxu0 0.0
  %2554 = vmatprep.subr.mxu0 0.0
  %2555 = vmatpush1.msra.mxu0 0.0
  %2556 = vmatprep.subr.mxu0 0.0
  %2557 = vmatpush1.msra.mxu0 0.0
  %2558 = vmatprep.subr.mxu0 0.0
  %2559 = vmatpush1.msra.mxu0 0.0
  %2560 = vmatprep.mubr.f32.mxu0 0.0
  %2561 = vmatmul.mubr.f32.gmra.mrb[0].mxu0 %v2488
  %v2562 = vpop.f32.mrb[0].mxu0
  %v2563 = vadd.f32 0.0, %v2562
  %v2564 = vpop.f32.mrb[0].mxu0
  %2565 = vmatprep.mubr.f32.mxu0 0.0
  %2566 = vmatmul.mubr.f32.gmra.mrb[0].mxu0 %v2491
  %v2567 = vpop.f32.mrb[0].mxu0
  %v2568 = vadd.f32 0.0, %v2567
  %v2569 = vpop.f32.mrb[0].mxu0
  %2570 = vmatprep.mubr.f32.mxu0 0.0
  %2571 = vmatmul.mubr.f32.gmra.mrb[0].mxu0 %v2494
  %v2572 = vpop.f32.mrb[0].mxu0
  %v2573 = vadd.f32 0.0, %v2572
  %v2574 = vpop.f32.mrb[0].mxu0
  %2575 = vdwg.mxu0
  %v2576 = vadd.f32 %v1992, %v2563
  %v2577 = vadd.f32 %v1993, %v2568
  %v2578 = vadd.f32 %v1994, %v2573
  %v2579 = vlaneseq
  %v2580 = vshrl.u32 %v2579, 7
  %v2581 = vsub.s32 0, %v2580
  %v2582 = vrot.slane %v239, %v2581
  %v2583 = vadd.f32 %v2576, %v2582
  %v2584 = vadd.f32 %v2577, %v2582
  %v2585 = vadd.f32 %v2578, %v2582
  %v2586 = vadd.f32 %v2583, %v201
  %v2587 = vadd.f32 %v2584, %v202
  %v2588 = vadd.f32 %v2585, %v203
  %v2589 = vsel %vm149, %v2586, 0.0
  %2590 = vadd.xlane.f32.xlu0 %v2589
  %v2591 = vpop.xlane.xlu0 %2590
  %v2592 = vsel %vm149, %v2587, 0.0
  %2593 = vadd.xlane.f32.xlu0 %v2592
  %v2594 = vpop.xlane.xlu0 %2593
  %v2595 = vsel %vm149, %v2588, 0.0
  %2596 = vadd.xlane.f32.xlu0 %v2595
  %v2597 = vpop.xlane.xlu0 %2596
  %v2598 = vmul.f32 %v2591, %v159
  %v2599 = vmul.f32 %v2594, %v159
  %v2600 = vmul.f32 %v2597, %v159
  %v2601 = vsub.f32 %v2586, %v2598
  %v2602 = vsub.f32 %v2587, %v2599
  %v2603 = vsub.f32 %v2588, %v2600
  %v2604 = vmul.f32 %v2601, %v2601
  %v2605 = vmul.f32 %v2602, %v2602
  %v2606 = vmul.f32 %v2603, %v2603
  %v2607 = vsel %vm149, %v2604, 0.0
  %2608 = vadd.xlane.f32.xlu0 %v2607
  %v2609 = vpop.xlane.xlu0 %2608
  %v2610 = vsel %vm149, %v2605, 0.0
  %2611 = vadd.xlane.f32.xlu0 %v2610
  %v2612 = vpop.xlane.xlu0 %2611
  %v2613 = vsel %vm149, %v2606, 0.0
  %2614 = vadd.xlane.f32.xlu0 %v2613
  %v2615 = vpop.xlane.xlu0 %2614
  %v2616 = vmul.f32 %v2609, %v159
  %v2617 = vmul.f32 %v2612, %v159
  %v2618 = vmul.f32 %v2615, %v159
  %v2619 = vadd.f32 %v2616, 1e-12
  %v2620 = vadd.f32 %v2617, 1e-12
  %v2621 = vadd.f32 %v2618, 1e-12
  %v2622 = vrsqrt.pop %v2619
  %v2623 = vrsqrt.pop %v2620
  %v2624 = vrsqrt.pop %v2621
  %v2625 = vmul.f32 %v2601, %v2622
  %v2626 = vmul.f32 %v2602, %v2623
  %v2627 = vmul.f32 %v2603, %v2624
  %v2628 = vlaneseq
  %v2629 = vshrl.u32 %v2628, 7
  %v2630 = vsub.s32 1, %v2629
  %v2631 = vrot.slane %v239, %v2630
  %v2632 = vmul.f32 %v2625, %v2631
  %v2633 = vmul.f32 %v2626, %v2631
  %v2634 = vmul.f32 %v2627, %v2631
  %v2635 = vlaneseq
  %v2636 = vshrl.u32 %v2635, 7
  %v2637 = vsub.s32 2, %v2636
  %v2638 = vrot.slane %v239, %v2637
  %v2639 = vadd.f32 %v2632, %v2638
  %v2640 = vadd.f32 %v2633, %v2638
  %v2641 = vadd.f32 %v2634, %v2638
  %v2642 = vld [vmem:[%s8] sm:$0xff]
  %v2643 = vld [vmem:[%s8 + $0x8] sm:$0xff]
  %v2644 = vld [vmem:[%s8 + $0x10] sm:$0xff]
  %v2645 = vld [vmem:[%s8 + $0x18] sm:$0xff]
  %v2646 = vld [vmem:[%s8 + $0x20] sm:$0xff]
  %v2647 = vld [vmem:[%s8 + $0x28] sm:$0xff]
  %v2648 = vld [vmem:[%s8 + $0x30] sm:$0xff]
  %v2649 = vld [vmem:[%s8 + $0x38] sm:$0xff]
  %v2650 = vld [vmem:[%s8 + $0x40] sm:$0xff]
  %v2651 = vld [vmem:[%s8 + $0x48] sm:$0xff]
  %v2652 = vld [vmem:[%s8 + $0x50] sm:$0xff]
  %v2653 = vld [vmem:[%s8 + $0x58] sm:$0xff]
  %v2654 = vlaneseq
  %v2655 = vshrl.u32 %v2654, 7
  %v2656 = vsub.s32 3, %v2655
  %v2657 = vrot.slane %v239, %v2656
  %v2659 = vsel %vm149, %v2639, 0
  %v2662 = vsel %vm149, %v2640, 0
  %v2665 = vsel %vm149, %v2641, 0
  %2667 = vmatprep.subr.mxu0 0.0
  %2668 = vmatpush1.msra.mxu0 %v2642
  %2669 = vmatprep.subr.mxu0 0.0
  %2670 = vmatpush1.msra.mxu0 %v2643
  %2671 = vmatprep.subr.mxu0 0.0
  %2672 = vmatpush1.msra.mxu0 %v2644
  %2673 = vmatprep.subr.mxu0 0.0
  %2674 = vmatpush1.msra.mxu0 %v2645
  %2675 = vmatprep.subr.mxu0 0.0
  %2676 = vmatpush1.msra.mxu0 0.0
  %2677 = vmatprep.subr.mxu0 0.0
  %2678 = vmatpush1.msra.mxu0 0.0
  %2679 = vmatprep.subr.mxu0 0.0
  %2680 = vmatpush1.msra.mxu0 0.0
  %2681 = vmatprep.subr.mxu0 0.0
  %2682 = vmatpush1.msra.mxu0 0.0
  %2683 = vmatprep.subr.mxu0 0.0
  %2684 = vmatpush1.msra.mxu0 0.0
  %2685 = vmatprep.subr.mxu0 0.0
  %2686 = vmatpush1.msra.mxu0 0.0
  %2687 = vmatprep.subr.mxu0 0.0
  %2688 = vmatpush1.msra.mxu0 0.0
  %2689 = vmatprep.subr.mxu0 0.0
  %2690 = vmatpush1.msra.mxu0 0.0
  %2691 = vmatprep.subr.mxu0 0.0
  %2692 = vmatpush1.msra.mxu0 0.0
  %2693 = vmatprep.subr.mxu0 0.0
  %2694 = vmatpush1.msra.mxu0 0.0
  %2695 = vmatprep.subr.mxu0 0.0
  %2696 = vmatpush1.msra.mxu0 0.0
  %2697 = vmatprep.subr.mxu0 0.0
  %2698 = vmatpush1.msra.mxu0 0.0
  %2699 = vmatprep.subr.mxu0 0.0
  %2700 = vmatpush1.msra.mxu0 0.0
  %2701 = vmatprep.subr.mxu0 0.0
  %2702 = vmatpush1.msra.mxu0 0.0
  %2703 = vmatprep.subr.mxu0 0.0
  %2704 = vmatpush1.msra.mxu0 0.0
  %2705 = vmatprep.subr.mxu0 0.0
  %2706 = vmatpush1.msra.mxu0 0.0
  %2707 = vmatprep.subr.mxu0 0.0
  %2708 = vmatpush1.msra.mxu0 0.0
  %2709 = vmatprep.subr.mxu0 0.0
  %2710 = vmatpush1.msra.mxu0 0.0
  %2711 = vmatprep.subr.mxu0 0.0
  %2712 = vmatpush1.msra.mxu0 0.0
  %2713 = vmatprep.subr.mxu0 0.0
  %2714 = vmatpush1.msra.mxu0 0.0
  %2715 = vmatprep.subr.mxu0 0.0
  %2716 = vmatpush1.msra.mxu0 0.0
  %2717 = vmatprep.subr.mxu0 0.0
  %2718 = vmatpush1.msra.mxu0 0.0
  %2719 = vmatprep.subr.mxu0 0.0
  %2720 = vmatpush1.msra.mxu0 0.0
  %2721 = vmatprep.subr.mxu0 0.0
  %2722 = vmatpush1.msra.mxu0 0.0
  %2723 = vmatprep.subr.mxu0 0.0
  %2724 = vmatpush1.msra.mxu0 0.0
  %2725 = vmatprep.subr.mxu0 0.0
  %2726 = vmatpush1.msra.mxu0 0.0
  %2727 = vmatprep.subr.mxu0 0.0
  %2728 = vmatpush1.msra.mxu0 0.0
  %2729 = vmatprep.subr.mxu0 0.0
  %2730 = vmatpush1.msra.mxu0 0.0
  %2731 = vmatprep.mubr.f32.mxu0 0.0
  %2732 = vmatmul.mubr.f32.gmra.mrb[0].mxu0 %v2659
  %v2733 = vpop.f32.mrb[0].mxu0
  %v2734 = vadd.f32 %v2657, %v2733
  %v2735 = vpop.f32.mrb[0].mxu0
  %2736 = vmatprep.mubr.f32.mxu0 0.0
  %2737 = vmatmul.mubr.f32.gmra.mrb[0].mxu0 %v2662
  %v2738 = vpop.f32.mrb[0].mxu0
  %v2739 = vadd.f32 %v2657, %v2738
  %v2740 = vpop.f32.mrb[0].mxu0
  %2741 = vmatprep.mubr.f32.mxu0 0.0
  %2742 = vmatmul.mubr.f32.gmra.mrb[0].mxu0 %v2665
  %v2743 = vpop.f32.mrb[0].mxu0
  %v2744 = vadd.f32 %v2657, %v2743
  %v2745 = vpop.f32.mrb[0].mxu0
  %2746 = vdwg.mxu0
  %v2747 = vmul.f32 %v2734, 0.5
  %v2748 = vmul.f32 %v2739, 0.5
  %v2749 = vmul.f32 %v2744, 0.5
  %v2750 = vmul.f32 %v2734, 0.044715
  %v2751 = vmul.f32 %v2739, 0.044715
  %v2752 = vmul.f32 %v2744, 0.044715
  %v2753 = vmul.f32 %v2750, %v2734
  %v2754 = vmul.f32 %v2751, %v2739
  %v2755 = vmul.f32 %v2752, %v2744
  %v2756 = vmul.f32 %v2753, %v2734
  %v2757 = vmul.f32 %v2754, %v2739
  %v2758 = vmul.f32 %v2755, %v2744
  %v2759 = vadd.f32 %v2734, %v2756
  %v2760 = vadd.f32 %v2739, %v2757
  %v2761 = vadd.f32 %v2744, %v2758
  %v2762 = vmul.f32 %v2759, 0.7978846
  %v2763 = vmul.f32 %v2760, 0.7978846
  %v2764 = vmul.f32 %v2761, 0.7978846
  %v2765 = vtanh.pop %v2762
  %v2766 = vtanh.pop %v2763
  %v2767 = vtanh.pop %v2764
  %v2768 = vadd.f32 %v2765, 1.0
  %v2769 = vadd.f32 %v2766, 1.0
  %v2770 = vadd.f32 %v2767, 1.0
  %v2771 = vmul.f32 %v2747, %v2768
  %v2772 = vmul.f32 %v2748, %v2769
  %v2773 = vmul.f32 %v2749, %v2770
  %v2774 = vlaneseq
  %v2775 = vshrl.u32 %v2774, 7
  %v2776 = vsub.s32 4, %v2775
  %v2777 = vrot.slane %v239, %v2776
  %vm2778 = vcmask 523264
  %v2780 = vsel %vm2778, %v2771, 0
  %v2783 = vsel %vm2778, %v2772, 0
  %v2786 = vsel %vm2778, %v2773, 0
  %2788 = vmatprep.subr.mxu0 0.0
  %2789 = vmatpush1.msra.mxu0 %v2646
  %2790 = vmatprep.subr.mxu0 0.0
  %2791 = vmatpush1.msra.mxu0 %v2647
  %2792 = vmatprep.subr.mxu0 0.0
  %2793 = vmatpush1.msra.mxu0 %v2648
  %2794 = vmatprep.subr.mxu0 0.0
  %2795 = vmatpush1.msra.mxu0 %v2649
  %2796 = vmatprep.subr.mxu0 0.0
  %2797 = vmatpush1.msra.mxu0 %v2650
  %2798 = vmatprep.subr.mxu0 0.0
  %2799 = vmatpush1.msra.mxu0 %v2651
  %2800 = vmatprep.subr.mxu0 0.0
  %2801 = vmatpush1.msra.mxu0 %v2652
  %2802 = vmatprep.subr.mxu0 0.0
  %2803 = vmatpush1.msra.mxu0 %v2653
  %2804 = vmatprep.subr.mxu0 0.0
  %2805 = vmatpush1.msra.mxu0 0.0
  %2806 = vmatprep.subr.mxu0 0.0
  %2807 = vmatpush1.msra.mxu0 0.0
  %2808 = vmatprep.subr.mxu0 0.0
  %2809 = vmatpush1.msra.mxu0 0.0
  %2810 = vmatprep.subr.mxu0 0.0
  %2811 = vmatpush1.msra.mxu0 0.0
  %2812 = vmatprep.subr.mxu0 0.0
  %2813 = vmatpush1.msra.mxu0 0.0
  %2814 = vmatprep.subr.mxu0 0.0
  %2815 = vmatpush1.msra.mxu0 0.0
  %2816 = vmatprep.subr.mxu0 0.0
  %2817 = vmatpush1.msra.mxu0 0.0
  %2818 = vmatprep.subr.mxu0 0.0
  %2819 = vmatpush1.msra.mxu0 0.0
  %2820 = vmatprep.subr.mxu0 0.0
  %2821 = vmatpush1.msra.mxu0 0.0
  %2822 = vmatprep.subr.mxu0 0.0
  %2823 = vmatpush1.msra.mxu0 0.0
  %2824 = vmatprep.subr.mxu0 0.0
  %2825 = vmatpush1.msra.mxu0 0.0
  %2826 = vmatprep.subr.mxu0 0.0
  %2827 = vmatpush1.msra.mxu0 0.0
  %2828 = vmatprep.subr.mxu0 0.0
  %2829 = vmatpush1.msra.mxu0 0.0
  %2830 = vmatprep.subr.mxu0 0.0
  %2831 = vmatpush1.msra.mxu0 0.0
  %2832 = vmatprep.subr.mxu0 0.0
  %2833 = vmatpush1.msra.mxu0 0.0
  %2834 = vmatprep.subr.mxu0 0.0
  %2835 = vmatpush1.msra.mxu0 0.0
  %2836 = vmatprep.subr.mxu0 0.0
  %2837 = vmatpush1.msra.mxu0 0.0
  %2838 = vmatprep.subr.mxu0 0.0
  %2839 = vmatpush1.msra.mxu0 0.0
  %2840 = vmatprep.subr.mxu0 0.0
  %2841 = vmatpush1.msra.mxu0 0.0
  %2842 = vmatprep.subr.mxu0 0.0
  %2843 = vmatpush1.msra.mxu0 0.0
  %2844 = vmatprep.subr.mxu0 0.0
  %2845 = vmatpush1.msra.mxu0 0.0
  %2846 = vmatprep.subr.mxu0 0.0
  %2847 = vmatpush1.msra.mxu0 0.0
  %2848 = vmatprep.subr.mxu0 0.0
  %2849 = vmatpush1.msra.mxu0 0.0
  %2850 = vmatprep.subr.mxu0 0.0
  %2851 = vmatpush1.msra.mxu0 0.0
  %2852 = vmatprep.mubr.f32.mxu0 0.0
  %2853 = vmatmul.mubr.f32.gmra.mrb[0].mxu0 %v2780
  %v2854 = vpop.f32.mrb[0].mxu0
  %v2855 = vadd.f32 %v2777, %v2854
  %v2856 = vpop.f32.mrb[0].mxu0
  %2857 = vmatprep.mubr.f32.mxu0 0.0
  %2858 = vmatmul.mubr.f32.gmra.mrb[0].mxu0 %v2783
  %v2859 = vpop.f32.mrb[0].mxu0
  %v2860 = vadd.f32 %v2777, %v2859
  %v2861 = vpop.f32.mrb[0].mxu0
  %2862 = vmatprep.mubr.f32.mxu0 0.0
  %2863 = vmatmul.mubr.f32.gmra.mrb[0].mxu0 %v2786
  %v2864 = vpop.f32.mrb[0].mxu0
  %v2865 = vadd.f32 %v2777, %v2864
  %v2866 = vpop.f32.mrb[0].mxu0
  %2867 = vdwg.mxu0
  %v2868 = vadd.f32 %v2855, %v2639
  %v2869 = vadd.f32 %v2860, %v2640
  %v2870 = vadd.f32 %v2865, %v2641
  %v2871 = vsel %vm149, %v2868, 0.0
  %2872 = vadd.xlane.f32.xlu0 %v2871
  %v2873 = vpop.xlane.xlu0 %2872
  %v2874 = vsel %vm149, %v2869, 0.0
  %2875 = vadd.xlane.f32.xlu0 %v2874
  %v2876 = vpop.xlane.xlu0 %2875
  %v2877 = vsel %vm149, %v2870, 0.0
  %2878 = vadd.xlane.f32.xlu0 %v2877
  %v2879 = vpop.xlane.xlu0 %2878
  %v2880 = vmul.f32 %v2873, %v159
  %v2881 = vmul.f32 %v2876, %v159
  %v2882 = vmul.f32 %v2879, %v159
  %v2883 = vsub.f32 %v2868, %v2880
  %v2884 = vsub.f32 %v2869, %v2881
  %v2885 = vsub.f32 %v2870, %v2882
  %v2886 = vmul.f32 %v2883, %v2883
  %v2887 = vmul.f32 %v2884, %v2884
  %v2888 = vmul.f32 %v2885, %v2885
  %v2889 = vsel %vm149, %v2886, 0.0
  %2890 = vadd.xlane.f32.xlu0 %v2889
  %v2891 = vpop.xlane.xlu0 %2890
  %v2892 = vsel %vm149, %v2887, 0.0
  %2893 = vadd.xlane.f32.xlu0 %v2892
  %v2894 = vpop.xlane.xlu0 %2893
  %v2895 = vsel %vm149, %v2888, 0.0
  %2896 = vadd.xlane.f32.xlu0 %v2895
  %v2897 = vpop.xlane.xlu0 %2896
  %v2898 = vmul.f32 %v2891, %v159
  %v2899 = vmul.f32 %v2894, %v159
  %v2900 = vmul.f32 %v2897, %v159
  %v2901 = vadd.f32 %v2898, 1e-12
  %v2902 = vadd.f32 %v2899, 1e-12
  %v2903 = vadd.f32 %v2900, 1e-12
  %v2904 = vrsqrt.pop %v2901
  %v2905 = vrsqrt.pop %v2902
  %v2906 = vrsqrt.pop %v2903
  %v2907 = vmul.f32 %v2883, %v2904
  %v2908 = vmul.f32 %v2884, %v2905
  %v2909 = vmul.f32 %v2885, %v2906
  %v2910 = vlaneseq
  %v2911 = vshrl.u32 %v2910, 7
  %v2912 = vsub.s32 5, %v2911
  %v2913 = vrot.slane %v239, %v2912
  %v2914 = vmul.f32 %v2907, %v2913
  %v2915 = vmul.f32 %v2908, %v2913
  %v2916 = vmul.f32 %v2909, %v2913
  %v2917 = vlaneseq
  %v2918 = vshrl.u32 %v2917, 7
  %v2919 = vsub.s32 6, %v2918
  %v2920 = vrot.slane %v239, %v2919
  %v2921 = vadd.f32 %v2914, %v2920
  %v2922 = vadd.f32 %v2915, %v2920
  %v2923 = vadd.f32 %v2916, %v2920
  %s2924 = scalar_lea.vmem %s5, 8
  %v2925 = vld [vmem:[%s2924] sm:$0xff]
  %s2926 = scalar_lea.vmem %s6, 480
  %v2927 = vld [vmem:[%s2926] sm:$0xff]
  %v2928 = vld [vmem:[%s2926 + $0x8] sm:$0xff]
  %v2929 = vld [vmem:[%s2926 + $0x10] sm:$0xff]
  %v2930 = vld [vmem:[%s2926 + $0x18] sm:$0xff]
  %v2931 = vld [vmem:[%s2926 + $0x20] sm:$0xff]
  %s2932 = scalar_lea.vmem %s6, 520
  %v2933 = vld [vmem:[%s2932] sm:$0xff]
  %v2934 = vld [vmem:[%s2932 + $0x8] sm:$0xff]
  %v2935 = vld [vmem:[%s2932 + $0x10] sm:$0xff]
  %v2936 = vld [vmem:[%s2932 + $0x18] sm:$0xff]
  %v2937 = vld [vmem:[%s2932 + $0x20] sm:$0xff]
  %s2938 = scalar_lea.vmem %s6, 560
  %v2939 = vld [vmem:[%s2938] sm:$0xff]
  %v2940 = vld [vmem:[%s2938 + $0x8] sm:$0xff]
  %v2941 = vld [vmem:[%s2938 + $0x10] sm:$0xff]
  %v2942 = vld [vmem:[%s2938 + $0x18] sm:$0xff]
  %v2943 = vld [vmem:[%s2938 + $0x20] sm:$0xff]
  %v2944 = vlaneseq
  %v2945 = vshrl.u32 %v2944, 7
  %v2946 = vsub.s32 0, %v2945
  %v2947 = vrot.slane %v2931, %v2946
  %v2949 = vsel %vm149, %v2921, 0
  %v2952 = vsel %vm149, %v2922, 0
  %v2955 = vsel %vm149, %v2923, 0
  %2957 = vmatprep.subr.mxu0 0.0
  %2958 = vmatpush1.msra.mxu0 %v2927
  %2959 = vmatprep.subr.mxu0 0.0
  %2960 = vmatpush1.msra.mxu0 %v2928
  %2961 = vmatprep.subr.mxu0 0.0
  %2962 = vmatpush1.msra.mxu0 %v2929
  %2963 = vmatprep.subr.mxu0 0.0
  %2964 = vmatpush1.msra.mxu0 %v2930
  %2965 = vmatprep.subr.mxu0 0.0
  %2966 = vmatpush1.msra.mxu0 0.0
  %2967 = vmatprep.subr.mxu0 0.0
  %2968 = vmatpush1.msra.mxu0 0.0
  %2969 = vmatprep.subr.mxu0 0.0
  %2970 = vmatpush1.msra.mxu0 0.0
  %2971 = vmatprep.subr.mxu0 0.0
  %2972 = vmatpush1.msra.mxu0 0.0
  %2973 = vmatprep.subr.mxu0 0.0
  %2974 = vmatpush1.msra.mxu0 0.0
  %2975 = vmatprep.subr.mxu0 0.0
  %2976 = vmatpush1.msra.mxu0 0.0
  %2977 = vmatprep.subr.mxu0 0.0
  %2978 = vmatpush1.msra.mxu0 0.0
  %2979 = vmatprep.subr.mxu0 0.0
  %2980 = vmatpush1.msra.mxu0 0.0
  %2981 = vmatprep.subr.mxu0 0.0
  %2982 = vmatpush1.msra.mxu0 0.0
  %2983 = vmatprep.subr.mxu0 0.0
  %2984 = vmatpush1.msra.mxu0 0.0
  %2985 = vmatprep.subr.mxu0 0.0
  %2986 = vmatpush1.msra.mxu0 0.0
  %2987 = vmatprep.subr.mxu0 0.0
  %2988 = vmatpush1.msra.mxu0 0.0
  %2989 = vmatprep.subr.mxu0 0.0
  %2990 = vmatpush1.msra.mxu0 0.0
  %2991 = vmatprep.subr.mxu0 0.0
  %2992 = vmatpush1.msra.mxu0 0.0
  %2993 = vmatprep.subr.mxu0 0.0
  %2994 = vmatpush1.msra.mxu0 0.0
  %2995 = vmatprep.subr.mxu0 0.0
  %2996 = vmatpush1.msra.mxu0 0.0
  %2997 = vmatprep.subr.mxu0 0.0
  %2998 = vmatpush1.msra.mxu0 0.0
  %2999 = vmatprep.subr.mxu0 0.0
  %3000 = vmatpush1.msra.mxu0 0.0
  %3001 = vmatprep.subr.mxu0 0.0
  %3002 = vmatpush1.msra.mxu0 0.0
  %3003 = vmatprep.subr.mxu0 0.0
  %3004 = vmatpush1.msra.mxu0 0.0
  %3005 = vmatprep.subr.mxu0 0.0
  %3006 = vmatpush1.msra.mxu0 0.0
  %3007 = vmatprep.subr.mxu0 0.0
  %3008 = vmatpush1.msra.mxu0 0.0
  %3009 = vmatprep.subr.mxu0 0.0
  %3010 = vmatpush1.msra.mxu0 0.0
  %3011 = vmatprep.subr.mxu0 0.0
  %3012 = vmatpush1.msra.mxu0 0.0
  %3013 = vmatprep.subr.mxu0 0.0
  %3014 = vmatpush1.msra.mxu0 0.0
  %3015 = vmatprep.subr.mxu0 0.0
  %3016 = vmatpush1.msra.mxu0 0.0
  %3017 = vmatprep.subr.mxu0 0.0
  %3018 = vmatpush1.msra.mxu0 0.0
  %3019 = vmatprep.subr.mxu0 0.0
  %3020 = vmatpush1.msra.mxu0 0.0
  %3021 = vmatprep.mubr.f32.mxu0 0.0
  %3022 = vmatmul.mubr.f32.gmra.mrb[0].mxu0 %v2949
  %v3023 = vpop.f32.mrb[0].mxu0
  %v3024 = vadd.f32 %v2947, %v3023
  %v3025 = vpop.f32.mrb[0].mxu0
  %3026 = vmatprep.mubr.f32.mxu0 0.0
  %3027 = vmatmul.mubr.f32.gmra.mrb[0].mxu0 %v2952
  %v3028 = vpop.f32.mrb[0].mxu0
  %v3029 = vadd.f32 %v2947, %v3028
  %v3030 = vpop.f32.mrb[0].mxu0
  %3031 = vmatprep.mubr.f32.mxu0 0.0
  %3032 = vmatmul.mubr.f32.gmra.mrb[0].mxu0 %v2955
  %v3033 = vpop.f32.mrb[0].mxu0
  %v3034 = vadd.f32 %v2947, %v3033
  %v3035 = vpop.f32.mrb[0].mxu0
  %3036 = vdwg.mxu0
  %v3037 = vlaneseq
  %v3038 = vshrl.u32 %v3037, 7
  %v3039 = vsub.s32 0, %v3038
  %v3040 = vrot.slane %v2937, %v3039
  %3041 = vmatprep.subr.mxu0 0.0
  %3042 = vmatpush1.msra.mxu0 %v2933
  %3043 = vmatprep.subr.mxu0 0.0
  %3044 = vmatpush1.msra.mxu0 %v2934
  %3045 = vmatprep.subr.mxu0 0.0
  %3046 = vmatpush1.msra.mxu0 %v2935
  %3047 = vmatprep.subr.mxu0 0.0
  %3048 = vmatpush1.msra.mxu0 %v2936
  %3049 = vmatprep.subr.mxu0 0.0
  %3050 = vmatpush1.msra.mxu0 0.0
  %3051 = vmatprep.subr.mxu0 0.0
  %3052 = vmatpush1.msra.mxu0 0.0
  %3053 = vmatprep.subr.mxu0 0.0
  %3054 = vmatpush1.msra.mxu0 0.0
  %3055 = vmatprep.subr.mxu0 0.0
  %3056 = vmatpush1.msra.mxu0 0.0
  %3057 = vmatprep.subr.mxu0 0.0
  %3058 = vmatpush1.msra.mxu0 0.0
  %3059 = vmatprep.subr.mxu0 0.0
  %3060 = vmatpush1.msra.mxu0 0.0
  %3061 = vmatprep.subr.mxu0 0.0
  %3062 = vmatpush1.msra.mxu0 0.0
  %3063 = vmatprep.subr.mxu0 0.0
  %3064 = vmatpush1.msra.mxu0 0.0
  %3065 = vmatprep.subr.mxu0 0.0
  %3066 = vmatpush1.msra.mxu0 0.0
  %3067 = vmatprep.subr.mxu0 0.0
  %3068 = vmatpush1.msra.mxu0 0.0
  %3069 = vmatprep.subr.mxu0 0.0
  %3070 = vmatpush1.msra.mxu0 0.0
  %3071 = vmatprep.subr.mxu0 0.0
  %3072 = vmatpush1.msra.mxu0 0.0
  %3073 = vmatprep.subr.mxu0 0.0
  %3074 = vmatpush1.msra.mxu0 0.0
  %3075 = vmatprep.subr.mxu0 0.0
  %3076 = vmatpush1.msra.mxu0 0.0
  %3077 = vmatprep.subr.mxu0 0.0
  %3078 = vmatpush1.msra.mxu0 0.0
  %3079 = vmatprep.subr.mxu0 0.0
  %3080 = vmatpush1.msra.mxu0 0.0
  %3081 = vmatprep.subr.mxu0 0.0
  %3082 = vmatpush1.msra.mxu0 0.0
  %3083 = vmatprep.subr.mxu0 0.0
  %3084 = vmatpush1.msra.mxu0 0.0
  %3085 = vmatprep.subr.mxu0 0.0
  %3086 = vmatpush1.msra.mxu0 0.0
  %3087 = vmatprep.subr.mxu0 0.0
  %3088 = vmatpush1.msra.mxu0 0.0
  %3089 = vmatprep.subr.mxu0 0.0
  %3090 = vmatpush1.msra.mxu0 0.0
  %3091 = vmatprep.subr.mxu0 0.0
  %3092 = vmatpush1.msra.mxu0 0.0
  %3093 = vmatprep.subr.mxu0 0.0
  %3094 = vmatpush1.msra.mxu0 0.0
  %3095 = vmatprep.subr.mxu0 0.0
  %3096 = vmatpush1.msra.mxu0 0.0
  %3097 = vmatprep.subr.mxu0 0.0
  %3098 = vmatpush1.msra.mxu0 0.0
  %3099 = vmatprep.subr.mxu0 0.0
  %3100 = vmatpush1.msra.mxu0 0.0
  %3101 = vmatprep.subr.mxu0 0.0
  %3102 = vmatpush1.msra.mxu0 0.0
  %3103 = vmatprep.subr.mxu0 0.0
  %3104 = vmatpush1.msra.mxu0 0.0
  %3105 = vmatprep.mubr.f32.mxu0 0.0
  %3106 = vmatmul.mubr.f32.gmra.mrb[0].mxu0 %v2949
  %v3107 = vpop.f32.mrb[0].mxu0
  %v3108 = vadd.f32 %v3040, %v3107
  %v3109 = vpop.f32.mrb[0].mxu0
  %3110 = vmatprep.mubr.f32.mxu0 0.0
  %3111 = vmatmul.mubr.f32.gmra.mrb[0].mxu0 %v2952
  %v3112 = vpop.f32.mrb[0].mxu0
  %v3113 = vadd.f32 %v3040, %v3112
  %v3114 = vpop.f32.mrb[0].mxu0
  %3115 = vmatprep.mubr.f32.mxu0 0.0
  %3116 = vmatmul.mubr.f32.gmra.mrb[0].mxu0 %v2955
  %v3117 = vpop.f32.mrb[0].mxu0
  %v3118 = vadd.f32 %v3040, %v3117
  %v3119 = vpop.f32.mrb[0].mxu0
  %3120 = vdwg.mxu0
  %v3121 = vlaneseq
  %v3122 = vshrl.u32 %v3121, 7
  %v3123 = vsub.s32 0, %v3122
  %v3124 = vrot.slane %v2943, %v3123
  %3125 = vmatprep.subr.mxu0 0.0
  %3126 = vmatpush1.msra.mxu0 %v2939
  %3127 = vmatprep.subr.mxu0 0.0
  %3128 = vmatpush1.msra.mxu0 %v2940
  %3129 = vmatprep.subr.mxu0 0.0
  %3130 = vmatpush1.msra.mxu0 %v2941
  %3131 = vmatprep.subr.mxu0 0.0
  %3132 = vmatpush1.msra.mxu0 %v2942
  %3133 = vmatprep.subr.mxu0 0.0
  %3134 = vmatpush1.msra.mxu0 0.0
  %3135 = vmatprep.subr.mxu0 0.0
  %3136 = vmatpush1.msra.mxu0 0.0
  %3137 = vmatprep.subr.mxu0 0.0
  %3138 = vmatpush1.msra.mxu0 0.0
  %3139 = vmatprep.subr.mxu0 0.0
  %3140 = vmatpush1.msra.mxu0 0.0
  %3141 = vmatprep.subr.mxu0 0.0
  %3142 = vmatpush1.msra.mxu0 0.0
  %3143 = vmatprep.subr.mxu0 0.0
  %3144 = vmatpush1.msra.mxu0 0.0
  %3145 = vmatprep.subr.mxu0 0.0
  %3146 = vmatpush1.msra.mxu0 0.0
  %3147 = vmatprep.subr.mxu0 0.0
  %3148 = vmatpush1.msra.mxu0 0.0
  %3149 = vmatprep.subr.mxu0 0.0
  %3150 = vmatpush1.msra.mxu0 0.0
  %3151 = vmatprep.subr.mxu0 0.0
  %3152 = vmatpush1.msra.mxu0 0.0
  %3153 = vmatprep.subr.mxu0 0.0
  %3154 = vmatpush1.msra.mxu0 0.0
  %3155 = vmatprep.subr.mxu0 0.0
  %3156 = vmatpush1.msra.mxu0 0.0
  %3157 = vmatprep.subr.mxu0 0.0
  %3158 = vmatpush1.msra.mxu0 0.0
  %3159 = vmatprep.subr.mxu0 0.0
  %3160 = vmatpush1.msra.mxu0 0.0
  %3161 = vmatprep.subr.mxu0 0.0
  %3162 = vmatpush1.msra.mxu0 0.0
  %3163 = vmatprep.subr.mxu0 0.0
  %3164 = vmatpush1.msra.mxu0 0.0
  %3165 = vmatprep.subr.mxu0 0.0
  %3166 = vmatpush1.msra.mxu0 0.0
  %3167 = vmatprep.subr.mxu0 0.0
  %3168 = vmatpush1.msra.mxu0 0.0
  %3169 = vmatprep.subr.mxu0 0.0
  %3170 = vmatpush1.msra.mxu0 0.0
  %3171 = vmatprep.subr.mxu0 0.0
  %3172 = vmatpush1.msra.mxu0 0.0
  %3173 = vmatprep.subr.mxu0 0.0
  %3174 = vmatpush1.msra.mxu0 0.0
  %3175 = vmatprep.subr.mxu0 0.0
  %3176 = vmatpush1.msra.mxu0 0.0
  %3177 = vmatprep.subr.mxu0 0.0
  %3178 = vmatpush1.msra.mxu0 0.0
  %3179 = vmatprep.subr.mxu0 0.0
  %3180 = vmatpush1.msra.mxu0 0.0
  %3181 = vmatprep.subr.mxu0 0.0
  %3182 = vmatpush1.msra.mxu0 0.0
  %3183 = vmatprep.subr.mxu0 0.0
  %3184 = vmatpush1.msra.mxu0 0.0
  %3185 = vmatprep.subr.mxu0 0.0
  %3186 = vmatpush1.msra.mxu0 0.0
  %3187 = vmatprep.subr.mxu0 0.0
  %3188 = vmatpush1.msra.mxu0 0.0
  %3189 = vmatprep.mubr.f32.mxu0 0.0
  %3190 = vmatmul.mubr.f32.gmra.mrb[0].mxu0 %v2949
  %v3191 = vpop.f32.mrb[0].mxu0
  %v3192 = vadd.f32 %v3124, %v3191
  %v3193 = vpop.f32.mrb[0].mxu0
  %3194 = vmatprep.mubr.f32.mxu0 0.0
  %3195 = vmatmul.mubr.f32.gmra.mrb[0].mxu0 %v2952
  %v3196 = vpop.f32.mrb[0].mxu0
  %v3197 = vadd.f32 %v3124, %v3196
  %v3198 = vpop.f32.mrb[0].mxu0
  %3199 = vmatprep.mubr.f32.mxu0 0.0
  %3200 = vmatmul.mubr.f32.gmra.mrb[0].mxu0 %v2955
  %v3201 = vpop.f32.mrb[0].mxu0
  %v3202 = vadd.f32 %v3124, %v3201
  %v3203 = vpop.f32.mrb[0].mxu0
  %3204 = vdwg.mxu0
  %v3206 = vsel %vm518, %v3024, 0
  %v3209 = vsel %vm518, %v3029, 0
  %v3212 = vsel %vm518, %v3034, 0
  %v3215 = vsel %vm518, %v3108, 0
  %v3218 = vsel %vm518, %v3113, 0
  %v3221 = vsel %vm518, %v3118, 0
  %3223 = vmatprep.subr.mxu0 0.0
  %3224 = vmatpush1.xpose.msra.mxu0 %v3215
  %3225 = vmatprep.subr.mxu0 0.0
  %3226 = vmatpush1.xpose.msra.mxu0 %v3218
  %3227 = vmatprep.subr.mxu0 0.0
  %3228 = vmatpush1.xpose.msra.mxu0 %v3221
  %3229 = vmatprep.subr.mxu0 0.0
  %3230 = vmatpush1.xpose.msra.mxu0 0.0
  %3231 = vmatprep.subr.mxu0 0.0
  %3232 = vmatpush1.xpose.msra.mxu0 0.0
  %3233 = vmatprep.subr.mxu0 0.0
  %3234 = vmatpush1.xpose.msra.mxu0 0.0
  %3235 = vmatprep.subr.mxu0 0.0
  %3236 = vmatpush1.xpose.msra.mxu0 0.0
  %3237 = vmatprep.subr.mxu0 0.0
  %3238 = vmatpush1.xpose.msra.mxu0 0.0
  %3239 = vmatprep.subr.mxu0 0.0
  %3240 = vmatpush1.xpose.msra.mxu0 0.0
  %3241 = vmatprep.subr.mxu0 0.0
  %3242 = vmatpush1.xpose.msra.mxu0 0.0
  %3243 = vmatprep.subr.mxu0 0.0
  %3244 = vmatpush1.xpose.msra.mxu0 0.0
  %3245 = vmatprep.subr.mxu0 0.0
  %3246 = vmatpush1.xpose.msra.mxu0 0.0
  %3247 = vmatprep.subr.mxu0 0.0
  %3248 = vmatpush1.xpose.msra.mxu0 0.0
  %3249 = vmatprep.subr.mxu0 0.0
  %3250 = vmatpush1.xpose.msra.mxu0 0.0
  %3251 = vmatprep.subr.mxu0 0.0
  %3252 = vmatpush1.xpose.msra.mxu0 0.0
  %3253 = vmatprep.subr.mxu0 0.0
  %3254 = vmatpush1.xpose.msra.mxu0 0.0
  %3255 = vmatprep.subr.mxu0 0.0
  %3256 = vmatpush1.xpose.msra.mxu0 0.0
  %3257 = vmatprep.subr.mxu0 0.0
  %3258 = vmatpush1.xpose.msra.mxu0 0.0
  %3259 = vmatprep.subr.mxu0 0.0
  %3260 = vmatpush1.xpose.msra.mxu0 0.0
  %3261 = vmatprep.subr.mxu0 0.0
  %3262 = vmatpush1.xpose.msra.mxu0 0.0
  %3263 = vmatprep.subr.mxu0 0.0
  %3264 = vmatpush1.xpose.msra.mxu0 0.0
  %3265 = vmatprep.subr.mxu0 0.0
  %3266 = vmatpush1.xpose.msra.mxu0 0.0
  %3267 = vmatprep.subr.mxu0 0.0
  %3268 = vmatpush1.xpose.msra.mxu0 0.0
  %3269 = vmatprep.subr.mxu0 0.0
  %3270 = vmatpush1.xpose.msra.mxu0 0.0
  %3271 = vmatprep.subr.mxu0 0.0
  %3272 = vmatpush1.xpose.msra.mxu0 0.0
  %3273 = vmatprep.subr.mxu0 0.0
  %3274 = vmatpush1.xpose.msra.mxu0 0.0
  %3275 = vmatprep.subr.mxu0 0.0
  %3276 = vmatpush1.xpose.msra.mxu0 0.0
  %3277 = vmatprep.subr.mxu0 0.0
  %3278 = vmatpush1.xpose.msra.mxu0 0.0
  %3279 = vmatprep.subr.mxu0 0.0
  %3280 = vmatpush1.xpose.msra.mxu0 0.0
  %3281 = vmatprep.subr.mxu0 0.0
  %3282 = vmatpush1.xpose.msra.mxu0 0.0
  %3283 = vmatprep.subr.mxu0 0.0
  %3284 = vmatpush1.xpose.msra.mxu0 0.0
  %3285 = vmatprep.subr.mxu0 0.0
  %3286 = vmatpush1.xpose.msra.mxu0 0.0
  %3287 = vmatprep.mubr.f32.mxu0 0.0
  %3288 = vmatmul.mubr.f32.gmra.mrb[0].mxu0 %v3206
  %v3289 = vpop.f32.mrb[0].mxu0
  %v3290 = vadd.f32 %v236, %v3289
  %v3291 = vpop.f32.mrb[0].mxu0
  %3292 = vmatprep.mubr.f32.mxu0 0.0
  %3293 = vmatmul.mubr.f32.gmra.mrb[0].mxu0 %v3209
  %v3294 = vpop.f32.mrb[0].mxu0
  %v3295 = vadd.f32 %v237, %v3294
  %v3296 = vpop.f32.mrb[0].mxu0
  %3297 = vmatprep.mubr.f32.mxu0 0.0
  %3298 = vmatmul.mubr.f32.gmra.mrb[0].mxu0 %v3212
  %v3299 = vpop.f32.mrb[0].mxu0
  %v3300 = vadd.f32 %v238, %v3299
  %v3301 = vpop.f32.mrb[0].mxu0
  %3302 = vdwg.mxu0
  %v3303 = vsel %vm617, %v3290, -inf
  %3304 = vmax.xlane.f32.xlu0 %v3303
  %v3305 = vpop.xlane.xlu0 %3304
  %v3306 = vsel %vm617, %v3295, -inf
  %3307 = vmax.xlane.f32.xlu0 %v3306
  %v3308 = vpop.xlane.xlu0 %3307
  %v3309 = vsel %vm617, %v3300, -inf
  %3310 = vmax.xlane.f32.xlu0 %v3309
  %v3311 = vpop.xlane.xlu0 %3310
  %v3312 = vsub.f32 %v3290, %v3305
  %v3313 = vsub.f32 %v3295, %v3308
  %v3314 = vsub.f32 %v3300, %v3311
  %v3315 = vmul.f32 %v3312, 1.442695
  %v3316 = vpow.pop %v3315
  %v3317 = vmul.f32 %v3313, 1.442695
  %v3318 = vpow.pop %v3317
  %v3319 = vmul.f32 %v3314, 1.442695
  %v3320 = vpow.pop %v3319
  %v3321 = vsel %vm617, %v3316, 0.0
  %3322 = vadd.xlane.f32.xlu0 %v3321
  %v3323 = vpop.xlane.xlu0 %3322
  %v3324 = vsel %vm617, %v3318, 0.0
  %3325 = vadd.xlane.f32.xlu0 %v3324
  %v3326 = vpop.xlane.xlu0 %3325
  %v3327 = vsel %vm617, %v3320, 0.0
  %3328 = vadd.xlane.f32.xlu0 %v3327
  %v3329 = vpop.xlane.xlu0 %3328
  %v3330 = vrcp.pop %v3323
  %v3331 = vrcp.pop %v3326
  %v3332 = vrcp.pop %v3329
  %v3333 = vmul.f32 %v3316, %v3330
  %v3334 = vmul.f32 %v3318, %v3331
  %v3335 = vmul.f32 %v3320, %v3332
  %v3337 = vsel %vm617, %v3333, 0
  %v3340 = vsel %vm617, %v3334, 0
  %v3343 = vsel %vm617, %v3335, 0
  %3345 = vmatprep.subr.mxu0 0.0
  %3346 = vmatpush1.msra.mxu0 %v3192
  %3347 = vmatprep.subr.mxu0 0.0
  %3348 = vmatpush1.msra.mxu0 %v3197
  %3349 = vmatprep.subr.mxu0 0.0
  %3350 = vmatpush1.msra.mxu0 %v3202
  %3351 = vmatprep.subr.mxu0 0.0
  %3352 = vmatpush1.msra.mxu0 0.0
  %3353 = vmatprep.subr.mxu0 0.0
  %3354 = vmatpush1.msra.mxu0 0.0
  %3355 = vmatprep.subr.mxu0 0.0
  %3356 = vmatpush1.msra.mxu0 0.0
  %3357 = vmatprep.subr.mxu0 0.0
  %3358 = vmatpush1.msra.mxu0 0.0
  %3359 = vmatprep.subr.mxu0 0.0
  %3360 = vmatpush1.msra.mxu0 0.0
  %3361 = vmatprep.subr.mxu0 0.0
  %3362 = vmatpush1.msra.mxu0 0.0
  %3363 = vmatprep.subr.mxu0 0.0
  %3364 = vmatpush1.msra.mxu0 0.0
  %3365 = vmatprep.subr.mxu0 0.0
  %3366 = vmatpush1.msra.mxu0 0.0
  %3367 = vmatprep.subr.mxu0 0.0
  %3368 = vmatpush1.msra.mxu0 0.0
  %3369 = vmatprep.subr.mxu0 0.0
  %3370 = vmatpush1.msra.mxu0 0.0
  %3371 = vmatprep.subr.mxu0 0.0
  %3372 = vmatpush1.msra.mxu0 0.0
  %3373 = vmatprep.subr.mxu0 0.0
  %3374 = vmatpush1.msra.mxu0 0.0
  %3375 = vmatprep.subr.mxu0 0.0
  %3376 = vmatpush1.msra.mxu0 0.0
  %3377 = vmatprep.subr.mxu0 0.0
  %3378 = vmatpush1.msra.mxu0 0.0
  %3379 = vmatprep.subr.mxu0 0.0
  %3380 = vmatpush1.msra.mxu0 0.0
  %3381 = vmatprep.subr.mxu0 0.0
  %3382 = vmatpush1.msra.mxu0 0.0
  %3383 = vmatprep.subr.mxu0 0.0
  %3384 = vmatpush1.msra.mxu0 0.0
  %3385 = vmatprep.subr.mxu0 0.0
  %3386 = vmatpush1.msra.mxu0 0.0
  %3387 = vmatprep.subr.mxu0 0.0
  %3388 = vmatpush1.msra.mxu0 0.0
  %3389 = vmatprep.subr.mxu0 0.0
  %3390 = vmatpush1.msra.mxu0 0.0
  %3391 = vmatprep.subr.mxu0 0.0
  %3392 = vmatpush1.msra.mxu0 0.0
  %3393 = vmatprep.subr.mxu0 0.0
  %3394 = vmatpush1.msra.mxu0 0.0
  %3395 = vmatprep.subr.mxu0 0.0
  %3396 = vmatpush1.msra.mxu0 0.0
  %3397 = vmatprep.subr.mxu0 0.0
  %3398 = vmatpush1.msra.mxu0 0.0
  %3399 = vmatprep.subr.mxu0 0.0
  %3400 = vmatpush1.msra.mxu0 0.0
  %3401 = vmatprep.subr.mxu0 0.0
  %3402 = vmatpush1.msra.mxu0 0.0
  %3403 = vmatprep.subr.mxu0 0.0
  %3404 = vmatpush1.msra.mxu0 0.0
  %3405 = vmatprep.subr.mxu0 0.0
  %3406 = vmatpush1.msra.mxu0 0.0
  %3407 = vmatprep.subr.mxu0 0.0
  %3408 = vmatpush1.msra.mxu0 0.0
  %3409 = vmatprep.mubr.f32.mxu0 0.0
  %3410 = vmatmul.mubr.f32.gmra.mrb[0].mxu0 %v3337
  %v3411 = vpop.f32.mrb[0].mxu0
  %v3412 = vadd.f32 0.0, %v3411
  %v3413 = vpop.f32.mrb[0].mxu0
  %3414 = vmatprep.mubr.f32.mxu0 0.0
  %3415 = vmatmul.mubr.f32.gmra.mrb[0].mxu0 %v3340
  %v3416 = vpop.f32.mrb[0].mxu0
  %v3417 = vadd.f32 0.0, %v3416
  %v3418 = vpop.f32.mrb[0].mxu0
  %3419 = vmatprep.mubr.f32.mxu0 0.0
  %3420 = vmatmul.mubr.f32.gmra.mrb[0].mxu0 %v3343
  %v3421 = vpop.f32.mrb[0].mxu0
  %v3422 = vadd.f32 0.0, %v3421
  %v3423 = vpop.f32.mrb[0].mxu0
  %3424 = vdwg.mxu0
  %s3425 = scalar_lea.vmem %s7, 32
  %v3426 = vld [vmem:[%s3425] sm:$0xff]
  %s3427 = scalar_lea.vmem %s6, 600
  %v3428 = vld [vmem:[%s3427] sm:$0xff]
  %v3429 = vld [vmem:[%s3427 + $0x8] sm:$0xff]
  %v3430 = vld [vmem:[%s3427 + $0x10] sm:$0xff]
  %v3431 = vld [vmem:[%s3427 + $0x18] sm:$0xff]
  %v3432 = vld [vmem:[%s3427 + $0x20] sm:$0xff]
  %s3433 = scalar_lea.vmem %s6, 640
  %v3434 = vld [vmem:[%s3433] sm:$0xff]
  %v3435 = vld [vmem:[%s3433 + $0x8] sm:$0xff]
  %v3436 = vld [vmem:[%s3433 + $0x10] sm:$0xff]
  %v3437 = vld [vmem:[%s3433 + $0x18] sm:$0xff]
  %v3438 = vld [vmem:[%s3433 + $0x20] sm:$0xff]
  %s3439 = scalar_lea.vmem %s6, 680
  %v3440 = vld [vmem:[%s3439] sm:$0xff]
  %v3441 = vld [vmem:[%s3439 + $0x8] sm:$0xff]
  %v3442 = vld [vmem:[%s3439 + $0x10] sm:$0xff]
  %v3443 = vld [vmem:[%s3439 + $0x18] sm:$0xff]
  %v3444 = vld [vmem:[%s3439 + $0x20] sm:$0xff]
  %v3445 = vlaneseq
  %v3446 = vshrl.u32 %v3445, 7
  %v3447 = vsub.s32 0, %v3446
  %v3448 = vrot.slane %v3432, %v3447
  %3449 = vmatprep.subr.mxu0 0.0
  %3450 = vmatpush1.msra.mxu0 %v3428
  %3451 = vmatprep.subr.mxu0 0.0
  %3452 = vmatpush1.msra.mxu0 %v3429
  %3453 = vmatprep.subr.mxu0 0.0
  %3454 = vmatpush1.msra.mxu0 %v3430
  %3455 = vmatprep.subr.mxu0 0.0
  %3456 = vmatpush1.msra.mxu0 %v3431
  %3457 = vmatprep.subr.mxu0 0.0
  %3458 = vmatpush1.msra.mxu0 0.0
  %3459 = vmatprep.subr.mxu0 0.0
  %3460 = vmatpush1.msra.mxu0 0.0
  %3461 = vmatprep.subr.mxu0 0.0
  %3462 = vmatpush1.msra.mxu0 0.0
  %3463 = vmatprep.subr.mxu0 0.0
  %3464 = vmatpush1.msra.mxu0 0.0
  %3465 = vmatprep.subr.mxu0 0.0
  %3466 = vmatpush1.msra.mxu0 0.0
  %3467 = vmatprep.subr.mxu0 0.0
  %3468 = vmatpush1.msra.mxu0 0.0
  %3469 = vmatprep.subr.mxu0 0.0
  %3470 = vmatpush1.msra.mxu0 0.0
  %3471 = vmatprep.subr.mxu0 0.0
  %3472 = vmatpush1.msra.mxu0 0.0
  %3473 = vmatprep.subr.mxu0 0.0
  %3474 = vmatpush1.msra.mxu0 0.0
  %3475 = vmatprep.subr.mxu0 0.0
  %3476 = vmatpush1.msra.mxu0 0.0
  %3477 = vmatprep.subr.mxu0 0.0
  %3478 = vmatpush1.msra.mxu0 0.0
  %3479 = vmatprep.subr.mxu0 0.0
  %3480 = vmatpush1.msra.mxu0 0.0
  %3481 = vmatprep.subr.mxu0 0.0
  %3482 = vmatpush1.msra.mxu0 0.0
  %3483 = vmatprep.subr.mxu0 0.0
  %3484 = vmatpush1.msra.mxu0 0.0
  %3485 = vmatprep.subr.mxu0 0.0
  %3486 = vmatpush1.msra.mxu0 0.0
  %3487 = vmatprep.subr.mxu0 0.0
  %3488 = vmatpush1.msra.mxu0 0.0
  %3489 = vmatprep.subr.mxu0 0.0
  %3490 = vmatpush1.msra.mxu0 0.0
  %3491 = vmatprep.subr.mxu0 0.0
  %3492 = vmatpush1.msra.mxu0 0.0
  %3493 = vmatprep.subr.mxu0 0.0
  %3494 = vmatpush1.msra.mxu0 0.0
  %3495 = vmatprep.subr.mxu0 0.0
  %3496 = vmatpush1.msra.mxu0 0.0
  %3497 = vmatprep.subr.mxu0 0.0
  %3498 = vmatpush1.msra.mxu0 0.0
  %3499 = vmatprep.subr.mxu0 0.0
  %3500 = vmatpush1.msra.mxu0 0.0
  %3501 = vmatprep.subr.mxu0 0.0
  %3502 = vmatpush1.msra.mxu0 0.0
  %3503 = vmatprep.subr.mxu0 0.0
  %3504 = vmatpush1.msra.mxu0 0.0
  %3505 = vmatprep.subr.mxu0 0.0
  %3506 = vmatpush1.msra.mxu0 0.0
  %3507 = vmatprep.subr.mxu0 0.0
  %3508 = vmatpush1.msra.mxu0 0.0
  %3509 = vmatprep.subr.mxu0 0.0
  %3510 = vmatpush1.msra.mxu0 0.0
  %3511 = vmatprep.subr.mxu0 0.0
  %3512 = vmatpush1.msra.mxu0 0.0
  %3513 = vmatprep.mubr.f32.mxu0 0.0
  %3514 = vmatmul.mubr.f32.gmra.mrb[0].mxu0 %v2949
  %v3515 = vpop.f32.mrb[0].mxu0
  %v3516 = vadd.f32 %v3448, %v3515
  %v3517 = vpop.f32.mrb[0].mxu0
  %3518 = vmatprep.mubr.f32.mxu0 0.0
  %3519 = vmatmul.mubr.f32.gmra.mrb[0].mxu0 %v2952
  %v3520 = vpop.f32.mrb[0].mxu0
  %v3521 = vadd.f32 %v3448, %v3520
  %v3522 = vpop.f32.mrb[0].mxu0
  %3523 = vmatprep.mubr.f32.mxu0 0.0
  %3524 = vmatmul.mubr.f32.gmra.mrb[0].mxu0 %v2955
  %v3525 = vpop.f32.mrb[0].mxu0
  %v3526 = vadd.f32 %v3448, %v3525
  %v3527 = vpop.f32.mrb[0].mxu0
  %3528 = vdwg.mxu0
  %v3529 = vlaneseq
  %v3530 = vshrl.u32 %v3529, 7
  %v3531 = vsub.s32 0, %v3530
  %v3532 = vrot.slane %v3438, %v3531
  %3533 = vmatprep.subr.mxu0 0.0
  %3534 = vmatpush1.msra.mxu0 %v3434
  %3535 = vmatprep.subr.mxu0 0.0
  %3536 = vmatpush1.msra.mxu0 %v3435
  %3537 = vmatprep.subr.mxu0 0.0
  %3538 = vmatpush1.msra.mxu0 %v3436
  %3539 = vmatprep.subr.mxu0 0.0
  %3540 = vmatpush1.msra.mxu0 %v3437
  %3541 = vmatprep.subr.mxu0 0.0
  %3542 = vmatpush1.msra.mxu0 0.0
  %3543 = vmatprep.subr.mxu0 0.0
  %3544 = vmatpush1.msra.mxu0 0.0
  %3545 = vmatprep.subr.mxu0 0.0
  %3546 = vmatpush1.msra.mxu0 0.0
  %3547 = vmatprep.subr.mxu0 0.0
  %3548 = vmatpush1.msra.mxu0 0.0
  %3549 = vmatprep.subr.mxu0 0.0
  %3550 = vmatpush1.msra.mxu0 0.0
  %3551 = vmatprep.subr.mxu0 0.0
  %3552 = vmatpush1.msra.mxu0 0.0
  %3553 = vmatprep.subr.mxu0 0.0
  %3554 = vmatpush1.msra.mxu0 0.0
  %3555 = vmatprep.subr.mxu0 0.0
  %3556 = vmatpush1.msra.mxu0 0.0
  %3557 = vmatprep.subr.mxu0 0.0
  %3558 = vmatpush1.msra.mxu0 0.0
  %3559 = vmatprep.subr.mxu0 0.0
  %3560 = vmatpush1.msra.mxu0 0.0
  %3561 = vmatprep.subr.mxu0 0.0
  %3562 = vmatpush1.msra.mxu0 0.0
  %3563 = vmatprep.subr.mxu0 0.0
  %3564 = vmatpush1.msra.mxu0 0.0
  %3565 = vmatprep.subr.mxu0 0.0
  %3566 = vmatpush1.msra.mxu0 0.0
  %3567 = vmatprep.subr.mxu0 0.0
  %3568 = vmatpush1.msra.mxu0 0.0
  %3569 = vmatprep.subr.mxu0 0.0
  %3570 = vmatpush1.msra.mxu0 0.0
  %3571 = vmatprep.subr.mxu0 0.0
  %3572 = vmatpush1.msra.mxu0 0.0
  %3573 = vmatprep.subr.mxu0 0.0
  %3574 = vmatpush1.msra.mxu0 0.0
  %3575 = vmatprep.subr.mxu0 0.0
  %3576 = vmatpush1.msra.mxu0 0.0
  %3577 = vmatprep.subr.mxu0 0.0
  %3578 = vmatpush1.msra.mxu0 0.0
  %3579 = vmatprep.subr.mxu0 0.0
  %3580 = vmatpush1.msra.mxu0 0.0
  %3581 = vmatprep.subr.mxu0 0.0
  %3582 = vmatpush1.msra.mxu0 0.0
  %3583 = vmatprep.subr.mxu0 0.0
  %3584 = vmatpush1.msra.mxu0 0.0
  %3585 = vmatprep.subr.mxu0 0.0
  %3586 = vmatpush1.msra.mxu0 0.0
  %3587 = vmatprep.subr.mxu0 0.0
  %3588 = vmatpush1.msra.mxu0 0.0
  %3589 = vmatprep.subr.mxu0 0.0
  %3590 = vmatpush1.msra.mxu0 0.0
  %3591 = vmatprep.subr.mxu0 0.0
  %3592 = vmatpush1.msra.mxu0 0.0
  %3593 = vmatprep.subr.mxu0 0.0
  %3594 = vmatpush1.msra.mxu0 0.0
  %3595 = vmatprep.subr.mxu0 0.0
  %3596 = vmatpush1.msra.mxu0 0.0
  %3597 = vmatprep.mubr.f32.mxu0 0.0
  %3598 = vmatmul.mubr.f32.gmra.mrb[0].mxu0 %v2949
  %v3599 = vpop.f32.mrb[0].mxu0
  %v3600 = vadd.f32 %v3532, %v3599
  %v3601 = vpop.f32.mrb[0].mxu0
  %3602 = vmatprep.mubr.f32.mxu0 0.0
  %3603 = vmatmul.mubr.f32.gmra.mrb[0].mxu0 %v2952
  %v3604 = vpop.f32.mrb[0].mxu0
  %v3605 = vadd.f32 %v3532, %v3604
  %v3606 = vpop.f32.mrb[0].mxu0
  %3607 = vmatprep.mubr.f32.mxu0 0.0
  %3608 = vmatmul.mubr.f32.gmra.mrb[0].mxu0 %v2955
  %v3609 = vpop.f32.mrb[0].mxu0
  %v3610 = vadd.f32 %v3532, %v3609
  %v3611 = vpop.f32.mrb[0].mxu0
  %3612 = vdwg.mxu0
  %v3613 = vlaneseq
  %v3614 = vshrl.u32 %v3613, 7
  %v3615 = vsub.s32 0, %v3614
  %v3616 = vrot.slane %v3444, %v3615
  %3617 = vmatprep.subr.mxu0 0.0
  %3618 = vmatpush1.msra.mxu0 %v3440
  %3619 = vmatprep.subr.mxu0 0.0
  %3620 = vmatpush1.msra.mxu0 %v3441
  %3621 = vmatprep.subr.mxu0 0.0
  %3622 = vmatpush1.msra.mxu0 %v3442
  %3623 = vmatprep.subr.mxu0 0.0
  %3624 = vmatpush1.msra.mxu0 %v3443
  %3625 = vmatprep.subr.mxu0 0.0
  %3626 = vmatpush1.msra.mxu0 0.0
  %3627 = vmatprep.subr.mxu0 0.0
  %3628 = vmatpush1.msra.mxu0 0.0
  %3629 = vmatprep.subr.mxu0 0.0
  %3630 = vmatpush1.msra.mxu0 0.0
  %3631 = vmatprep.subr.mxu0 0.0
  %3632 = vmatpush1.msra.mxu0 0.0
  %3633 = vmatprep.subr.mxu0 0.0
  %3634 = vmatpush1.msra.mxu0 0.0
  %3635 = vmatprep.subr.mxu0 0.0
  %3636 = vmatpush1.msra.mxu0 0.0
  %3637 = vmatprep.subr.mxu0 0.0
  %3638 = vmatpush1.msra.mxu0 0.0
  %3639 = vmatprep.subr.mxu0 0.0
  %3640 = vmatpush1.msra.mxu0 0.0
  %3641 = vmatprep.subr.mxu0 0.0
  %3642 = vmatpush1.msra.mxu0 0.0
  %3643 = vmatprep.subr.mxu0 0.0
  %3644 = vmatpush1.msra.mxu0 0.0
  %3645 = vmatprep.subr.mxu0 0.0
  %3646 = vmatpush1.msra.mxu0 0.0
  %3647 = vmatprep.subr.mxu0 0.0
  %3648 = vmatpush1.msra.mxu0 0.0
  %3649 = vmatprep.subr.mxu0 0.0
  %3650 = vmatpush1.msra.mxu0 0.0
  %3651 = vmatprep.subr.mxu0 0.0
  %3652 = vmatpush1.msra.mxu0 0.0
  %3653 = vmatprep.subr.mxu0 0.0
  %3654 = vmatpush1.msra.mxu0 0.0
  %3655 = vmatprep.subr.mxu0 0.0
  %3656 = vmatpush1.msra.mxu0 0.0
  %3657 = vmatprep.subr.mxu0 0.0
  %3658 = vmatpush1.msra.mxu0 0.0
  %3659 = vmatprep.subr.mxu0 0.0
  %3660 = vmatpush1.msra.mxu0 0.0
  %3661 = vmatprep.subr.mxu0 0.0
  %3662 = vmatpush1.msra.mxu0 0.0
  %3663 = vmatprep.subr.mxu0 0.0
  %3664 = vmatpush1.msra.mxu0 0.0
  %3665 = vmatprep.subr.mxu0 0.0
  %3666 = vmatpush1.msra.mxu0 0.0
  %3667 = vmatprep.subr.mxu0 0.0
  %3668 = vmatpush1.msra.mxu0 0.0
  %3669 = vmatprep.subr.mxu0 0.0
  %3670 = vmatpush1.msra.mxu0 0.0
  %3671 = vmatprep.subr.mxu0 0.0
  %3672 = vmatpush1.msra.mxu0 0.0
  %3673 = vmatprep.subr.mxu0 0.0
  %3674 = vmatpush1.msra.mxu0 0.0
  %3675 = vmatprep.subr.mxu0 0.0
  %3676 = vmatpush1.msra.mxu0 0.0
  %3677 = vmatprep.subr.mxu0 0.0
  %3678 = vmatpush1.msra.mxu0 0.0
  %3679 = vmatprep.subr.mxu0 0.0
  %3680 = vmatpush1.msra.mxu0 0.0
  %3681 = vmatprep.mubr.f32.mxu0 0.0
  %3682 = vmatmul.mubr.f32.gmra.mrb[0].mxu0 %v2949
  %v3683 = vpop.f32.mrb[0].mxu0
  %v3684 = vadd.f32 %v3616, %v3683
  %v3685 = vpop.f32.mrb[0].mxu0
  %3686 = vmatprep.mubr.f32.mxu0 0.0
  %3687 = vmatmul.mubr.f32.gmra.mrb[0].mxu0 %v2952
  %v3688 = vpop.f32.mrb[0].mxu0
  %v3689 = vadd.f32 %v3616, %v3688
  %v3690 = vpop.f32.mrb[0].mxu0
  %3691 = vmatprep.mubr.f32.mxu0 0.0
  %3692 = vmatmul.mubr.f32.gmra.mrb[0].mxu0 %v2955
  %v3693 = vpop.f32.mrb[0].mxu0
  %v3694 = vadd.f32 %v3616, %v3693
  %v3695 = vpop.f32.mrb[0].mxu0
  %3696 = vdwg.mxu0
  %v3698 = vsel %vm518, %v3516, 0
  %v3701 = vsel %vm518, %v3521, 0
  %v3704 = vsel %vm518, %v3526, 0
  %v3707 = vsel %vm518, %v3600, 0
  %v3710 = vsel %vm518, %v3605, 0
  %v3713 = vsel %vm518, %v3610, 0
  %3715 = vmatprep.subr.mxu0 0.0
  %3716 = vmatpush1.xpose.msra.mxu0 %v3707
  %3717 = vmatprep.subr.mxu0 0.0
  %3718 = vmatpush1.xpose.msra.mxu0 %v3710
  %3719 = vmatprep.subr.mxu0 0.0
  %3720 = vmatpush1.xpose.msra.mxu0 %v3713
  %3721 = vmatprep.subr.mxu0 0.0
  %3722 = vmatpush1.xpose.msra.mxu0 0.0
  %3723 = vmatprep.subr.mxu0 0.0
  %3724 = vmatpush1.xpose.msra.mxu0 0.0
  %3725 = vmatprep.subr.mxu0 0.0
  %3726 = vmatpush1.xpose.msra.mxu0 0.0
  %3727 = vmatprep.subr.mxu0 0.0
  %3728 = vmatpush1.xpose.msra.mxu0 0.0
  %3729 = vmatprep.subr.mxu0 0.0
  %3730 = vmatpush1.xpose.msra.mxu0 0.0
  %3731 = vmatprep.subr.mxu0 0.0
  %3732 = vmatpush1.xpose.msra.mxu0 0.0
  %3733 = vmatprep.subr.mxu0 0.0
  %3734 = vmatpush1.xpose.msra.mxu0 0.0
  %3735 = vmatprep.subr.mxu0 0.0
  %3736 = vmatpush1.xpose.msra.mxu0 0.0
  %3737 = vmatprep.subr.mxu0 0.0
  %3738 = vmatpush1.xpose.msra.mxu0 0.0
  %3739 = vmatprep.subr.mxu0 0.0
  %3740 = vmatpush1.xpose.msra.mxu0 0.0
  %3741 = vmatprep.subr.mxu0 0.0
  %3742 = vmatpush1.xpose.msra.mxu0 0.0
  %3743 = vmatprep.subr.mxu0 0.0
  %3744 = vmatpush1.xpose.msra.mxu0 0.0
  %3745 = vmatprep.subr.mxu0 0.0
  %3746 = vmatpush1.xpose.msra.mxu0 0.0
  %3747 = vmatprep.subr.mxu0 0.0
  %3748 = vmatpush1.xpose.msra.mxu0 0.0
  %3749 = vmatprep.subr.mxu0 0.0
  %3750 = vmatpush1.xpose.msra.mxu0 0.0
  %3751 = vmatprep.subr.mxu0 0.0
  %3752 = vmatpush1.xpose.msra.mxu0 0.0
  %3753 = vmatprep.subr.mxu0 0.0
  %3754 = vmatpush1.xpose.msra.mxu0 0.0
  %3755 = vmatprep.subr.mxu0 0.0
  %3756 = vmatpush1.xpose.msra.mxu0 0.0
  %3757 = vmatprep.subr.mxu0 0.0
  %3758 = vmatpush1.xpose.msra.mxu0 0.0
  %3759 = vmatprep.subr.mxu0 0.0
  %3760 = vmatpush1.xpose.msra.mxu0 0.0
  %3761 = vmatprep.subr.mxu0 0.0
  %3762 = vmatpush1.xpose.msra.mxu0 0.0
  %3763 = vmatprep.subr.mxu0 0.0
  %3764 = vmatpush1.xpose.msra.mxu0 0.0
  %3765 = vmatprep.subr.mxu0 0.0
  %3766 = vmatpush1.xpose.msra.mxu0 0.0
  %3767 = vmatprep.subr.mxu0 0.0
  %3768 = vmatpush1.xpose.msra.mxu0 0.0
  %3769 = vmatprep.subr.mxu0 0.0
  %3770 = vmatpush1.xpose.msra.mxu0 0.0
  %3771 = vmatprep.subr.mxu0 0.0
  %3772 = vmatpush1.xpose.msra.mxu0 0.0
  %3773 = vmatprep.subr.mxu0 0.0
  %3774 = vmatpush1.xpose.msra.mxu0 0.0
  %3775 = vmatprep.subr.mxu0 0.0
  %3776 = vmatpush1.xpose.msra.mxu0 0.0
  %3777 = vmatprep.subr.mxu0 0.0
  %3778 = vmatpush1.xpose.msra.mxu0 0.0
  %3779 = vmatprep.mubr.f32.mxu0 0.0
  %3780 = vmatmul.mubr.f32.gmra.mrb[0].mxu0 %v3698
  %v3781 = vpop.f32.mrb[0].mxu0
  %v3782 = vadd.f32 %v236, %v3781
  %v3783 = vpop.f32.mrb[0].mxu0
  %3784 = vmatprep.mubr.f32.mxu0 0.0
  %3785 = vmatmul.mubr.f32.gmra.mrb[0].mxu0 %v3701
  %v3786 = vpop.f32.mrb[0].mxu0
  %v3787 = vadd.f32 %v237, %v3786
  %v3788 = vpop.f32.mrb[0].mxu0
  %3789 = vmatprep.mubr.f32.mxu0 0.0
  %3790 = vmatmul.mubr.f32.gmra.mrb[0].mxu0 %v3704
  %v3791 = vpop.f32.mrb[0].mxu0
  %v3792 = vadd.f32 %v238, %v3791
  %v3793 = vpop.f32.mrb[0].mxu0
  %3794 = vdwg.mxu0
  %v3795 = vsel %vm617, %v3782, -inf
  %3796 = vmax.xlane.f32.xlu0 %v3795
  %v3797 = vpop.xlane.xlu0 %3796
  %v3798 = vsel %vm617, %v3787, -inf
  %3799 = vmax.xlane.f32.xlu0 %v3798
  %v3800 = vpop.xlane.xlu0 %3799
  %v3801 = vsel %vm617, %v3792, -inf
  %3802 = vmax.xlane.f32.xlu0 %v3801
  %v3803 = vpop.xlane.xlu0 %3802
  %v3804 = vsub.f32 %v3782, %v3797
  %v3805 = vsub.f32 %v3787, %v3800
  %v3806 = vsub.f32 %v3792, %v3803
  %v3807 = vmul.f32 %v3804, 1.442695
  %v3808 = vpow.pop %v3807
  %v3809 = vmul.f32 %v3805, 1.442695
  %v3810 = vpow.pop %v3809
  %v3811 = vmul.f32 %v3806, 1.442695
  %v3812 = vpow.pop %v3811
  %v3813 = vsel %vm617, %v3808, 0.0
  %3814 = vadd.xlane.f32.xlu0 %v3813
  %v3815 = vpop.xlane.xlu0 %3814
  %v3816 = vsel %vm617, %v3810, 0.0
  %3817 = vadd.xlane.f32.xlu0 %v3816
  %v3818 = vpop.xlane.xlu0 %3817
  %v3819 = vsel %vm617, %v3812, 0.0
  %3820 = vadd.xlane.f32.xlu0 %v3819
  %v3821 = vpop.xlane.xlu0 %3820
  %v3822 = vrcp.pop %v3815
  %v3823 = vrcp.pop %v3818
  %v3824 = vrcp.pop %v3821
  %v3825 = vmul.f32 %v3808, %v3822
  %v3826 = vmul.f32 %v3810, %v3823
  %v3827 = vmul.f32 %v3812, %v3824
  %v3829 = vsel %vm617, %v3825, 0
  %v3832 = vsel %vm617, %v3826, 0
  %v3835 = vsel %vm617, %v3827, 0
  %3837 = vmatprep.subr.mxu0 0.0
  %3838 = vmatpush1.msra.mxu0 %v3684
  %3839 = vmatprep.subr.mxu0 0.0
  %3840 = vmatpush1.msra.mxu0 %v3689
  %3841 = vmatprep.subr.mxu0 0.0
  %3842 = vmatpush1.msra.mxu0 %v3694
  %3843 = vmatprep.subr.mxu0 0.0
  %3844 = vmatpush1.msra.mxu0 0.0
  %3845 = vmatprep.subr.mxu0 0.0
  %3846 = vmatpush1.msra.mxu0 0.0
  %3847 = vmatprep.subr.mxu0 0.0
  %3848 = vmatpush1.msra.mxu0 0.0
  %3849 = vmatprep.subr.mxu0 0.0
  %3850 = vmatpush1.msra.mxu0 0.0
  %3851 = vmatprep.subr.mxu0 0.0
  %3852 = vmatpush1.msra.mxu0 0.0
  %3853 = vmatprep.subr.mxu0 0.0
  %3854 = vmatpush1.msra.mxu0 0.0
  %3855 = vmatprep.subr.mxu0 0.0
  %3856 = vmatpush1.msra.mxu0 0.0
  %3857 = vmatprep.subr.mxu0 0.0
  %3858 = vmatpush1.msra.mxu0 0.0
  %3859 = vmatprep.subr.mxu0 0.0
  %3860 = vmatpush1.msra.mxu0 0.0
  %3861 = vmatprep.subr.mxu0 0.0
  %3862 = vmatpush1.msra.mxu0 0.0
  %3863 = vmatprep.subr.mxu0 0.0
  %3864 = vmatpush1.msra.mxu0 0.0
  %3865 = vmatprep.subr.mxu0 0.0
  %3866 = vmatpush1.msra.mxu0 0.0
  %3867 = vmatprep.subr.mxu0 0.0
  %3868 = vmatpush1.msra.mxu0 0.0
  %3869 = vmatprep.subr.mxu0 0.0
  %3870 = vmatpush1.msra.mxu0 0.0
  %3871 = vmatprep.subr.mxu0 0.0
  %3872 = vmatpush1.msra.mxu0 0.0
  %3873 = vmatprep.subr.mxu0 0.0
  %3874 = vmatpush1.msra.mxu0 0.0
  %3875 = vmatprep.subr.mxu0 0.0
  %3876 = vmatpush1.msra.mxu0 0.0
  %3877 = vmatprep.subr.mxu0 0.0
  %3878 = vmatpush1.msra.mxu0 0.0
  %3879 = vmatprep.subr.mxu0 0.0
  %3880 = vmatpush1.msra.mxu0 0.0
  %3881 = vmatprep.subr.mxu0 0.0
  %3882 = vmatpush1.msra.mxu0 0.0
  %3883 = vmatprep.subr.mxu0 0.0
  %3884 = vmatpush1.msra.mxu0 0.0
  %3885 = vmatprep.subr.mxu0 0.0
  %3886 = vmatpush1.msra.mxu0 0.0
  %3887 = vmatprep.subr.mxu0 0.0
  %3888 = vmatpush1.msra.mxu0 0.0
  %3889 = vmatprep.subr.mxu0 0.0
  %3890 = vmatpush1.msra.mxu0 0.0
  %3891 = vmatprep.subr.mxu0 0.0
  %3892 = vmatpush1.msra.mxu0 0.0
  %3893 = vmatprep.subr.mxu0 0.0
  %3894 = vmatpush1.msra.mxu0 0.0
  %3895 = vmatprep.subr.mxu0 0.0
  %3896 = vmatpush1.msra.mxu0 0.0
  %3897 = vmatprep.subr.mxu0 0.0
  %3898 = vmatpush1.msra.mxu0 0.0
  %3899 = vmatprep.subr.mxu0 0.0
  %3900 = vmatpush1.msra.mxu0 0.0
  %3901 = vmatprep.mubr.f32.mxu0 0.0
  %3902 = vmatmul.mubr.f32.gmra.mrb[0].mxu0 %v3829
  %v3903 = vpop.f32.mrb[0].mxu0
  %v3904 = vadd.f32 0.0, %v3903
  %v3905 = vpop.f32.mrb[0].mxu0
  %3906 = vmatprep.mubr.f32.mxu0 0.0
  %3907 = vmatmul.mubr.f32.gmra.mrb[0].mxu0 %v3832
  %v3908 = vpop.f32.mrb[0].mxu0
  %v3909 = vadd.f32 0.0, %v3908
  %v3910 = vpop.f32.mrb[0].mxu0
  %3911 = vmatprep.mubr.f32.mxu0 0.0
  %3912 = vmatmul.mubr.f32.gmra.mrb[0].mxu0 %v3835
  %v3913 = vpop.f32.mrb[0].mxu0
  %v3914 = vadd.f32 0.0, %v3913
  %v3915 = vpop.f32.mrb[0].mxu0
  %3916 = vdwg.mxu0
  %s3917 = scalar_lea.vmem %s7, 40
  %v3918 = vld [vmem:[%s3917] sm:$0xff]
  %v3920 = vsel %vm518, %v3904, 0
  %v3923 = vsel %vm518, %v3909, 0
  %v3926 = vsel %vm518, %v3914, 0
  %3928 = vmatprep.subr.mxu0 0.0
  %3929 = vmatpush1.msra.mxu0 %v3918
  %3930 = vmatprep.subr.mxu0 0.0
  %3931 = vmatpush1.msra.mxu0 0.0
  %3932 = vmatprep.subr.mxu0 0.0
  %3933 = vmatpush1.msra.mxu0 0.0
  %3934 = vmatprep.subr.mxu0 0.0
  %3935 = vmatpush1.msra.mxu0 0.0
  %3936 = vmatprep.subr.mxu0 0.0
  %3937 = vmatpush1.msra.mxu0 0.0
  %3938 = vmatprep.subr.mxu0 0.0
  %3939 = vmatpush1.msra.mxu0 0.0
  %3940 = vmatprep.subr.mxu0 0.0
  %3941 = vmatpush1.msra.mxu0 0.0
  %3942 = vmatprep.subr.mxu0 0.0
  %3943 = vmatpush1.msra.mxu0 0.0
  %3944 = vmatprep.subr.mxu0 0.0
  %3945 = vmatpush1.msra.mxu0 0.0
  %3946 = vmatprep.subr.mxu0 0.0
  %3947 = vmatpush1.msra.mxu0 0.0
  %3948 = vmatprep.subr.mxu0 0.0
  %3949 = vmatpush1.msra.mxu0 0.0
  %3950 = vmatprep.subr.mxu0 0.0
  %3951 = vmatpush1.msra.mxu0 0.0
  %3952 = vmatprep.subr.mxu0 0.0
  %3953 = vmatpush1.msra.mxu0 0.0
  %3954 = vmatprep.subr.mxu0 0.0
  %3955 = vmatpush1.msra.mxu0 0.0
  %3956 = vmatprep.subr.mxu0 0.0
  %3957 = vmatpush1.msra.mxu0 0.0
  %3958 = vmatprep.subr.mxu0 0.0
  %3959 = vmatpush1.msra.mxu0 0.0
  %3960 = vmatprep.subr.mxu0 0.0
  %3961 = vmatpush1.msra.mxu0 0.0
  %3962 = vmatprep.subr.mxu0 0.0
  %3963 = vmatpush1.msra.mxu0 0.0
  %3964 = vmatprep.subr.mxu0 0.0
  %3965 = vmatpush1.msra.mxu0 0.0
  %3966 = vmatprep.subr.mxu0 0.0
  %3967 = vmatpush1.msra.mxu0 0.0
  %3968 = vmatprep.subr.mxu0 0.0
  %3969 = vmatpush1.msra.mxu0 0.0
  %3970 = vmatprep.subr.mxu0 0.0
  %3971 = vmatpush1.msra.mxu0 0.0
  %3972 = vmatprep.subr.mxu0 0.0
  %3973 = vmatpush1.msra.mxu0 0.0
  %3974 = vmatprep.subr.mxu0 0.0
  %3975 = vmatpush1.msra.mxu0 0.0
  %3976 = vmatprep.subr.mxu0 0.0
  %3977 = vmatpush1.msra.mxu0 0.0
  %3978 = vmatprep.subr.mxu0 0.0
  %3979 = vmatpush1.msra.mxu0 0.0
  %3980 = vmatprep.subr.mxu0 0.0
  %3981 = vmatpush1.msra.mxu0 0.0
  %3982 = vmatprep.subr.mxu0 0.0
  %3983 = vmatpush1.msra.mxu0 0.0
  %3984 = vmatprep.subr.mxu0 0.0
  %3985 = vmatpush1.msra.mxu0 0.0
  %3986 = vmatprep.subr.mxu0 0.0
  %3987 = vmatpush1.msra.mxu0 0.0
  %3988 = vmatprep.subr.mxu0 0.0
  %3989 = vmatpush1.msra.mxu0 0.0
  %3990 = vmatprep.subr.mxu0 0.0
  %3991 = vmatpush1.msra.mxu0 0.0
  %3992 = vmatprep.mubr.f32.mxu0 0.0
  %3993 = vmatmul.mubr.f32.gmra.mrb[0].mxu0 %v3920
  %v3994 = vpop.f32.mrb[0].mxu0
  %v3995 = vadd.f32 0.0, %v3994
  %v3996 = vpop.f32.mrb[0].mxu0
  %3997 = vmatprep.mubr.f32.mxu0 0.0
  %3998 = vmatmul.mubr.f32.gmra.mrb[0].mxu0 %v3923
  %v3999 = vpop.f32.mrb[0].mxu0
  %v4000 = vadd.f32 0.0, %v3999
  %v4001 = vpop.f32.mrb[0].mxu0
  %4002 = vmatprep.mubr.f32.mxu0 0.0
  %4003 = vmatmul.mubr.f32.gmra.mrb[0].mxu0 %v3926
  %v4004 = vpop.f32.mrb[0].mxu0
  %v4005 = vadd.f32 0.0, %v4004
  %v4006 = vpop.f32.mrb[0].mxu0
  %4007 = vdwg.mxu0
  %v4009 = vsel %vm518, %v3412, 0
  %v4012 = vsel %vm518, %v3417, 0
  %v4015 = vsel %vm518, %v3422, 0
  %4017 = vmatprep.subr.mxu0 0.0
  %4018 = vmatpush1.msra.mxu0 %v3426
  %4019 = vmatprep.subr.mxu0 0.0
  %4020 = vmatpush1.msra.mxu0 0.0
  %4021 = vmatprep.subr.mxu0 0.0
  %4022 = vmatpush1.msra.mxu0 0.0
  %4023 = vmatprep.subr.mxu0 0.0
  %4024 = vmatpush1.msra.mxu0 0.0
  %4025 = vmatprep.subr.mxu0 0.0
  %4026 = vmatpush1.msra.mxu0 0.0
  %4027 = vmatprep.subr.mxu0 0.0
  %4028 = vmatpush1.msra.mxu0 0.0
  %4029 = vmatprep.subr.mxu0 0.0
  %4030 = vmatpush1.msra.mxu0 0.0
  %4031 = vmatprep.subr.mxu0 0.0
  %4032 = vmatpush1.msra.mxu0 0.0
  %4033 = vmatprep.subr.mxu0 0.0
  %4034 = vmatpush1.msra.mxu0 0.0
  %4035 = vmatprep.subr.mxu0 0.0
  %4036 = vmatpush1.msra.mxu0 0.0
  %4037 = vmatprep.subr.mxu0 0.0
  %4038 = vmatpush1.msra.mxu0 0.0
  %4039 = vmatprep.subr.mxu0 0.0
  %4040 = vmatpush1.msra.mxu0 0.0
  %4041 = vmatprep.subr.mxu0 0.0
  %4042 = vmatpush1.msra.mxu0 0.0
  %4043 = vmatprep.subr.mxu0 0.0
  %4044 = vmatpush1.msra.mxu0 0.0
  %4045 = vmatprep.subr.mxu0 0.0
  %4046 = vmatpush1.msra.mxu0 0.0
  %4047 = vmatprep.subr.mxu0 0.0
  %4048 = vmatpush1.msra.mxu0 0.0
  %4049 = vmatprep.subr.mxu0 0.0
  %4050 = vmatpush1.msra.mxu0 0.0
  %4051 = vmatprep.subr.mxu0 0.0
  %4052 = vmatpush1.msra.mxu0 0.0
  %4053 = vmatprep.subr.mxu0 0.0
  %4054 = vmatpush1.msra.mxu0 0.0
  %4055 = vmatprep.subr.mxu0 0.0
  %4056 = vmatpush1.msra.mxu0 0.0
  %4057 = vmatprep.subr.mxu0 0.0
  %4058 = vmatpush1.msra.mxu0 0.0
  %4059 = vmatprep.subr.mxu0 0.0
  %4060 = vmatpush1.msra.mxu0 0.0
  %4061 = vmatprep.subr.mxu0 0.0
  %4062 = vmatpush1.msra.mxu0 0.0
  %4063 = vmatprep.subr.mxu0 0.0
  %4064 = vmatpush1.msra.mxu0 0.0
  %4065 = vmatprep.subr.mxu0 0.0
  %4066 = vmatpush1.msra.mxu0 0.0
  %4067 = vmatprep.subr.mxu0 0.0
  %4068 = vmatpush1.msra.mxu0 0.0
  %4069 = vmatprep.subr.mxu0 0.0
  %4070 = vmatpush1.msra.mxu0 0.0
  %4071 = vmatprep.subr.mxu0 0.0
  %4072 = vmatpush1.msra.mxu0 0.0
  %4073 = vmatprep.subr.mxu0 0.0
  %4074 = vmatpush1.msra.mxu0 0.0
  %4075 = vmatprep.subr.mxu0 0.0
  %4076 = vmatpush1.msra.mxu0 0.0
  %4077 = vmatprep.subr.mxu0 0.0
  %4078 = vmatpush1.msra.mxu0 0.0
  %4079 = vmatprep.subr.mxu0 0.0
  %4080 = vmatpush1.msra.mxu0 0.0
  %4081 = vmatprep.mubr.f32.mxu0 0.0
  %4082 = vmatmul.mubr.f32.gmra.mrb[0].mxu0 %v4009
  %v4083 = vpop.f32.mrb[0].mxu0
  %v4084 = vadd.f32 %v3995, %v4083
  %v4085 = vpop.f32.mrb[0].mxu0
  %4086 = vmatprep.mubr.f32.mxu0 0.0
  %4087 = vmatmul.mubr.f32.gmra.mrb[0].mxu0 %v4012
  %v4088 = vpop.f32.mrb[0].mxu0
  %v4089 = vadd.f32 %v4000, %v4088
  %v4090 = vpop.f32.mrb[0].mxu0
  %4091 = vmatprep.mubr.f32.mxu0 0.0
  %4092 = vmatmul.mubr.f32.gmra.mrb[0].mxu0 %v4015
  %v4093 = vpop.f32.mrb[0].mxu0
  %v4094 = vadd.f32 %v4005, %v4093
  %v4095 = vpop.f32.mrb[0].mxu0
  %4096 = vdwg.mxu0
  %s4097 = scalar_lea.vmem %s6, 720
  %v4098 = vld [vmem:[%s4097] sm:$0xff]
  %v4099 = vld [vmem:[%s4097 + $0x8] sm:$0xff]
  %v4100 = vld [vmem:[%s4097 + $0x10] sm:$0xff]
  %v4101 = vld [vmem:[%s4097 + $0x18] sm:$0xff]
  %v4102 = vld [vmem:[%s4097 + $0x20] sm:$0xff]
  %s4103 = scalar_lea.vmem %s6, 760
  %v4104 = vld [vmem:[%s4103] sm:$0xff]
  %v4105 = vld [vmem:[%s4103 + $0x8] sm:$0xff]
  %v4106 = vld [vmem:[%s4103 + $0x10] sm:$0xff]
  %v4107 = vld [vmem:[%s4103 + $0x18] sm:$0xff]
  %v4108 = vld [vmem:[%s4103 + $0x20] sm:$0xff]
  %s4109 = scalar_lea.vmem %s6, 800
  %v4110 = vld [vmem:[%s4109] sm:$0xff]
  %v4111 = vld [vmem:[%s4109 + $0x8] sm:$0xff]
  %v4112 = vld [vmem:[%s4109 + $0x10] sm:$0xff]
  %v4113 = vld [vmem:[%s4109 + $0x18] sm:$0xff]
  %v4114 = vld [vmem:[%s4109 + $0x20] sm:$0xff]
  %v4115 = vlaneseq
  %v4116 = vshrl.u32 %v4115, 7
  %v4117 = vsub.s32 0, %v4116
  %v4118 = vrot.slane %v4102, %v4117
  %4119 = vmatprep.subr.mxu0 0.0
  %4120 = vmatpush1.msra.mxu0 %v4098
  %4121 = vmatprep.subr.mxu0 0.0
  %4122 = vmatpush1.msra.mxu0 %v4099
  %4123 = vmatprep.subr.mxu0 0.0
  %4124 = vmatpush1.msra.mxu0 %v4100
  %4125 = vmatprep.subr.mxu0 0.0
  %4126 = vmatpush1.msra.mxu0 %v4101
  %4127 = vmatprep.subr.mxu0 0.0
  %4128 = vmatpush1.msra.mxu0 0.0
  %4129 = vmatprep.subr.mxu0 0.0
  %4130 = vmatpush1.msra.mxu0 0.0
  %4131 = vmatprep.subr.mxu0 0.0
  %4132 = vmatpush1.msra.mxu0 0.0
  %4133 = vmatprep.subr.mxu0 0.0
  %4134 = vmatpush1.msra.mxu0 0.0
  %4135 = vmatprep.subr.mxu0 0.0
  %4136 = vmatpush1.msra.mxu0 0.0
  %4137 = vmatprep.subr.mxu0 0.0
  %4138 = vmatpush1.msra.mxu0 0.0
  %4139 = vmatprep.subr.mxu0 0.0
  %4140 = vmatpush1.msra.mxu0 0.0
  %4141 = vmatprep.subr.mxu0 0.0
  %4142 = vmatpush1.msra.mxu0 0.0
  %4143 = vmatprep.subr.mxu0 0.0
  %4144 = vmatpush1.msra.mxu0 0.0
  %4145 = vmatprep.subr.mxu0 0.0
  %4146 = vmatpush1.msra.mxu0 0.0
  %4147 = vmatprep.subr.mxu0 0.0
  %4148 = vmatpush1.msra.mxu0 0.0
  %4149 = vmatprep.subr.mxu0 0.0
  %4150 = vmatpush1.msra.mxu0 0.0
  %4151 = vmatprep.subr.mxu0 0.0
  %4152 = vmatpush1.msra.mxu0 0.0
  %4153 = vmatprep.subr.mxu0 0.0
  %4154 = vmatpush1.msra.mxu0 0.0
  %4155 = vmatprep.subr.mxu0 0.0
  %4156 = vmatpush1.msra.mxu0 0.0
  %4157 = vmatprep.subr.mxu0 0.0
  %4158 = vmatpush1.msra.mxu0 0.0
  %4159 = vmatprep.subr.mxu0 0.0
  %4160 = vmatpush1.msra.mxu0 0.0
  %4161 = vmatprep.subr.mxu0 0.0
  %4162 = vmatpush1.msra.mxu0 0.0
  %4163 = vmatprep.subr.mxu0 0.0
  %4164 = vmatpush1.msra.mxu0 0.0
  %4165 = vmatprep.subr.mxu0 0.0
  %4166 = vmatpush1.msra.mxu0 0.0
  %4167 = vmatprep.subr.mxu0 0.0
  %4168 = vmatpush1.msra.mxu0 0.0
  %4169 = vmatprep.subr.mxu0 0.0
  %4170 = vmatpush1.msra.mxu0 0.0
  %4171 = vmatprep.subr.mxu0 0.0
  %4172 = vmatpush1.msra.mxu0 0.0
  %4173 = vmatprep.subr.mxu0 0.0
  %4174 = vmatpush1.msra.mxu0 0.0
  %4175 = vmatprep.subr.mxu0 0.0
  %4176 = vmatpush1.msra.mxu0 0.0
  %4177 = vmatprep.subr.mxu0 0.0
  %4178 = vmatpush1.msra.mxu0 0.0
  %4179 = vmatprep.subr.mxu0 0.0
  %4180 = vmatpush1.msra.mxu0 0.0
  %4181 = vmatprep.subr.mxu0 0.0
  %4182 = vmatpush1.msra.mxu0 0.0
  %4183 = vmatprep.mubr.f32.mxu0 0.0
  %4184 = vmatmul.mubr.f32.gmra.mrb[0].mxu0 %v2949
  %v4185 = vpop.f32.mrb[0].mxu0
  %v4186 = vadd.f32 %v4118, %v4185
  %v4187 = vpop.f32.mrb[0].mxu0
  %4188 = vmatprep.mubr.f32.mxu0 0.0
  %4189 = vmatmul.mubr.f32.gmra.mrb[0].mxu0 %v2952
  %v4190 = vpop.f32.mrb[0].mxu0
  %v4191 = vadd.f32 %v4118, %v4190
  %v4192 = vpop.f32.mrb[0].mxu0
  %4193 = vmatprep.mubr.f32.mxu0 0.0
  %4194 = vmatmul.mubr.f32.gmra.mrb[0].mxu0 %v2955
  %v4195 = vpop.f32.mrb[0].mxu0
  %v4196 = vadd.f32 %v4118, %v4195
  %v4197 = vpop.f32.mrb[0].mxu0
  %4198 = vdwg.mxu0
  %v4199 = vlaneseq
  %v4200 = vshrl.u32 %v4199, 7
  %v4201 = vsub.s32 0, %v4200
  %v4202 = vrot.slane %v4108, %v4201
  %4203 = vmatprep.subr.mxu0 0.0
  %4204 = vmatpush1.msra.mxu0 %v4104
  %4205 = vmatprep.subr.mxu0 0.0
  %4206 = vmatpush1.msra.mxu0 %v4105
  %4207 = vmatprep.subr.mxu0 0.0
  %4208 = vmatpush1.msra.mxu0 %v4106
  %4209 = vmatprep.subr.mxu0 0.0
  %4210 = vmatpush1.msra.mxu0 %v4107
  %4211 = vmatprep.subr.mxu0 0.0
  %4212 = vmatpush1.msra.mxu0 0.0
  %4213 = vmatprep.subr.mxu0 0.0
  %4214 = vmatpush1.msra.mxu0 0.0
  %4215 = vmatprep.subr.mxu0 0.0
  %4216 = vmatpush1.msra.mxu0 0.0
  %4217 = vmatprep.subr.mxu0 0.0
  %4218 = vmatpush1.msra.mxu0 0.0
  %4219 = vmatprep.subr.mxu0 0.0
  %4220 = vmatpush1.msra.mxu0 0.0
  %4221 = vmatprep.subr.mxu0 0.0
  %4222 = vmatpush1.msra.mxu0 0.0
  %4223 = vmatprep.subr.mxu0 0.0
  %4224 = vmatpush1.msra.mxu0 0.0
  %4225 = vmatprep.subr.mxu0 0.0
  %4226 = vmatpush1.msra.mxu0 0.0
  %4227 = vmatprep.subr.mxu0 0.0
  %4228 = vmatpush1.msra.mxu0 0.0
  %4229 = vmatprep.subr.mxu0 0.0
  %4230 = vmatpush1.msra.mxu0 0.0
  %4231 = vmatprep.subr.mxu0 0.0
  %4232 = vmatpush1.msra.mxu0 0.0
  %4233 = vmatprep.subr.mxu0 0.0
  %4234 = vmatpush1.msra.mxu0 0.0
  %4235 = vmatprep.subr.mxu0 0.0
  %4236 = vmatpush1.msra.mxu0 0.0
  %4237 = vmatprep.subr.mxu0 0.0
  %4238 = vmatpush1.msra.mxu0 0.0
  %4239 = vmatprep.subr.mxu0 0.0
  %4240 = vmatpush1.msra.mxu0 0.0
  %4241 = vmatprep.subr.mxu0 0.0
  %4242 = vmatpush1.msra.mxu0 0.0
  %4243 = vmatprep.subr.mxu0 0.0
  %4244 = vmatpush1.msra.mxu0 0.0
  %4245 = vmatprep.subr.mxu0 0.0
  %4246 = vmatpush1.msra.mxu0 0.0
  %4247 = vmatprep.subr.mxu0 0.0
  %4248 = vmatpush1.msra.mxu0 0.0
  %4249 = vmatprep.subr.mxu0 0.0
  %4250 = vmatpush1.msra.mxu0 0.0
  %4251 = vmatprep.subr.mxu0 0.0
  %4252 = vmatpush1.msra.mxu0 0.0
  %4253 = vmatprep.subr.mxu0 0.0
  %4254 = vmatpush1.msra.mxu0 0.0
  %4255 = vmatprep.subr.mxu0 0.0
  %4256 = vmatpush1.msra.mxu0 0.0
  %4257 = vmatprep.subr.mxu0 0.0
  %4258 = vmatpush1.msra.mxu0 0.0
  %4259 = vmatprep.subr.mxu0 0.0
  %4260 = vmatpush1.msra.mxu0 0.0
  %4261 = vmatprep.subr.mxu0 0.0
  %4262 = vmatpush1.msra.mxu0 0.0
  %4263 = vmatprep.subr.mxu0 0.0
  %4264 = vmatpush1.msra.mxu0 0.0
  %4265 = vmatprep.subr.mxu0 0.0
  %4266 = vmatpush1.msra.mxu0 0.0
  %4267 = vmatprep.mubr.f32.mxu0 0.0
  %4268 = vmatmul.mubr.f32.gmra.mrb[0].mxu0 %v2949
  %v4269 = vpop.f32.mrb[0].mxu0
  %v4270 = vadd.f32 %v4202, %v4269
  %v4271 = vpop.f32.mrb[0].mxu0
  %4272 = vmatprep.mubr.f32.mxu0 0.0
  %4273 = vmatmul.mubr.f32.gmra.mrb[0].mxu0 %v2952
  %v4274 = vpop.f32.mrb[0].mxu0
  %v4275 = vadd.f32 %v4202, %v4274
  %v4276 = vpop.f32.mrb[0].mxu0
  %4277 = vmatprep.mubr.f32.mxu0 0.0
  %4278 = vmatmul.mubr.f32.gmra.mrb[0].mxu0 %v2955
  %v4279 = vpop.f32.mrb[0].mxu0
  %v4280 = vadd.f32 %v4202, %v4279
  %v4281 = vpop.f32.mrb[0].mxu0
  %4282 = vdwg.mxu0
  %v4283 = vlaneseq
  %v4284 = vshrl.u32 %v4283, 7
  %v4285 = vsub.s32 0, %v4284
  %v4286 = vrot.slane %v4114, %v4285
  %4287 = vmatprep.subr.mxu0 0.0
  %4288 = vmatpush1.msra.mxu0 %v4110
  %4289 = vmatprep.subr.mxu0 0.0
  %4290 = vmatpush1.msra.mxu0 %v4111
  %4291 = vmatprep.subr.mxu0 0.0
  %4292 = vmatpush1.msra.mxu0 %v4112
  %4293 = vmatprep.subr.mxu0 0.0
  %4294 = vmatpush1.msra.mxu0 %v4113
  %4295 = vmatprep.subr.mxu0 0.0
  %4296 = vmatpush1.msra.mxu0 0.0
  %4297 = vmatprep.subr.mxu0 0.0
  %4298 = vmatpush1.msra.mxu0 0.0
  %4299 = vmatprep.subr.mxu0 0.0
  %4300 = vmatpush1.msra.mxu0 0.0
  %4301 = vmatprep.subr.mxu0 0.0
  %4302 = vmatpush1.msra.mxu0 0.0
  %4303 = vmatprep.subr.mxu0 0.0
  %4304 = vmatpush1.msra.mxu0 0.0
  %4305 = vmatprep.subr.mxu0 0.0
  %4306 = vmatpush1.msra.mxu0 0.0
  %4307 = vmatprep.subr.mxu0 0.0
  %4308 = vmatpush1.msra.mxu0 0.0
  %4309 = vmatprep.subr.mxu0 0.0
  %4310 = vmatpush1.msra.mxu0 0.0
  %4311 = vmatprep.subr.mxu0 0.0
  %4312 = vmatpush1.msra.mxu0 0.0
  %4313 = vmatprep.subr.mxu0 0.0
  %4314 = vmatpush1.msra.mxu0 0.0
  %4315 = vmatprep.subr.mxu0 0.0
  %4316 = vmatpush1.msra.mxu0 0.0
  %4317 = vmatprep.subr.mxu0 0.0
  %4318 = vmatpush1.msra.mxu0 0.0
  %4319 = vmatprep.subr.mxu0 0.0
  %4320 = vmatpush1.msra.mxu0 0.0
  %4321 = vmatprep.subr.mxu0 0.0
  %4322 = vmatpush1.msra.mxu0 0.0
  %4323 = vmatprep.subr.mxu0 0.0
  %4324 = vmatpush1.msra.mxu0 0.0
  %4325 = vmatprep.subr.mxu0 0.0
  %4326 = vmatpush1.msra.mxu0 0.0
  %4327 = vmatprep.subr.mxu0 0.0
  %4328 = vmatpush1.msra.mxu0 0.0
  %4329 = vmatprep.subr.mxu0 0.0
  %4330 = vmatpush1.msra.mxu0 0.0
  %4331 = vmatprep.subr.mxu0 0.0
  %4332 = vmatpush1.msra.mxu0 0.0
  %4333 = vmatprep.subr.mxu0 0.0
  %4334 = vmatpush1.msra.mxu0 0.0
  %4335 = vmatprep.subr.mxu0 0.0
  %4336 = vmatpush1.msra.mxu0 0.0
  %4337 = vmatprep.subr.mxu0 0.0
  %4338 = vmatpush1.msra.mxu0 0.0
  %4339 = vmatprep.subr.mxu0 0.0
  %4340 = vmatpush1.msra.mxu0 0.0
  %4341 = vmatprep.subr.mxu0 0.0
  %4342 = vmatpush1.msra.mxu0 0.0
  %4343 = vmatprep.subr.mxu0 0.0
  %4344 = vmatpush1.msra.mxu0 0.0
  %4345 = vmatprep.subr.mxu0 0.0
  %4346 = vmatpush1.msra.mxu0 0.0
  %4347 = vmatprep.subr.mxu0 0.0
  %4348 = vmatpush1.msra.mxu0 0.0
  %4349 = vmatprep.subr.mxu0 0.0
  %4350 = vmatpush1.msra.mxu0 0.0
  %4351 = vmatprep.mubr.f32.mxu0 0.0
  %4352 = vmatmul.mubr.f32.gmra.mrb[0].mxu0 %v2949
  %v4353 = vpop.f32.mrb[0].mxu0
  %v4354 = vadd.f32 %v4286, %v4353
  %v4355 = vpop.f32.mrb[0].mxu0
  %4356 = vmatprep.mubr.f32.mxu0 0.0
  %4357 = vmatmul.mubr.f32.gmra.mrb[0].mxu0 %v2952
  %v4358 = vpop.f32.mrb[0].mxu0
  %v4359 = vadd.f32 %v4286, %v4358
  %v4360 = vpop.f32.mrb[0].mxu0
  %4361 = vmatprep.mubr.f32.mxu0 0.0
  %4362 = vmatmul.mubr.f32.gmra.mrb[0].mxu0 %v2955
  %v4363 = vpop.f32.mrb[0].mxu0
  %v4364 = vadd.f32 %v4286, %v4363
  %v4365 = vpop.f32.mrb[0].mxu0
  %4366 = vdwg.mxu0
  %v4368 = vsel %vm518, %v4186, 0
  %v4371 = vsel %vm518, %v4191, 0
  %v4374 = vsel %vm518, %v4196, 0
  %v4377 = vsel %vm518, %v4270, 0
  %v4380 = vsel %vm518, %v4275, 0
  %v4383 = vsel %vm518, %v4280, 0
  %4385 = vmatprep.subr.mxu0 0.0
  %4386 = vmatpush1.xpose.msra.mxu0 %v4377
  %4387 = vmatprep.subr.mxu0 0.0
  %4388 = vmatpush1.xpose.msra.mxu0 %v4380
  %4389 = vmatprep.subr.mxu0 0.0
  %4390 = vmatpush1.xpose.msra.mxu0 %v4383
  %4391 = vmatprep.subr.mxu0 0.0
  %4392 = vmatpush1.xpose.msra.mxu0 0.0
  %4393 = vmatprep.subr.mxu0 0.0
  %4394 = vmatpush1.xpose.msra.mxu0 0.0
  %4395 = vmatprep.subr.mxu0 0.0
  %4396 = vmatpush1.xpose.msra.mxu0 0.0
  %4397 = vmatprep.subr.mxu0 0.0
  %4398 = vmatpush1.xpose.msra.mxu0 0.0
  %4399 = vmatprep.subr.mxu0 0.0
  %4400 = vmatpush1.xpose.msra.mxu0 0.0
  %4401 = vmatprep.subr.mxu0 0.0
  %4402 = vmatpush1.xpose.msra.mxu0 0.0
  %4403 = vmatprep.subr.mxu0 0.0
  %4404 = vmatpush1.xpose.msra.mxu0 0.0
  %4405 = vmatprep.subr.mxu0 0.0
  %4406 = vmatpush1.xpose.msra.mxu0 0.0
  %4407 = vmatprep.subr.mxu0 0.0
  %4408 = vmatpush1.xpose.msra.mxu0 0.0
  %4409 = vmatprep.subr.mxu0 0.0
  %4410 = vmatpush1.xpose.msra.mxu0 0.0
  %4411 = vmatprep.subr.mxu0 0.0
  %4412 = vmatpush1.xpose.msra.mxu0 0.0
  %4413 = vmatprep.subr.mxu0 0.0
  %4414 = vmatpush1.xpose.msra.mxu0 0.0
  %4415 = vmatprep.subr.mxu0 0.0
  %4416 = vmatpush1.xpose.msra.mxu0 0.0
  %4417 = vmatprep.subr.mxu0 0.0
  %4418 = vmatpush1.xpose.msra.mxu0 0.0
  %4419 = vmatprep.subr.mxu0 0.0
  %4420 = vmatpush1.xpose.msra.mxu0 0.0
  %4421 = vmatprep.subr.mxu0 0.0
  %4422 = vmatpush1.xpose.msra.mxu0 0.0
  %4423 = vmatprep.subr.mxu0 0.0
  %4424 = vmatpush1.xpose.msra.mxu0 0.0
  %4425 = vmatprep.subr.mxu0 0.0
  %4426 = vmatpush1.xpose.msra.mxu0 0.0
  %4427 = vmatprep.subr.mxu0 0.0
  %4428 = vmatpush1.xpose.msra.mxu0 0.0
  %4429 = vmatprep.subr.mxu0 0.0
  %4430 = vmatpush1.xpose.msra.mxu0 0.0
  %4431 = vmatprep.subr.mxu0 0.0
  %4432 = vmatpush1.xpose.msra.mxu0 0.0
  %4433 = vmatprep.subr.mxu0 0.0
  %4434 = vmatpush1.xpose.msra.mxu0 0.0
  %4435 = vmatprep.subr.mxu0 0.0
  %4436 = vmatpush1.xpose.msra.mxu0 0.0
  %4437 = vmatprep.subr.mxu0 0.0
  %4438 = vmatpush1.xpose.msra.mxu0 0.0
  %4439 = vmatprep.subr.mxu0 0.0
  %4440 = vmatpush1.xpose.msra.mxu0 0.0
  %4441 = vmatprep.subr.mxu0 0.0
  %4442 = vmatpush1.xpose.msra.mxu0 0.0
  %4443 = vmatprep.subr.mxu0 0.0
  %4444 = vmatpush1.xpose.msra.mxu0 0.0
  %4445 = vmatprep.subr.mxu0 0.0
  %4446 = vmatpush1.xpose.msra.mxu0 0.0
  %4447 = vmatprep.subr.mxu0 0.0
  %4448 = vmatpush1.xpose.msra.mxu0 0.0
  %4449 = vmatprep.mubr.f32.mxu0 0.0
  %4450 = vmatmul.mubr.f32.gmra.mrb[0].mxu0 %v4368
  %v4451 = vpop.f32.mrb[0].mxu0
  %v4452 = vadd.f32 %v236, %v4451
  %v4453 = vpop.f32.mrb[0].mxu0
  %4454 = vmatprep.mubr.f32.mxu0 0.0
  %4455 = vmatmul.mubr.f32.gmra.mrb[0].mxu0 %v4371
  %v4456 = vpop.f32.mrb[0].mxu0
  %v4457 = vadd.f32 %v237, %v4456
  %v4458 = vpop.f32.mrb[0].mxu0
  %4459 = vmatprep.mubr.f32.mxu0 0.0
  %4460 = vmatmul.mubr.f32.gmra.mrb[0].mxu0 %v4374
  %v4461 = vpop.f32.mrb[0].mxu0
  %v4462 = vadd.f32 %v238, %v4461
  %v4463 = vpop.f32.mrb[0].mxu0
  %4464 = vdwg.mxu0
  %v4465 = vsel %vm617, %v4452, -inf
  %4466 = vmax.xlane.f32.xlu0 %v4465
  %v4467 = vpop.xlane.xlu0 %4466
  %v4468 = vsel %vm617, %v4457, -inf
  %4469 = vmax.xlane.f32.xlu0 %v4468
  %v4470 = vpop.xlane.xlu0 %4469
  %v4471 = vsel %vm617, %v4462, -inf
  %4472 = vmax.xlane.f32.xlu0 %v4471
  %v4473 = vpop.xlane.xlu0 %4472
  %v4474 = vsub.f32 %v4452, %v4467
  %v4475 = vsub.f32 %v4457, %v4470
  %v4476 = vsub.f32 %v4462, %v4473
  %v4477 = vmul.f32 %v4474, 1.442695
  %v4478 = vpow.pop %v4477
  %v4479 = vmul.f32 %v4475, 1.442695
  %v4480 = vpow.pop %v4479
  %v4481 = vmul.f32 %v4476, 1.442695
  %v4482 = vpow.pop %v4481
  %v4483 = vsel %vm617, %v4478, 0.0
  %4484 = vadd.xlane.f32.xlu0 %v4483
  %v4485 = vpop.xlane.xlu0 %4484
  %v4486 = vsel %vm617, %v4480, 0.0
  %4487 = vadd.xlane.f32.xlu0 %v4486
  %v4488 = vpop.xlane.xlu0 %4487
  %v4489 = vsel %vm617, %v4482, 0.0
  %4490 = vadd.xlane.f32.xlu0 %v4489
  %v4491 = vpop.xlane.xlu0 %4490
  %v4492 = vrcp.pop %v4485
  %v4493 = vrcp.pop %v4488
  %v4494 = vrcp.pop %v4491
  %v4495 = vmul.f32 %v4478, %v4492
  %v4496 = vmul.f32 %v4480, %v4493
  %v4497 = vmul.f32 %v4482, %v4494
  %v4499 = vsel %vm617, %v4495, 0
  %v4502 = vsel %vm617, %v4496, 0
  %v4505 = vsel %vm617, %v4497, 0
  %4507 = vmatprep.subr.mxu0 0.0
  %4508 = vmatpush1.msra.mxu0 %v4354
  %4509 = vmatprep.subr.mxu0 0.0
  %4510 = vmatpush1.msra.mxu0 %v4359
  %4511 = vmatprep.subr.mxu0 0.0
  %4512 = vmatpush1.msra.mxu0 %v4364
  %4513 = vmatprep.subr.mxu0 0.0
  %4514 = vmatpush1.msra.mxu0 0.0
  %4515 = vmatprep.subr.mxu0 0.0
  %4516 = vmatpush1.msra.mxu0 0.0
  %4517 = vmatprep.subr.mxu0 0.0
  %4518 = vmatpush1.msra.mxu0 0.0
  %4519 = vmatprep.subr.mxu0 0.0
  %4520 = vmatpush1.msra.mxu0 0.0
  %4521 = vmatprep.subr.mxu0 0.0
  %4522 = vmatpush1.msra.mxu0 0.0
  %4523 = vmatprep.subr.mxu0 0.0
  %4524 = vmatpush1.msra.mxu0 0.0
  %4525 = vmatprep.subr.mxu0 0.0
  %4526 = vmatpush1.msra.mxu0 0.0
  %4527 = vmatprep.subr.mxu0 0.0
  %4528 = vmatpush1.msra.mxu0 0.0
  %4529 = vmatprep.subr.mxu0 0.0
  %4530 = vmatpush1.msra.mxu0 0.0
  %4531 = vmatprep.subr.mxu0 0.0
  %4532 = vmatpush1.msra.mxu0 0.0
  %4533 = vmatprep.subr.mxu0 0.0
  %4534 = vmatpush1.msra.mxu0 0.0
  %4535 = vmatprep.subr.mxu0 0.0
  %4536 = vmatpush1.msra.mxu0 0.0
  %4537 = vmatprep.subr.mxu0 0.0
  %4538 = vmatpush1.msra.mxu0 0.0
  %4539 = vmatprep.subr.mxu0 0.0
  %4540 = vmatpush1.msra.mxu0 0.0
  %4541 = vmatprep.subr.mxu0 0.0
  %4542 = vmatpush1.msra.mxu0 0.0
  %4543 = vmatprep.subr.mxu0 0.0
  %4544 = vmatpush1.msra.mxu0 0.0
  %4545 = vmatprep.subr.mxu0 0.0
  %4546 = vmatpush1.msra.mxu0 0.0
  %4547 = vmatprep.subr.mxu0 0.0
  %4548 = vmatpush1.msra.mxu0 0.0
  %4549 = vmatprep.subr.mxu0 0.0
  %4550 = vmatpush1.msra.mxu0 0.0
  %4551 = vmatprep.subr.mxu0 0.0
  %4552 = vmatpush1.msra.mxu0 0.0
  %4553 = vmatprep.subr.mxu0 0.0
  %4554 = vmatpush1.msra.mxu0 0.0
  %4555 = vmatprep.subr.mxu0 0.0
  %4556 = vmatpush1.msra.mxu0 0.0
  %4557 = vmatprep.subr.mxu0 0.0
  %4558 = vmatpush1.msra.mxu0 0.0
  %4559 = vmatprep.subr.mxu0 0.0
  %4560 = vmatpush1.msra.mxu0 0.0
  %4561 = vmatprep.subr.mxu0 0.0
  %4562 = vmatpush1.msra.mxu0 0.0
  %4563 = vmatprep.subr.mxu0 0.0
  %4564 = vmatpush1.msra.mxu0 0.0
  %4565 = vmatprep.subr.mxu0 0.0
  %4566 = vmatpush1.msra.mxu0 0.0
  %4567 = vmatprep.subr.mxu0 0.0
  %4568 = vmatpush1.msra.mxu0 0.0
  %4569 = vmatprep.subr.mxu0 0.0
  %4570 = vmatpush1.msra.mxu0 0.0
  %4571 = vmatprep.mubr.f32.mxu0 0.0
  %4572 = vmatmul.mubr.f32.gmra.mrb[0].mxu0 %v4499
  %v4573 = vpop.f32.mrb[0].mxu0
  %v4574 = vadd.f32 0.0, %v4573
  %v4575 = vpop.f32.mrb[0].mxu0
  %4576 = vmatprep.mubr.f32.mxu0 0.0
  %4577 = vmatmul.mubr.f32.gmra.mrb[0].mxu0 %v4502
  %v4578 = vpop.f32.mrb[0].mxu0
  %v4579 = vadd.f32 0.0, %v4578
  %v4580 = vpop.f32.mrb[0].mxu0
  %4581 = vmatprep.mubr.f32.mxu0 0.0
  %4582 = vmatmul.mubr.f32.gmra.mrb[0].mxu0 %v4505
  %v4583 = vpop.f32.mrb[0].mxu0
  %v4584 = vadd.f32 0.0, %v4583
  %v4585 = vpop.f32.mrb[0].mxu0
  %4586 = vdwg.mxu0
  %s4587 = scalar_lea.vmem %s7, 48
  %v4588 = vld [vmem:[%s4587] sm:$0xff]
  %v4590 = vsel %vm518, %v4574, 0
  %v4593 = vsel %vm518, %v4579, 0
  %v4596 = vsel %vm518, %v4584, 0
  %4598 = vmatprep.subr.mxu0 0.0
  %4599 = vmatpush1.msra.mxu0 %v4588
  %4600 = vmatprep.subr.mxu0 0.0
  %4601 = vmatpush1.msra.mxu0 0.0
  %4602 = vmatprep.subr.mxu0 0.0
  %4603 = vmatpush1.msra.mxu0 0.0
  %4604 = vmatprep.subr.mxu0 0.0
  %4605 = vmatpush1.msra.mxu0 0.0
  %4606 = vmatprep.subr.mxu0 0.0
  %4607 = vmatpush1.msra.mxu0 0.0
  %4608 = vmatprep.subr.mxu0 0.0
  %4609 = vmatpush1.msra.mxu0 0.0
  %4610 = vmatprep.subr.mxu0 0.0
  %4611 = vmatpush1.msra.mxu0 0.0
  %4612 = vmatprep.subr.mxu0 0.0
  %4613 = vmatpush1.msra.mxu0 0.0
  %4614 = vmatprep.subr.mxu0 0.0
  %4615 = vmatpush1.msra.mxu0 0.0
  %4616 = vmatprep.subr.mxu0 0.0
  %4617 = vmatpush1.msra.mxu0 0.0
  %4618 = vmatprep.subr.mxu0 0.0
  %4619 = vmatpush1.msra.mxu0 0.0
  %4620 = vmatprep.subr.mxu0 0.0
  %4621 = vmatpush1.msra.mxu0 0.0
  %4622 = vmatprep.subr.mxu0 0.0
  %4623 = vmatpush1.msra.mxu0 0.0
  %4624 = vmatprep.subr.mxu0 0.0
  %4625 = vmatpush1.msra.mxu0 0.0
  %4626 = vmatprep.subr.mxu0 0.0
  %4627 = vmatpush1.msra.mxu0 0.0
  %4628 = vmatprep.subr.mxu0 0.0
  %4629 = vmatpush1.msra.mxu0 0.0
  %4630 = vmatprep.subr.mxu0 0.0
  %4631 = vmatpush1.msra.mxu0 0.0
  %4632 = vmatprep.subr.mxu0 0.0
  %4633 = vmatpush1.msra.mxu0 0.0
  %4634 = vmatprep.subr.mxu0 0.0
  %4635 = vmatpush1.msra.mxu0 0.0
  %4636 = vmatprep.subr.mxu0 0.0
  %4637 = vmatpush1.msra.mxu0 0.0
  %4638 = vmatprep.subr.mxu0 0.0
  %4639 = vmatpush1.msra.mxu0 0.0
  %4640 = vmatprep.subr.mxu0 0.0
  %4641 = vmatpush1.msra.mxu0 0.0
  %4642 = vmatprep.subr.mxu0 0.0
  %4643 = vmatpush1.msra.mxu0 0.0
  %4644 = vmatprep.subr.mxu0 0.0
  %4645 = vmatpush1.msra.mxu0 0.0
  %4646 = vmatprep.subr.mxu0 0.0
  %4647 = vmatpush1.msra.mxu0 0.0
  %4648 = vmatprep.subr.mxu0 0.0
  %4649 = vmatpush1.msra.mxu0 0.0
  %4650 = vmatprep.subr.mxu0 0.0
  %4651 = vmatpush1.msra.mxu0 0.0
  %4652 = vmatprep.subr.mxu0 0.0
  %4653 = vmatpush1.msra.mxu0 0.0
  %4654 = vmatprep.subr.mxu0 0.0
  %4655 = vmatpush1.msra.mxu0 0.0
  %4656 = vmatprep.subr.mxu0 0.0
  %4657 = vmatpush1.msra.mxu0 0.0
  %4658 = vmatprep.subr.mxu0 0.0
  %4659 = vmatpush1.msra.mxu0 0.0
  %4660 = vmatprep.subr.mxu0 0.0
  %4661 = vmatpush1.msra.mxu0 0.0
  %4662 = vmatprep.mubr.f32.mxu0 0.0
  %4663 = vmatmul.mubr.f32.gmra.mrb[0].mxu0 %v4590
  %v4664 = vpop.f32.mrb[0].mxu0
  %v4665 = vadd.f32 0.0, %v4664
  %v4666 = vpop.f32.mrb[0].mxu0
  %4667 = vmatprep.mubr.f32.mxu0 0.0
  %4668 = vmatmul.mubr.f32.gmra.mrb[0].mxu0 %v4593
  %v4669 = vpop.f32.mrb[0].mxu0
  %v4670 = vadd.f32 0.0, %v4669
  %v4671 = vpop.f32.mrb[0].mxu0
  %4672 = vmatprep.mubr.f32.mxu0 0.0
  %4673 = vmatmul.mubr.f32.gmra.mrb[0].mxu0 %v4596
  %v4674 = vpop.f32.mrb[0].mxu0
  %v4675 = vadd.f32 0.0, %v4674
  %v4676 = vpop.f32.mrb[0].mxu0
  %4677 = vdwg.mxu0
  %v4678 = vadd.f32 %v4084, %v4665
  %v4679 = vadd.f32 %v4089, %v4670
  %v4680 = vadd.f32 %v4094, %v4675
  %s4681 = scalar_lea.vmem %s6, 840
  %v4682 = vld [vmem:[%s4681] sm:$0xff]
  %v4683 = vld [vmem:[%s4681 + $0x8] sm:$0xff]
  %v4684 = vld [vmem:[%s4681 + $0x10] sm:$0xff]
  %v4685 = vld [vmem:[%s4681 + $0x18] sm:$0xff]
  %v4686 = vld [vmem:[%s4681 + $0x20] sm:$0xff]
  %s4687 = scalar_lea.vmem %s6, 880
  %v4688 = vld [vmem:[%s4687] sm:$0xff]
  %v4689 = vld [vmem:[%s4687 + $0x8] sm:$0xff]
  %v4690 = vld [vmem:[%s4687 + $0x10] sm:$0xff]
  %v4691 = vld [vmem:[%s4687 + $0x18] sm:$0xff]
  %v4692 = vld [vmem:[%s4687 + $0x20] sm:$0xff]
  %s4693 = scalar_lea.vmem %s6, 920
  %v4694 = vld [vmem:[%s4693] sm:$0xff]
  %v4695 = vld [vmem:[%s4693 + $0x8] sm:$0xff]
  %v4696 = vld [vmem:[%s4693 + $0x10] sm:$0xff]
  %v4697 = vld [vmem:[%s4693 + $0x18] sm:$0xff]
  %v4698 = vld [vmem:[%s4693 + $0x20] sm:$0xff]
  %v4699 = vlaneseq
  %v4700 = vshrl.u32 %v4699, 7
  %v4701 = vsub.s32 0, %v4700
  %v4702 = vrot.slane %v4686, %v4701
  %4703 = vmatprep.subr.mxu0 0.0
  %4704 = vmatpush1.msra.mxu0 %v4682
  %4705 = vmatprep.subr.mxu0 0.0
  %4706 = vmatpush1.msra.mxu0 %v4683
  %4707 = vmatprep.subr.mxu0 0.0
  %4708 = vmatpush1.msra.mxu0 %v4684
  %4709 = vmatprep.subr.mxu0 0.0
  %4710 = vmatpush1.msra.mxu0 %v4685
  %4711 = vmatprep.subr.mxu0 0.0
  %4712 = vmatpush1.msra.mxu0 0.0
  %4713 = vmatprep.subr.mxu0 0.0
  %4714 = vmatpush1.msra.mxu0 0.0
  %4715 = vmatprep.subr.mxu0 0.0
  %4716 = vmatpush1.msra.mxu0 0.0
  %4717 = vmatprep.subr.mxu0 0.0
  %4718 = vmatpush1.msra.mxu0 0.0
  %4719 = vmatprep.subr.mxu0 0.0
  %4720 = vmatpush1.msra.mxu0 0.0
  %4721 = vmatprep.subr.mxu0 0.0
  %4722 = vmatpush1.msra.mxu0 0.0
  %4723 = vmatprep.subr.mxu0 0.0
  %4724 = vmatpush1.msra.mxu0 0.0
  %4725 = vmatprep.subr.mxu0 0.0
  %4726 = vmatpush1.msra.mxu0 0.0
  %4727 = vmatprep.subr.mxu0 0.0
  %4728 = vmatpush1.msra.mxu0 0.0
  %4729 = vmatprep.subr.mxu0 0.0
  %4730 = vmatpush1.msra.mxu0 0.0
  %4731 = vmatprep.subr.mxu0 0.0
  %4732 = vmatpush1.msra.mxu0 0.0
  %4733 = vmatprep.subr.mxu0 0.0
  %4734 = vmatpush1.msra.mxu0 0.0
  %4735 = vmatprep.subr.mxu0 0.0
  %4736 = vmatpush1.msra.mxu0 0.0
  %4737 = vmatprep.subr.mxu0 0.0
  %4738 = vmatpush1.msra.mxu0 0.0
  %4739 = vmatprep.subr.mxu0 0.0
  %4740 = vmatpush1.msra.mxu0 0.0
  %4741 = vmatprep.subr.mxu0 0.0
  %4742 = vmatpush1.msra.mxu0 0.0
  %4743 = vmatprep.subr.mxu0 0.0
  %4744 = vmatpush1.msra.mxu0 0.0
  %4745 = vmatprep.subr.mxu0 0.0
  %4746 = vmatpush1.msra.mxu0 0.0
  %4747 = vmatprep.subr.mxu0 0.0
  %4748 = vmatpush1.msra.mxu0 0.0
  %4749 = vmatprep.subr.mxu0 0.0
  %4750 = vmatpush1.msra.mxu0 0.0
  %4751 = vmatprep.subr.mxu0 0.0
  %4752 = vmatpush1.msra.mxu0 0.0
  %4753 = vmatprep.subr.mxu0 0.0
  %4754 = vmatpush1.msra.mxu0 0.0
  %4755 = vmatprep.subr.mxu0 0.0
  %4756 = vmatpush1.msra.mxu0 0.0
  %4757 = vmatprep.subr.mxu0 0.0
  %4758 = vmatpush1.msra.mxu0 0.0
  %4759 = vmatprep.subr.mxu0 0.0
  %4760 = vmatpush1.msra.mxu0 0.0
  %4761 = vmatprep.subr.mxu0 0.0
  %4762 = vmatpush1.msra.mxu0 0.0
  %4763 = vmatprep.subr.mxu0 0.0
  %4764 = vmatpush1.msra.mxu0 0.0
  %4765 = vmatprep.subr.mxu0 0.0
  %4766 = vmatpush1.msra.mxu0 0.0
  %4767 = vmatprep.mubr.f32.mxu0 0.0
  %4768 = vmatmul.mubr.f32.gmra.mrb[0].mxu0 %v2949
  %v4769 = vpop.f32.mrb[0].mxu0
  %v4770 = vadd.f32 %v4702, %v4769
  %v4771 = vpop.f32.mrb[0].mxu0
  %4772 = vmatprep.mubr.f32.mxu0 0.0
  %4773 = vmatmul.mubr.f32.gmra.mrb[0].mxu0 %v2952
  %v4774 = vpop.f32.mrb[0].mxu0
  %v4775 = vadd.f32 %v4702, %v4774
  %v4776 = vpop.f32.mrb[0].mxu0
  %4777 = vmatprep.mubr.f32.mxu0 0.0
  %4778 = vmatmul.mubr.f32.gmra.mrb[0].mxu0 %v2955
  %v4779 = vpop.f32.mrb[0].mxu0
  %v4780 = vadd.f32 %v4702, %v4779
  %v4781 = vpop.f32.mrb[0].mxu0
  %4782 = vdwg.mxu0
  %v4783 = vlaneseq
  %v4784 = vshrl.u32 %v4783, 7
  %v4785 = vsub.s32 0, %v4784
  %v4786 = vrot.slane %v4692, %v4785
  %4787 = vmatprep.subr.mxu0 0.0
  %4788 = vmatpush1.msra.mxu0 %v4688
  %4789 = vmatprep.subr.mxu0 0.0
  %4790 = vmatpush1.msra.mxu0 %v4689
  %4791 = vmatprep.subr.mxu0 0.0
  %4792 = vmatpush1.msra.mxu0 %v4690
  %4793 = vmatprep.subr.mxu0 0.0
  %4794 = vmatpush1.msra.mxu0 %v4691
  %4795 = vmatprep.subr.mxu0 0.0
  %4796 = vmatpush1.msra.mxu0 0.0
  %4797 = vmatprep.subr.mxu0 0.0
  %4798 = vmatpush1.msra.mxu0 0.0
  %4799 = vmatprep.subr.mxu0 0.0
  %4800 = vmatpush1.msra.mxu0 0.0
  %4801 = vmatprep.subr.mxu0 0.0
  %4802 = vmatpush1.msra.mxu0 0.0
  %4803 = vmatprep.subr.mxu0 0.0
  %4804 = vmatpush1.msra.mxu0 0.0
  %4805 = vmatprep.subr.mxu0 0.0
  %4806 = vmatpush1.msra.mxu0 0.0
  %4807 = vmatprep.subr.mxu0 0.0
  %4808 = vmatpush1.msra.mxu0 0.0
  %4809 = vmatprep.subr.mxu0 0.0
  %4810 = vmatpush1.msra.mxu0 0.0
  %4811 = vmatprep.subr.mxu0 0.0
  %4812 = vmatpush1.msra.mxu0 0.0
  %4813 = vmatprep.subr.mxu0 0.0
  %4814 = vmatpush1.msra.mxu0 0.0
  %4815 = vmatprep.subr.mxu0 0.0
  %4816 = vmatpush1.msra.mxu0 0.0
  %4817 = vmatprep.subr.mxu0 0.0
  %4818 = vmatpush1.msra.mxu0 0.0
  %4819 = vmatprep.subr.mxu0 0.0
  %4820 = vmatpush1.msra.mxu0 0.0
  %4821 = vmatprep.subr.mxu0 0.0
  %4822 = vmatpush1.msra.mxu0 0.0
  %4823 = vmatprep.subr.mxu0 0.0
  %4824 = vmatpush1.msra.mxu0 0.0
  %4825 = vmatprep.subr.mxu0 0.0
  %4826 = vmatpush1.msra.mxu0 0.0
  %4827 = vmatprep.subr.mxu0 0.0
  %4828 = vmatpush1.msra.mxu0 0.0
  %4829 = vmatprep.subr.mxu0 0.0
  %4830 = vmatpush1.msra.mxu0 0.0
  %4831 = vmatprep.subr.mxu0 0.0
  %4832 = vmatpush1.msra.mxu0 0.0
  %4833 = vmatprep.subr.mxu0 0.0
  %4834 = vmatpush1.msra.mxu0 0.0
  %4835 = vmatprep.subr.mxu0 0.0
  %4836 = vmatpush1.msra.mxu0 0.0
  %4837 = vmatprep.subr.mxu0 0.0
  %4838 = vmatpush1.msra.mxu0 0.0
  %4839 = vmatprep.subr.mxu0 0.0
  %4840 = vmatpush1.msra.mxu0 0.0
  %4841 = vmatprep.subr.mxu0 0.0
  %4842 = vmatpush1.msra.mxu0 0.0
  %4843 = vmatprep.subr.mxu0 0.0
  %4844 = vmatpush1.msra.mxu0 0.0
  %4845 = vmatprep.subr.mxu0 0.0
  %4846 = vmatpush1.msra.mxu0 0.0
  %4847 = vmatprep.subr.mxu0 0.0
  %4848 = vmatpush1.msra.mxu0 0.0
  %4849 = vmatprep.subr.mxu0 0.0
  %4850 = vmatpush1.msra.mxu0 0.0
  %4851 = vmatprep.mubr.f32.mxu0 0.0
  %4852 = vmatmul.mubr.f32.gmra.mrb[0].mxu0 %v2949
  %v4853 = vpop.f32.mrb[0].mxu0
  %v4854 = vadd.f32 %v4786, %v4853
  %v4855 = vpop.f32.mrb[0].mxu0
  %4856 = vmatprep.mubr.f32.mxu0 0.0
  %4857 = vmatmul.mubr.f32.gmra.mrb[0].mxu0 %v2952
  %v4858 = vpop.f32.mrb[0].mxu0
  %v4859 = vadd.f32 %v4786, %v4858
  %v4860 = vpop.f32.mrb[0].mxu0
  %4861 = vmatprep.mubr.f32.mxu0 0.0
  %4862 = vmatmul.mubr.f32.gmra.mrb[0].mxu0 %v2955
  %v4863 = vpop.f32.mrb[0].mxu0
  %v4864 = vadd.f32 %v4786, %v4863
  %v4865 = vpop.f32.mrb[0].mxu0
  %4866 = vdwg.mxu0
  %v4867 = vlaneseq
  %v4868 = vshrl.u32 %v4867, 7
  %v4869 = vsub.s32 0, %v4868
  %v4870 = vrot.slane %v4698, %v4869
  %4871 = vmatprep.subr.mxu0 0.0
  %4872 = vmatpush1.msra.mxu0 %v4694
  %4873 = vmatprep.subr.mxu0 0.0
  %4874 = vmatpush1.msra.mxu0 %v4695
  %4875 = vmatprep.subr.mxu0 0.0
  %4876 = vmatpush1.msra.mxu0 %v4696
  %4877 = vmatprep.subr.mxu0 0.0
  %4878 = vmatpush1.msra.mxu0 %v4697
  %4879 = vmatprep.subr.mxu0 0.0
  %4880 = vmatpush1.msra.mxu0 0.0
  %4881 = vmatprep.subr.mxu0 0.0
  %4882 = vmatpush1.msra.mxu0 0.0
  %4883 = vmatprep.subr.mxu0 0.0
  %4884 = vmatpush1.msra.mxu0 0.0
  %4885 = vmatprep.subr.mxu0 0.0
  %4886 = vmatpush1.msra.mxu0 0.0
  %4887 = vmatprep.subr.mxu0 0.0
  %4888 = vmatpush1.msra.mxu0 0.0
  %4889 = vmatprep.subr.mxu0 0.0
  %4890 = vmatpush1.msra.mxu0 0.0
  %4891 = vmatprep.subr.mxu0 0.0
  %4892 = vmatpush1.msra.mxu0 0.0
  %4893 = vmatprep.subr.mxu0 0.0
  %4894 = vmatpush1.msra.mxu0 0.0
  %4895 = vmatprep.subr.mxu0 0.0
  %4896 = vmatpush1.msra.mxu0 0.0
  %4897 = vmatprep.subr.mxu0 0.0
  %4898 = vmatpush1.msra.mxu0 0.0
  %4899 = vmatprep.subr.mxu0 0.0
  %4900 = vmatpush1.msra.mxu0 0.0
  %4901 = vmatprep.subr.mxu0 0.0
  %4902 = vmatpush1.msra.mxu0 0.0
  %4903 = vmatprep.subr.mxu0 0.0
  %4904 = vmatpush1.msra.mxu0 0.0
  %4905 = vmatprep.subr.mxu0 0.0
  %4906 = vmatpush1.msra.mxu0 0.0
  %4907 = vmatprep.subr.mxu0 0.0
  %4908 = vmatpush1.msra.mxu0 0.0
  %4909 = vmatprep.subr.mxu0 0.0
  %4910 = vmatpush1.msra.mxu0 0.0
  %4911 = vmatprep.subr.mxu0 0.0
  %4912 = vmatpush1.msra.mxu0 0.0
  %4913 = vmatprep.subr.mxu0 0.0
  %4914 = vmatpush1.msra.mxu0 0.0
  %4915 = vmatprep.subr.mxu0 0.0
  %4916 = vmatpush1.msra.mxu0 0.0
  %4917 = vmatprep.subr.mxu0 0.0
  %4918 = vmatpush1.msra.mxu0 0.0
  %4919 = vmatprep.subr.mxu0 0.0
  %4920 = vmatpush1.msra.mxu0 0.0
  %4921 = vmatprep.subr.mxu0 0.0
  %4922 = vmatpush1.msra.mxu0 0.0
  %4923 = vmatprep.subr.mxu0 0.0
  %4924 = vmatpush1.msra.mxu0 0.0
  %4925 = vmatprep.subr.mxu0 0.0
  %4926 = vmatpush1.msra.mxu0 0.0
  %4927 = vmatprep.subr.mxu0 0.0
  %4928 = vmatpush1.msra.mxu0 0.0
  %4929 = vmatprep.subr.mxu0 0.0
  %4930 = vmatpush1.msra.mxu0 0.0
  %4931 = vmatprep.subr.mxu0 0.0
  %4932 = vmatpush1.msra.mxu0 0.0
  %4933 = vmatprep.subr.mxu0 0.0
  %4934 = vmatpush1.msra.mxu0 0.0
  %4935 = vmatprep.mubr.f32.mxu0 0.0
  %4936 = vmatmul.mubr.f32.gmra.mrb[0].mxu0 %v2949
  %v4937 = vpop.f32.mrb[0].mxu0
  %v4938 = vadd.f32 %v4870, %v4937
  %v4939 = vpop.f32.mrb[0].mxu0
  %4940 = vmatprep.mubr.f32.mxu0 0.0
  %4941 = vmatmul.mubr.f32.gmra.mrb[0].mxu0 %v2952
  %v4942 = vpop.f32.mrb[0].mxu0
  %v4943 = vadd.f32 %v4870, %v4942
  %v4944 = vpop.f32.mrb[0].mxu0
  %4945 = vmatprep.mubr.f32.mxu0 0.0
  %4946 = vmatmul.mubr.f32.gmra.mrb[0].mxu0 %v2955
  %v4947 = vpop.f32.mrb[0].mxu0
  %v4948 = vadd.f32 %v4870, %v4947
  %v4949 = vpop.f32.mrb[0].mxu0
  %4950 = vdwg.mxu0
  %v4952 = vsel %vm518, %v4770, 0
  %v4955 = vsel %vm518, %v4775, 0
  %v4958 = vsel %vm518, %v4780, 0
  %v4961 = vsel %vm518, %v4854, 0
  %v4964 = vsel %vm518, %v4859, 0
  %v4967 = vsel %vm518, %v4864, 0
  %4969 = vmatprep.subr.mxu0 0.0
  %4970 = vmatpush1.xpose.msra.mxu0 %v4961
  %4971 = vmatprep.subr.mxu0 0.0
  %4972 = vmatpush1.xpose.msra.mxu0 %v4964
  %4973 = vmatprep.subr.mxu0 0.0
  %4974 = vmatpush1.xpose.msra.mxu0 %v4967
  %4975 = vmatprep.subr.mxu0 0.0
  %4976 = vmatpush1.xpose.msra.mxu0 0.0
  %4977 = vmatprep.subr.mxu0 0.0
  %4978 = vmatpush1.xpose.msra.mxu0 0.0
  %4979 = vmatprep.subr.mxu0 0.0
  %4980 = vmatpush1.xpose.msra.mxu0 0.0
  %4981 = vmatprep.subr.mxu0 0.0
  %4982 = vmatpush1.xpose.msra.mxu0 0.0
  %4983 = vmatprep.subr.mxu0 0.0
  %4984 = vmatpush1.xpose.msra.mxu0 0.0
  %4985 = vmatprep.subr.mxu0 0.0
  %4986 = vmatpush1.xpose.msra.mxu0 0.0
  %4987 = vmatprep.subr.mxu0 0.0
  %4988 = vmatpush1.xpose.msra.mxu0 0.0
  %4989 = vmatprep.subr.mxu0 0.0
  %4990 = vmatpush1.xpose.msra.mxu0 0.0
  %4991 = vmatprep.subr.mxu0 0.0
  %4992 = vmatpush1.xpose.msra.mxu0 0.0
  %4993 = vmatprep.subr.mxu0 0.0
  %4994 = vmatpush1.xpose.msra.mxu0 0.0
  %4995 = vmatprep.subr.mxu0 0.0
  %4996 = vmatpush1.xpose.msra.mxu0 0.0
  %4997 = vmatprep.subr.mxu0 0.0
  %4998 = vmatpush1.xpose.msra.mxu0 0.0
  %4999 = vmatprep.subr.mxu0 0.0
  %5000 = vmatpush1.xpose.msra.mxu0 0.0
  %5001 = vmatprep.subr.mxu0 0.0
  %5002 = vmatpush1.xpose.msra.mxu0 0.0
  %5003 = vmatprep.subr.mxu0 0.0
  %5004 = vmatpush1.xpose.msra.mxu0 0.0
  %5005 = vmatprep.subr.mxu0 0.0
  %5006 = vmatpush1.xpose.msra.mxu0 0.0
  %5007 = vmatprep.subr.mxu0 0.0
  %5008 = vmatpush1.xpose.msra.mxu0 0.0
  %5009 = vmatprep.subr.mxu0 0.0
  %5010 = vmatpush1.xpose.msra.mxu0 0.0
  %5011 = vmatprep.subr.mxu0 0.0
  %5012 = vmatpush1.xpose.msra.mxu0 0.0
  %5013 = vmatprep.subr.mxu0 0.0
  %5014 = vmatpush1.xpose.msra.mxu0 0.0
  %5015 = vmatprep.subr.mxu0 0.0
  %5016 = vmatpush1.xpose.msra.mxu0 0.0
  %5017 = vmatprep.subr.mxu0 0.0
  %5018 = vmatpush1.xpose.msra.mxu0 0.0
  %5019 = vmatprep.subr.mxu0 0.0
  %5020 = vmatpush1.xpose.msra.mxu0 0.0
  %5021 = vmatprep.subr.mxu0 0.0
  %5022 = vmatpush1.xpose.msra.mxu0 0.0
  %5023 = vmatprep.subr.mxu0 0.0
  %5024 = vmatpush1.xpose.msra.mxu0 0.0
  %5025 = vmatprep.subr.mxu0 0.0
  %5026 = vmatpush1.xpose.msra.mxu0 0.0
  %5027 = vmatprep.subr.mxu0 0.0
  %5028 = vmatpush1.xpose.msra.mxu0 0.0
  %5029 = vmatprep.subr.mxu0 0.0
  %5030 = vmatpush1.xpose.msra.mxu0 0.0
  %5031 = vmatprep.subr.mxu0 0.0
  %5032 = vmatpush1.xpose.msra.mxu0 0.0
  %5033 = vmatprep.mubr.f32.mxu0 0.0
  %5034 = vmatmul.mubr.f32.gmra.mrb[0].mxu0 %v4952
  %v5035 = vpop.f32.mrb[0].mxu0
  %v5036 = vadd.f32 %v236, %v5035
  %v5037 = vpop.f32.mrb[0].mxu0
  %5038 = vmatprep.mubr.f32.mxu0 0.0
  %5039 = vmatmul.mubr.f32.gmra.mrb[0].mxu0 %v4955
  %v5040 = vpop.f32.mrb[0].mxu0
  %v5041 = vadd.f32 %v237, %v5040
  %v5042 = vpop.f32.mrb[0].mxu0
  %5043 = vmatprep.mubr.f32.mxu0 0.0
  %5044 = vmatmul.mubr.f32.gmra.mrb[0].mxu0 %v4958
  %v5045 = vpop.f32.mrb[0].mxu0
  %v5046 = vadd.f32 %v238, %v5045
  %v5047 = vpop.f32.mrb[0].mxu0
  %5048 = vdwg.mxu0
  %v5049 = vsel %vm617, %v5036, -inf
  %5050 = vmax.xlane.f32.xlu0 %v5049
  %v5051 = vpop.xlane.xlu0 %5050
  %v5052 = vsel %vm617, %v5041, -inf
  %5053 = vmax.xlane.f32.xlu0 %v5052
  %v5054 = vpop.xlane.xlu0 %5053
  %v5055 = vsel %vm617, %v5046, -inf
  %5056 = vmax.xlane.f32.xlu0 %v5055
  %v5057 = vpop.xlane.xlu0 %5056
  %v5058 = vsub.f32 %v5036, %v5051
  %v5059 = vsub.f32 %v5041, %v5054
  %v5060 = vsub.f32 %v5046, %v5057
  %v5061 = vmul.f32 %v5058, 1.442695
  %v5062 = vpow.pop %v5061
  %v5063 = vmul.f32 %v5059, 1.442695
  %v5064 = vpow.pop %v5063
  %v5065 = vmul.f32 %v5060, 1.442695
  %v5066 = vpow.pop %v5065
  %v5067 = vsel %vm617, %v5062, 0.0
  %5068 = vadd.xlane.f32.xlu0 %v5067
  %v5069 = vpop.xlane.xlu0 %5068
  %v5070 = vsel %vm617, %v5064, 0.0
  %5071 = vadd.xlane.f32.xlu0 %v5070
  %v5072 = vpop.xlane.xlu0 %5071
  %v5073 = vsel %vm617, %v5066, 0.0
  %5074 = vadd.xlane.f32.xlu0 %v5073
  %v5075 = vpop.xlane.xlu0 %5074
  %v5076 = vrcp.pop %v5069
  %v5077 = vrcp.pop %v5072
  %v5078 = vrcp.pop %v5075
  %v5079 = vmul.f32 %v5062, %v5076
  %v5080 = vmul.f32 %v5064, %v5077
  %v5081 = vmul.f32 %v5066, %v5078
  %v5083 = vsel %vm617, %v5079, 0
  %v5086 = vsel %vm617, %v5080, 0
  %v5089 = vsel %vm617, %v5081, 0
  %5091 = vmatprep.subr.mxu0 0.0
  %5092 = vmatpush1.msra.mxu0 %v4938
  %5093 = vmatprep.subr.mxu0 0.0
  %5094 = vmatpush1.msra.mxu0 %v4943
  %5095 = vmatprep.subr.mxu0 0.0
  %5096 = vmatpush1.msra.mxu0 %v4948
  %5097 = vmatprep.subr.mxu0 0.0
  %5098 = vmatpush1.msra.mxu0 0.0
  %5099 = vmatprep.subr.mxu0 0.0
  %5100 = vmatpush1.msra.mxu0 0.0
  %5101 = vmatprep.subr.mxu0 0.0
  %5102 = vmatpush1.msra.mxu0 0.0
  %5103 = vmatprep.subr.mxu0 0.0
  %5104 = vmatpush1.msra.mxu0 0.0
  %5105 = vmatprep.subr.mxu0 0.0
  %5106 = vmatpush1.msra.mxu0 0.0
  %5107 = vmatprep.subr.mxu0 0.0
  %5108 = vmatpush1.msra.mxu0 0.0
  %5109 = vmatprep.subr.mxu0 0.0
  %5110 = vmatpush1.msra.mxu0 0.0
  %5111 = vmatprep.subr.mxu0 0.0
  %5112 = vmatpush1.msra.mxu0 0.0
  %5113 = vmatprep.subr.mxu0 0.0
  %5114 = vmatpush1.msra.mxu0 0.0
  %5115 = vmatprep.subr.mxu0 0.0
  %5116 = vmatpush1.msra.mxu0 0.0
  %5117 = vmatprep.subr.mxu0 0.0
  %5118 = vmatpush1.msra.mxu0 0.0
  %5119 = vmatprep.subr.mxu0 0.0
  %5120 = vmatpush1.msra.mxu0 0.0
  %5121 = vmatprep.subr.mxu0 0.0
  %5122 = vmatpush1.msra.mxu0 0.0
  %5123 = vmatprep.subr.mxu0 0.0
  %5124 = vmatpush1.msra.mxu0 0.0
  %5125 = vmatprep.subr.mxu0 0.0
  %5126 = vmatpush1.msra.mxu0 0.0
  %5127 = vmatprep.subr.mxu0 0.0
  %5128 = vmatpush1.msra.mxu0 0.0
  %5129 = vmatprep.subr.mxu0 0.0
  %5130 = vmatpush1.msra.mxu0 0.0
  %5131 = vmatprep.subr.mxu0 0.0
  %5132 = vmatpush1.msra.mxu0 0.0
  %5133 = vmatprep.subr.mxu0 0.0
  %5134 = vmatpush1.msra.mxu0 0.0
  %5135 = vmatprep.subr.mxu0 0.0
  %5136 = vmatpush1.msra.mxu0 0.0
  %5137 = vmatprep.subr.mxu0 0.0
  %5138 = vmatpush1.msra.mxu0 0.0
  %5139 = vmatprep.subr.mxu0 0.0
  %5140 = vmatpush1.msra.mxu0 0.0
  %5141 = vmatprep.subr.mxu0 0.0
  %5142 = vmatpush1.msra.mxu0 0.0
  %5143 = vmatprep.subr.mxu0 0.0
  %5144 = vmatpush1.msra.mxu0 0.0
  %5145 = vmatprep.subr.mxu0 0.0
  %5146 = vmatpush1.msra.mxu0 0.0
  %5147 = vmatprep.subr.mxu0 0.0
  %5148 = vmatpush1.msra.mxu0 0.0
  %5149 = vmatprep.subr.mxu0 0.0
  %5150 = vmatpush1.msra.mxu0 0.0
  %5151 = vmatprep.subr.mxu0 0.0
  %5152 = vmatpush1.msra.mxu0 0.0
  %5153 = vmatprep.subr.mxu0 0.0
  %5154 = vmatpush1.msra.mxu0 0.0
  %5155 = vmatprep.mubr.f32.mxu0 0.0
  %5156 = vmatmul.mubr.f32.gmra.mrb[0].mxu0 %v5083
  %v5157 = vpop.f32.mrb[0].mxu0
  %v5158 = vadd.f32 0.0, %v5157
  %v5159 = vpop.f32.mrb[0].mxu0
  %5160 = vmatprep.mubr.f32.mxu0 0.0
  %5161 = vmatmul.mubr.f32.gmra.mrb[0].mxu0 %v5086
  %v5162 = vpop.f32.mrb[0].mxu0
  %v5163 = vadd.f32 0.0, %v5162
  %v5164 = vpop.f32.mrb[0].mxu0
  %5165 = vmatprep.mubr.f32.mxu0 0.0
  %5166 = vmatmul.mubr.f32.gmra.mrb[0].mxu0 %v5089
  %v5167 = vpop.f32.mrb[0].mxu0
  %v5168 = vadd.f32 0.0, %v5167
  %v5169 = vpop.f32.mrb[0].mxu0
  %5170 = vdwg.mxu0
  %s5171 = scalar_lea.vmem %s7, 56
  %v5172 = vld [vmem:[%s5171] sm:$0xff]
  %v5174 = vsel %vm518, %v5158, 0
  %v5177 = vsel %vm518, %v5163, 0
  %v5180 = vsel %vm518, %v5168, 0
  %5182 = vmatprep.subr.mxu0 0.0
  %5183 = vmatpush1.msra.mxu0 %v5172
  %5184 = vmatprep.subr.mxu0 0.0
  %5185 = vmatpush1.msra.mxu0 0.0
  %5186 = vmatprep.subr.mxu0 0.0
  %5187 = vmatpush1.msra.mxu0 0.0
  %5188 = vmatprep.subr.mxu0 0.0
  %5189 = vmatpush1.msra.mxu0 0.0
  %5190 = vmatprep.subr.mxu0 0.0
  %5191 = vmatpush1.msra.mxu0 0.0
  %5192 = vmatprep.subr.mxu0 0.0
  %5193 = vmatpush1.msra.mxu0 0.0
  %5194 = vmatprep.subr.mxu0 0.0
  %5195 = vmatpush1.msra.mxu0 0.0
  %5196 = vmatprep.subr.mxu0 0.0
  %5197 = vmatpush1.msra.mxu0 0.0
  %5198 = vmatprep.subr.mxu0 0.0
  %5199 = vmatpush1.msra.mxu0 0.0
  %5200 = vmatprep.subr.mxu0 0.0
  %5201 = vmatpush1.msra.mxu0 0.0
  %5202 = vmatprep.subr.mxu0 0.0
  %5203 = vmatpush1.msra.mxu0 0.0
  %5204 = vmatprep.subr.mxu0 0.0
  %5205 = vmatpush1.msra.mxu0 0.0
  %5206 = vmatprep.subr.mxu0 0.0
  %5207 = vmatpush1.msra.mxu0 0.0
  %5208 = vmatprep.subr.mxu0 0.0
  %5209 = vmatpush1.msra.mxu0 0.0
  %5210 = vmatprep.subr.mxu0 0.0
  %5211 = vmatpush1.msra.mxu0 0.0
  %5212 = vmatprep.subr.mxu0 0.0
  %5213 = vmatpush1.msra.mxu0 0.0
  %5214 = vmatprep.subr.mxu0 0.0
  %5215 = vmatpush1.msra.mxu0 0.0
  %5216 = vmatprep.subr.mxu0 0.0
  %5217 = vmatpush1.msra.mxu0 0.0
  %5218 = vmatprep.subr.mxu0 0.0
  %5219 = vmatpush1.msra.mxu0 0.0
  %5220 = vmatprep.subr.mxu0 0.0
  %5221 = vmatpush1.msra.mxu0 0.0
  %5222 = vmatprep.subr.mxu0 0.0
  %5223 = vmatpush1.msra.mxu0 0.0
  %5224 = vmatprep.subr.mxu0 0.0
  %5225 = vmatpush1.msra.mxu0 0.0
  %5226 = vmatprep.subr.mxu0 0.0
  %5227 = vmatpush1.msra.mxu0 0.0
  %5228 = vmatprep.subr.mxu0 0.0
  %5229 = vmatpush1.msra.mxu0 0.0
  %5230 = vmatprep.subr.mxu0 0.0
  %5231 = vmatpush1.msra.mxu0 0.0
  %5232 = vmatprep.subr.mxu0 0.0
  %5233 = vmatpush1.msra.mxu0 0.0
  %5234 = vmatprep.subr.mxu0 0.0
  %5235 = vmatpush1.msra.mxu0 0.0
  %5236 = vmatprep.subr.mxu0 0.0
  %5237 = vmatpush1.msra.mxu0 0.0
  %5238 = vmatprep.subr.mxu0 0.0
  %5239 = vmatpush1.msra.mxu0 0.0
  %5240 = vmatprep.subr.mxu0 0.0
  %5241 = vmatpush1.msra.mxu0 0.0
  %5242 = vmatprep.subr.mxu0 0.0
  %5243 = vmatpush1.msra.mxu0 0.0
  %5244 = vmatprep.subr.mxu0 0.0
  %5245 = vmatpush1.msra.mxu0 0.0
  %5246 = vmatprep.mubr.f32.mxu0 0.0
  %5247 = vmatmul.mubr.f32.gmra.mrb[0].mxu0 %v5174
  %v5248 = vpop.f32.mrb[0].mxu0
  %v5249 = vadd.f32 0.0, %v5248
  %v5250 = vpop.f32.mrb[0].mxu0
  %5251 = vmatprep.mubr.f32.mxu0 0.0
  %5252 = vmatmul.mubr.f32.gmra.mrb[0].mxu0 %v5177
  %v5253 = vpop.f32.mrb[0].mxu0
  %v5254 = vadd.f32 0.0, %v5253
  %v5255 = vpop.f32.mrb[0].mxu0
  %5256 = vmatprep.mubr.f32.mxu0 0.0
  %5257 = vmatmul.mubr.f32.gmra.mrb[0].mxu0 %v5180
  %v5258 = vpop.f32.mrb[0].mxu0
  %v5259 = vadd.f32 0.0, %v5258
  %v5260 = vpop.f32.mrb[0].mxu0
  %5261 = vdwg.mxu0
  %v5262 = vadd.f32 %v4678, %v5249
  %v5263 = vadd.f32 %v4679, %v5254
  %v5264 = vadd.f32 %v4680, %v5259
  %v5265 = vlaneseq
  %v5266 = vshrl.u32 %v5265, 7
  %v5267 = vsub.s32 0, %v5266
  %v5268 = vrot.slane %v2925, %v5267
  %v5269 = vadd.f32 %v5262, %v5268
  %v5270 = vadd.f32 %v5263, %v5268
  %v5271 = vadd.f32 %v5264, %v5268
  %v5272 = vadd.f32 %v5269, %v2921
  %v5273 = vadd.f32 %v5270, %v2922
  %v5274 = vadd.f32 %v5271, %v2923
  %v5275 = vsel %vm149, %v5272, 0.0
  %5276 = vadd.xlane.f32.xlu0 %v5275
  %v5277 = vpop.xlane.xlu0 %5276
  %v5278 = vsel %vm149, %v5273, 0.0
  %5279 = vadd.xlane.f32.xlu0 %v5278
  %v5280 = vpop.xlane.xlu0 %5279
  %v5281 = vsel %vm149, %v5274, 0.0
  %5282 = vadd.xlane.f32.xlu0 %v5281
  %v5283 = vpop.xlane.xlu0 %5282
  %v5284 = vmul.f32 %v5277, %v159
  %v5285 = vmul.f32 %v5280, %v159
  %v5286 = vmul.f32 %v5283, %v159
  %v5287 = vsub.f32 %v5272, %v5284
  %v5288 = vsub.f32 %v5273, %v5285
  %v5289 = vsub.f32 %v5274, %v5286
  %v5290 = vmul.f32 %v5287, %v5287
  %v5291 = vmul.f32 %v5288, %v5288
  %v5292 = vmul.f32 %v5289, %v5289
  %v5293 = vsel %vm149, %v5290, 0.0
  %5294 = vadd.xlane.f32.xlu0 %v5293
  %v5295 = vpop.xlane.xlu0 %5294
  %v5296 = vsel %vm149, %v5291, 0.0
  %5297 = vadd.xlane.f32.xlu0 %v5296
  %v5298 = vpop.xlane.xlu0 %5297
  %v5299 = vsel %vm149, %v5292, 0.0
  %5300 = vadd.xlane.f32.xlu0 %v5299
  %v5301 = vpop.xlane.xlu0 %5300
  %v5302 = vmul.f32 %v5295, %v159
  %v5303 = vmul.f32 %v5298, %v159
  %v5304 = vmul.f32 %v5301, %v159
  %v5305 = vadd.f32 %v5302, 1e-12
  %v5306 = vadd.f32 %v5303, 1e-12
  %v5307 = vadd.f32 %v5304, 1e-12
  %v5308 = vrsqrt.pop %v5305
  %v5309 = vrsqrt.pop %v5306
  %v5310 = vrsqrt.pop %v5307
  %v5311 = vmul.f32 %v5287, %v5308
  %v5312 = vmul.f32 %v5288, %v5309
  %v5313 = vmul.f32 %v5289, %v5310
  %v5314 = vlaneseq
  %v5315 = vshrl.u32 %v5314, 7
  %v5316 = vsub.s32 1, %v5315
  %v5317 = vrot.slane %v2925, %v5316
  %v5318 = vmul.f32 %v5311, %v5317
  %v5319 = vmul.f32 %v5312, %v5317
  %v5320 = vmul.f32 %v5313, %v5317
  %v5321 = vlaneseq
  %v5322 = vshrl.u32 %v5321, 7
  %v5323 = vsub.s32 2, %v5322
  %v5324 = vrot.slane %v2925, %v5323
  %v5325 = vadd.f32 %v5318, %v5324
  %v5326 = vadd.f32 %v5319, %v5324
  %v5327 = vadd.f32 %v5320, %v5324
  %s5328 = scalar_lea.vmem %s8, 96
  %v5329 = vld [vmem:[%s5328] sm:$0xff]
  %v5330 = vld [vmem:[%s5328 + $0x8] sm:$0xff]
  %v5331 = vld [vmem:[%s5328 + $0x10] sm:$0xff]
  %v5332 = vld [vmem:[%s5328 + $0x18] sm:$0xff]
  %v5333 = vld [vmem:[%s5328 + $0x20] sm:$0xff]
  %v5334 = vld [vmem:[%s5328 + $0x28] sm:$0xff]
  %v5335 = vld [vmem:[%s5328 + $0x30] sm:$0xff]
  %v5336 = vld [vmem:[%s5328 + $0x38] sm:$0xff]
  %v5337 = vld [vmem:[%s5328 + $0x40] sm:$0xff]
  %v5338 = vld [vmem:[%s5328 + $0x48] sm:$0xff]
  %v5339 = vld [vmem:[%s5328 + $0x50] sm:$0xff]
  %v5340 = vld [vmem:[%s5328 + $0x58] sm:$0xff]
  %v5341 = vlaneseq
  %v5342 = vshrl.u32 %v5341, 7
  %v5343 = vsub.s32 3, %v5342
  %v5344 = vrot.slane %v2925, %v5343
  %v5346 = vsel %vm149, %v5325, 0
  %v5349 = vsel %vm149, %v5326, 0
  %v5352 = vsel %vm149, %v5327, 0
  %5354 = vmatprep.subr.mxu0 0.0
  %5355 = vmatpush1.msra.mxu0 %v5329
  %5356 = vmatprep.subr.mxu0 0.0
  %5357 = vmatpush1.msra.mxu0 %v5330
  %5358 = vmatprep.subr.mxu0 0.0
  %5359 = vmatpush1.msra.mxu0 %v5331
  %5360 = vmatprep.subr.mxu0 0.0
  %5361 = vmatpush1.msra.mxu0 %v5332
  %5362 = vmatprep.subr.mxu0 0.0
  %5363 = vmatpush1.msra.mxu0 0.0
  %5364 = vmatprep.subr.mxu0 0.0
  %5365 = vmatpush1.msra.mxu0 0.0
  %5366 = vmatprep.subr.mxu0 0.0
  %5367 = vmatpush1.msra.mxu0 0.0
  %5368 = vmatprep.subr.mxu0 0.0
  %5369 = vmatpush1.msra.mxu0 0.0
  %5370 = vmatprep.subr.mxu0 0.0
  %5371 = vmatpush1.msra.mxu0 0.0
  %5372 = vmatprep.subr.mxu0 0.0
  %5373 = vmatpush1.msra.mxu0 0.0
  %5374 = vmatprep.subr.mxu0 0.0
  %5375 = vmatpush1.msra.mxu0 0.0
  %5376 = vmatprep.subr.mxu0 0.0
  %5377 = vmatpush1.msra.mxu0 0.0
  %5378 = vmatprep.subr.mxu0 0.0
  %5379 = vmatpush1.msra.mxu0 0.0
  %5380 = vmatprep.subr.mxu0 0.0
  %5381 = vmatpush1.msra.mxu0 0.0
  %5382 = vmatprep.subr.mxu0 0.0
  %5383 = vmatpush1.msra.mxu0 0.0
  %5384 = vmatprep.subr.mxu0 0.0
  %5385 = vmatpush1.msra.mxu0 0.0
  %5386 = vmatprep.subr.mxu0 0.0
  %5387 = vmatpush1.msra.mxu0 0.0
  %5388 = vmatprep.subr.mxu0 0.0
  %5389 = vmatpush1.msra.mxu0 0.0
  %5390 = vmatprep.subr.mxu0 0.0
  %5391 = vmatpush1.msra.mxu0 0.0
  %5392 = vmatprep.subr.mxu0 0.0
  %5393 = vmatpush1.msra.mxu0 0.0
  %5394 = vmatprep.subr.mxu0 0.0
  %5395 = vmatpush1.msra.mxu0 0.0
  %5396 = vmatprep.subr.mxu0 0.0
  %5397 = vmatpush1.msra.mxu0 0.0
  %5398 = vmatprep.subr.mxu0 0.0
  %5399 = vmatpush1.msra.mxu0 0.0
  %5400 = vmatprep.subr.mxu0 0.0
  %5401 = vmatpush1.msra.mxu0 0.0
  %5402 = vmatprep.subr.mxu0 0.0
  %5403 = vmatpush1.msra.mxu0 0.0
  %5404 = vmatprep.subr.mxu0 0.0
  %5405 = vmatpush1.msra.mxu0 0.0
  %5406 = vmatprep.subr.mxu0 0.0
  %5407 = vmatpush1.msra.mxu0 0.0
  %5408 = vmatprep.subr.mxu0 0.0
  %5409 = vmatpush1.msra.mxu0 0.0
  %5410 = vmatprep.subr.mxu0 0.0
  %5411 = vmatpush1.msra.mxu0 0.0
  %5412 = vmatprep.subr.mxu0 0.0
  %5413 = vmatpush1.msra.mxu0 0.0
  %5414 = vmatprep.subr.mxu0 0.0
  %5415 = vmatpush1.msra.mxu0 0.0
  %5416 = vmatprep.subr.mxu0 0.0
  %5417 = vmatpush1.msra.mxu0 0.0
  %5418 = vmatprep.mubr.f32.mxu0 0.0
  %5419 = vmatmul.mubr.f32.gmra.mrb[0].mxu0 %v5346
  %v5420 = vpop.f32.mrb[0].mxu0
  %v5421 = vadd.f32 %v5344, %v5420
  %v5422 = vpop.f32.mrb[0].mxu0
  %5423 = vmatprep.mubr.f32.mxu0 0.0
  %5424 = vmatmul.mubr.f32.gmra.mrb[0].mxu0 %v5349
  %v5425 = vpop.f32.mrb[0].mxu0
  %v5426 = vadd.f32 %v5344, %v5425
  %v5427 = vpop.f32.mrb[0].mxu0
  %5428 = vmatprep.mubr.f32.mxu0 0.0
  %5429 = vmatmul.mubr.f32.gmra.mrb[0].mxu0 %v5352
  %v5430 = vpop.f32.mrb[0].mxu0
  %v5431 = vadd.f32 %v5344, %v5430
  %v5432 = vpop.f32.mrb[0].mxu0
  %5433 = vdwg.mxu0
  %v5434 = vmul.f32 %v5421, 0.5
  %v5435 = vmul.f32 %v5426, 0.5
  %v5436 = vmul.f32 %v5431, 0.5
  %v5437 = vmul.f32 %v5421, 0.044715
  %v5438 = vmul.f32 %v5426, 0.044715
  %v5439 = vmul.f32 %v5431, 0.044715
  %v5440 = vmul.f32 %v5437, %v5421
  %v5441 = vmul.f32 %v5438, %v5426
  %v5442 = vmul.f32 %v5439, %v5431
  %v5443 = vmul.f32 %v5440, %v5421
  %v5444 = vmul.f32 %v5441, %v5426
  %v5445 = vmul.f32 %v5442, %v5431
  %v5446 = vadd.f32 %v5421, %v5443
  %v5447 = vadd.f32 %v5426, %v5444
  %v5448 = vadd.f32 %v5431, %v5445
  %v5449 = vmul.f32 %v5446, 0.7978846
  %v5450 = vmul.f32 %v5447, 0.7978846
  %v5451 = vmul.f32 %v5448, 0.7978846
  %v5452 = vtanh.pop %v5449
  %v5453 = vtanh.pop %v5450
  %v5454 = vtanh.pop %v5451
  %v5455 = vadd.f32 %v5452, 1.0
  %v5456 = vadd.f32 %v5453, 1.0
  %v5457 = vadd.f32 %v5454, 1.0
  %v5458 = vmul.f32 %v5434, %v5455
  %v5459 = vmul.f32 %v5435, %v5456
  %v5460 = vmul.f32 %v5436, %v5457
  %v5461 = vlaneseq
  %v5462 = vshrl.u32 %v5461, 7
  %v5463 = vsub.s32 4, %v5462
  %v5464 = vrot.slane %v2925, %v5463
  %v5466 = vsel %vm2778, %v5458, 0
  %v5469 = vsel %vm2778, %v5459, 0
  %v5472 = vsel %vm2778, %v5460, 0
  %5474 = vmatprep.subr.mxu0 0.0
  %5475 = vmatpush1.msra.mxu0 %v5333
  %5476 = vmatprep.subr.mxu0 0.0
  %5477 = vmatpush1.msra.mxu0 %v5334
  %5478 = vmatprep.subr.mxu0 0.0
  %5479 = vmatpush1.msra.mxu0 %v5335
  %5480 = vmatprep.subr.mxu0 0.0
  %5481 = vmatpush1.msra.mxu0 %v5336
  %5482 = vmatprep.subr.mxu0 0.0
  %5483 = vmatpush1.msra.mxu0 %v5337
  %5484 = vmatprep.subr.mxu0 0.0
  %5485 = vmatpush1.msra.mxu0 %v5338
  %5486 = vmatprep.subr.mxu0 0.0
  %5487 = vmatpush1.msra.mxu0 %v5339
  %5488 = vmatprep.subr.mxu0 0.0
  %5489 = vmatpush1.msra.mxu0 %v5340
  %5490 = vmatprep.subr.mxu0 0.0
  %5491 = vmatpush1.msra.mxu0 0.0
  %5492 = vmatprep.subr.mxu0 0.0
  %5493 = vmatpush1.msra.mxu0 0.0
  %5494 = vmatprep.subr.mxu0 0.0
  %5495 = vmatpush1.msra.mxu0 0.0
  %5496 = vmatprep.subr.mxu0 0.0
  %5497 = vmatpush1.msra.mxu0 0.0
  %5498 = vmatprep.subr.mxu0 0.0
  %5499 = vmatpush1.msra.mxu0 0.0
  %5500 = vmatprep.subr.mxu0 0.0
  %5501 = vmatpush1.msra.mxu0 0.0
  %5502 = vmatprep.subr.mxu0 0.0
  %5503 = vmatpush1.msra.mxu0 0.0
  %5504 = vmatprep.subr.mxu0 0.0
  %5505 = vmatpush1.msra.mxu0 0.0
  %5506 = vmatprep.subr.mxu0 0.0
  %5507 = vmatpush1.msra.mxu0 0.0
  %5508 = vmatprep.subr.mxu0 0.0
  %5509 = vmatpush1.msra.mxu0 0.0
  %5510 = vmatprep.subr.mxu0 0.0
  %5511 = vmatpush1.msra.mxu0 0.0
  %5512 = vmatprep.subr.mxu0 0.0
  %5513 = vmatpush1.msra.mxu0 0.0
  %5514 = vmatprep.subr.mxu0 0.0
  %5515 = vmatpush1.msra.mxu0 0.0
  %5516 = vmatprep.subr.mxu0 0.0
  %5517 = vmatpush1.msra.mxu0 0.0
  %5518 = vmatprep.subr.mxu0 0.0
  %5519 = vmatpush1.msra.mxu0 0.0
  %5520 = vmatprep.subr.mxu0 0.0
  %5521 = vmatpush1.msra.mxu0 0.0
  %5522 = vmatprep.subr.mxu0 0.0
  %5523 = vmatpush1.msra.mxu0 0.0
  %5524 = vmatprep.subr.mxu0 0.0
  %5525 = vmatpush1.msra.mxu0 0.0
  %5526 = vmatprep.subr.mxu0 0.0
  %5527 = vmatpush1.msra.mxu0 0.0
  %5528 = vmatprep.subr.mxu0 0.0
  %5529 = vmatpush1.msra.mxu0 0.0
  %5530 = vmatprep.subr.mxu0 0.0
  %5531 = vmatpush1.msra.mxu0 0.0
  %5532 = vmatprep.subr.mxu0 0.0
  %5533 = vmatpush1.msra.mxu0 0.0
  %5534 = vmatprep.subr.mxu0 0.0
  %5535 = vmatpush1.msra.mxu0 0.0
  %5536 = vmatprep.subr.mxu0 0.0
  %5537 = vmatpush1.msra.mxu0 0.0
  %5538 = vmatprep.mubr.f32.mxu0 0.0
  %5539 = vmatmul.mubr.f32.gmra.mrb[0].mxu0 %v5466
  %v5540 = vpop.f32.mrb[0].mxu0
  %v5541 = vadd.f32 %v5464, %v5540
  %v5542 = vpop.f32.mrb[0].mxu0
  %5543 = vmatprep.mubr.f32.mxu0 0.0
  %5544 = vmatmul.mubr.f32.gmra.mrb[0].mxu0 %v5469
  %v5545 = vpop.f32.mrb[0].mxu0
  %v5546 = vadd.f32 %v5464, %v5545
  %v5547 = vpop.f32.mrb[0].mxu0
  %5548 = vmatprep.mubr.f32.mxu0 0.0
  %5549 = vmatmul.mubr.f32.gmra.mrb[0].mxu0 %v5472
  %v5550 = vpop.f32.mrb[0].mxu0
  %v5551 = vadd.f32 %v5464, %v5550
  %v5552 = vpop.f32.mrb[0].mxu0
  %5553 = vdwg.mxu0
  %v5554 = vadd.f32 %v5541, %v5325
  %v5555 = vadd.f32 %v5546, %v5326
  %v5556 = vadd.f32 %v5551, %v5327
  %v5557 = vsel %vm149, %v5554, 0.0
  %5558 = vadd.xlane.f32.xlu0 %v5557
  %v5559 = vpop.xlane.xlu0 %5558
  %v5560 = vsel %vm149, %v5555, 0.0
  %5561 = vadd.xlane.f32.xlu0 %v5560
  %v5562 = vpop.xlane.xlu0 %5561
  %v5563 = vsel %vm149, %v5556, 0.0
  %5564 = vadd.xlane.f32.xlu0 %v5563
  %v5565 = vpop.xlane.xlu0 %5564
  %v5566 = vmul.f32 %v5559, %v159
  %v5567 = vmul.f32 %v5562, %v159
  %v5568 = vmul.f32 %v5565, %v159
  %v5569 = vsub.f32 %v5554, %v5566
  %v5570 = vsub.f32 %v5555, %v5567
  %v5571 = vsub.f32 %v5556, %v5568
  %v5572 = vmul.f32 %v5569, %v5569
  %v5573 = vmul.f32 %v5570, %v5570
  %v5574 = vmul.f32 %v5571, %v5571
  %v5575 = vsel %vm149, %v5572, 0.0
  %5576 = vadd.xlane.f32.xlu0 %v5575
  %v5577 = vpop.xlane.xlu0 %5576
  %v5578 = vsel %vm149, %v5573, 0.0
  %5579 = vadd.xlane.f32.xlu0 %v5578
  %v5580 = vpop.xlane.xlu0 %5579
  %v5581 = vsel %vm149, %v5574, 0.0
  %5582 = vadd.xlane.f32.xlu0 %v5581
  %v5583 = vpop.xlane.xlu0 %5582
  %v5584 = vmul.f32 %v5577, %v159
  %v5585 = vmul.f32 %v5580, %v159
  %v5586 = vmul.f32 %v5583, %v159
  %v5587 = vadd.f32 %v5584, 1e-12
  %v5588 = vadd.f32 %v5585, 1e-12
  %v5589 = vadd.f32 %v5586, 1e-12
  %v5590 = vrsqrt.pop %v5587
  %v5591 = vrsqrt.pop %v5588
  %v5592 = vrsqrt.pop %v5589
  %v5593 = vmul.f32 %v5569, %v5590
  %v5594 = vmul.f32 %v5570, %v5591
  %v5595 = vmul.f32 %v5571, %v5592
  %v5596 = vlaneseq
  %v5597 = vshrl.u32 %v5596, 7
  %v5598 = vsub.s32 5, %v5597
  %v5599 = vrot.slane %v2925, %v5598
  %v5600 = vmul.f32 %v5593, %v5599
  %v5601 = vmul.f32 %v5594, %v5599
  %v5602 = vmul.f32 %v5595, %v5599
  %v5603 = vlaneseq
  %v5604 = vshrl.u32 %v5603, 7
  %v5605 = vsub.s32 6, %v5604
  %v5606 = vrot.slane %v2925, %v5605
  %v5607 = vadd.f32 %v5600, %v5606
  %v5608 = vadd.f32 %v5601, %v5606
  %v5609 = vadd.f32 %v5602, %v5606
  %vm5610 = vcmp.lt.s32.totalorder %v205, 2
  %v5611 = vmul.u32 %v205, 12
  %vm5612 = vcmp.eq.s32.totalorder %v209, %v5611
  %vm5613 = vmand %vm5610, %vm5612
  %v5614 = vsel %vm5613, 1.0, 0.0
  %v5616 = vsel %vm617, %v5614, 0
  %5618 = vmatprep.subr.mxu0 0.0
  %5619 = vmatpush1.msra.mxu0 %v5607
  %5620 = vmatprep.subr.mxu0 0.0
  %5621 = vmatpush1.msra.mxu0 %v5608
  %5622 = vmatprep.subr.mxu0 0.0
  %5623 = vmatpush1.msra.mxu0 %v5609
  %5624 = vmatprep.subr.mxu0 0.0
  %5625 = vmatpush1.msra.mxu0 0.0
  %5626 = vmatprep.subr.mxu0 0.0
  %5627 = vmatpush1.msra.mxu0 0.0
  %5628 = vmatprep.subr.mxu0 0.0
  %5629 = vmatpush1.msra.mxu0 0.0
  %5630 = vmatprep.subr.mxu0 0.0
  %5631 = vmatpush1.msra.mxu0 0.0
  %5632 = vmatprep.subr.mxu0 0.0
  %5633 = vmatpush1.msra.mxu0 0.0
  %5634 = vmatprep.subr.mxu0 0.0
  %5635 = vmatpush1.msra.mxu0 0.0
  %5636 = vmatprep.subr.mxu0 0.0
  %5637 = vmatpush1.msra.mxu0 0.0
  %5638 = vmatprep.subr.mxu0 0.0
  %5639 = vmatpush1.msra.mxu0 0.0
  %5640 = vmatprep.subr.mxu0 0.0
  %5641 = vmatpush1.msra.mxu0 0.0
  %5642 = vmatprep.subr.mxu0 0.0
  %5643 = vmatpush1.msra.mxu0 0.0
  %5644 = vmatprep.subr.mxu0 0.0
  %5645 = vmatpush1.msra.mxu0 0.0
  %5646 = vmatprep.subr.mxu0 0.0
  %5647 = vmatpush1.msra.mxu0 0.0
  %5648 = vmatprep.subr.mxu0 0.0
  %5649 = vmatpush1.msra.mxu0 0.0
  %5650 = vmatprep.subr.mxu0 0.0
  %5651 = vmatpush1.msra.mxu0 0.0
  %5652 = vmatprep.subr.mxu0 0.0
  %5653 = vmatpush1.msra.mxu0 0.0
  %5654 = vmatprep.subr.mxu0 0.0
  %5655 = vmatpush1.msra.mxu0 0.0
  %5656 = vmatprep.subr.mxu0 0.0
  %5657 = vmatpush1.msra.mxu0 0.0
  %5658 = vmatprep.subr.mxu0 0.0
  %5659 = vmatpush1.msra.mxu0 0.0
  %5660 = vmatprep.subr.mxu0 0.0
  %5661 = vmatpush1.msra.mxu0 0.0
  %5662 = vmatprep.subr.mxu0 0.0
  %5663 = vmatpush1.msra.mxu0 0.0
  %5664 = vmatprep.subr.mxu0 0.0
  %5665 = vmatpush1.msra.mxu0 0.0
  %5666 = vmatprep.subr.mxu0 0.0
  %5667 = vmatpush1.msra.mxu0 0.0
  %5668 = vmatprep.subr.mxu0 0.0
  %5669 = vmatpush1.msra.mxu0 0.0
  %5670 = vmatprep.subr.mxu0 0.0
  %5671 = vmatpush1.msra.mxu0 0.0
  %5672 = vmatprep.subr.mxu0 0.0
  %5673 = vmatpush1.msra.mxu0 0.0
  %5674 = vmatprep.subr.mxu0 0.0
  %5675 = vmatpush1.msra.mxu0 0.0
  %5676 = vmatprep.subr.mxu0 0.0
  %5677 = vmatpush1.msra.mxu0 0.0
  %5678 = vmatprep.subr.mxu0 0.0
  %5679 = vmatpush1.msra.mxu0 0.0
  %5680 = vmatprep.subr.mxu0 0.0
  %5681 = vmatpush1.msra.mxu0 0.0
  %5682 = vmatprep.mubr.f32.mxu0 0.0
  %5683 = vmatmul.mubr.f32.gmra.mrb[0].mxu0 %v5616
  %v5684 = vpop.f32.mrb[0].mxu0
  %v5685 = vadd.f32 0.0, %v5684
  %v5686 = vpop.f32.mrb[0].mxu0
  %5687 = vdwg.mxu0
  %v5688 = vlaneseq
  %v5689 = vshrl.u32 %v5688, 7
  %v5690 = vsub.s32 2, %v5689
  %v5691 = vrot.slane %v32, %v5690
  %v5693 = vsel %vm149, %v5685, 0
  %5695 = vmatprep.subr.mxu0 0.0
  %5696 = vmatpush1.msra.mxu0 %v36
  %5697 = vmatprep.subr.mxu0 0.0
  %5698 = vmatpush1.msra.mxu0 %v37
  %5699 = vmatprep.subr.mxu0 0.0
  %5700 = vmatpush1.msra.mxu0 %v38
  %5701 = vmatprep.subr.mxu0 0.0
  %5702 = vmatpush1.msra.mxu0 %v39
  %5703 = vmatprep.subr.mxu0 0.0
  %5704 = vmatpush1.msra.mxu0 0.0
  %5705 = vmatprep.subr.mxu0 0.0
  %5706 = vmatpush1.msra.mxu0 0.0
  %5707 = vmatprep.subr.mxu0 0.0
  %5708 = vmatpush1.msra.mxu0 0.0
  %5709 = vmatprep.subr.mxu0 0.0
  %5710 = vmatpush1.msra.mxu0 0.0
  %5711 = vmatprep.subr.mxu0 0.0
  %5712 = vmatpush1.msra.mxu0 0.0
  %5713 = vmatprep.subr.mxu0 0.0
  %5714 = vmatpush1.msra.mxu0 0.0
  %5715 = vmatprep.subr.mxu0 0.0
  %5716 = vmatpush1.msra.mxu0 0.0
  %5717 = vmatprep.subr.mxu0 0.0
  %5718 = vmatpush1.msra.mxu0 0.0
  %5719 = vmatprep.subr.mxu0 0.0
  %5720 = vmatpush1.msra.mxu0 0.0
  %5721 = vmatprep.subr.mxu0 0.0
  %5722 = vmatpush1.msra.mxu0 0.0
  %5723 = vmatprep.subr.mxu0 0.0
  %5724 = vmatpush1.msra.mxu0 0.0
  %5725 = vmatprep.subr.mxu0 0.0
  %5726 = vmatpush1.msra.mxu0 0.0
  %5727 = vmatprep.subr.mxu0 0.0
  %5728 = vmatpush1.msra.mxu0 0.0
  %5729 = vmatprep.subr.mxu0 0.0
  %5730 = vmatpush1.msra.mxu0 0.0
  %5731 = vmatprep.subr.mxu0 0.0
  %5732 = vmatpush1.msra.mxu0 0.0
  %5733 = vmatprep.subr.mxu0 0.0
  %5734 = vmatpush1.msra.mxu0 0.0
  %5735 = vmatprep.subr.mxu0 0.0
  %5736 = vmatpush1.msra.mxu0 0.0
  %5737 = vmatprep.subr.mxu0 0.0
  %5738 = vmatpush1.msra.mxu0 0.0
  %5739 = vmatprep.subr.mxu0 0.0
  %5740 = vmatpush1.msra.mxu0 0.0
  %5741 = vmatprep.subr.mxu0 0.0
  %5742 = vmatpush1.msra.mxu0 0.0
  %5743 = vmatprep.subr.mxu0 0.0
  %5744 = vmatpush1.msra.mxu0 0.0
  %5745 = vmatprep.subr.mxu0 0.0
  %5746 = vmatpush1.msra.mxu0 0.0
  %5747 = vmatprep.subr.mxu0 0.0
  %5748 = vmatpush1.msra.mxu0 0.0
  %5749 = vmatprep.subr.mxu0 0.0
  %5750 = vmatpush1.msra.mxu0 0.0
  %5751 = vmatprep.subr.mxu0 0.0
  %5752 = vmatpush1.msra.mxu0 0.0
  %5753 = vmatprep.subr.mxu0 0.0
  %5754 = vmatpush1.msra.mxu0 0.0
  %5755 = vmatprep.subr.mxu0 0.0
  %5756 = vmatpush1.msra.mxu0 0.0
  %5757 = vmatprep.subr.mxu0 0.0
  %5758 = vmatpush1.msra.mxu0 0.0
  %5759 = vmatprep.mubr.f32.mxu0 0.0
  %5760 = vmatmul.mubr.f32.gmra.mrb[0].mxu0 %v5693
  %v5761 = vpop.f32.mrb[0].mxu0
  %v5762 = vadd.f32 %v5691, %v5761
  %v5763 = vpop.f32.mrb[0].mxu0
  %5764 = vdwg.mxu0
  %v5765 = vtanh.pop %v5762
  %v5766 = vlaneseq
  %v5767 = vshrl.u32 %v5766, 7
  %v5768 = vsub.s32 3, %v5767
  %v5769 = vrot.slane %v32, %v5768
  %v5771 = vsel %vm149, %v5765, 0
  %5773 = vmatprep.subr.mxu0 0.0
  %5774 = vmatpush1.msra.mxu0 %v41
  %5775 = vmatprep.subr.mxu0 0.0
  %5776 = vmatpush1.msra.mxu0 %v42
  %5777 = vmatprep.subr.mxu0 0.0
  %5778 = vmatpush1.msra.mxu0 %v43
  %5779 = vmatprep.subr.mxu0 0.0
  %5780 = vmatpush1.msra.mxu0 %v44
  %5781 = vmatprep.subr.mxu0 0.0
  %5782 = vmatpush1.msra.mxu0 0.0
  %5783 = vmatprep.subr.mxu0 0.0
  %5784 = vmatpush1.msra.mxu0 0.0
  %5785 = vmatprep.subr.mxu0 0.0
  %5786 = vmatpush1.msra.mxu0 0.0
  %5787 = vmatprep.subr.mxu0 0.0
  %5788 = vmatpush1.msra.mxu0 0.0
  %5789 = vmatprep.subr.mxu0 0.0
  %5790 = vmatpush1.msra.mxu0 0.0
  %5791 = vmatprep.subr.mxu0 0.0
  %5792 = vmatpush1.msra.mxu0 0.0
  %5793 = vmatprep.subr.mxu0 0.0
  %5794 = vmatpush1.msra.mxu0 0.0
  %5795 = vmatprep.subr.mxu0 0.0
  %5796 = vmatpush1.msra.mxu0 0.0
  %5797 = vmatprep.subr.mxu0 0.0
  %5798 = vmatpush1.msra.mxu0 0.0
  %5799 = vmatprep.subr.mxu0 0.0
  %5800 = vmatpush1.msra.mxu0 0.0
  %5801 = vmatprep.subr.mxu0 0.0
  %5802 = vmatpush1.msra.mxu0 0.0
  %5803 = vmatprep.subr.mxu0 0.0
  %5804 = vmatpush1.msra.mxu0 0.0
  %5805 = vmatprep.subr.mxu0 0.0
  %5806 = vmatpush1.msra.mxu0 0.0
  %5807 = vmatprep.subr.mxu0 0.0
  %5808 = vmatpush1.msra.mxu0 0.0
  %5809 = vmatprep.subr.mxu0 0.0
  %5810 = vmatpush1.msra.mxu0 0.0
  %5811 = vmatprep.subr.mxu0 0.0
  %5812 = vmatpush1.msra.mxu0 0.0
  %5813 = vmatprep.subr.mxu0 0.0
  %5814 = vmatpush1.msra.mxu0 0.0
  %5815 = vmatprep.subr.mxu0 0.0
  %5816 = vmatpush1.msra.mxu0 0.0
  %5817 = vmatprep.subr.mxu0 0.0
  %5818 = vmatpush1.msra.mxu0 0.0
  %5819 = vmatprep.subr.mxu0 0.0
  %5820 = vmatpush1.msra.mxu0 0.0
  %5821 = vmatprep.subr.mxu0 0.0
  %5822 = vmatpush1.msra.mxu0 0.0
  %5823 = vmatprep.subr.mxu0 0.0
  %5824 = vmatpush1.msra.mxu0 0.0
  %5825 = vmatprep.subr.mxu0 0.0
  %5826 = vmatpush1.msra.mxu0 0.0
  %5827 = vmatprep.subr.mxu0 0.0
  %5828 = vmatpush1.msra.mxu0 0.0
  %5829 = vmatprep.subr.mxu0 0.0
  %5830 = vmatpush1.msra.mxu0 0.0
  %5831 = vmatprep.subr.mxu0 0.0
  %5832 = vmatpush1.msra.mxu0 0.0
  %5833 = vmatprep.subr.mxu0 0.0
  %5834 = vmatpush1.msra.mxu0 0.0
  %5835 = vmatprep.subr.mxu0 0.0
  %5836 = vmatpush1.msra.mxu0 0.0
  %5837 = vmatprep.mubr.f32.mxu0 0.0
  %5838 = vmatmul.mubr.f32.gmra.mrb[0].mxu0 %v5771
  %v5839 = vpop.f32.mrb[0].mxu0
  %v5840 = vadd.f32 %v5769, %v5839
  %v5841 = vpop.f32.mrb[0].mxu0
  %5842 = vdwg.mxu0
  %v5843 = vmul.f32 %v5840, 0.5
  %v5844 = vmul.f32 %v5840, 0.044715
  %v5845 = vmul.f32 %v5844, %v5840
  %v5846 = vmul.f32 %v5845, %v5840
  %v5847 = vadd.f32 %v5840, %v5846
  %v5848 = vmul.f32 %v5847, 0.7978846
  %v5849 = vtanh.pop %v5848
  %v5850 = vadd.f32 %v5849, 1.0
  %v5851 = vmul.f32 %v5843, %v5850
  %v5852 = vsel %vm149, %v5851, 0.0
  %5853 = vadd.xlane.f32.xlu0 %v5852
  %v5854 = vpop.xlane.xlu0 %5853
  %v5855 = vmul.f32 %v5854, %v159
  %v5856 = vsub.f32 %v5851, %v5855
  %v5857 = vmul.f32 %v5856, %v5856
  %v5858 = vsel %vm149, %v5857, 0.0
  %5859 = vadd.xlane.f32.xlu0 %v5858
  %v5860 = vpop.xlane.xlu0 %5859
  %v5861 = vmul.f32 %v5860, %v159
  %v5862 = vadd.f32 %v5861, 1e-12
  %v5863 = vrsqrt.pop %v5862
  %v5864 = vmul.f32 %v5856, %v5863
  %v5865 = vlaneseq
  %v5866 = vshrl.u32 %v5865, 7
  %v5867 = vsub.s32 4, %v5866
  %v5868 = vrot.slane %v32, %v5867
  %v5869 = vmul.f32 %v5864, %v5868
  %v5870 = vlaneseq
  %v5871 = vshrl.u32 %v5870, 7
  %v5872 = vsub.s32 5, %v5871
  %v5873 = vrot.slane %v32, %v5872
  %v5874 = vadd.f32 %v5869, %v5873
  %v5875 = vlaneseq
  %v5876 = vshrl.u32 %v5875, 7
  %v5877 = vsub.s32 6, %v5876
  %v5878 = vrot.slane %v32, %v5877
  %v5880 = vsel %vm149, %v5874, 0
  %5882 = vmatprep.subr.mxu0 0.0
  %5883 = vmatpush1.msra.mxu0 %v46
  %5884 = vmatprep.subr.mxu0 0.0
  %5885 = vmatpush1.msra.mxu0 %v47
  %5886 = vmatprep.subr.mxu0 0.0
  %5887 = vmatpush1.msra.mxu0 %v48
  %5888 = vmatprep.subr.mxu0 0.0
  %5889 = vmatpush1.msra.mxu0 %v49
  %5890 = vmatprep.subr.mxu0 0.0
  %5891 = vmatpush1.msra.mxu0 0.0
  %5892 = vmatprep.subr.mxu0 0.0
  %5893 = vmatpush1.msra.mxu0 0.0
  %5894 = vmatprep.subr.mxu0 0.0
  %5895 = vmatpush1.msra.mxu0 0.0
  %5896 = vmatprep.subr.mxu0 0.0
  %5897 = vmatpush1.msra.mxu0 0.0
  %5898 = vmatprep.subr.mxu0 0.0
  %5899 = vmatpush1.msra.mxu0 0.0
  %5900 = vmatprep.subr.mxu0 0.0
  %5901 = vmatpush1.msra.mxu0 0.0
  %5902 = vmatprep.subr.mxu0 0.0
  %5903 = vmatpush1.msra.mxu0 0.0
  %5904 = vmatprep.subr.mxu0 0.0
  %5905 = vmatpush1.msra.mxu0 0.0
  %5906 = vmatprep.subr.mxu0 0.0
  %5907 = vmatpush1.msra.mxu0 0.0
  %5908 = vmatprep.subr.mxu0 0.0
  %5909 = vmatpush1.msra.mxu0 0.0
  %5910 = vmatprep.subr.mxu0 0.0
  %5911 = vmatpush1.msra.mxu0 0.0
  %5912 = vmatprep.subr.mxu0 0.0
  %5913 = vmatpush1.msra.mxu0 0.0
  %5914 = vmatprep.subr.mxu0 0.0
  %5915 = vmatpush1.msra.mxu0 0.0
  %5916 = vmatprep.subr.mxu0 0.0
  %5917 = vmatpush1.msra.mxu0 0.0
  %5918 = vmatprep.subr.mxu0 0.0
  %5919 = vmatpush1.msra.mxu0 0.0
  %5920 = vmatprep.subr.mxu0 0.0
  %5921 = vmatpush1.msra.mxu0 0.0
  %5922 = vmatprep.subr.mxu0 0.0
  %5923 = vmatpush1.msra.mxu0 0.0
  %5924 = vmatprep.subr.mxu0 0.0
  %5925 = vmatpush1.msra.mxu0 0.0
  %5926 = vmatprep.subr.mxu0 0.0
  %5927 = vmatpush1.msra.mxu0 0.0
  %5928 = vmatprep.subr.mxu0 0.0
  %5929 = vmatpush1.msra.mxu0 0.0
  %5930 = vmatprep.subr.mxu0 0.0
  %5931 = vmatpush1.msra.mxu0 0.0
  %5932 = vmatprep.subr.mxu0 0.0
  %5933 = vmatpush1.msra.mxu0 0.0
  %5934 = vmatprep.subr.mxu0 0.0
  %5935 = vmatpush1.msra.mxu0 0.0
  %5936 = vmatprep.subr.mxu0 0.0
  %5937 = vmatpush1.msra.mxu0 0.0
  %5938 = vmatprep.subr.mxu0 0.0
  %5939 = vmatpush1.msra.mxu0 0.0
  %5940 = vmatprep.subr.mxu0 0.0
  %5941 = vmatpush1.msra.mxu0 0.0
  %5942 = vmatprep.subr.mxu0 0.0
  %5943 = vmatpush1.msra.mxu0 0.0
  %5944 = vmatprep.subr.mxu0 0.0
  %5945 = vmatpush1.msra.mxu0 0.0
  %5946 = vmatprep.mubr.f32.mxu0 0.0
  %5947 = vmatmul.mubr.f32.gmra.mrb[0].mxu0 %v5880
  %v5948 = vpop.f32.mrb[0].mxu0
  %v5949 = vadd.f32 %v5878, %v5948
  %v5950 = vpop.f32.mrb[0].mxu0
  %5951 = vdwg.mxu0
  %5952 = vst [vmem:[%s9] sm:$0xff] %v5949
  // Predicated region
  $region38: #{_lambda_.1} parent=0 // pred_check
    _
  $region39: #{_lambda_.1} parent=0 // pred_check_branch
    %5954 = sbr.rel (0) target = $region41
  $region40: #{_lambda_.1} parent=0 // pred_region
    _
  $region41: #{_lambda_.1} parent=0 // pred_fallthru
    _
  // Predicated region
  $region42: #{_lambda_.1} parent=0 // pred_check
    _
  $region43: #{_lambda_.1} parent=0 // pred_check_branch
    %5956 = sbr.rel (0) target = $region45
  $region44: #{_lambda_.1} parent=0 // pred_region
    _
  $region45: #{_lambda_.1} parent=0 // pred_fallthru
    _

</llo_original>
